<compile_context>
chip_gen: v7x
topology: tpu7x:2x2x1
jax: 0.10.0
libtpu: 0.0.40
codegen_flags: <defaults>
</compile_context>

<pallas_src>
import functools

import jax
import jax.numpy as jnp
import numpy as np
from jax.experimental import pallas as pl
from jax.experimental.pallas import tpu as pltpu

EPS = 1e-9
TEMP = 0.66          # concrete temperature -- distribution-only, not in the image path

NUM_PIXELS = 784
NUM_HIDDEN1 = 400
NUM_HIDDEN2 = 200
Z_SHARED = 10
Z_PRIVATE = 50


def _round_up(x, m):
    return (x + m - 1) // m * m


def _bf16_tail_supported():
    """bf16 VPU/EUP exist on v6e / v7x; keep the elementwise tail f32 elsewhere (v5e)."""
    try:
        kind = jax.devices()[0].device_kind.lower()
    except Exception:
        return False
    return ("v6" in kind) or ("v7" in kind) or ("7x" in kind)


def _decoder_a_kernel(z_ref, x_ref, w1_ref, b1_ref, w2_ref, b2_ref, w3_ref, b3_ref,
                      mean_ref, loss_ref, *, tail_dtype):
    w_dtype = w1_ref.dtype                         # matmul operand dtype (bf16 or f32)

    # --- 3-layer MLP: f32 MXU accumulation, f32 bias-add / ReLU ---
    z = z_ref[...]                                                        # [TB, 64]
    h1 = jnp.dot(z, w1_ref[...], preferred_element_type=jnp.float32) + b1_ref[...]
    h1 = jnp.maximum(h1, 0.0)                                             # [TB, 256]
    h2 = jnp.dot(h1.astype(w_dtype), w2_ref[...],
                 preferred_element_type=jnp.float32) + b2_ref[...]
    h2 = jnp.maximum(h2, 0.0)                                             # [TB, 512]
    logits = jnp.dot(h2.astype(w_dtype), w3_ref[...],
                     preferred_element_type=jnp.float32) + b3_ref[...]    # [TB, 784]

    # --- elementwise tail (bf16 on v6e/v7x, f32 on v5e) ---
    t = logits.astype(tail_dtype)
    x_hat = jax.nn.sigmoid(t)
    mean_ref[...] = x_hat.astype(mean_ref.dtype)

    # Stable Bernoulli log-likelihood:
    #   ll = x*log(x_hat) + (1-x)*log(1-x_hat) = x*logits - softplus(logits)
    # softplus(l) = max(l,0) + log(1 + exp(-|l|)) never over/underflows catastrophically.
    x = x_ref[...].astype(tail_dtype)
    softplus = jnp.maximum(t, 0.0) + jnp.log(1.0 + jnp.exp(-jnp.abs(t)))
    ll = x * t - softplus
    loss_ref[...] = -jnp.sum(ll.astype(jnp.float32), axis=-1, keepdims=True)  # [TB, 1]


def prepare_decoder_a_params(params, compute_dtype=jnp.bfloat16):
    """One-time (off the hot path) weight prep.

    params: (w1, b1, w2, b2, w3, b3) with weights pre-transposed to [in, out].
    Zero-pads contraction/hidden dims to MXU-friendly sizes (60->64, 200->256, 400->512)
    -- exactly preserves the function -- and casts matmul operands to compute_dtype.
    Biases stay f32 (elementwise math is f32/bf16 in the kernel, never below f32 adds
    into the MXU accumulators).
    """
    w1, b1, w2, b2, w3, b3 = params
    z_dim, h2_dim = w1.shape                      # 60, 200
    h1_dim = w2.shape[1]                          # 400
    zp = _round_up(z_dim, 8)                      # 64
    h2p = _round_up(h2_dim, 128)                  # 256
    h1p = _round_up(h1_dim, 128)                  # 512
    w1p = jnp.pad(w1, ((0, zp - z_dim), (0, h2p - h2_dim))).astype(compute_dtype)
    b1p = jnp.pad(jnp.reshape(b1, (1, -1)), ((0, 0), (0, h2p - h2_dim))).astype(jnp.float32)
    w2p = jnp.pad(w2, ((0, h2p - h2_dim), (0, h1p - h1_dim))).astype(compute_dtype)
    b2p = jnp.pad(jnp.reshape(b2, (1, -1)), ((0, 0), (0, h1p - h1_dim))).astype(jnp.float32)
    w3p = jnp.pad(w3, ((0, h1p - h1_dim), (0, 0))).astype(compute_dtype)
    b3p = jnp.reshape(b3, (1, -1)).astype(jnp.float32)
    return (w1p, b1p, w2p, b2p, w3p, b3p)


def decoder_a_forward(z_private, z_shared, images, prepared_params, *, poe=False,
                      tb_max=512, tail_dtype=None):
    """DecoderA image path for one shared key.

    images may be bf16 (recommended: exact for binarized pixels, halves the input DMA)
    or f32. Returns (images_mean [N, 784], loss [N]); mean is bf16 on the bf16 path.
    """
    w1, b1, w2, b2, w3, b3 = prepared_params
    compute_dtype = w1.dtype
    if tail_dtype is None:
        tail_dtype = (jnp.float32 if compute_dtype == jnp.float32
                      else (jnp.bfloat16 if _bf16_tail_supported() else jnp.float32))
    mean_dtype = jnp.bfloat16 if compute_dtype == jnp.bfloat16 else jnp.float32

    n = z_private.shape[0]
    z_pad_dim = w1.shape[0]                                 # 64
    h2p, h1p, px = w1.shape[1], w2.shape[1], w3.shape[1]    # 256, 512, 784

    # Cheap per-call prep on the tiny z arrays: 'poe' cube-root, lane concat, pad 60->64.
    zs = jnp.power(z_shared + EPS, 1.0 / 3.0) if poe else z_shared
    z = jnp.concatenate([z_private, zs], axis=-1)
    z = jnp.pad(z, ((0, 0), (0, z_pad_dim - z.shape[1]))).astype(compute_dtype)

    # Batch tiling: whole batch as one block if it fits (no padding / slicing at all);
    # otherwise an even number of grid steps (v7x: 2 TensorCores) with the tile derived
    # from n so at most 8*steps-1 rows are padded.
    if n <= tb_max:
        num_steps, tb, n_pad = 1, n, n
    else:
        num_steps = -(-n // tb_max)
        if num_steps % 2:
            num_steps += 1
        tb = _round_up(-(-n // num_steps), 8)
        n_pad = tb * num_steps
    if n_pad != n:
        # NOTE: this copies the image array; steady-state callers should feed a batch
        # that tiles exactly (or fits one tile) to keep the kernel I/O copy-free.
        z = jnp.pad(z, ((0, n_pad - n), (0, 0)))
        images = jnp.pad(images, ((0, n_pad - n), (0, 0)))

    kernel = functools.partial(_decoder_a_kernel, tail_dtype=tail_dtype)
    mean, loss = pl.pallas_call(
        kernel,
        out_shape=(jax.ShapeDtypeStruct((n_pad, px), mean_dtype),
                   jax.ShapeDtypeStruct((n_pad, 1), jnp.float32)),
        grid=(num_steps,),
        in_specs=[
            pl.BlockSpec((tb, z_pad_dim), lambda i: (i, 0)),     # z (concat, padded 64)
            pl.BlockSpec((tb, px), lambda i: (i, 0)),            # images (full 784 lanes)
            pl.BlockSpec((z_pad_dim, h2p), lambda i: (0, 0)),    # W1 [64, 256]
            pl.BlockSpec((1, h2p), lambda i: (0, 0)),            # b1
            pl.BlockSpec((h2p, h1p), lambda i: (0, 0)),          # W2 [256, 512]
            pl.BlockSpec((1, h1p), lambda i: (0, 0)),            # b2
            pl.BlockSpec((h1p, px), lambda i: (0, 0)),           # W3 [512, 784]
            pl.BlockSpec((1, px), lambda i: (0, 0)),             # b3
        ],
        out_specs=(
            pl.BlockSpec((tb, px), lambda i: (i, 0)),            # images_mean
            pl.BlockSpec((tb, 1), lambda i: (i, 0)),             # per-row loss
        ),
        compiler_params=pltpu.CompilerParams(
            dimension_semantics=("parallel",)),
    )(z, images, w1, b1, w2, b2, w3, b3)

    if n_pad != n:
        mean, loss = mean[:n], loss[:n]
    return mean, loss[:, 0]


def _init_params(key):
    """Deterministic stand-in for the nn.Linear weights (pre-transposed to [in, out])."""
    dims = [(Z_PRIVATE + Z_SHARED, NUM_HIDDEN2),
            (NUM_HIDDEN2, NUM_HIDDEN1),
            (NUM_HIDDEN1, NUM_PIXELS)]
    params = []
    for d_in, d_out in dims:
        key, kw, kb = jax.random.split(key, 3)
        bound = 1.0 / np.sqrt(d_in)
        w = jax.random.uniform(kw, (d_in, d_out), jnp.float32, -bound, bound)
        b = jax.random.uniform(kb, (1, d_out), jnp.float32, -bound, bound)
        params += [w, b]
    return tuple(params)


def _reference(z_private, z_shared, images, params, poe=False):
    """Pure-JAX f32 reference following the PyTorch module exactly."""
    w1, b1, w2, b2, w3, b3 = params
    hi = jax.lax.Precision.HIGHEST
    zs = jnp.power(z_shared + EPS, 1.0 / 3.0) if poe else z_shared
    z = jnp.concatenate([z_private, zs], axis=-1)
    h1 = jax.nn.relu(jnp.dot(z, w1, precision=hi) + b1)
    h2 = jax.nn.relu(jnp.dot(h1, w2, precision=hi) + b2)
    x_hat = jax.nn.sigmoid(jnp.dot(h2, w3, precision=hi) + b3)
    loss = -(jnp.log(x_hat + EPS) * images
             + jnp.log(1.0 - x_hat + EPS) * (1.0 - images)).sum(-1)
    return x_hat, loss


# TODO(synk): probtorch Trace construction (p.normal / p.concrete node registration and
# their log-prob bookkeeping) is distribution-graph metadata with no Pallas equivalent;
# only the decoder MLP + reconstruction loss (the tensor compute) is implemented here.

if __name__ == "__main__":
    key = jax.random.PRNGKey(0)
    k_params, k_a, k_b = jax.random.split(key, 3)
    params = _init_params(k_params)

    def make_inputs(k, n):
        kzp, kzs, kimg = jax.random.split(k, 3)
        z_private = jax.random.normal(kzp, (n, Z_PRIVATE), jnp.float32)      # q['privateA']
        z_shared = jax.nn.softmax(                                            # Concrete(T) sample
            jax.random.gumbel(kzs, (n, Z_SHARED), jnp.float32) / TEMP, axis=-1)
        images = (jax.random.uniform(kimg, (n, NUM_PIXELS), jnp.float32) > 0.5
                  ).astype(jnp.float32)                                       # binarized MNIST-like
        return z_private, z_shared, images

    # --- f32 matmul path: tight semantic check, single-block grid (N <= tb_max) ---
    N = 300
    z_private, z_shared, images = make_inputs(k_a, N)
    prep_f32 = prepare_decoder_a_params(params, jnp.float32)
    for poe in (False, True):
        mean, loss = decoder_a_forward(z_private, z_shared, images, prep_f32,
                                       poe=poe, tail_dtype=jnp.float32)
        jax.block_until_ready((mean, loss))
        ref_mean, ref_loss = _reference(z_private, z_shared, images, params, poe=poe)
        np.testing.assert_allclose(np.asarray(mean), np.asarray(ref_mean),
                                   rtol=1e-5, atol=2e-5)
        np.testing.assert_allclose(np.asarray(loss), np.asarray(ref_loss),
                                   rtol=2e-4, atol=1e-2)

    # --- f32 path: multi-step grid + batch-padding coverage (N=650 -> 2 tiles of 328) ---
    N2 = 650
    zp2, zs2, img2 = make_inputs(k_b, N2)
    mean2, loss2 = decoder_a_forward(zp2, zs2, img2, prep_f32,
                                     poe=False, tail_dtype=jnp.float32)
    jax.block_until_ready((mean2, loss2))
    ref_mean2, ref_loss2 = _reference(zp2, zs2, img2, params, poe=False)
    np.testing.assert_allclose(np.asarray(mean2), np.asarray(ref_mean2),
                               rtol=1e-5, atol=2e-5)
    np.testing.assert_allclose(np.asarray(loss2), np.asarray(ref_loss2),
                               rtol=2e-4, atol=1e-2)

    # --- default bf16 path: bf16 images (exact for {0,1}), bf16 mean, auto tail dtype ---
    prep_bf16 = prepare_decoder_a_params(params, jnp.bfloat16)
    images_bf16 = images.astype(jnp.bfloat16)
    mean_bf, loss_bf = decoder_a_forward(z_private, z_shared, images_bf16, prep_bf16,
                                         poe=False)
    jax.block_until_ready((mean_bf, loss_bf))
    ref_mean, ref_loss = _reference(z_private, z_shared, images, params, poe=False)
    np.testing.assert_allclose(np.asarray(mean_bf.astype(jnp.float32)),
                               np.asarray(ref_mean), rtol=0.0, atol=3e-2)
    np.testing.assert_allclose(np.asarray(loss_bf), np.asarray(ref_loss),
                               rtol=3e-2, atol=2.0)

    print("KERNEL_OK")
</pallas_src>

<mosaic_0001>
module attributes {stable_mosaic.version = 11 : i64} {
  func.func @_decoder_a_kernel(%arg0: i32, %arg1: memref<300x64xf32, #tpu.memory_space<vmem>>, %arg2: memref<300x784xf32, #tpu.memory_space<vmem>>, %arg3: memref<64x256xf32, #tpu.memory_space<vmem>>, %arg4: memref<1x256xf32, #tpu.memory_space<vmem>>, %arg5: memref<256x512xf32, #tpu.memory_space<vmem>>, %arg6: memref<1x512xf32, #tpu.memory_space<vmem>>, %arg7: memref<512x784xf32, #tpu.memory_space<vmem>>, %arg8: memref<1x784xf32, #tpu.memory_space<vmem>>, %arg9: memref<300x784xf32, #tpu.memory_space<vmem>>, %arg10: memref<300x1xf32, #tpu.memory_space<vmem>>) attributes {dimension_semantics = [#tpu.dimension_semantics<parallel>], iteration_bounds = array<i64: 1>, scalar_prefetch = 0 : i64, scratch_operands = 0 : i64, tpu.core_type = #tpu.core_type<tc>, window_params = [{transform_indices = @transform_0, window_bounds = array<i64: 300, 64>}, {transform_indices = @transform_1, window_bounds = array<i64: 300, 784>}, {pipeline_mode = #tpu.pipeline_mode<synchronous>, transform_indices = @transform_2, window_bounds = array<i64: 64, 256>}, {pipeline_mode = #tpu.pipeline_mode<synchronous>, transform_indices = @transform_3, window_bounds = array<i64: 1, 256>}, {pipeline_mode = #tpu.pipeline_mode<synchronous>, transform_indices = @transform_4, window_bounds = array<i64: 256, 512>}, {pipeline_mode = #tpu.pipeline_mode<synchronous>, transform_indices = @transform_5, window_bounds = array<i64: 1, 512>}, {pipeline_mode = #tpu.pipeline_mode<synchronous>, transform_indices = @transform_6, window_bounds = array<i64: 512, 784>}, {pipeline_mode = #tpu.pipeline_mode<synchronous>, transform_indices = @transform_7, window_bounds = array<i64: 1, 784>}, {transform_indices = @transform_8, window_bounds = array<i64: 300, 784>}, {transform_indices = @transform_9, window_bounds = array<i64: 300, 1>}]} {
    %c0 = arith.constant 0 : index
    %c0_0 = arith.constant 0 : index
    %0 = vector.load %arg1[%c0, %c0_0] : memref<300x64xf32, #tpu.memory_space<vmem>>, vector<300x64xf32>
    %c0_1 = arith.constant 0 : index
    %c0_2 = arith.constant 0 : index
    %1 = vector.load %arg3[%c0_1, %c0_2] : memref<64x256xf32, #tpu.memory_space<vmem>>, vector<64x256xf32>
    %cst = arith.constant dense<0.000000e+00> : vector<300x256xf32>
    %2 = tpu.matmul %0, %1, %cst {dimension_numbers = #tpu.dot_dimension_numbers<[1], [0], [0], [1], [0, 0, 1, 1], [], []>} : vector<300x64xf32>, vector<64x256xf32>, vector<300x256xf32> -> vector<300x256xf32>
    %c0_3 = arith.constant 0 : index
    %c0_4 = arith.constant 0 : index
    %3 = vector.load %arg4[%c0_3, %c0_4] : memref<1x256xf32, #tpu.memory_space<vmem>>, vector<1x256xf32>
    %4 = vector.broadcast %3 : vector<1x256xf32> to vector<300x256xf32>
    %5 = arith.addf %2, %4 : vector<300x256xf32>
    %cst_5 = arith.constant 0.000000e+00 : f32
    %6 = vector.broadcast %cst_5 : f32 to vector<300x256xf32>
    %7 = arith.maximumf %5, %6 : vector<300x256xf32>
    %c0_6 = arith.constant 0 : index
    %c0_7 = arith.constant 0 : index
    %8 = vector.load %arg5[%c0_6, %c0_7] : memref<256x512xf32, #tpu.memory_space<vmem>>, vector<256x512xf32>
    %cst_8 = arith.constant dense<0.000000e+00> : vector<300x512xf32>
    %9 = tpu.matmul %7, %8, %cst_8 {dimension_numbers = #tpu.dot_dimension_numbers<[1], [0], [0], [1], [0, 0, 1, 1], [], []>} : vector<300x256xf32>, vector<256x512xf32>, vector<300x512xf32> -> vector<300x512xf32>
    %c0_9 = arith.constant 0 : index
    %c0_10 = arith.constant 0 : index
    %10 = vector.load %arg6[%c0_9, %c0_10] : memref<1x512xf32, #tpu.memory_space<vmem>>, vector<1x512xf32>
    %11 = vector.broadcast %10 : vector<1x512xf32> to vector<300x512xf32>
    %12 = arith.addf %9, %11 : vector<300x512xf32>
    %cst_11 = arith.constant 0.000000e+00 : f32
    %13 = vector.broadcast %cst_11 : f32 to vector<300x512xf32>
    %14 = arith.maximumf %12, %13 : vector<300x512xf32>
    %c0_12 = arith.constant 0 : index
    %c0_13 = arith.constant 0 : index
    %15 = vector.load %arg7[%c0_12, %c0_13] : memref<512x784xf32, #tpu.memory_space<vmem>>, vector<512x784xf32>
    %cst_14 = arith.constant dense<0.000000e+00> : vector<300x784xf32>
    %16 = tpu.matmul %14, %15, %cst_14 {dimension_numbers = #tpu.dot_dimension_numbers<[1], [0], [0], [1], [0, 0, 1, 1], [], []>} : vector<300x512xf32>, vector<512x784xf32>, vector<300x784xf32> -> vector<300x784xf32>
    %c0_15 = arith.constant 0 : index
    %c0_16 = arith.constant 0 : index
    %17 = vector.load %arg8[%c0_15, %c0_16] : memref<1x784xf32, #tpu.memory_space<vmem>>, vector<1x784xf32>
    %18 = vector.broadcast %17 : vector<1x784xf32> to vector<300x784xf32>
    %19 = arith.addf %16, %18 : vector<300x784xf32>
    %20 = arith.negf %19 : vector<300x784xf32>
    %21 = math.exp %20 : vector<300x784xf32>
    %cst_17 = arith.constant 1.000000e+00 : f32
    %22 = vector.broadcast %cst_17 : f32 to vector<300x784xf32>
    %23 = arith.addf %22, %21 : vector<300x784xf32>
    %24 = arith.divf %22, %23 : vector<300x784xf32>
    %c0_18 = arith.constant 0 : index
    %c0_19 = arith.constant 0 : index
    %25 = vector.load %arg9[%c0_18, %c0_19] : memref<300x784xf32, #tpu.memory_space<vmem>>, vector<300x784xf32>
    tpu.vector_store %arg9[%c0_18, %c0_19], %24 {strides = array<i32>} : memref<300x784xf32, #tpu.memory_space<vmem>>, vector<300x784xf32>,
    %c0_20 = arith.constant 0 : index
    %c0_21 = arith.constant 0 : index
    %26 = vector.load %arg2[%c0_20, %c0_21] : memref<300x784xf32, #tpu.memory_space<vmem>>, vector<300x784xf32>
    %cst_22 = arith.constant 0.000000e+00 : f32
    %27 = vector.broadcast %cst_22 : f32 to vector<300x784xf32>
    %28 = arith.maximumf %19, %27 : vector<300x784xf32>
    %29 = math.absf %19 : vector<300x784xf32>
    %cst_23 = arith.constant 0.000000e+00 : f32
    %30 = vector.broadcast %cst_23 : f32 to vector<300x784xf32>
    %31 = arith.subf %30, %29 : vector<300x784xf32>
    %32 = math.exp %31 : vector<300x784xf32>
    %cst_24 = arith.constant 1.000000e+00 : f32
    %33 = vector.broadcast %cst_24 : f32 to vector<300x784xf32>
    %34 = arith.addf %33, %32 : vector<300x784xf32>
    %35 = math.log %34 : vector<300x784xf32>
    %36 = arith.addf %28, %35 : vector<300x784xf32>
    %37 = arith.mulf %26, %19 : vector<300x784xf32>
    %38 = arith.subf %37, %36 : vector<300x784xf32>
    %cst_25 = arith.constant dense<0.000000e+00> : vector<300xf32>
    %39 = vector.multi_reduction <add>, %38, %cst_25 [1] : vector<300x784xf32> to vector<300xf32>
    %40 = vector.shape_cast %39 : vector<300xf32> to vector<300x1xf32>
    %cst_26 = arith.constant 0.000000e+00 : f32
    %41 = vector.broadcast %cst_26 : f32 to vector<300x1xf32>
    %42 = arith.subf %41, %40 : vector<300x1xf32>
    %c0_27 = arith.constant 0 : index
    %c0_28 = arith.constant 0 : index
    %43 = vector.load %arg10[%c0_27, %c0_28] : memref<300x1xf32, #tpu.memory_space<vmem>>, vector<300x1xf32>
    tpu.vector_store %arg10[%c0_27, %c0_28], %42 {strides = array<i32>} : memref<300x1xf32, #tpu.memory_space<vmem>>, vector<300x1xf32>,
    return
  }
  func.func @transform_0(%arg0: i32) -> (i32, i32) {
    %c0_i32 = arith.constant 0 : i32
    %c0_i32_0 = arith.constant 0 : i32
    return %arg0, %c0_i32 : i32, i32
  }
  func.func @transform_1(%arg0: i32) -> (i32, i32) {
    %c0_i32 = arith.constant 0 : i32
    %c0_i32_0 = arith.constant 0 : i32
    return %arg0, %c0_i32 : i32, i32
  }
  func.func @transform_2(%arg0: i32) -> (i32, i32) {
    %c0_i32 = arith.constant 0 : i32
    %c0_i32_0 = arith.constant 0 : i32
    %c0_i32_1 = arith.constant 0 : i32
    return %c0_i32, %c0_i32_0 : i32, i32
  }
  func.func @transform_3(%arg0: i32) -> (i32, i32) {
    %c0_i32 = arith.constant 0 : i32
    %c0_i32_0 = arith.constant 0 : i32
    %c0_i32_1 = arith.constant 0 : i32
    return %c0_i32, %c0_i32_0 : i32, i32
  }
  func.func @transform_4(%arg0: i32) -> (i32, i32) {
    %c0_i32 = arith.constant 0 : i32
    %c0_i32_0 = arith.constant 0 : i32
    %c0_i32_1 = arith.constant 0 : i32
    return %c0_i32, %c0_i32_0 : i32, i32
  }
  func.func @transform_5(%arg0: i32) -> (i32, i32) {
    %c0_i32 = arith.constant 0 : i32
    %c0_i32_0 = arith.constant 0 : i32
    %c0_i32_1 = arith.constant 0 : i32
    return %c0_i32, %c0_i32_0 : i32, i32
  }
  func.func @transform_6(%arg0: i32) -> (i32, i32) {
    %c0_i32 = arith.constant 0 : i32
    %c0_i32_0 = arith.constant 0 : i32
    %c0_i32_1 = arith.constant 0 : i32
    return %c0_i32, %c0_i32_0 : i32, i32
  }
  func.func @transform_7(%arg0: i32) -> (i32, i32) {
    %c0_i32 = arith.constant 0 : i32
    %c0_i32_0 = arith.constant 0 : i32
    %c0_i32_1 = arith.constant 0 : i32
    return %c0_i32, %c0_i32_0 : i32, i32
  }
  func.func @transform_8(%arg0: i32) -> (i32, i32) {
    %c0_i32 = arith.constant 0 : i32
    %c0_i32_0 = arith.constant 0 : i32
    return %arg0, %c0_i32 : i32, i32
  }
  func.func @transform_9(%arg0: i32) -> (i32, i32) {
    %c0_i32 = arith.constant 0 : i32
    %c0_i32_0 = arith.constant 0 : i32
    return %arg0, %c0_i32 : i32, i32
  }
}

</mosaic_0001>

<llo_original>
// kernel: tpu_custom_call.1
$region0: #{tpu_custom_call.1}
  #allocation0 [shape = 'u32[]', space=smem, size = 0x4, offset = 0x4, fixed_abs, tag = 'smem constant byte address 0x4 - core index']
  #allocation1 [shape = 'u32[144,128]{1,0:T(1,128)}', space=vmem, size = 0x12000, scoped, tag = 'internal scratch']
  %s0 = inlined_call_operand.vmem [shape: f32[300,64], index: 0, kind: input, shape index: {}]
  %s1 = inlined_call_operand.vmem [shape: f32[300,784], index: 1, kind: input, shape index: {}]
  %s2 = inlined_call_operand.vmem [shape: f32[64,256], index: 2, kind: input, shape index: {}]
  %s3 = inlined_call_operand.vmem [shape: f32[1,256], index: 3, kind: input, shape index: {}]
  %s4 = inlined_call_operand.vmem [shape: f32[256,512], index: 4, kind: input, shape index: {}]
  %s5 = inlined_call_operand.vmem [shape: f32[1,512], index: 5, kind: input, shape index: {}]
  %s6 = inlined_call_operand.vmem [shape: f32[512,784], index: 6, kind: input, shape index: {}]
  %s7 = inlined_call_operand.vmem [shape: f32[1,784], index: 7, kind: input, shape index: {}]
  %s8 = inlined_call_operand.hbm [shape: f32[300,784], index: 8, kind: output, shape index: {0}]
  %s9 = inlined_call_operand.vmem [shape: f32[300,1], index: 9, kind: output, shape index: {1}]
  %10 = xla_tuple %s8, %s9
  %s11 = sld [smem:[#allocation0]]
  $region50: #{tpu_custom_call.1} parent=0
    _
  %s13 = ssub.s32 1, %s11
  %s14 = scalar_select 0, %s13, %s11
  $region1: #{tpu_custom_call.1} parent=0
    #allocation2 [shape = 'u8[1089536]{0}', space=vmem, size = 0x10a000, scoped, tag = 'output window, operand 0, single buffered']
    #allocation3 [shape = 's32[1]{0}', space=sflag, size = 0x4, scoped, tag = 'scoped memory for tpu_custom_call.1']
    %15 = vsyncpa [#allocation3], 0
    // Predicated region
    $region2: #{tpu_custom_call.1} parent=1 // pred_check
      _
    $region3: #{tpu_custom_call.1} parent=1 // pred_check_branch
      %17 = sbr.rel (0) target = $region5
    $region4: #{tpu_custom_call.1} parent=1 // pred_region
      _
    $region5: #{tpu_custom_call.1} parent=1 // pred_fallthru
      _
    // Predicated region
    $region6: #{tpu_custom_call.1} parent=1 // pred_check
      _
    $region7: #{tpu_custom_call.1} parent=1 // pred_check_branch
      %19 = sbr.rel (0) target = $region9
    $region8: #{tpu_custom_call.1} parent=1 // pred_region
      _
    $region9: #{tpu_custom_call.1} parent=1 // pred_fallthru
      _
    // Predicated region
    $region10: #{tpu_custom_call.1} parent=1 // pred_check
      _
    $region11: #{tpu_custom_call.1} parent=1 // pred_check_branch
      %21 = sbr.rel (0) target = $region13
    $region12: #{tpu_custom_call.1} parent=1 // pred_region
      _
    $region13: #{tpu_custom_call.1} parent=1 // pred_fallthru
      _
    // Predicated region
    $region14: #{tpu_custom_call.1} parent=1 // pred_check
      _
    $region15: #{tpu_custom_call.1} parent=1 // pred_check_branch
      %23 = sbr.rel (0) target = $region17
    $region16: #{tpu_custom_call.1} parent=1 // pred_region
      _
    $region17: #{tpu_custom_call.1} parent=1 // pred_fallthru
      _
    // Predicated region
    $region18: #{tpu_custom_call.1} parent=1 // pred_check
      _
    $region19: #{tpu_custom_call.1} parent=1 // pred_check_branch
      %25 = sbr.rel (0) target = $region21
    $region20: #{tpu_custom_call.1} parent=1 // pred_region
      _
    $region21: #{tpu_custom_call.1} parent=1 // pred_fallthru
      _
    // Predicated region
    $region22: #{tpu_custom_call.1} parent=1 // pred_check
      _
    $region23: #{tpu_custom_call.1} parent=1 // pred_check_branch
      %27 = sbr.rel (0) target = $region25
    $region24: #{tpu_custom_call.1} parent=1 // pred_region
      _
    $region25: #{tpu_custom_call.1} parent=1 // pred_fallthru
      _
    // Predicated region
    $region26: #{tpu_custom_call.1} parent=1 // pred_check
      _
    $region27: #{tpu_custom_call.1} parent=1 // pred_check_branch
      %29 = sbr.rel (0) target = $region29
    $region28: #{tpu_custom_call.1} parent=1 // pred_region
      _
    $region29: #{tpu_custom_call.1} parent=1 // pred_fallthru
      _
    // Predicated region
    $region30: #{tpu_custom_call.1} parent=1 // pred_check
      _
    $region31: #{tpu_custom_call.1} parent=1 // pred_check_branch
      %31 = sbr.rel (0) target = $region33
    $region32: #{tpu_custom_call.1} parent=1 // pred_region
      _
    $region33: #{tpu_custom_call.1} parent=1 // pred_fallthru
      _
    %v32 = vld [vmem:[%s0] sm:$0xff]
    %v33 = vld [vmem:[%s0 + $0x8] sm:$0xff]
    %v34 = vld [vmem:[%s0 + $0x10] sm:$0xff]
    %v35 = vld [vmem:[%s0 + $0x18] sm:$0xff]
    %v36 = vld [vmem:[%s0 + $0x20] sm:$0xff]
    %v37 = vld [vmem:[%s0 + $0x28] sm:$0xff]
    %v38 = vld [vmem:[%s0 + $0x30] sm:$0xff]
    %v39 = vld [vmem:[%s0 + $0x38] sm:$0xff]
    %v40 = vld [vmem:[%s0 + $0x40] sm:$0xff]
    %v41 = vld [vmem:[%s0 + $0x48] sm:$0xff]
    %v42 = vld [vmem:[%s0 + $0x50] sm:$0xff]
    %v43 = vld [vmem:[%s0 + $0x58] sm:$0xff]
    %v44 = vld [vmem:[%s0 + $0x60] sm:$0xff]
    %v45 = vld [vmem:[%s0 + $0x68] sm:$0xff]
    %v46 = vld [vmem:[%s0 + $0x70] sm:$0xff]
    %v47 = vld [vmem:[%s0 + $0x78] sm:$0xff]
    %v48 = vld [vmem:[%s0 + $0x80] sm:$0xff]
    %v49 = vld [vmem:[%s0 + $0x88] sm:$0xff]
    %v50 = vld [vmem:[%s0 + $0x90] sm:$0xff]
    %v51 = vld [vmem:[%s0 + $0x98] sm:$0xff]
    %v52 = vld [vmem:[%s0 + $0xa0] sm:$0xff]
    %v53 = vld [vmem:[%s0 + $0xa8] sm:$0xff]
    %v54 = vld [vmem:[%s0 + $0xb0] sm:$0xff]
    %v55 = vld [vmem:[%s0 + $0xb8] sm:$0xff]
    %v56 = vld [vmem:[%s0 + $0xc0] sm:$0xff]
    %v57 = vld [vmem:[%s0 + $0xc8] sm:$0xff]
    %v58 = vld [vmem:[%s0 + $0xd0] sm:$0xff]
    %v59 = vld [vmem:[%s0 + $0xd8] sm:$0xff]
    %v60 = vld [vmem:[%s0 + $0xe0] sm:$0xff]
    %v61 = vld [vmem:[%s0 + $0xe8] sm:$0xff]
    %v62 = vld [vmem:[%s0 + $0xf0] sm:$0xff]
    %v63 = vld [vmem:[%s0 + $0xf8] sm:$0xff]
    %v64 = vld [vmem:[%s0 + $0x100] sm:$0xff]
    %v65 = vld [vmem:[%s0 + $0x108] sm:$0xff]
    %v66 = vld [vmem:[%s0 + $0x110] sm:$0xff]
    %v67 = vld [vmem:[%s0 + $0x118] sm:$0xff]
    %v68 = vld [vmem:[%s0 + $0x120] sm:$0xff]
    %v69 = vld [vmem:[%s0 + $0x128] sm:$0xf]
    %v70 = vld [vmem:[%s2] sm:$0xff]
    %v71 = vld [vmem:[%s2 + $0x8] sm:$0xff]
    %v72 = vld [vmem:[%s2 + $0x10] sm:$0xff]
    %v73 = vld [vmem:[%s2 + $0x18] sm:$0xff]
    %v74 = vld [vmem:[%s2 + $0x20] sm:$0xff]
    %v75 = vld [vmem:[%s2 + $0x28] sm:$0xff]
    %v76 = vld [vmem:[%s2 + $0x30] sm:$0xff]
    %v77 = vld [vmem:[%s2 + $0x38] sm:$0xff]
    %v78 = vld [vmem:[%s2 + $0x40] sm:$0xff]
    %v79 = vld [vmem:[%s2 + $0x48] sm:$0xff]
    %v80 = vld [vmem:[%s2 + $0x50] sm:$0xff]
    %v81 = vld [vmem:[%s2 + $0x58] sm:$0xff]
    %v82 = vld [vmem:[%s2 + $0x60] sm:$0xff]
    %v83 = vld [vmem:[%s2 + $0x68] sm:$0xff]
    %v84 = vld [vmem:[%s2 + $0x70] sm:$0xff]
    %v85 = vld [vmem:[%s2 + $0x78] sm:$0xff]
    %v86 = vld [vmem:[%s3] sm:$0x3]
    %v88 = vlaneseq
    %v89 = vshrl.u32 %v88, 7
    %v90 = vsub.s32 0, %v89
    %v91 = vrot.slane %v86, %v90
    %v92 = vlaneseq
    %v93 = vshrl.u32 %v92, 7
    %v94 = vsub.s32 1, %v93
    %v95 = vrot.slane %v86, %v94
    %vm98 = vcmask 523264
    %v100 = vsel %vm98, %v32, 0
    %v103 = vsel %vm98, %v33, 0
    %v106 = vsel %vm98, %v34, 0
    %v109 = vsel %vm98, %v35, 0
    %v112 = vsel %vm98, %v36, 0
    %v115 = vsel %vm98, %v37, 0
    %v118 = vsel %vm98, %v38, 0
    %v121 = vsel %vm98, %v39, 0
    %v124 = vsel %vm98, %v40, 0
    %v127 = vsel %vm98, %v41, 0
    %v130 = vsel %vm98, %v42, 0
    %v133 = vsel %vm98, %v43, 0
    %v136 = vsel %vm98, %v44, 0
    %v139 = vsel %vm98, %v45, 0
    %v142 = vsel %vm98, %v46, 0
    %v145 = vsel %vm98, %v47, 0
    %v148 = vsel %vm98, %v48, 0
    %v151 = vsel %vm98, %v49, 0
    %v154 = vsel %vm98, %v50, 0
    %v157 = vsel %vm98, %v51, 0
    %v160 = vsel %vm98, %v52, 0
    %v163 = vsel %vm98, %v53, 0
    %v166 = vsel %vm98, %v54, 0
    %v169 = vsel %vm98, %v55, 0
    %v172 = vsel %vm98, %v56, 0
    %v175 = vsel %vm98, %v57, 0
    %v178 = vsel %vm98, %v58, 0
    %v181 = vsel %vm98, %v59, 0
    %v184 = vsel %vm98, %v60, 0
    %v187 = vsel %vm98, %v61, 0
    %v190 = vsel %vm98, %v62, 0
    %v193 = vsel %vm98, %v63, 0
    %v196 = vsel %vm98, %v64, 0
    %v199 = vsel %vm98, %v65, 0
    %v202 = vsel %vm98, %v66, 0
    %v205 = vsel %vm98, %v67, 0
    %v208 = vsel %vm98, %v68, 0
    %v211 = vsel %vm98, %v69, 0
    %213 = vmatprep.subr.mxu0 %v71
    %214 = vmatpush1.msra.mxu0 %v70
    %215 = vmatprep.subr.mxu0 %v73
    %216 = vmatpush1.msra.mxu0 %v72
    %217 = vmatprep.subr.mxu0 %v75
    %218 = vmatpush1.msra.mxu0 %v74
    %219 = vmatprep.subr.mxu0 %v77
    %220 = vmatpush1.msra.mxu0 %v76
    %221 = vmatprep.subr.mxu0 %v79
    %222 = vmatpush1.msra.mxu0 %v78
    %223 = vmatprep.subr.mxu0 %v81
    %224 = vmatpush1.msra.mxu0 %v80
    %225 = vmatprep.subr.mxu0 %v83
    %226 = vmatpush1.msra.mxu0 %v82
    %227 = vmatprep.subr.mxu0 %v85
    %228 = vmatpush1.msra.mxu0 %v84
    %229 = vmatprep.subr.mxu0 0.0
    %230 = vmatpush1.msra.mxu0 0.0
    %231 = vmatprep.subr.mxu0 0.0
    %232 = vmatpush1.msra.mxu0 0.0
    %233 = vmatprep.subr.mxu0 0.0
    %234 = vmatpush1.msra.mxu0 0.0
    %235 = vmatprep.subr.mxu0 0.0
    %236 = vmatpush1.msra.mxu0 0.0
    %237 = vmatprep.subr.mxu0 0.0
    %238 = vmatpush1.msra.mxu0 0.0
    %239 = vmatprep.subr.mxu0 0.0
    %240 = vmatpush1.msra.mxu0 0.0
    %241 = vmatprep.subr.mxu0 0.0
    %242 = vmatpush1.msra.mxu0 0.0
    %243 = vmatprep.subr.mxu0 0.0
    %244 = vmatpush1.msra.mxu0 0.0
    %245 = vmatprep.subr.mxu0 0.0
    %246 = vmatpush1.msra.mxu0 0.0
    %247 = vmatprep.subr.mxu0 0.0
    %248 = vmatpush1.msra.mxu0 0.0
    %249 = vmatprep.subr.mxu0 0.0
    %250 = vmatpush1.msra.mxu0 0.0
    %251 = vmatprep.subr.mxu0 0.0
    %252 = vmatpush1.msra.mxu0 0.0
    %253 = vmatprep.subr.mxu0 0.0
    %254 = vmatpush1.msra.mxu0 0.0
    %255 = vmatprep.subr.mxu0 0.0
    %256 = vmatpush1.msra.mxu0 0.0
    %257 = vmatprep.subr.mxu0 0.0
    %258 = vmatpush1.msra.mxu0 0.0
    %259 = vmatprep.subr.mxu0 0.0
    %260 = vmatpush1.msra.mxu0 0.0
    %261 = vmatprep.subr.mxu0 0.0
    %262 = vmatpush1.msra.mxu0 0.0
    %263 = vmatprep.subr.mxu0 0.0
    %264 = vmatpush1.msra.mxu0 0.0
    %265 = vmatprep.subr.mxu0 0.0
    %266 = vmatpush1.msra.mxu0 0.0
    %267 = vmatprep.subr.mxu0 0.0
    %268 = vmatpush1.msra.mxu0 0.0
    %269 = vmatprep.subr.mxu0 0.0
    %270 = vmatpush1.msra.mxu0 0.0
    %271 = vmatprep.subr.mxu0 0.0
    %272 = vmatpush1.msra.mxu0 0.0
    %273 = vmatprep.subr.mxu0 0.0
    %274 = vmatpush1.msra.mxu0 0.0
    %275 = vmatprep.subr.mxu0 0.0
    %276 = vmatpush1.msra.mxu0 0.0
    %277 = vmatprep.mubr.f32.mxu0 0.0
    %278 = vmatmul.mubr.f32.gmra.mrb[0].mxu0 %v100
    %v279 = vpop.f32.mrb[0].mxu0
    %v280 = vadd.f32 %v91, %v279
    %v281 = vpop.f32.mrb[0].mxu0
    %v282 = vadd.f32 %v95, %v281
    %283 = vmatprep.mubr.f32.mxu0 0.0
    %284 = vmatmul.mubr.f32.gmra.mrb[0].mxu0 %v103
    %v285 = vpop.f32.mrb[0].mxu0
    %v286 = vadd.f32 %v91, %v285
    %v287 = vpop.f32.mrb[0].mxu0
    %v288 = vadd.f32 %v95, %v287
    %289 = vmatprep.mubr.f32.mxu0 0.0
    %290 = vmatmul.mubr.f32.gmra.mrb[0].mxu0 %v106
    %v291 = vpop.f32.mrb[0].mxu0
    %v292 = vadd.f32 %v91, %v291
    %v293 = vpop.f32.mrb[0].mxu0
    %v294 = vadd.f32 %v95, %v293
    %295 = vmatprep.mubr.f32.mxu0 0.0
    %296 = vmatmul.mubr.f32.gmra.mrb[0].mxu0 %v109
    %v297 = vpop.f32.mrb[0].mxu0
    %v298 = vadd.f32 %v91, %v297
    %v299 = vpop.f32.mrb[0].mxu0
    %v300 = vadd.f32 %v95, %v299
    %301 = vmatprep.mubr.f32.mxu0 0.0
    %302 = vmatmul.mubr.f32.gmra.mrb[0].mxu0 %v112
    %v303 = vpop.f32.mrb[0].mxu0
    %v304 = vadd.f32 %v91, %v303
    %v305 = vpop.f32.mrb[0].mxu0
    %v306 = vadd.f32 %v95, %v305
    %307 = vmatprep.mubr.f32.mxu0 0.0
    %308 = vmatmul.mubr.f32.gmra.mrb[0].mxu0 %v115
    %v309 = vpop.f32.mrb[0].mxu0
    %v310 = vadd.f32 %v91, %v309
    %v311 = vpop.f32.mrb[0].mxu0
    %v312 = vadd.f32 %v95, %v311
    %313 = vmatprep.mubr.f32.mxu0 0.0
    %314 = vmatmul.mubr.f32.gmra.mrb[0].mxu0 %v118
    %v315 = vpop.f32.mrb[0].mxu0
    %v316 = vadd.f32 %v91, %v315
    %v317 = vpop.f32.mrb[0].mxu0
    %v318 = vadd.f32 %v95, %v317
    %319 = vmatprep.mubr.f32.mxu0 0.0
    %320 = vmatmul.mubr.f32.gmra.mrb[0].mxu0 %v121
    %v321 = vpop.f32.mrb[0].mxu0
    %v322 = vadd.f32 %v91, %v321
    %v323 = vpop.f32.mrb[0].mxu0
    %v324 = vadd.f32 %v95, %v323
    %325 = vmatprep.mubr.f32.mxu0 0.0
    %326 = vmatmul.mubr.f32.gmra.mrb[0].mxu0 %v124
    %v327 = vpop.f32.mrb[0].mxu0
    %v328 = vadd.f32 %v91, %v327
    %v329 = vpop.f32.mrb[0].mxu0
    %v330 = vadd.f32 %v95, %v329
    %331 = vmatprep.mubr.f32.mxu0 0.0
    %332 = vmatmul.mubr.f32.gmra.mrb[0].mxu0 %v127
    %v333 = vpop.f32.mrb[0].mxu0
    %v334 = vadd.f32 %v91, %v333
    %v335 = vpop.f32.mrb[0].mxu0
    %v336 = vadd.f32 %v95, %v335
    %337 = vmatprep.mubr.f32.mxu0 0.0
    %338 = vmatmul.mubr.f32.gmra.mrb[0].mxu0 %v130
    %v339 = vpop.f32.mrb[0].mxu0
    %v340 = vadd.f32 %v91, %v339
    %v341 = vpop.f32.mrb[0].mxu0
    %v342 = vadd.f32 %v95, %v341
    %343 = vmatprep.mubr.f32.mxu0 0.0
    %344 = vmatmul.mubr.f32.gmra.mrb[0].mxu0 %v133
    %v345 = vpop.f32.mrb[0].mxu0
    %v346 = vadd.f32 %v91, %v345
    %v347 = vpop.f32.mrb[0].mxu0
    %v348 = vadd.f32 %v95, %v347
    %349 = vmatprep.mubr.f32.mxu0 0.0
    %350 = vmatmul.mubr.f32.gmra.mrb[0].mxu0 %v136
    %v351 = vpop.f32.mrb[0].mxu0
    %v352 = vadd.f32 %v91, %v351
    %v353 = vpop.f32.mrb[0].mxu0
    %v354 = vadd.f32 %v95, %v353
    %355 = vmatprep.mubr.f32.mxu0 0.0
    %356 = vmatmul.mubr.f32.gmra.mrb[0].mxu0 %v139
    %v357 = vpop.f32.mrb[0].mxu0
    %v358 = vadd.f32 %v91, %v357
    %v359 = vpop.f32.mrb[0].mxu0
    %v360 = vadd.f32 %v95, %v359
    %361 = vmatprep.mubr.f32.mxu0 0.0
    %362 = vmatmul.mubr.f32.gmra.mrb[0].mxu0 %v142
    %v363 = vpop.f32.mrb[0].mxu0
    %v364 = vadd.f32 %v91, %v363
    %v365 = vpop.f32.mrb[0].mxu0
    %v366 = vadd.f32 %v95, %v365
    %367 = vmatprep.mubr.f32.mxu0 0.0
    %368 = vmatmul.mubr.f32.gmra.mrb[0].mxu0 %v145
    %v369 = vpop.f32.mrb[0].mxu0
    %v370 = vadd.f32 %v91, %v369
    %v371 = vpop.f32.mrb[0].mxu0
    %v372 = vadd.f32 %v95, %v371
    %373 = vmatprep.mubr.f32.mxu0 0.0
    %374 = vmatmul.mubr.f32.gmra.mrb[0].mxu0 %v148
    %v375 = vpop.f32.mrb[0].mxu0
    %v376 = vadd.f32 %v91, %v375
    %v377 = vpop.f32.mrb[0].mxu0
    %v378 = vadd.f32 %v95, %v377
    %379 = vmatprep.mubr.f32.mxu0 0.0
    %380 = vmatmul.mubr.f32.gmra.mrb[0].mxu0 %v151
    %v381 = vpop.f32.mrb[0].mxu0
    %v382 = vadd.f32 %v91, %v381
    %v383 = vpop.f32.mrb[0].mxu0
    %v384 = vadd.f32 %v95, %v383
    %385 = vmatprep.mubr.f32.mxu0 0.0
    %386 = vmatmul.mubr.f32.gmra.mrb[0].mxu0 %v154
    %v387 = vpop.f32.mrb[0].mxu0
    %v388 = vadd.f32 %v91, %v387
    %v389 = vpop.f32.mrb[0].mxu0
    %v390 = vadd.f32 %v95, %v389
    %391 = vmatprep.mubr.f32.mxu0 0.0
    %392 = vmatmul.mubr.f32.gmra.mrb[0].mxu0 %v157
    %v393 = vpop.f32.mrb[0].mxu0
    %v394 = vadd.f32 %v91, %v393
    %v395 = vpop.f32.mrb[0].mxu0
    %v396 = vadd.f32 %v95, %v395
    %397 = vmatprep.mubr.f32.mxu0 0.0
    %398 = vmatmul.mubr.f32.gmra.mrb[0].mxu0 %v160
    %v399 = vpop.f32.mrb[0].mxu0
    %v400 = vadd.f32 %v91, %v399
    %v401 = vpop.f32.mrb[0].mxu0
    %v402 = vadd.f32 %v95, %v401
    %403 = vmatprep.mubr.f32.mxu0 0.0
    %404 = vmatmul.mubr.f32.gmra.mrb[0].mxu0 %v163
    %v405 = vpop.f32.mrb[0].mxu0
    %v406 = vadd.f32 %v91, %v405
    %v407 = vpop.f32.mrb[0].mxu0
    %v408 = vadd.f32 %v95, %v407
    %409 = vmatprep.mubr.f32.mxu0 0.0
    %410 = vmatmul.mubr.f32.gmra.mrb[0].mxu0 %v166
    %v411 = vpop.f32.mrb[0].mxu0
    %v412 = vadd.f32 %v91, %v411
    %v413 = vpop.f32.mrb[0].mxu0
    %v414 = vadd.f32 %v95, %v413
    %415 = vmatprep.mubr.f32.mxu0 0.0
    %416 = vmatmul.mubr.f32.gmra.mrb[0].mxu0 %v169
    %v417 = vpop.f32.mrb[0].mxu0
    %v418 = vadd.f32 %v91, %v417
    %v419 = vpop.f32.mrb[0].mxu0
    %v420 = vadd.f32 %v95, %v419
    %421 = vmatprep.mubr.f32.mxu0 0.0
    %422 = vmatmul.mubr.f32.gmra.mrb[0].mxu0 %v172
    %v423 = vpop.f32.mrb[0].mxu0
    %v424 = vadd.f32 %v91, %v423
    %v425 = vpop.f32.mrb[0].mxu0
    %v426 = vadd.f32 %v95, %v425
    %427 = vmatprep.mubr.f32.mxu0 0.0
    %428 = vmatmul.mubr.f32.gmra.mrb[0].mxu0 %v175
    %v429 = vpop.f32.mrb[0].mxu0
    %v430 = vadd.f32 %v91, %v429
    %v431 = vpop.f32.mrb[0].mxu0
    %v432 = vadd.f32 %v95, %v431
    %433 = vmatprep.mubr.f32.mxu0 0.0
    %434 = vmatmul.mubr.f32.gmra.mrb[0].mxu0 %v178
    %v435 = vpop.f32.mrb[0].mxu0
    %v436 = vadd.f32 %v91, %v435
    %v437 = vpop.f32.mrb[0].mxu0
    %v438 = vadd.f32 %v95, %v437
    %439 = vmatprep.mubr.f32.mxu0 0.0
    %440 = vmatmul.mubr.f32.gmra.mrb[0].mxu0 %v181
    %v441 = vpop.f32.mrb[0].mxu0
    %v442 = vadd.f32 %v91, %v441
    %v443 = vpop.f32.mrb[0].mxu0
    %v444 = vadd.f32 %v95, %v443
    %445 = vmatprep.mubr.f32.mxu0 0.0
    %446 = vmatmul.mubr.f32.gmra.mrb[0].mxu0 %v184
    %v447 = vpop.f32.mrb[0].mxu0
    %v448 = vadd.f32 %v91, %v447
    %v449 = vpop.f32.mrb[0].mxu0
    %v450 = vadd.f32 %v95, %v449
    %451 = vmatprep.mubr.f32.mxu0 0.0
    %452 = vmatmul.mubr.f32.gmra.mrb[0].mxu0 %v187
    %v453 = vpop.f32.mrb[0].mxu0
    %v454 = vadd.f32 %v91, %v453
    %v455 = vpop.f32.mrb[0].mxu0
    %v456 = vadd.f32 %v95, %v455
    %457 = vmatprep.mubr.f32.mxu0 0.0
    %458 = vmatmul.mubr.f32.gmra.mrb[0].mxu0 %v190
    %v459 = vpop.f32.mrb[0].mxu0
    %v460 = vadd.f32 %v91, %v459
    %v461 = vpop.f32.mrb[0].mxu0
    %v462 = vadd.f32 %v95, %v461
    %463 = vmatprep.mubr.f32.mxu0 0.0
    %464 = vmatmul.mubr.f32.gmra.mrb[0].mxu0 %v193
    %v465 = vpop.f32.mrb[0].mxu0
    %v466 = vadd.f32 %v91, %v465
    %v467 = vpop.f32.mrb[0].mxu0
    %v468 = vadd.f32 %v95, %v467
    %469 = vmatprep.mubr.f32.mxu0 0.0
    %470 = vmatmul.mubr.f32.gmra.mrb[0].mxu0 %v196
    %v471 = vpop.f32.mrb[0].mxu0
    %v472 = vadd.f32 %v91, %v471
    %v473 = vpop.f32.mrb[0].mxu0
    %v474 = vadd.f32 %v95, %v473
    %475 = vmatprep.mubr.f32.mxu0 0.0
    %476 = vmatmul.mubr.f32.gmra.mrb[0].mxu0 %v199
    %v477 = vpop.f32.mrb[0].mxu0
    %v478 = vadd.f32 %v91, %v477
    %v479 = vpop.f32.mrb[0].mxu0
    %v480 = vadd.f32 %v95, %v479
    %481 = vmatprep.mubr.f32.mxu0 0.0
    %482 = vmatmul.mubr.f32.gmra.mrb[0].mxu0 %v202
    %v483 = vpop.f32.mrb[0].mxu0
    %v484 = vadd.f32 %v91, %v483
    %v485 = vpop.f32.mrb[0].mxu0
    %v486 = vadd.f32 %v95, %v485
    %487 = vmatprep.mubr.f32.mxu0 0.0
    %488 = vmatmul.mubr.f32.gmra.mrb[0].mxu0 %v205
    %v489 = vpop.f32.mrb[0].mxu0
    %v490 = vadd.f32 %v91, %v489
    %v491 = vpop.f32.mrb[0].mxu0
    %v492 = vadd.f32 %v95, %v491
    %493 = vmatprep.mubr.f32.mxu0 0.0
    %494 = vmatmul.mubr.f32.gmra.mrb[0].mxu0 %v208
    %v495 = vpop.f32.mrb[0].mxu0
    %v496 = vadd.f32 %v91, %v495
    %v497 = vpop.f32.mrb[0].mxu0
    %v498 = vadd.f32 %v95, %v497
    %499 = vmatprep.mubr.f32.mxu0 0.0
    %500 = vmatmul.mubr.f32.gmra.mrb[0].mxu0 %v211
    %v501 = vpop.f32.mrb[0].mxu0
    %v502 = vadd.f32 %v91, %v501
    %v503 = vpop.f32.mrb[0].mxu0
    %v504 = vadd.f32 %v95, %v503
    %505 = vdwg.mxu0
    %v506 = vmax.f32 %v280, 0.0
    %v507 = vmax.f32 %v282, 0.0
    %v508 = vmax.f32 %v286, 0.0
    %v509 = vmax.f32 %v288, 0.0
    %v510 = vmax.f32 %v292, 0.0
    %v511 = vmax.f32 %v294, 0.0
    %v512 = vmax.f32 %v298, 0.0
    %v513 = vmax.f32 %v300, 0.0
    %v514 = vmax.f32 %v304, 0.0
    %v515 = vmax.f32 %v306, 0.0
    %v516 = vmax.f32 %v310, 0.0
    %v517 = vmax.f32 %v312, 0.0
    %v518 = vmax.f32 %v316, 0.0
    %v519 = vmax.f32 %v318, 0.0
    %v520 = vmax.f32 %v322, 0.0
    %v521 = vmax.f32 %v324, 0.0
    %v522 = vmax.f32 %v328, 0.0
    %v523 = vmax.f32 %v330, 0.0
    %v524 = vmax.f32 %v334, 0.0
    %v525 = vmax.f32 %v336, 0.0
    %v526 = vmax.f32 %v340, 0.0
    %v527 = vmax.f32 %v342, 0.0
    %v528 = vmax.f32 %v346, 0.0
    %v529 = vmax.f32 %v348, 0.0
    %v530 = vmax.f32 %v352, 0.0
    %v531 = vmax.f32 %v354, 0.0
    %v532 = vmax.f32 %v358, 0.0
    %v533 = vmax.f32 %v360, 0.0
    %v534 = vmax.f32 %v364, 0.0
    %v535 = vmax.f32 %v366, 0.0
    %v536 = vmax.f32 %v370, 0.0
    %v537 = vmax.f32 %v372, 0.0
    %v538 = vmax.f32 %v376, 0.0
    %v539 = vmax.f32 %v378, 0.0
    %v540 = vmax.f32 %v382, 0.0
    %v541 = vmax.f32 %v384, 0.0
    %v542 = vmax.f32 %v388, 0.0
    %v543 = vmax.f32 %v390, 0.0
    %v544 = vmax.f32 %v394, 0.0
    %v545 = vmax.f32 %v396, 0.0
    %v546 = vmax.f32 %v400, 0.0
    %v547 = vmax.f32 %v402, 0.0
    %v548 = vmax.f32 %v406, 0.0
    %v549 = vmax.f32 %v408, 0.0
    %v550 = vmax.f32 %v412, 0.0
    %v551 = vmax.f32 %v414, 0.0
    %v552 = vmax.f32 %v418, 0.0
    %v553 = vmax.f32 %v420, 0.0
    %v554 = vmax.f32 %v424, 0.0
    %v555 = vmax.f32 %v426, 0.0
    %v556 = vmax.f32 %v430, 0.0
    %v557 = vmax.f32 %v432, 0.0
    %v558 = vmax.f32 %v436, 0.0
    %v559 = vmax.f32 %v438, 0.0
    %v560 = vmax.f32 %v442, 0.0
    %v561 = vmax.f32 %v444, 0.0
    %v562 = vmax.f32 %v448, 0.0
    %v563 = vmax.f32 %v450, 0.0
    %v564 = vmax.f32 %v454, 0.0
    %v565 = vmax.f32 %v456, 0.0
    %v566 = vmax.f32 %v460, 0.0
    %v567 = vmax.f32 %v462, 0.0
    %v568 = vmax.f32 %v466, 0.0
    %v569 = vmax.f32 %v468, 0.0
    %v570 = vmax.f32 %v472, 0.0
    %v571 = vmax.f32 %v474, 0.0
    %v572 = vmax.f32 %v478, 0.0
    %v573 = vmax.f32 %v480, 0.0
    %v574 = vmax.f32 %v484, 0.0
    %v575 = vmax.f32 %v486, 0.0
    %v576 = vmax.f32 %v490, 0.0
    %v577 = vmax.f32 %v492, 0.0
    %v578 = vmax.f32 %v496, 0.0
    %v579 = vmax.f32 %v498, 0.0
    %v580 = vmax.f32 %v502, 0.0
    %v581 = vmax.f32 %v504, 0.0
    %v582 = vld [vmem:[%s4] sm:$0xff]
    %v583 = vld [vmem:[%s4 + $0x8] sm:$0xff]
    %v584 = vld [vmem:[%s4 + $0x10] sm:$0xff]
    %v585 = vld [vmem:[%s4 + $0x18] sm:$0xff]
    %v586 = vld [vmem:[%s4 + $0x20] sm:$0xff]
    %v587 = vld [vmem:[%s4 + $0x28] sm:$0xff]
    %v588 = vld [vmem:[%s4 + $0x30] sm:$0xff]
    %v589 = vld [vmem:[%s4 + $0x38] sm:$0xff]
    %v590 = vld [vmem:[%s4 + $0x40] sm:$0xff]
    %v591 = vld [vmem:[%s4 + $0x48] sm:$0xff]
    %v592 = vld [vmem:[%s4 + $0x50] sm:$0xff]
    %v593 = vld [vmem:[%s4 + $0x58] sm:$0xff]
    %v594 = vld [vmem:[%s4 + $0x60] sm:$0xff]
    %v595 = vld [vmem:[%s4 + $0x68] sm:$0xff]
    %v596 = vld [vmem:[%s4 + $0x70] sm:$0xff]
    %v597 = vld [vmem:[%s4 + $0x78] sm:$0xff]
    %v598 = vld [vmem:[%s4 + $0x80] sm:$0xff]
    %v599 = vld [vmem:[%s4 + $0x88] sm:$0xff]
    %v600 = vld [vmem:[%s4 + $0x90] sm:$0xff]
    %v601 = vld [vmem:[%s4 + $0x98] sm:$0xff]
    %v602 = vld [vmem:[%s4 + $0xa0] sm:$0xff]
    %v603 = vld [vmem:[%s4 + $0xa8] sm:$0xff]
    %v604 = vld [vmem:[%s4 + $0xb0] sm:$0xff]
    %v605 = vld [vmem:[%s4 + $0xb8] sm:$0xff]
    %v606 = vld [vmem:[%s4 + $0xc0] sm:$0xff]
    %v607 = vld [vmem:[%s4 + $0xc8] sm:$0xff]
    %v608 = vld [vmem:[%s4 + $0xd0] sm:$0xff]
    %v609 = vld [vmem:[%s4 + $0xd8] sm:$0xff]
    %v610 = vld [vmem:[%s4 + $0xe0] sm:$0xff]
    %v611 = vld [vmem:[%s4 + $0xe8] sm:$0xff]
    %v612 = vld [vmem:[%s4 + $0xf0] sm:$0xff]
    %v613 = vld [vmem:[%s4 + $0xf8] sm:$0xff]
    %v614 = vld [vmem:[%s4 + $0x100] sm:$0xff]
    %v615 = vld [vmem:[%s4 + $0x108] sm:$0xff]
    %v616 = vld [vmem:[%s4 + $0x110] sm:$0xff]
    %v617 = vld [vmem:[%s4 + $0x118] sm:$0xff]
    %v618 = vld [vmem:[%s4 + $0x120] sm:$0xff]
    %v619 = vld [vmem:[%s4 + $0x128] sm:$0xff]
    %v620 = vld [vmem:[%s4 + $0x130] sm:$0xff]
    %v621 = vld [vmem:[%s4 + $0x138] sm:$0xff]
    %v622 = vld [vmem:[%s4 + $0x140] sm:$0xff]
    %v623 = vld [vmem:[%s4 + $0x148] sm:$0xff]
    %v624 = vld [vmem:[%s4 + $0x150] sm:$0xff]
    %v625 = vld [vmem:[%s4 + $0x158] sm:$0xff]
    %v626 = vld [vmem:[%s4 + $0x160] sm:$0xff]
    %v627 = vld [vmem:[%s4 + $0x168] sm:$0xff]
    %v628 = vld [vmem:[%s4 + $0x170] sm:$0xff]
    %v629 = vld [vmem:[%s4 + $0x178] sm:$0xff]
    %v630 = vld [vmem:[%s4 + $0x180] sm:$0xff]
    %v631 = vld [vmem:[%s4 + $0x188] sm:$0xff]
    %v632 = vld [vmem:[%s4 + $0x190] sm:$0xff]
    %v633 = vld [vmem:[%s4 + $0x198] sm:$0xff]
    %v634 = vld [vmem:[%s4 + $0x1a0] sm:$0xff]
    %v635 = vld [vmem:[%s4 + $0x1a8] sm:$0xff]
    %v636 = vld [vmem:[%s4 + $0x1b0] sm:$0xff]
    %v637 = vld [vmem:[%s4 + $0x1b8] sm:$0xff]
    %v638 = vld [vmem:[%s4 + $0x1c0] sm:$0xff]
    %v639 = vld [vmem:[%s4 + $0x1c8] sm:$0xff]
    %v640 = vld [vmem:[%s4 + $0x1d0] sm:$0xff]
    %v641 = vld [vmem:[%s4 + $0x1d8] sm:$0xff]
    %v642 = vld [vmem:[%s4 + $0x1e0] sm:$0xff]
    %v643 = vld [vmem:[%s4 + $0x1e8] sm:$0xff]
    %v644 = vld [vmem:[%s4 + $0x1f0] sm:$0xff]
    %v645 = vld [vmem:[%s4 + $0x1f8] sm:$0xff]
    %v646 = vld [vmem:[%s4 + $0x200] sm:$0xff]
    %v647 = vld [vmem:[%s4 + $0x208] sm:$0xff]
    %v648 = vld [vmem:[%s4 + $0x210] sm:$0xff]
    %v649 = vld [vmem:[%s4 + $0x218] sm:$0xff]
    %v650 = vld [vmem:[%s4 + $0x220] sm:$0xff]
    %v651 = vld [vmem:[%s4 + $0x228] sm:$0xff]
    %v652 = vld [vmem:[%s4 + $0x230] sm:$0xff]
    %v653 = vld [vmem:[%s4 + $0x238] sm:$0xff]
    %v654 = vld [vmem:[%s4 + $0x240] sm:$0xff]
    %v655 = vld [vmem:[%s4 + $0x248] sm:$0xff]
    %v656 = vld [vmem:[%s4 + $0x250] sm:$0xff]
    %v657 = vld [vmem:[%s4 + $0x258] sm:$0xff]
    %v658 = vld [vmem:[%s4 + $0x260] sm:$0xff]
    %v659 = vld [vmem:[%s4 + $0x268] sm:$0xff]
    %v660 = vld [vmem:[%s4 + $0x270] sm:$0xff]
    %v661 = vld [vmem:[%s4 + $0x278] sm:$0xff]
    %v662 = vld [vmem:[%s4 + $0x280] sm:$0xff]
    %v663 = vld [vmem:[%s4 + $0x288] sm:$0xff]
    %v664 = vld [vmem:[%s4 + $0x290] sm:$0xff]
    %v665 = vld [vmem:[%s4 + $0x298] sm:$0xff]
    %v666 = vld [vmem:[%s4 + $0x2a0] sm:$0xff]
    %v667 = vld [vmem:[%s4 + $0x2a8] sm:$0xff]
    %v668 = vld [vmem:[%s4 + $0x2b0] sm:$0xff]
    %v669 = vld [vmem:[%s4 + $0x2b8] sm:$0xff]
    %v670 = vld [vmem:[%s4 + $0x2c0] sm:$0xff]
    %v671 = vld [vmem:[%s4 + $0x2c8] sm:$0xff]
    %v672 = vld [vmem:[%s4 + $0x2d0] sm:$0xff]
    %v673 = vld [vmem:[%s4 + $0x2d8] sm:$0xff]
    %v674 = vld [vmem:[%s4 + $0x2e0] sm:$0xff]
    %v675 = vld [vmem:[%s4 + $0x2e8] sm:$0xff]
    %v676 = vld [vmem:[%s4 + $0x2f0] sm:$0xff]
    %v677 = vld [vmem:[%s4 + $0x2f8] sm:$0xff]
    %v678 = vld [vmem:[%s4 + $0x300] sm:$0xff]
    %v679 = vld [vmem:[%s4 + $0x308] sm:$0xff]
    %v680 = vld [vmem:[%s4 + $0x310] sm:$0xff]
    %v681 = vld [vmem:[%s4 + $0x318] sm:$0xff]
    %v682 = vld [vmem:[%s4 + $0x320] sm:$0xff]
    %v683 = vld [vmem:[%s4 + $0x328] sm:$0xff]
    %v684 = vld [vmem:[%s4 + $0x330] sm:$0xff]
    %v685 = vld [vmem:[%s4 + $0x338] sm:$0xff]
    %v686 = vld [vmem:[%s4 + $0x340] sm:$0xff]
    %v687 = vld [vmem:[%s4 + $0x348] sm:$0xff]
    %v688 = vld [vmem:[%s4 + $0x350] sm:$0xff]
    %v689 = vld [vmem:[%s4 + $0x358] sm:$0xff]
    %v690 = vld [vmem:[%s4 + $0x360] sm:$0xff]
    %v691 = vld [vmem:[%s4 + $0x368] sm:$0xff]
    %v692 = vld [vmem:[%s4 + $0x370] sm:$0xff]
    %v693 = vld [vmem:[%s4 + $0x378] sm:$0xff]
    %v694 = vld [vmem:[%s4 + $0x380] sm:$0xff]
    %v695 = vld [vmem:[%s4 + $0x388] sm:$0xff]
    %v696 = vld [vmem:[%s4 + $0x390] sm:$0xff]
    %v697 = vld [vmem:[%s4 + $0x398] sm:$0xff]
    %v698 = vld [vmem:[%s4 + $0x3a0] sm:$0xff]
    %v699 = vld [vmem:[%s4 + $0x3a8] sm:$0xff]
    %v700 = vld [vmem:[%s4 + $0x3b0] sm:$0xff]
    %v701 = vld [vmem:[%s4 + $0x3b8] sm:$0xff]
    %v702 = vld [vmem:[%s4 + $0x3c0] sm:$0xff]
    %v703 = vld [vmem:[%s4 + $0x3c8] sm:$0xff]
    %v704 = vld [vmem:[%s4 + $0x3d0] sm:$0xff]
    %v705 = vld [vmem:[%s4 + $0x3d8] sm:$0xff]
    %v706 = vld [vmem:[%s4 + $0x3e0] sm:$0xff]
    %v707 = vld [vmem:[%s4 + $0x3e8] sm:$0xff]
    %v708 = vld [vmem:[%s4 + $0x3f0] sm:$0xff]
    %v709 = vld [vmem:[%s4 + $0x3f8] sm:$0xff]
    %v710 = vld [vmem:[%s5] sm:$0xf]
    %v712 = vlaneseq
    %v713 = vshrl.u32 %v712, 7
    %v714 = vsub.s32 0, %v713
    %v715 = vrot.slane %v710, %v714
    %v716 = vlaneseq
    %v717 = vshrl.u32 %v716, 7
    %v718 = vsub.s32 1, %v717
    %v719 = vrot.slane %v710, %v718
    %v720 = vlaneseq
    %v721 = vshrl.u32 %v720, 7
    %v722 = vsub.s32 2, %v721
    %v723 = vrot.slane %v710, %v722
    %v724 = vlaneseq
    %v725 = vshrl.u32 %v724, 7
    %v726 = vsub.s32 3, %v725
    %v727 = vrot.slane %v710, %v726
    %732 = vmatprep.subr.mxu0 %v583
    %733 = vmatpush1.msra.mxu0 %v582
    %734 = vmatprep.subr.mxu0 %v587
    %735 = vmatpush1.msra.mxu0 %v586
    %736 = vmatprep.subr.mxu0 %v591
    %737 = vmatpush1.msra.mxu0 %v590
    %738 = vmatprep.subr.mxu0 %v595
    %739 = vmatpush1.msra.mxu0 %v594
    %740 = vmatprep.subr.mxu0 %v599
    %741 = vmatpush1.msra.mxu0 %v598
    %742 = vmatprep.subr.mxu0 %v603
    %743 = vmatpush1.msra.mxu0 %v602
    %744 = vmatprep.subr.mxu0 %v607
    %745 = vmatpush1.msra.mxu0 %v606
    %746 = vmatprep.subr.mxu0 %v611
    %747 = vmatpush1.msra.mxu0 %v610
    %748 = vmatprep.subr.mxu0 %v615
    %749 = vmatpush1.msra.mxu0 %v614
    %750 = vmatprep.subr.mxu0 %v619
    %751 = vmatpush1.msra.mxu0 %v618
    %752 = vmatprep.subr.mxu0 %v623
    %753 = vmatpush1.msra.mxu0 %v622
    %754 = vmatprep.subr.mxu0 %v627
    %755 = vmatpush1.msra.mxu0 %v626
    %756 = vmatprep.subr.mxu0 %v631
    %757 = vmatpush1.msra.mxu0 %v630
    %758 = vmatprep.subr.mxu0 %v635
    %759 = vmatpush1.msra.mxu0 %v634
    %760 = vmatprep.subr.mxu0 %v639
    %761 = vmatpush1.msra.mxu0 %v638
    %762 = vmatprep.subr.mxu0 %v643
    %763 = vmatpush1.msra.mxu0 %v642
    %764 = vmatprep.subr.mxu0 %v647
    %765 = vmatpush1.msra.mxu0 %v646
    %766 = vmatprep.subr.mxu0 %v651
    %767 = vmatpush1.msra.mxu0 %v650
    %768 = vmatprep.subr.mxu0 %v655
    %769 = vmatpush1.msra.mxu0 %v654
    %770 = vmatprep.subr.mxu0 %v659
    %771 = vmatpush1.msra.mxu0 %v658
    %772 = vmatprep.subr.mxu0 %v663
    %773 = vmatpush1.msra.mxu0 %v662
    %774 = vmatprep.subr.mxu0 %v667
    %775 = vmatpush1.msra.mxu0 %v666
    %776 = vmatprep.subr.mxu0 %v671
    %777 = vmatpush1.msra.mxu0 %v670
    %778 = vmatprep.subr.mxu0 %v675
    %779 = vmatpush1.msra.mxu0 %v674
    %780 = vmatprep.subr.mxu0 %v679
    %781 = vmatpush1.msra.mxu0 %v678
    %782 = vmatprep.subr.mxu0 %v683
    %783 = vmatpush1.msra.mxu0 %v682
    %784 = vmatprep.subr.mxu0 %v687
    %785 = vmatpush1.msra.mxu0 %v686
    %786 = vmatprep.subr.mxu0 %v691
    %787 = vmatpush1.msra.mxu0 %v690
    %788 = vmatprep.subr.mxu0 %v695
    %789 = vmatpush1.msra.mxu0 %v694
    %790 = vmatprep.subr.mxu0 %v699
    %791 = vmatpush1.msra.mxu0 %v698
    %792 = vmatprep.subr.mxu0 %v703
    %793 = vmatpush1.msra.mxu0 %v702
    %794 = vmatprep.subr.mxu0 %v707
    %795 = vmatpush1.msra.mxu0 %v706
    %796 = vmatprep.mubr.f32.mxu0 %v507
    %797 = vmatmul.mubr.f32.gmra.mrb[0].mxu0 %v506
    %v798 = vpop.f32.mrb[0].mxu0
    %v799 = vadd.f32 %v715, %v798
    %v800 = vpop.f32.mrb[0].mxu0
    %v801 = vadd.f32 %v719, %v800
    %802 = vmatprep.mubr.f32.mxu0 %v509
    %803 = vmatmul.mubr.f32.gmra.mrb[0].mxu0 %v508
    %v804 = vpop.f32.mrb[0].mxu0
    %v805 = vadd.f32 %v715, %v804
    %v806 = vpop.f32.mrb[0].mxu0
    %v807 = vadd.f32 %v719, %v806
    %808 = vmatprep.mubr.f32.mxu0 %v511
    %809 = vmatmul.mubr.f32.gmra.mrb[0].mxu0 %v510
    %v810 = vpop.f32.mrb[0].mxu0
    %v811 = vadd.f32 %v715, %v810
    %v812 = vpop.f32.mrb[0].mxu0
    %v813 = vadd.f32 %v719, %v812
    %814 = vmatprep.mubr.f32.mxu0 %v513
    %815 = vmatmul.mubr.f32.gmra.mrb[0].mxu0 %v512
    %v816 = vpop.f32.mrb[0].mxu0
    %v817 = vadd.f32 %v715, %v816
    %v818 = vpop.f32.mrb[0].mxu0
    %v819 = vadd.f32 %v719, %v818
    %820 = vmatprep.mubr.f32.mxu0 %v515
    %821 = vmatmul.mubr.f32.gmra.mrb[0].mxu0 %v514
    %v822 = vpop.f32.mrb[0].mxu0
    %v823 = vadd.f32 %v715, %v822
    %v824 = vpop.f32.mrb[0].mxu0
    %v825 = vadd.f32 %v719, %v824
    %826 = vmatprep.mubr.f32.mxu0 %v517
    %827 = vmatmul.mubr.f32.gmra.mrb[0].mxu0 %v516
    %v828 = vpop.f32.mrb[0].mxu0
    %v829 = vadd.f32 %v715, %v828
    %v830 = vpop.f32.mrb[0].mxu0
    %v831 = vadd.f32 %v719, %v830
    %832 = vmatprep.mubr.f32.mxu0 %v519
    %833 = vmatmul.mubr.f32.gmra.mrb[0].mxu0 %v518
    %v834 = vpop.f32.mrb[0].mxu0
    %v835 = vadd.f32 %v715, %v834
    %v836 = vpop.f32.mrb[0].mxu0
    %v837 = vadd.f32 %v719, %v836
    %838 = vmatprep.mubr.f32.mxu0 %v521
    %839 = vmatmul.mubr.f32.gmra.mrb[0].mxu0 %v520
    %v840 = vpop.f32.mrb[0].mxu0
    %v841 = vadd.f32 %v715, %v840
    %v842 = vpop.f32.mrb[0].mxu0
    %v843 = vadd.f32 %v719, %v842
    %844 = vmatprep.mubr.f32.mxu0 %v523
    %845 = vmatmul.mubr.f32.gmra.mrb[0].mxu0 %v522
    %v846 = vpop.f32.mrb[0].mxu0
    %v847 = vadd.f32 %v715, %v846
    %v848 = vpop.f32.mrb[0].mxu0
    %v849 = vadd.f32 %v719, %v848
    %850 = vmatprep.mubr.f32.mxu0 %v525
    %851 = vmatmul.mubr.f32.gmra.mrb[0].mxu0 %v524
    %v852 = vpop.f32.mrb[0].mxu0
    %v853 = vadd.f32 %v715, %v852
    %v854 = vpop.f32.mrb[0].mxu0
    %v855 = vadd.f32 %v719, %v854
    %856 = vmatprep.mubr.f32.mxu0 %v527
    %857 = vmatmul.mubr.f32.gmra.mrb[0].mxu0 %v526
    %v858 = vpop.f32.mrb[0].mxu0
    %v859 = vadd.f32 %v715, %v858
    %v860 = vpop.f32.mrb[0].mxu0
    %v861 = vadd.f32 %v719, %v860
    %862 = vmatprep.mubr.f32.mxu0 %v529
    %863 = vmatmul.mubr.f32.gmra.mrb[0].mxu0 %v528
    %v864 = vpop.f32.mrb[0].mxu0
    %v865 = vadd.f32 %v715, %v864
    %v866 = vpop.f32.mrb[0].mxu0
    %v867 = vadd.f32 %v719, %v866
    %868 = vmatprep.mubr.f32.mxu0 %v531
    %869 = vmatmul.mubr.f32.gmra.mrb[0].mxu0 %v530
    %v870 = vpop.f32.mrb[0].mxu0
    %v871 = vadd.f32 %v715, %v870
    %v872 = vpop.f32.mrb[0].mxu0
    %v873 = vadd.f32 %v719, %v872
    %874 = vmatprep.mubr.f32.mxu0 %v533
    %875 = vmatmul.mubr.f32.gmra.mrb[0].mxu0 %v532
    %v876 = vpop.f32.mrb[0].mxu0
    %v877 = vadd.f32 %v715, %v876
    %v878 = vpop.f32.mrb[0].mxu0
    %v879 = vadd.f32 %v719, %v878
    %880 = vmatprep.mubr.f32.mxu0 %v535
    %881 = vmatmul.mubr.f32.gmra.mrb[0].mxu0 %v534
    %v882 = vpop.f32.mrb[0].mxu0
    %v883 = vadd.f32 %v715, %v882
    %v884 = vpop.f32.mrb[0].mxu0
    %v885 = vadd.f32 %v719, %v884
    %886 = vmatprep.mubr.f32.mxu0 %v537
    %887 = vmatmul.mubr.f32.gmra.mrb[0].mxu0 %v536
    %v888 = vpop.f32.mrb[0].mxu0
    %v889 = vadd.f32 %v715, %v888
    %v890 = vpop.f32.mrb[0].mxu0
    %v891 = vadd.f32 %v719, %v890
    %892 = vmatprep.mubr.f32.mxu0 %v539
    %893 = vmatmul.mubr.f32.gmra.mrb[0].mxu0 %v538
    %v894 = vpop.f32.mrb[0].mxu0
    %v895 = vadd.f32 %v715, %v894
    %v896 = vpop.f32.mrb[0].mxu0
    %v897 = vadd.f32 %v719, %v896
    %898 = vmatprep.mubr.f32.mxu0 %v541
    %899 = vmatmul.mubr.f32.gmra.mrb[0].mxu0 %v540
    %v900 = vpop.f32.mrb[0].mxu0
    %v901 = vadd.f32 %v715, %v900
    %v902 = vpop.f32.mrb[0].mxu0
    %v903 = vadd.f32 %v719, %v902
    %904 = vmatprep.mubr.f32.mxu0 %v543
    %905 = vmatmul.mubr.f32.gmra.mrb[0].mxu0 %v542
    %v906 = vpop.f32.mrb[0].mxu0
    %v907 = vadd.f32 %v715, %v906
    %v908 = vpop.f32.mrb[0].mxu0
    %v909 = vadd.f32 %v719, %v908
    %910 = vmatprep.mubr.f32.mxu0 %v545
    %911 = vmatmul.mubr.f32.gmra.mrb[0].mxu0 %v544
    %v912 = vpop.f32.mrb[0].mxu0
    %v913 = vadd.f32 %v715, %v912
    %v914 = vpop.f32.mrb[0].mxu0
    %v915 = vadd.f32 %v719, %v914
    %916 = vmatprep.mubr.f32.mxu0 %v547
    %917 = vmatmul.mubr.f32.gmra.mrb[0].mxu0 %v546
    %v918 = vpop.f32.mrb[0].mxu0
    %v919 = vadd.f32 %v715, %v918
    %v920 = vpop.f32.mrb[0].mxu0
    %v921 = vadd.f32 %v719, %v920
    %922 = vmatprep.mubr.f32.mxu0 %v549
    %923 = vmatmul.mubr.f32.gmra.mrb[0].mxu0 %v548
    %v924 = vpop.f32.mrb[0].mxu0
    %v925 = vadd.f32 %v715, %v924
    %v926 = vpop.f32.mrb[0].mxu0
    %v927 = vadd.f32 %v719, %v926
    %928 = vmatprep.mubr.f32.mxu0 %v551
    %929 = vmatmul.mubr.f32.gmra.mrb[0].mxu0 %v550
    %v930 = vpop.f32.mrb[0].mxu0
    %v931 = vadd.f32 %v715, %v930
    %v932 = vpop.f32.mrb[0].mxu0
    %v933 = vadd.f32 %v719, %v932
    %934 = vmatprep.mubr.f32.mxu0 %v553
    %935 = vmatmul.mubr.f32.gmra.mrb[0].mxu0 %v552
    %v936 = vpop.f32.mrb[0].mxu0
    %v937 = vadd.f32 %v715, %v936
    %v938 = vpop.f32.mrb[0].mxu0
    %v939 = vadd.f32 %v719, %v938
    %940 = vmatprep.mubr.f32.mxu0 %v555
    %941 = vmatmul.mubr.f32.gmra.mrb[0].mxu0 %v554
    %v942 = vpop.f32.mrb[0].mxu0
    %v943 = vadd.f32 %v715, %v942
    %v944 = vpop.f32.mrb[0].mxu0
    %v945 = vadd.f32 %v719, %v944
    %946 = vmatprep.mubr.f32.mxu0 %v557
    %947 = vmatmul.mubr.f32.gmra.mrb[0].mxu0 %v556
    %v948 = vpop.f32.mrb[0].mxu0
    %v949 = vadd.f32 %v715, %v948
    %v950 = vpop.f32.mrb[0].mxu0
    %v951 = vadd.f32 %v719, %v950
    %952 = vmatprep.mubr.f32.mxu0 %v559
    %953 = vmatmul.mubr.f32.gmra.mrb[0].mxu0 %v558
    %v954 = vpop.f32.mrb[0].mxu0
    %v955 = vadd.f32 %v715, %v954
    %v956 = vpop.f32.mrb[0].mxu0
    %v957 = vadd.f32 %v719, %v956
    %958 = vmatprep.mubr.f32.mxu0 %v561
    %959 = vmatmul.mubr.f32.gmra.mrb[0].mxu0 %v560
    %v960 = vpop.f32.mrb[0].mxu0
    %v961 = vadd.f32 %v715, %v960
    %v962 = vpop.f32.mrb[0].mxu0
    %v963 = vadd.f32 %v719, %v962
    %964 = vmatprep.mubr.f32.mxu0 %v563
    %965 = vmatmul.mubr.f32.gmra.mrb[0].mxu0 %v562
    %v966 = vpop.f32.mrb[0].mxu0
    %v967 = vadd.f32 %v715, %v966
    %v968 = vpop.f32.mrb[0].mxu0
    %v969 = vadd.f32 %v719, %v968
    %970 = vmatprep.mubr.f32.mxu0 %v565
    %971 = vmatmul.mubr.f32.gmra.mrb[0].mxu0 %v564
    %v972 = vpop.f32.mrb[0].mxu0
    %v973 = vadd.f32 %v715, %v972
    %v974 = vpop.f32.mrb[0].mxu0
    %v975 = vadd.f32 %v719, %v974
    %976 = vmatprep.mubr.f32.mxu0 %v567
    %977 = vmatmul.mubr.f32.gmra.mrb[0].mxu0 %v566
    %v978 = vpop.f32.mrb[0].mxu0
    %v979 = vadd.f32 %v715, %v978
    %v980 = vpop.f32.mrb[0].mxu0
    %v981 = vadd.f32 %v719, %v980
    %982 = vmatprep.mubr.f32.mxu0 %v569
    %983 = vmatmul.mubr.f32.gmra.mrb[0].mxu0 %v568
    %v984 = vpop.f32.mrb[0].mxu0
    %v985 = vadd.f32 %v715, %v984
    %v986 = vpop.f32.mrb[0].mxu0
    %v987 = vadd.f32 %v719, %v986
    %988 = vmatprep.mubr.f32.mxu0 %v571
    %989 = vmatmul.mubr.f32.gmra.mrb[0].mxu0 %v570
    %v990 = vpop.f32.mrb[0].mxu0
    %v991 = vadd.f32 %v715, %v990
    %v992 = vpop.f32.mrb[0].mxu0
    %v993 = vadd.f32 %v719, %v992
    %994 = vmatprep.mubr.f32.mxu0 %v573
    %995 = vmatmul.mubr.f32.gmra.mrb[0].mxu0 %v572
    %v996 = vpop.f32.mrb[0].mxu0
    %v997 = vadd.f32 %v715, %v996
    %v998 = vpop.f32.mrb[0].mxu0
    %v999 = vadd.f32 %v719, %v998
    %1000 = vmatprep.mubr.f32.mxu0 %v575
    %1001 = vmatmul.mubr.f32.gmra.mrb[0].mxu0 %v574
    %v1002 = vpop.f32.mrb[0].mxu0
    %v1003 = vadd.f32 %v715, %v1002
    %v1004 = vpop.f32.mrb[0].mxu0
    %v1005 = vadd.f32 %v719, %v1004
    %1006 = vmatprep.mubr.f32.mxu0 %v577
    %1007 = vmatmul.mubr.f32.gmra.mrb[0].mxu0 %v576
    %v1008 = vpop.f32.mrb[0].mxu0
    %v1009 = vadd.f32 %v715, %v1008
    %v1010 = vpop.f32.mrb[0].mxu0
    %v1011 = vadd.f32 %v719, %v1010
    %1012 = vmatprep.mubr.f32.mxu0 %v579
    %1013 = vmatmul.mubr.f32.gmra.mrb[0].mxu0 %v578
    %v1014 = vpop.f32.mrb[0].mxu0
    %v1015 = vadd.f32 %v715, %v1014
    %v1016 = vpop.f32.mrb[0].mxu0
    %v1017 = vadd.f32 %v719, %v1016
    %1018 = vmatprep.mubr.f32.mxu0 %v581
    %1019 = vmatmul.mubr.f32.gmra.mrb[0].mxu0 %v580
    %v1020 = vpop.f32.mrb[0].mxu0
    %v1021 = vadd.f32 %v715, %v1020
    %v1022 = vpop.f32.mrb[0].mxu0
    %v1023 = vadd.f32 %v719, %v1022
    %1024 = vdwg.mxu0
    %1025 = vmatprep.subr.mxu0 %v585
    %1026 = vmatpush1.msra.mxu0 %v584
    %1027 = vmatprep.subr.mxu0 %v589
    %1028 = vmatpush1.msra.mxu0 %v588
    %1029 = vmatprep.subr.mxu0 %v593
    %1030 = vmatpush1.msra.mxu0 %v592
    %1031 = vmatprep.subr.mxu0 %v597
    %1032 = vmatpush1.msra.mxu0 %v596
    %1033 = vmatprep.subr.mxu0 %v601
    %1034 = vmatpush1.msra.mxu0 %v600
    %1035 = vmatprep.subr.mxu0 %v605
    %1036 = vmatpush1.msra.mxu0 %v604
    %1037 = vmatprep.subr.mxu0 %v609
    %1038 = vmatpush1.msra.mxu0 %v608
    %1039 = vmatprep.subr.mxu0 %v613
    %1040 = vmatpush1.msra.mxu0 %v612
    %1041 = vmatprep.subr.mxu0 %v617
    %1042 = vmatpush1.msra.mxu0 %v616
    %1043 = vmatprep.subr.mxu0 %v621
    %1044 = vmatpush1.msra.mxu0 %v620
    %1045 = vmatprep.subr.mxu0 %v625
    %1046 = vmatpush1.msra.mxu0 %v624
    %1047 = vmatprep.subr.mxu0 %v629
    %1048 = vmatpush1.msra.mxu0 %v628
    %1049 = vmatprep.subr.mxu0 %v633
    %1050 = vmatpush1.msra.mxu0 %v632
    %1051 = vmatprep.subr.mxu0 %v637
    %1052 = vmatpush1.msra.mxu0 %v636
    %1053 = vmatprep.subr.mxu0 %v641
    %1054 = vmatpush1.msra.mxu0 %v640
    %1055 = vmatprep.subr.mxu0 %v645
    %1056 = vmatpush1.msra.mxu0 %v644
    %1057 = vmatprep.subr.mxu0 %v649
    %1058 = vmatpush1.msra.mxu0 %v648
    %1059 = vmatprep.subr.mxu0 %v653
    %1060 = vmatpush1.msra.mxu0 %v652
    %1061 = vmatprep.subr.mxu0 %v657
    %1062 = vmatpush1.msra.mxu0 %v656
    %1063 = vmatprep.subr.mxu0 %v661
    %1064 = vmatpush1.msra.mxu0 %v660
    %1065 = vmatprep.subr.mxu0 %v665
    %1066 = vmatpush1.msra.mxu0 %v664
    %1067 = vmatprep.subr.mxu0 %v669
    %1068 = vmatpush1.msra.mxu0 %v668
    %1069 = vmatprep.subr.mxu0 %v673
    %1070 = vmatpush1.msra.mxu0 %v672
    %1071 = vmatprep.subr.mxu0 %v677
    %1072 = vmatpush1.msra.mxu0 %v676
    %1073 = vmatprep.subr.mxu0 %v681
    %1074 = vmatpush1.msra.mxu0 %v680
    %1075 = vmatprep.subr.mxu0 %v685
    %1076 = vmatpush1.msra.mxu0 %v684
    %1077 = vmatprep.subr.mxu0 %v689
    %1078 = vmatpush1.msra.mxu0 %v688
    %1079 = vmatprep.subr.mxu0 %v693
    %1080 = vmatpush1.msra.mxu0 %v692
    %1081 = vmatprep.subr.mxu0 %v697
    %1082 = vmatpush1.msra.mxu0 %v696
    %1083 = vmatprep.subr.mxu0 %v701
    %1084 = vmatpush1.msra.mxu0 %v700
    %1085 = vmatprep.subr.mxu0 %v705
    %1086 = vmatpush1.msra.mxu0 %v704
    %1087 = vmatprep.subr.mxu0 %v709
    %1088 = vmatpush1.msra.mxu0 %v708
    %1089 = vmatprep.mubr.f32.mxu0 %v507
    %1090 = vmatmul.mubr.f32.gmra.mrb[0].mxu0 %v506
    %v1091 = vpop.f32.mrb[0].mxu0
    %v1092 = vadd.f32 %v723, %v1091
    %v1093 = vpop.f32.mrb[0].mxu0
    %v1094 = vadd.f32 %v727, %v1093
    %1095 = vmatprep.mubr.f32.mxu0 %v509
    %1096 = vmatmul.mubr.f32.gmra.mrb[0].mxu0 %v508
    %v1097 = vpop.f32.mrb[0].mxu0
    %v1098 = vadd.f32 %v723, %v1097
    %v1099 = vpop.f32.mrb[0].mxu0
    %v1100 = vadd.f32 %v727, %v1099
    %1101 = vmatprep.mubr.f32.mxu0 %v511
    %1102 = vmatmul.mubr.f32.gmra.mrb[0].mxu0 %v510
    %v1103 = vpop.f32.mrb[0].mxu0
    %v1104 = vadd.f32 %v723, %v1103
    %v1105 = vpop.f32.mrb[0].mxu0
    %v1106 = vadd.f32 %v727, %v1105
    %1107 = vmatprep.mubr.f32.mxu0 %v513
    %1108 = vmatmul.mubr.f32.gmra.mrb[0].mxu0 %v512
    %v1109 = vpop.f32.mrb[0].mxu0
    %v1110 = vadd.f32 %v723, %v1109
    %v1111 = vpop.f32.mrb[0].mxu0
    %v1112 = vadd.f32 %v727, %v1111
    %1113 = vmatprep.mubr.f32.mxu0 %v515
    %1114 = vmatmul.mubr.f32.gmra.mrb[0].mxu0 %v514
    %v1115 = vpop.f32.mrb[0].mxu0
    %v1116 = vadd.f32 %v723, %v1115
    %v1117 = vpop.f32.mrb[0].mxu0
    %v1118 = vadd.f32 %v727, %v1117
    %1119 = vmatprep.mubr.f32.mxu0 %v517
    %1120 = vmatmul.mubr.f32.gmra.mrb[0].mxu0 %v516
    %v1121 = vpop.f32.mrb[0].mxu0
    %v1122 = vadd.f32 %v723, %v1121
    %v1123 = vpop.f32.mrb[0].mxu0
    %v1124 = vadd.f32 %v727, %v1123
    %1125 = vmatprep.mubr.f32.mxu0 %v519
    %1126 = vmatmul.mubr.f32.gmra.mrb[0].mxu0 %v518
    %v1127 = vpop.f32.mrb[0].mxu0
    %v1128 = vadd.f32 %v723, %v1127
    %v1129 = vpop.f32.mrb[0].mxu0
    %v1130 = vadd.f32 %v727, %v1129
    %1131 = vmatprep.mubr.f32.mxu0 %v521
    %1132 = vmatmul.mubr.f32.gmra.mrb[0].mxu0 %v520
    %v1133 = vpop.f32.mrb[0].mxu0
    %v1134 = vadd.f32 %v723, %v1133
    %v1135 = vpop.f32.mrb[0].mxu0
    %v1136 = vadd.f32 %v727, %v1135
    %1137 = vmatprep.mubr.f32.mxu0 %v523
    %1138 = vmatmul.mubr.f32.gmra.mrb[0].mxu0 %v522
    %v1139 = vpop.f32.mrb[0].mxu0
    %v1140 = vadd.f32 %v723, %v1139
    %v1141 = vpop.f32.mrb[0].mxu0
    %v1142 = vadd.f32 %v727, %v1141
    %1143 = vmatprep.mubr.f32.mxu0 %v525
    %1144 = vmatmul.mubr.f32.gmra.mrb[0].mxu0 %v524
    %v1145 = vpop.f32.mrb[0].mxu0
    %v1146 = vadd.f32 %v723, %v1145
    %v1147 = vpop.f32.mrb[0].mxu0
    %v1148 = vadd.f32 %v727, %v1147
    %1149 = vmatprep.mubr.f32.mxu0 %v527
    %1150 = vmatmul.mubr.f32.gmra.mrb[0].mxu0 %v526
    %v1151 = vpop.f32.mrb[0].mxu0
    %v1152 = vadd.f32 %v723, %v1151
    %v1153 = vpop.f32.mrb[0].mxu0
    %v1154 = vadd.f32 %v727, %v1153
    %1155 = vmatprep.mubr.f32.mxu0 %v529
    %1156 = vmatmul.mubr.f32.gmra.mrb[0].mxu0 %v528
    %v1157 = vpop.f32.mrb[0].mxu0
    %v1158 = vadd.f32 %v723, %v1157
    %v1159 = vpop.f32.mrb[0].mxu0
    %v1160 = vadd.f32 %v727, %v1159
    %1161 = vmatprep.mubr.f32.mxu0 %v531
    %1162 = vmatmul.mubr.f32.gmra.mrb[0].mxu0 %v530
    %v1163 = vpop.f32.mrb[0].mxu0
    %v1164 = vadd.f32 %v723, %v1163
    %v1165 = vpop.f32.mrb[0].mxu0
    %v1166 = vadd.f32 %v727, %v1165
    %1167 = vmatprep.mubr.f32.mxu0 %v533
    %1168 = vmatmul.mubr.f32.gmra.mrb[0].mxu0 %v532
    %v1169 = vpop.f32.mrb[0].mxu0
    %v1170 = vadd.f32 %v723, %v1169
    %v1171 = vpop.f32.mrb[0].mxu0
    %v1172 = vadd.f32 %v727, %v1171
    %1173 = vmatprep.mubr.f32.mxu0 %v535
    %1174 = vmatmul.mubr.f32.gmra.mrb[0].mxu0 %v534
    %v1175 = vpop.f32.mrb[0].mxu0
    %v1176 = vadd.f32 %v723, %v1175
    %v1177 = vpop.f32.mrb[0].mxu0
    %v1178 = vadd.f32 %v727, %v1177
    %1179 = vmatprep.mubr.f32.mxu0 %v537
    %1180 = vmatmul.mubr.f32.gmra.mrb[0].mxu0 %v536
    %v1181 = vpop.f32.mrb[0].mxu0
    %v1182 = vadd.f32 %v723, %v1181
    %v1183 = vpop.f32.mrb[0].mxu0
    %v1184 = vadd.f32 %v727, %v1183
    %1185 = vmatprep.mubr.f32.mxu0 %v539
    %1186 = vmatmul.mubr.f32.gmra.mrb[0].mxu0 %v538
    %v1187 = vpop.f32.mrb[0].mxu0
    %v1188 = vadd.f32 %v723, %v1187
    %v1189 = vpop.f32.mrb[0].mxu0
    %v1190 = vadd.f32 %v727, %v1189
    %1191 = vmatprep.mubr.f32.mxu0 %v541
    %1192 = vmatmul.mubr.f32.gmra.mrb[0].mxu0 %v540
    %v1193 = vpop.f32.mrb[0].mxu0
    %v1194 = vadd.f32 %v723, %v1193
    %v1195 = vpop.f32.mrb[0].mxu0
    %v1196 = vadd.f32 %v727, %v1195
    %1197 = vmatprep.mubr.f32.mxu0 %v543
    %1198 = vmatmul.mubr.f32.gmra.mrb[0].mxu0 %v542
    %v1199 = vpop.f32.mrb[0].mxu0
    %v1200 = vadd.f32 %v723, %v1199
    %v1201 = vpop.f32.mrb[0].mxu0
    %v1202 = vadd.f32 %v727, %v1201
    %1203 = vmatprep.mubr.f32.mxu0 %v545
    %1204 = vmatmul.mubr.f32.gmra.mrb[0].mxu0 %v544
    %v1205 = vpop.f32.mrb[0].mxu0
    %v1206 = vadd.f32 %v723, %v1205
    %v1207 = vpop.f32.mrb[0].mxu0
    %v1208 = vadd.f32 %v727, %v1207
    %1209 = vmatprep.mubr.f32.mxu0 %v547
    %1210 = vmatmul.mubr.f32.gmra.mrb[0].mxu0 %v546
    %v1211 = vpop.f32.mrb[0].mxu0
    %v1212 = vadd.f32 %v723, %v1211
    %v1213 = vpop.f32.mrb[0].mxu0
    %v1214 = vadd.f32 %v727, %v1213
    %1215 = vmatprep.mubr.f32.mxu0 %v549
    %1216 = vmatmul.mubr.f32.gmra.mrb[0].mxu0 %v548
    %v1217 = vpop.f32.mrb[0].mxu0
    %v1218 = vadd.f32 %v723, %v1217
    %v1219 = vpop.f32.mrb[0].mxu0
    %v1220 = vadd.f32 %v727, %v1219
    %1221 = vmatprep.mubr.f32.mxu0 %v551
    %1222 = vmatmul.mubr.f32.gmra.mrb[0].mxu0 %v550
    %v1223 = vpop.f32.mrb[0].mxu0
    %v1224 = vadd.f32 %v723, %v1223
    %v1225 = vpop.f32.mrb[0].mxu0
    %v1226 = vadd.f32 %v727, %v1225
    %1227 = vmatprep.mubr.f32.mxu0 %v553
    %1228 = vmatmul.mubr.f32.gmra.mrb[0].mxu0 %v552
    %v1229 = vpop.f32.mrb[0].mxu0
    %v1230 = vadd.f32 %v723, %v1229
    %v1231 = vpop.f32.mrb[0].mxu0
    %v1232 = vadd.f32 %v727, %v1231
    %1233 = vmatprep.mubr.f32.mxu0 %v555
    %1234 = vmatmul.mubr.f32.gmra.mrb[0].mxu0 %v554
    %v1235 = vpop.f32.mrb[0].mxu0
    %v1236 = vadd.f32 %v723, %v1235
    %v1237 = vpop.f32.mrb[0].mxu0
    %v1238 = vadd.f32 %v727, %v1237
    %1239 = vmatprep.mubr.f32.mxu0 %v557
    %1240 = vmatmul.mubr.f32.gmra.mrb[0].mxu0 %v556
    %v1241 = vpop.f32.mrb[0].mxu0
    %v1242 = vadd.f32 %v723, %v1241
    %v1243 = vpop.f32.mrb[0].mxu0
    %v1244 = vadd.f32 %v727, %v1243
    %1245 = vmatprep.mubr.f32.mxu0 %v559
    %1246 = vmatmul.mubr.f32.gmra.mrb[0].mxu0 %v558
    %v1247 = vpop.f32.mrb[0].mxu0
    %v1248 = vadd.f32 %v723, %v1247
    %v1249 = vpop.f32.mrb[0].mxu0
    %v1250 = vadd.f32 %v727, %v1249
    %1251 = vmatprep.mubr.f32.mxu0 %v561
    %1252 = vmatmul.mubr.f32.gmra.mrb[0].mxu0 %v560
    %v1253 = vpop.f32.mrb[0].mxu0
    %v1254 = vadd.f32 %v723, %v1253
    %v1255 = vpop.f32.mrb[0].mxu0
    %v1256 = vadd.f32 %v727, %v1255
    %1257 = vmatprep.mubr.f32.mxu0 %v563
    %1258 = vmatmul.mubr.f32.gmra.mrb[0].mxu0 %v562
    %v1259 = vpop.f32.mrb[0].mxu0
    %v1260 = vadd.f32 %v723, %v1259
    %v1261 = vpop.f32.mrb[0].mxu0
    %v1262 = vadd.f32 %v727, %v1261
    %1263 = vmatprep.mubr.f32.mxu0 %v565
    %1264 = vmatmul.mubr.f32.gmra.mrb[0].mxu0 %v564
    %v1265 = vpop.f32.mrb[0].mxu0
    %v1266 = vadd.f32 %v723, %v1265
    %v1267 = vpop.f32.mrb[0].mxu0
    %v1268 = vadd.f32 %v727, %v1267
    %1269 = vmatprep.mubr.f32.mxu0 %v567
    %1270 = vmatmul.mubr.f32.gmra.mrb[0].mxu0 %v566
    %v1271 = vpop.f32.mrb[0].mxu0
    %v1272 = vadd.f32 %v723, %v1271
    %v1273 = vpop.f32.mrb[0].mxu0
    %v1274 = vadd.f32 %v727, %v1273
    %1275 = vmatprep.mubr.f32.mxu0 %v569
    %1276 = vmatmul.mubr.f32.gmra.mrb[0].mxu0 %v568
    %v1277 = vpop.f32.mrb[0].mxu0
    %v1278 = vadd.f32 %v723, %v1277
    %v1279 = vpop.f32.mrb[0].mxu0
    %v1280 = vadd.f32 %v727, %v1279
    %1281 = vmatprep.mubr.f32.mxu0 %v571
    %1282 = vmatmul.mubr.f32.gmra.mrb[0].mxu0 %v570
    %v1283 = vpop.f32.mrb[0].mxu0
    %v1284 = vadd.f32 %v723, %v1283
    %v1285 = vpop.f32.mrb[0].mxu0
    %v1286 = vadd.f32 %v727, %v1285
    %1287 = vmatprep.mubr.f32.mxu0 %v573
    %1288 = vmatmul.mubr.f32.gmra.mrb[0].mxu0 %v572
    %v1289 = vpop.f32.mrb[0].mxu0
    %v1290 = vadd.f32 %v723, %v1289
    %v1291 = vpop.f32.mrb[0].mxu0
    %v1292 = vadd.f32 %v727, %v1291
    %1293 = vmatprep.mubr.f32.mxu0 %v575
    %1294 = vmatmul.mubr.f32.gmra.mrb[0].mxu0 %v574
    %v1295 = vpop.f32.mrb[0].mxu0
    %v1296 = vadd.f32 %v723, %v1295
    %v1297 = vpop.f32.mrb[0].mxu0
    %v1298 = vadd.f32 %v727, %v1297
    %1299 = vmatprep.mubr.f32.mxu0 %v577
    %1300 = vmatmul.mubr.f32.gmra.mrb[0].mxu0 %v576
    %v1301 = vpop.f32.mrb[0].mxu0
    %v1302 = vadd.f32 %v723, %v1301
    %v1303 = vpop.f32.mrb[0].mxu0
    %v1304 = vadd.f32 %v727, %v1303
    %1305 = vmatprep.mubr.f32.mxu0 %v579
    %1306 = vmatmul.mubr.f32.gmra.mrb[0].mxu0 %v578
    %v1307 = vpop.f32.mrb[0].mxu0
    %v1308 = vadd.f32 %v723, %v1307
    %v1309 = vpop.f32.mrb[0].mxu0
    %v1310 = vadd.f32 %v727, %v1309
    %1311 = vmatprep.mubr.f32.mxu0 %v581
    %1312 = vmatmul.mubr.f32.gmra.mrb[0].mxu0 %v580
    %v1313 = vpop.f32.mrb[0].mxu0
    %v1314 = vadd.f32 %v723, %v1313
    %v1315 = vpop.f32.mrb[0].mxu0
    %v1316 = vadd.f32 %v727, %v1315
    %1317 = vdwg.mxu0
    %v1318 = vmax.f32 %v799, 0.0
    %v1319 = vmax.f32 %v801, 0.0
    %v1320 = vmax.f32 %v1092, 0.0
    %v1321 = vmax.f32 %v1094, 0.0
    %v1322 = vmax.f32 %v805, 0.0
    %v1323 = vmax.f32 %v807, 0.0
    %v1324 = vmax.f32 %v1098, 0.0
    %v1325 = vmax.f32 %v1100, 0.0
    %v1326 = vmax.f32 %v811, 0.0
    %v1327 = vmax.f32 %v813, 0.0
    %v1328 = vmax.f32 %v1104, 0.0
    %v1329 = vmax.f32 %v1106, 0.0
    %v1330 = vmax.f32 %v817, 0.0
    %v1331 = vmax.f32 %v819, 0.0
    %v1332 = vmax.f32 %v1110, 0.0
    %v1333 = vmax.f32 %v1112, 0.0
    %v1334 = vmax.f32 %v823, 0.0
    %v1335 = vmax.f32 %v825, 0.0
    %v1336 = vmax.f32 %v1116, 0.0
    %v1337 = vmax.f32 %v1118, 0.0
    %v1338 = vmax.f32 %v829, 0.0
    %v1339 = vmax.f32 %v831, 0.0
    %v1340 = vmax.f32 %v1122, 0.0
    %v1341 = vmax.f32 %v1124, 0.0
    %v1342 = vmax.f32 %v835, 0.0
    %v1343 = vmax.f32 %v837, 0.0
    %v1344 = vmax.f32 %v1128, 0.0
    %v1345 = vmax.f32 %v1130, 0.0
    %v1346 = vmax.f32 %v841, 0.0
    %v1347 = vmax.f32 %v843, 0.0
    %v1348 = vmax.f32 %v1134, 0.0
    %v1349 = vmax.f32 %v1136, 0.0
    %v1350 = vmax.f32 %v847, 0.0
    %v1351 = vmax.f32 %v849, 0.0
    %v1352 = vmax.f32 %v1140, 0.0
    %v1353 = vmax.f32 %v1142, 0.0
    %v1354 = vmax.f32 %v853, 0.0
    %v1355 = vmax.f32 %v855, 0.0
    %v1356 = vmax.f32 %v1146, 0.0
    %v1357 = vmax.f32 %v1148, 0.0
    %v1358 = vmax.f32 %v859, 0.0
    %v1359 = vmax.f32 %v861, 0.0
    %v1360 = vmax.f32 %v1152, 0.0
    %v1361 = vmax.f32 %v1154, 0.0
    %v1362 = vmax.f32 %v865, 0.0
    %v1363 = vmax.f32 %v867, 0.0
    %v1364 = vmax.f32 %v1158, 0.0
    %v1365 = vmax.f32 %v1160, 0.0
    %v1366 = vmax.f32 %v871, 0.0
    %v1367 = vmax.f32 %v873, 0.0
    %v1368 = vmax.f32 %v1164, 0.0
    %v1369 = vmax.f32 %v1166, 0.0
    %v1370 = vmax.f32 %v877, 0.0
    %v1371 = vmax.f32 %v879, 0.0
    %v1372 = vmax.f32 %v1170, 0.0
    %v1373 = vmax.f32 %v1172, 0.0
    %v1374 = vmax.f32 %v883, 0.0
    %v1375 = vmax.f32 %v885, 0.0
    %v1376 = vmax.f32 %v1176, 0.0
    %v1377 = vmax.f32 %v1178, 0.0
    %v1378 = vmax.f32 %v889, 0.0
    %v1379 = vmax.f32 %v891, 0.0
    %v1380 = vmax.f32 %v1182, 0.0
    %v1381 = vmax.f32 %v1184, 0.0
    %v1382 = vmax.f32 %v895, 0.0
    %v1383 = vmax.f32 %v897, 0.0
    %v1384 = vmax.f32 %v1188, 0.0
    %v1385 = vmax.f32 %v1190, 0.0
    %v1386 = vmax.f32 %v901, 0.0
    %v1387 = vmax.f32 %v903, 0.0
    %v1388 = vmax.f32 %v1194, 0.0
    %v1389 = vmax.f32 %v1196, 0.0
    %v1390 = vmax.f32 %v907, 0.0
    %v1391 = vmax.f32 %v909, 0.0
    %v1392 = vmax.f32 %v1200, 0.0
    %v1393 = vmax.f32 %v1202, 0.0
    %v1394 = vmax.f32 %v913, 0.0
    %v1395 = vmax.f32 %v915, 0.0
    %v1396 = vmax.f32 %v1206, 0.0
    %v1397 = vmax.f32 %v1208, 0.0
    %v1398 = vmax.f32 %v919, 0.0
    %v1399 = vmax.f32 %v921, 0.0
    %v1400 = vmax.f32 %v1212, 0.0
    %v1401 = vmax.f32 %v1214, 0.0
    %v1402 = vmax.f32 %v925, 0.0
    %v1403 = vmax.f32 %v927, 0.0
    %v1404 = vmax.f32 %v1218, 0.0
    %v1405 = vmax.f32 %v1220, 0.0
    %v1406 = vmax.f32 %v931, 0.0
    %v1407 = vmax.f32 %v933, 0.0
    %v1408 = vmax.f32 %v1224, 0.0
    %v1409 = vmax.f32 %v1226, 0.0
    %v1410 = vmax.f32 %v937, 0.0
    %v1411 = vmax.f32 %v939, 0.0
    %v1412 = vmax.f32 %v1230, 0.0
    %v1413 = vmax.f32 %v1232, 0.0
    %v1414 = vmax.f32 %v943, 0.0
    %v1415 = vmax.f32 %v945, 0.0
    %v1416 = vmax.f32 %v1236, 0.0
    %v1417 = vmax.f32 %v1238, 0.0
    %v1418 = vmax.f32 %v949, 0.0
    %v1419 = vmax.f32 %v951, 0.0
    %v1420 = vmax.f32 %v1242, 0.0
    %v1421 = vmax.f32 %v1244, 0.0
    %v1422 = vmax.f32 %v955, 0.0
    %v1423 = vmax.f32 %v957, 0.0
    %v1424 = vmax.f32 %v1248, 0.0
    %v1425 = vmax.f32 %v1250, 0.0
    %v1426 = vmax.f32 %v961, 0.0
    %v1427 = vmax.f32 %v963, 0.0
    %v1428 = vmax.f32 %v1254, 0.0
    %v1429 = vmax.f32 %v1256, 0.0
    %v1430 = vmax.f32 %v967, 0.0
    %v1431 = vmax.f32 %v969, 0.0
    %v1432 = vmax.f32 %v1260, 0.0
    %v1433 = vmax.f32 %v1262, 0.0
    %v1434 = vmax.f32 %v973, 0.0
    %v1435 = vmax.f32 %v975, 0.0
    %v1436 = vmax.f32 %v1266, 0.0
    %v1437 = vmax.f32 %v1268, 0.0
    %v1438 = vmax.f32 %v979, 0.0
    %v1439 = vmax.f32 %v981, 0.0
    %v1440 = vmax.f32 %v1272, 0.0
    %v1441 = vmax.f32 %v1274, 0.0
    %v1442 = vmax.f32 %v985, 0.0
    %v1443 = vmax.f32 %v987, 0.0
    %v1444 = vmax.f32 %v1278, 0.0
    %v1445 = vmax.f32 %v1280, 0.0
    %v1446 = vmax.f32 %v991, 0.0
    %v1447 = vmax.f32 %v993, 0.0
    %v1448 = vmax.f32 %v1284, 0.0
    %v1449 = vmax.f32 %v1286, 0.0
    %v1450 = vmax.f32 %v997, 0.0
    %v1451 = vmax.f32 %v999, 0.0
    %v1452 = vmax.f32 %v1290, 0.0
    %v1453 = vmax.f32 %v1292, 0.0
    %v1454 = vmax.f32 %v1003, 0.0
    %v1455 = vmax.f32 %v1005, 0.0
    %v1456 = vmax.f32 %v1296, 0.0
    %v1457 = vmax.f32 %v1298, 0.0
    %v1458 = vmax.f32 %v1009, 0.0
    %v1459 = vmax.f32 %v1011, 0.0
    %v1460 = vmax.f32 %v1302, 0.0
    %v1461 = vmax.f32 %v1304, 0.0
    %v1462 = vmax.f32 %v1015, 0.0
    %v1463 = vmax.f32 %v1017, 0.0
    %v1464 = vmax.f32 %v1308, 0.0
    %v1465 = vmax.f32 %v1310, 0.0
    %v1466 = vmax.f32 %v1021, 0.0
    %v1467 = vmax.f32 %v1023, 0.0
    %v1468 = vmax.f32 %v1314, 0.0
    %v1469 = vmax.f32 %v1316, 0.0
    %v1470 = vld [vmem:[%s6] sm:$0xff]
    %v1471 = vld [vmem:[%s6 + $0x8] sm:$0xff]
    %v1472 = vld [vmem:[%s6 + $0x10] sm:$0xff]
    %v1473 = vld [vmem:[%s6 + $0x18] sm:$0xff]
    %v1474 = vld [vmem:[%s6 + $0x20] sm:$0xff]
    %v1475 = vld [vmem:[%s6 + $0x28] sm:$0xff]
    %v1476 = vld [vmem:[%s6 + $0x30] sm:$0xff]
    %v1477 = vld [vmem:[%s6 + $0x38] sm:$0xff]
    %v1478 = vld [vmem:[%s6 + $0x40] sm:$0xff]
    %v1479 = vld [vmem:[%s6 + $0x48] sm:$0xff]
    %v1480 = vld [vmem:[%s6 + $0x50] sm:$0xff]
    %v1481 = vld [vmem:[%s6 + $0x58] sm:$0xff]
    %v1482 = vld [vmem:[%s6 + $0x60] sm:$0xff]
    %v1483 = vld [vmem:[%s6 + $0x68] sm:$0xff]
    %v1484 = vld [vmem:[%s6 + $0x70] sm:$0xff]
    %v1485 = vld [vmem:[%s6 + $0x78] sm:$0xff]
    %v1486 = vld [vmem:[%s6 + $0x80] sm:$0xff]
    %v1487 = vld [vmem:[%s6 + $0x88] sm:$0xff]
    %v1488 = vld [vmem:[%s6 + $0x90] sm:$0xff]
    %v1489 = vld [vmem:[%s6 + $0x98] sm:$0xff]
    %v1490 = vld [vmem:[%s6 + $0xa0] sm:$0xff]
    %v1491 = vld [vmem:[%s6 + $0xa8] sm:$0xff]
    %v1492 = vld [vmem:[%s6 + $0xb0] sm:$0xff]
    %v1493 = vld [vmem:[%s6 + $0xb8] sm:$0xff]
    %v1494 = vld [vmem:[%s6 + $0xc0] sm:$0xff]
    %v1495 = vld [vmem:[%s6 + $0xc8] sm:$0xff]
    %v1496 = vld [vmem:[%s6 + $0xd0] sm:$0xff]
    %v1497 = vld [vmem:[%s6 + $0xd8] sm:$0xff]
    %v1498 = vld [vmem:[%s6 + $0xe0] sm:$0xff]
    %v1499 = vld [vmem:[%s6 + $0xe8] sm:$0xff]
    %v1500 = vld [vmem:[%s6 + $0xf0] sm:$0xff]
    %v1501 = vld [vmem:[%s6 + $0xf8] sm:$0xff]
    %v1502 = vld [vmem:[%s6 + $0x100] sm:$0xff]
    %v1503 = vld [vmem:[%s6 + $0x108] sm:$0xff]
    %v1504 = vld [vmem:[%s6 + $0x110] sm:$0xff]
    %v1505 = vld [vmem:[%s6 + $0x118] sm:$0xff]
    %v1506 = vld [vmem:[%s6 + $0x120] sm:$0xff]
    %v1507 = vld [vmem:[%s6 + $0x128] sm:$0xff]
    %v1508 = vld [vmem:[%s6 + $0x130] sm:$0xff]
    %v1509 = vld [vmem:[%s6 + $0x138] sm:$0xff]
    %v1510 = vld [vmem:[%s6 + $0x140] sm:$0xff]
    %v1511 = vld [vmem:[%s6 + $0x148] sm:$0xff]
    %v1512 = vld [vmem:[%s6 + $0x150] sm:$0xff]
    %v1513 = vld [vmem:[%s6 + $0x158] sm:$0xff]
    %v1514 = vld [vmem:[%s6 + $0x160] sm:$0xff]
    %v1515 = vld [vmem:[%s6 + $0x168] sm:$0xff]
    %v1516 = vld [vmem:[%s6 + $0x170] sm:$0xff]
    %v1517 = vld [vmem:[%s6 + $0x178] sm:$0xff]
    %v1518 = vld [vmem:[%s6 + $0x180] sm:$0xff]
    %v1519 = vld [vmem:[%s6 + $0x188] sm:$0xff]
    %v1520 = vld [vmem:[%s6 + $0x190] sm:$0xff]
    %v1521 = vld [vmem:[%s6 + $0x198] sm:$0xff]
    %v1522 = vld [vmem:[%s6 + $0x1a0] sm:$0xff]
    %v1523 = vld [vmem:[%s6 + $0x1a8] sm:$0xff]
    %v1524 = vld [vmem:[%s6 + $0x1b0] sm:$0xff]
    %v1525 = vld [vmem:[%s6 + $0x1b8] sm:$0xff]
    %v1526 = vld [vmem:[%s6 + $0x1c0] sm:$0xff]
    %v1527 = vld [vmem:[%s6 + $0x1c8] sm:$0xff]
    %v1528 = vld [vmem:[%s6 + $0x1d0] sm:$0xff]
    %v1529 = vld [vmem:[%s6 + $0x1d8] sm:$0xff]
    %v1530 = vld [vmem:[%s6 + $0x1e0] sm:$0xff]
    %v1531 = vld [vmem:[%s6 + $0x1e8] sm:$0xff]
    %v1532 = vld [vmem:[%s6 + $0x1f0] sm:$0xff]
    %v1533 = vld [vmem:[%s6 + $0x1f8] sm:$0xff]
    %v1534 = vld [vmem:[%s6 + $0x200] sm:$0xff]
    %v1535 = vld [vmem:[%s6 + $0x208] sm:$0xff]
    %v1536 = vld [vmem:[%s6 + $0x210] sm:$0xff]
    %v1537 = vld [vmem:[%s6 + $0x218] sm:$0xff]
    %v1538 = vld [vmem:[%s6 + $0x220] sm:$0xff]
    %v1539 = vld [vmem:[%s6 + $0x228] sm:$0xff]
    %v1540 = vld [vmem:[%s6 + $0x230] sm:$0xff]
    %v1541 = vld [vmem:[%s6 + $0x238] sm:$0xff]
    %v1542 = vld [vmem:[%s6 + $0x240] sm:$0xff]
    %v1543 = vld [vmem:[%s6 + $0x248] sm:$0xff]
    %v1544 = vld [vmem:[%s6 + $0x250] sm:$0xff]
    %v1545 = vld [vmem:[%s6 + $0x258] sm:$0xff]
    %v1546 = vld [vmem:[%s6 + $0x260] sm:$0xff]
    %v1547 = vld [vmem:[%s6 + $0x268] sm:$0xff]
    %v1548 = vld [vmem:[%s6 + $0x270] sm:$0xff]
    %v1549 = vld [vmem:[%s6 + $0x278] sm:$0xff]
    %v1550 = vld [vmem:[%s6 + $0x280] sm:$0xff]
    %v1551 = vld [vmem:[%s6 + $0x288] sm:$0xff]
    %v1552 = vld [vmem:[%s6 + $0x290] sm:$0xff]
    %v1553 = vld [vmem:[%s6 + $0x298] sm:$0xff]
    %v1554 = vld [vmem:[%s6 + $0x2a0] sm:$0xff]
    %v1555 = vld [vmem:[%s6 + $0x2a8] sm:$0xff]
    %v1556 = vld [vmem:[%s6 + $0x2b0] sm:$0xff]
    %v1557 = vld [vmem:[%s6 + $0x2b8] sm:$0xff]
    %v1558 = vld [vmem:[%s6 + $0x2c0] sm:$0xff]
    %v1559 = vld [vmem:[%s6 + $0x2c8] sm:$0xff]
    %v1560 = vld [vmem:[%s6 + $0x2d0] sm:$0xff]
    %v1561 = vld [vmem:[%s6 + $0x2d8] sm:$0xff]
    %v1562 = vld [vmem:[%s6 + $0x2e0] sm:$0xff]
    %v1563 = vld [vmem:[%s6 + $0x2e8] sm:$0xff]
    %v1564 = vld [vmem:[%s6 + $0x2f0] sm:$0xff]
    %v1565 = vld [vmem:[%s6 + $0x2f8] sm:$0xff]
    %v1566 = vld [vmem:[%s6 + $0x300] sm:$0xff]
    %v1567 = vld [vmem:[%s6 + $0x308] sm:$0xff]
    %v1568 = vld [vmem:[%s6 + $0x310] sm:$0xff]
    %v1569 = vld [vmem:[%s6 + $0x318] sm:$0xff]
    %v1570 = vld [vmem:[%s6 + $0x320] sm:$0xff]
    %v1571 = vld [vmem:[%s6 + $0x328] sm:$0xff]
    %v1572 = vld [vmem:[%s6 + $0x330] sm:$0xff]
    %v1573 = vld [vmem:[%s6 + $0x338] sm:$0xff]
    %v1574 = vld [vmem:[%s6 + $0x340] sm:$0xff]
    %v1575 = vld [vmem:[%s6 + $0x348] sm:$0xff]
    %v1576 = vld [vmem:[%s6 + $0x350] sm:$0xff]
    %v1577 = vld [vmem:[%s6 + $0x358] sm:$0xff]
    %v1578 = vld [vmem:[%s6 + $0x360] sm:$0xff]
    %v1579 = vld [vmem:[%s6 + $0x368] sm:$0xff]
    %v1580 = vld [vmem:[%s6 + $0x370] sm:$0xff]
    %v1581 = vld [vmem:[%s6 + $0x378] sm:$0xff]
    %v1582 = vld [vmem:[%s6 + $0x380] sm:$0xff]
    %v1583 = vld [vmem:[%s6 + $0x388] sm:$0xff]
    %v1584 = vld [vmem:[%s6 + $0x390] sm:$0xff]
    %v1585 = vld [vmem:[%s6 + $0x398] sm:$0xff]
    %v1586 = vld [vmem:[%s6 + $0x3a0] sm:$0xff]
    %v1587 = vld [vmem:[%s6 + $0x3a8] sm:$0xff]
    %v1588 = vld [vmem:[%s6 + $0x3b0] sm:$0xff]
    %v1589 = vld [vmem:[%s6 + $0x3b8] sm:$0xff]
    %v1590 = vld [vmem:[%s6 + $0x3c0] sm:$0xff]
    %v1591 = vld [vmem:[%s6 + $0x3c8] sm:$0xff]
    %v1592 = vld [vmem:[%s6 + $0x3d0] sm:$0xff]
    %v1593 = vld [vmem:[%s6 + $0x3d8] sm:$0xff]
    %v1594 = vld [vmem:[%s6 + $0x3e0] sm:$0xff]
    %v1595 = vld [vmem:[%s6 + $0x3e8] sm:$0xff]
    %v1596 = vld [vmem:[%s6 + $0x3f0] sm:$0xff]
    %v1597 = vld [vmem:[%s6 + $0x3f8] sm:$0xff]
    %v1598 = vld [vmem:[%s6 + $0x400] sm:$0xff]
    %v1599 = vld [vmem:[%s6 + $0x408] sm:$0xff]
    %v1600 = vld [vmem:[%s6 + $0x410] sm:$0xff]
    %v1601 = vld [vmem:[%s6 + $0x418] sm:$0xff]
    %v1602 = vld [vmem:[%s6 + $0x420] sm:$0xff]
    %v1603 = vld [vmem:[%s6 + $0x428] sm:$0xff]
    %v1604 = vld [vmem:[%s6 + $0x430] sm:$0xff]
    %v1605 = vld [vmem:[%s6 + $0x438] sm:$0xff]
    %v1606 = vld [vmem:[%s6 + $0x440] sm:$0xff]
    %v1607 = vld [vmem:[%s6 + $0x448] sm:$0xff]
    %v1608 = vld [vmem:[%s6 + $0x450] sm:$0xff]
    %v1609 = vld [vmem:[%s6 + $0x458] sm:$0xff]
    %v1610 = vld [vmem:[%s6 + $0x460] sm:$0xff]
    %v1611 = vld [vmem:[%s6 + $0x468] sm:$0xff]
    %v1612 = vld [vmem:[%s6 + $0x470] sm:$0xff]
    %v1613 = vld [vmem:[%s6 + $0x478] sm:$0xff]
    %v1614 = vld [vmem:[%s6 + $0x480] sm:$0xff]
    %v1615 = vld [vmem:[%s6 + $0x488] sm:$0xff]
    %v1616 = vld [vmem:[%s6 + $0x490] sm:$0xff]
    %v1617 = vld [vmem:[%s6 + $0x498] sm:$0xff]
    %v1618 = vld [vmem:[%s6 + $0x4a0] sm:$0xff]
    %v1619 = vld [vmem:[%s6 + $0x4a8] sm:$0xff]
    %v1620 = vld [vmem:[%s6 + $0x4b0] sm:$0xff]
    %v1621 = vld [vmem:[%s6 + $0x4b8] sm:$0xff]
    %v1622 = vld [vmem:[%s6 + $0x4c0] sm:$0xff]
    %v1623 = vld [vmem:[%s6 + $0x4c8] sm:$0xff]
    %v1624 = vld [vmem:[%s6 + $0x4d0] sm:$0xff]
    %v1625 = vld [vmem:[%s6 + $0x4d8] sm:$0xff]
    %v1626 = vld [vmem:[%s6 + $0x4e0] sm:$0xff]
    %v1627 = vld [vmem:[%s6 + $0x4e8] sm:$0xff]
    %v1628 = vld [vmem:[%s6 + $0x4f0] sm:$0xff]
    %v1629 = vld [vmem:[%s6 + $0x4f8] sm:$0xff]
    %v1630 = vld [vmem:[%s6 + $0x500] sm:$0xff]
    %v1631 = vld [vmem:[%s6 + $0x508] sm:$0xff]
    %v1632 = vld [vmem:[%s6 + $0x510] sm:$0xff]
    %v1633 = vld [vmem:[%s6 + $0x518] sm:$0xff]
    %v1634 = vld [vmem:[%s6 + $0x520] sm:$0xff]
    %v1635 = vld [vmem:[%s6 + $0x528] sm:$0xff]
    %v1636 = vld [vmem:[%s6 + $0x530] sm:$0xff]
    %v1637 = vld [vmem:[%s6 + $0x538] sm:$0xff]
    %v1638 = vld [vmem:[%s6 + $0x540] sm:$0xff]
    %v1639 = vld [vmem:[%s6 + $0x548] sm:$0xff]
    %v1640 = vld [vmem:[%s6 + $0x550] sm:$0xff]
    %v1641 = vld [vmem:[%s6 + $0x558] sm:$0xff]
    %v1642 = vld [vmem:[%s6 + $0x560] sm:$0xff]
    %v1643 = vld [vmem:[%s6 + $0x568] sm:$0xff]
    %v1644 = vld [vmem:[%s6 + $0x570] sm:$0xff]
    %v1645 = vld [vmem:[%s6 + $0x578] sm:$0xff]
    %v1646 = vld [vmem:[%s6 + $0x580] sm:$0xff]
    %v1647 = vld [vmem:[%s6 + $0x588] sm:$0xff]
    %v1648 = vld [vmem:[%s6 + $0x590] sm:$0xff]
    %v1649 = vld [vmem:[%s6 + $0x598] sm:$0xff]
    %v1650 = vld [vmem:[%s6 + $0x5a0] sm:$0xff]
    %v1651 = vld [vmem:[%s6 + $0x5a8] sm:$0xff]
    %v1652 = vld [vmem:[%s6 + $0x5b0] sm:$0xff]
    %v1653 = vld [vmem:[%s6 + $0x5b8] sm:$0xff]
    %v1654 = vld [vmem:[%s6 + $0x5c0] sm:$0xff]
    %v1655 = vld [vmem:[%s6 + $0x5c8] sm:$0xff]
    %v1656 = vld [vmem:[%s6 + $0x5d0] sm:$0xff]
    %v1657 = vld [vmem:[%s6 + $0x5d8] sm:$0xff]
    %v1658 = vld [vmem:[%s6 + $0x5e0] sm:$0xff]
    %v1659 = vld [vmem:[%s6 + $0x5e8] sm:$0xff]
    %v1660 = vld [vmem:[%s6 + $0x5f0] sm:$0xff]
    %v1661 = vld [vmem:[%s6 + $0x5f8] sm:$0xff]
    %v1662 = vld [vmem:[%s6 + $0x600] sm:$0xff]
    %v1663 = vld [vmem:[%s6 + $0x608] sm:$0xff]
    %v1664 = vld [vmem:[%s6 + $0x610] sm:$0xff]
    %v1665 = vld [vmem:[%s6 + $0x618] sm:$0xff]
    %v1666 = vld [vmem:[%s6 + $0x620] sm:$0xff]
    %v1667 = vld [vmem:[%s6 + $0x628] sm:$0xff]
    %v1668 = vld [vmem:[%s6 + $0x630] sm:$0xff]
    %v1669 = vld [vmem:[%s6 + $0x638] sm:$0xff]
    %v1670 = vld [vmem:[%s6 + $0x640] sm:$0xff]
    %v1671 = vld [vmem:[%s6 + $0x648] sm:$0xff]
    %v1672 = vld [vmem:[%s6 + $0x650] sm:$0xff]
    %v1673 = vld [vmem:[%s6 + $0x658] sm:$0xff]
    %v1674 = vld [vmem:[%s6 + $0x660] sm:$0xff]
    %v1675 = vld [vmem:[%s6 + $0x668] sm:$0xff]
    %v1676 = vld [vmem:[%s6 + $0x670] sm:$0xff]
    %v1677 = vld [vmem:[%s6 + $0x678] sm:$0xff]
    %v1678 = vld [vmem:[%s6 + $0x680] sm:$0xff]
    %v1679 = vld [vmem:[%s6 + $0x688] sm:$0xff]
    %v1680 = vld [vmem:[%s6 + $0x690] sm:$0xff]
    %v1681 = vld [vmem:[%s6 + $0x698] sm:$0xff]
    %v1682 = vld [vmem:[%s6 + $0x6a0] sm:$0xff]
    %v1683 = vld [vmem:[%s6 + $0x6a8] sm:$0xff]
    %v1684 = vld [vmem:[%s6 + $0x6b0] sm:$0xff]
    %v1685 = vld [vmem:[%s6 + $0x6b8] sm:$0xff]
    %v1686 = vld [vmem:[%s6 + $0x6c0] sm:$0xff]
    %v1687 = vld [vmem:[%s6 + $0x6c8] sm:$0xff]
    %v1688 = vld [vmem:[%s6 + $0x6d0] sm:$0xff]
    %v1689 = vld [vmem:[%s6 + $0x6d8] sm:$0xff]
    %v1690 = vld [vmem:[%s6 + $0x6e0] sm:$0xff]
    %v1691 = vld [vmem:[%s6 + $0x6e8] sm:$0xff]
    %v1692 = vld [vmem:[%s6 + $0x6f0] sm:$0xff]
    %v1693 = vld [vmem:[%s6 + $0x6f8] sm:$0xff]
    %v1694 = vld [vmem:[%s6 + $0x700] sm:$0xff]
    %v1695 = vld [vmem:[%s6 + $0x708] sm:$0xff]
    %v1696 = vld [vmem:[%s6 + $0x710] sm:$0xff]
    %v1697 = vld [vmem:[%s6 + $0x718] sm:$0xff]
    %v1698 = vld [vmem:[%s6 + $0x720] sm:$0xff]
    %v1699 = vld [vmem:[%s6 + $0x728] sm:$0xff]
    %v1700 = vld [vmem:[%s6 + $0x730] sm:$0xff]
    %v1701 = vld [vmem:[%s6 + $0x738] sm:$0xff]
    %v1702 = vld [vmem:[%s6 + $0x740] sm:$0xff]
    %v1703 = vld [vmem:[%s6 + $0x748] sm:$0xff]
    %v1704 = vld [vmem:[%s6 + $0x750] sm:$0xff]
    %v1705 = vld [vmem:[%s6 + $0x758] sm:$0xff]
    %v1706 = vld [vmem:[%s6 + $0x760] sm:$0xff]
    %v1707 = vld [vmem:[%s6 + $0x768] sm:$0xff]
    %v1708 = vld [vmem:[%s6 + $0x770] sm:$0xff]
    %v1709 = vld [vmem:[%s6 + $0x778] sm:$0xff]
    %v1710 = vld [vmem:[%s6 + $0x780] sm:$0xff]
    %v1711 = vld [vmem:[%s6 + $0x788] sm:$0xff]
    %v1712 = vld [vmem:[%s6 + $0x790] sm:$0xff]
    %v1713 = vld [vmem:[%s6 + $0x798] sm:$0xff]
    %v1714 = vld [vmem:[%s6 + $0x7a0] sm:$0xff]
    %v1715 = vld [vmem:[%s6 + $0x7a8] sm:$0xff]
    %v1716 = vld [vmem:[%s6 + $0x7b0] sm:$0xff]
    %v1717 = vld [vmem:[%s6 + $0x7b8] sm:$0xff]
    %v1718 = vld [vmem:[%s6 + $0x7c0] sm:$0xff]
    %v1719 = vld [vmem:[%s6 + $0x7c8] sm:$0xff]
    %v1720 = vld [vmem:[%s6 + $0x7d0] sm:$0xff]
    %v1721 = vld [vmem:[%s6 + $0x7d8] sm:$0xff]
    %v1722 = vld [vmem:[%s6 + $0x7e0] sm:$0xff]
    %v1723 = vld [vmem:[%s6 + $0x7e8] sm:$0xff]
    %v1724 = vld [vmem:[%s6 + $0x7f0] sm:$0xff]
    %v1725 = vld [vmem:[%s6 + $0x7f8] sm:$0xff]
    %v1726 = vld [vmem:[%s6 + $0x800] sm:$0xff]
    %v1727 = vld [vmem:[%s6 + $0x808] sm:$0xff]
    %v1728 = vld [vmem:[%s6 + $0x810] sm:$0xff]
    %v1729 = vld [vmem:[%s6 + $0x818] sm:$0xff]
    %v1730 = vld [vmem:[%s6 + $0x820] sm:$0xff]
    %v1731 = vld [vmem:[%s6 + $0x828] sm:$0xff]
    %v1732 = vld [vmem:[%s6 + $0x830] sm:$0xff]
    %v1733 = vld [vmem:[%s6 + $0x838] sm:$0xff]
    %v1734 = vld [vmem:[%s6 + $0x840] sm:$0xff]
    %v1735 = vld [vmem:[%s6 + $0x848] sm:$0xff]
    %v1736 = vld [vmem:[%s6 + $0x850] sm:$0xff]
    %v1737 = vld [vmem:[%s6 + $0x858] sm:$0xff]
    %v1738 = vld [vmem:[%s6 + $0x860] sm:$0xff]
    %v1739 = vld [vmem:[%s6 + $0x868] sm:$0xff]
    %v1740 = vld [vmem:[%s6 + $0x870] sm:$0xff]
    %v1741 = vld [vmem:[%s6 + $0x878] sm:$0xff]
    %v1742 = vld [vmem:[%s6 + $0x880] sm:$0xff]
    %v1743 = vld [vmem:[%s6 + $0x888] sm:$0xff]
    %v1744 = vld [vmem:[%s6 + $0x890] sm:$0xff]
    %v1745 = vld [vmem:[%s6 + $0x898] sm:$0xff]
    %v1746 = vld [vmem:[%s6 + $0x8a0] sm:$0xff]
    %v1747 = vld [vmem:[%s6 + $0x8a8] sm:$0xff]
    %v1748 = vld [vmem:[%s6 + $0x8b0] sm:$0xff]
    %v1749 = vld [vmem:[%s6 + $0x8b8] sm:$0xff]
    %v1750 = vld [vmem:[%s6 + $0x8c0] sm:$0xff]
    %v1751 = vld [vmem:[%s6 + $0x8c8] sm:$0xff]
    %v1752 = vld [vmem:[%s6 + $0x8d0] sm:$0xff]
    %v1753 = vld [vmem:[%s6 + $0x8d8] sm:$0xff]
    %v1754 = vld [vmem:[%s6 + $0x8e0] sm:$0xff]
    %v1755 = vld [vmem:[%s6 + $0x8e8] sm:$0xff]
    %v1756 = vld [vmem:[%s6 + $0x8f0] sm:$0xff]
    %v1757 = vld [vmem:[%s6 + $0x8f8] sm:$0xff]
    %v1758 = vld [vmem:[%s6 + $0x900] sm:$0xff]
    %v1759 = vld [vmem:[%s6 + $0x908] sm:$0xff]
    %v1760 = vld [vmem:[%s6 + $0x910] sm:$0xff]
    %v1761 = vld [vmem:[%s6 + $0x918] sm:$0xff]
    %v1762 = vld [vmem:[%s6 + $0x920] sm:$0xff]
    %v1763 = vld [vmem:[%s6 + $0x928] sm:$0xff]
    %v1764 = vld [vmem:[%s6 + $0x930] sm:$0xff]
    %v1765 = vld [vmem:[%s6 + $0x938] sm:$0xff]
    %v1766 = vld [vmem:[%s6 + $0x940] sm:$0xff]
    %v1767 = vld [vmem:[%s6 + $0x948] sm:$0xff]
    %v1768 = vld [vmem:[%s6 + $0x950] sm:$0xff]
    %v1769 = vld [vmem:[%s6 + $0x958] sm:$0xff]
    %v1770 = vld [vmem:[%s6 + $0x960] sm:$0xff]
    %v1771 = vld [vmem:[%s6 + $0x968] sm:$0xff]
    %v1772 = vld [vmem:[%s6 + $0x970] sm:$0xff]
    %v1773 = vld [vmem:[%s6 + $0x978] sm:$0xff]
    %v1774 = vld [vmem:[%s6 + $0x980] sm:$0xff]
    %v1775 = vld [vmem:[%s6 + $0x988] sm:$0xff]
    %v1776 = vld [vmem:[%s6 + $0x990] sm:$0xff]
    %v1777 = vld [vmem:[%s6 + $0x998] sm:$0xff]
    %v1778 = vld [vmem:[%s6 + $0x9a0] sm:$0xff]
    %v1779 = vld [vmem:[%s6 + $0x9a8] sm:$0xff]
    %v1780 = vld [vmem:[%s6 + $0x9b0] sm:$0xff]
    %v1781 = vld [vmem:[%s6 + $0x9b8] sm:$0xff]
    %v1782 = vld [vmem:[%s6 + $0x9c0] sm:$0xff]
    %v1783 = vld [vmem:[%s6 + $0x9c8] sm:$0xff]
    %v1784 = vld [vmem:[%s6 + $0x9d0] sm:$0xff]
    %v1785 = vld [vmem:[%s6 + $0x9d8] sm:$0xff]
    %v1786 = vld [vmem:[%s6 + $0x9e0] sm:$0xff]
    %v1787 = vld [vmem:[%s6 + $0x9e8] sm:$0xff]
    %v1788 = vld [vmem:[%s6 + $0x9f0] sm:$0xff]
    %v1789 = vld [vmem:[%s6 + $0x9f8] sm:$0xff]
    %v1790 = vld [vmem:[%s6 + $0xa00] sm:$0xff]
    %v1791 = vld [vmem:[%s6 + $0xa08] sm:$0xff]
    %v1792 = vld [vmem:[%s6 + $0xa10] sm:$0xff]
    %v1793 = vld [vmem:[%s6 + $0xa18] sm:$0xff]
    %v1794 = vld [vmem:[%s6 + $0xa20] sm:$0xff]
    %v1795 = vld [vmem:[%s6 + $0xa28] sm:$0xff]
    %v1796 = vld [vmem:[%s6 + $0xa30] sm:$0xff]
    %v1797 = vld [vmem:[%s6 + $0xa38] sm:$0xff]
    %v1798 = vld [vmem:[%s6 + $0xa40] sm:$0xff]
    %v1799 = vld [vmem:[%s6 + $0xa48] sm:$0xff]
    %v1800 = vld [vmem:[%s6 + $0xa50] sm:$0xff]
    %v1801 = vld [vmem:[%s6 + $0xa58] sm:$0xff]
    %v1802 = vld [vmem:[%s6 + $0xa60] sm:$0xff]
    %v1803 = vld [vmem:[%s6 + $0xa68] sm:$0xff]
    %v1804 = vld [vmem:[%s6 + $0xa70] sm:$0xff]
    %v1805 = vld [vmem:[%s6 + $0xa78] sm:$0xff]
    %v1806 = vld [vmem:[%s6 + $0xa80] sm:$0xff]
    %v1807 = vld [vmem:[%s6 + $0xa88] sm:$0xff]
    %v1808 = vld [vmem:[%s6 + $0xa90] sm:$0xff]
    %v1809 = vld [vmem:[%s6 + $0xa98] sm:$0xff]
    %v1810 = vld [vmem:[%s6 + $0xaa0] sm:$0xff]
    %v1811 = vld [vmem:[%s6 + $0xaa8] sm:$0xff]
    %v1812 = vld [vmem:[%s6 + $0xab0] sm:$0xff]
    %v1813 = vld [vmem:[%s6 + $0xab8] sm:$0xff]
    %v1814 = vld [vmem:[%s6 + $0xac0] sm:$0xff]
    %v1815 = vld [vmem:[%s6 + $0xac8] sm:$0xff]
    %v1816 = vld [vmem:[%s6 + $0xad0] sm:$0xff]
    %v1817 = vld [vmem:[%s6 + $0xad8] sm:$0xff]
    %v1818 = vld [vmem:[%s6 + $0xae0] sm:$0xff]
    %v1819 = vld [vmem:[%s6 + $0xae8] sm:$0xff]
    %v1820 = vld [vmem:[%s6 + $0xaf0] sm:$0xff]
    %v1821 = vld [vmem:[%s6 + $0xaf8] sm:$0xff]
    %v1822 = vld [vmem:[%s6 + $0xb00] sm:$0xff]
    %v1823 = vld [vmem:[%s6 + $0xb08] sm:$0xff]
    %v1824 = vld [vmem:[%s6 + $0xb10] sm:$0xff]
    %v1825 = vld [vmem:[%s6 + $0xb18] sm:$0xff]
    %v1826 = vld [vmem:[%s6 + $0xb20] sm:$0xff]
    %v1827 = vld [vmem:[%s6 + $0xb28] sm:$0xff]
    %v1828 = vld [vmem:[%s6 + $0xb30] sm:$0xff]
    %v1829 = vld [vmem:[%s6 + $0xb38] sm:$0xff]
    %v1830 = vld [vmem:[%s6 + $0xb40] sm:$0xff]
    %v1831 = vld [vmem:[%s6 + $0xb48] sm:$0xff]
    %v1832 = vld [vmem:[%s6 + $0xb50] sm:$0xff]
    %v1833 = vld [vmem:[%s6 + $0xb58] sm:$0xff]
    %v1834 = vld [vmem:[%s6 + $0xb60] sm:$0xff]
    %v1835 = vld [vmem:[%s6 + $0xb68] sm:$0xff]
    %v1836 = vld [vmem:[%s6 + $0xb70] sm:$0xff]
    %v1837 = vld [vmem:[%s6 + $0xb78] sm:$0xff]
    %v1838 = vld [vmem:[%s6 + $0xb80] sm:$0xff]
    %v1839 = vld [vmem:[%s6 + $0xb88] sm:$0xff]
    %v1840 = vld [vmem:[%s6 + $0xb90] sm:$0xff]
    %v1841 = vld [vmem:[%s6 + $0xb98] sm:$0xff]
    %v1842 = vld [vmem:[%s6 + $0xba0] sm:$0xff]
    %v1843 = vld [vmem:[%s6 + $0xba8] sm:$0xff]
    %v1844 = vld [vmem:[%s6 + $0xbb0] sm:$0xff]
    %v1845 = vld [vmem:[%s6 + $0xbb8] sm:$0xff]
    %v1846 = vld [vmem:[%s6 + $0xbc0] sm:$0xff]
    %v1847 = vld [vmem:[%s6 + $0xbc8] sm:$0xff]
    %v1848 = vld [vmem:[%s6 + $0xbd0] sm:$0xff]
    %v1849 = vld [vmem:[%s6 + $0xbd8] sm:$0xff]
    %v1850 = vld [vmem:[%s6 + $0xbe0] sm:$0xff]
    %v1851 = vld [vmem:[%s6 + $0xbe8] sm:$0xff]
    %v1852 = vld [vmem:[%s6 + $0xbf0] sm:$0xff]
    %v1853 = vld [vmem:[%s6 + $0xbf8] sm:$0xff]
    %v1854 = vld [vmem:[%s6 + $0xc00] sm:$0xff]
    %v1855 = vld [vmem:[%s6 + $0xc08] sm:$0xff]
    %v1856 = vld [vmem:[%s6 + $0xc10] sm:$0xff]
    %v1857 = vld [vmem:[%s6 + $0xc18] sm:$0xff]
    %v1858 = vld [vmem:[%s6 + $0xc20] sm:$0xff]
    %v1859 = vld [vmem:[%s6 + $0xc28] sm:$0xff]
    %v1860 = vld [vmem:[%s6 + $0xc30] sm:$0xff]
    %v1861 = vld [vmem:[%s6 + $0xc38] sm:$0xff]
    %v1862 = vld [vmem:[%s6 + $0xc40] sm:$0xff]
    %v1863 = vld [vmem:[%s6 + $0xc48] sm:$0xff]
    %v1864 = vld [vmem:[%s6 + $0xc50] sm:$0xff]
    %v1865 = vld [vmem:[%s6 + $0xc58] sm:$0xff]
    %v1866 = vld [vmem:[%s6 + $0xc60] sm:$0xff]
    %v1867 = vld [vmem:[%s6 + $0xc68] sm:$0xff]
    %v1868 = vld [vmem:[%s6 + $0xc70] sm:$0xff]
    %v1869 = vld [vmem:[%s6 + $0xc78] sm:$0xff]
    %v1870 = vld [vmem:[%s6 + $0xc80] sm:$0xff]
    %v1871 = vld [vmem:[%s6 + $0xc88] sm:$0xff]
    %v1872 = vld [vmem:[%s6 + $0xc90] sm:$0xff]
    %v1873 = vld [vmem:[%s6 + $0xc98] sm:$0xff]
    %v1874 = vld [vmem:[%s6 + $0xca0] sm:$0xff]
    %v1875 = vld [vmem:[%s6 + $0xca8] sm:$0xff]
    %v1876 = vld [vmem:[%s6 + $0xcb0] sm:$0xff]
    %v1877 = vld [vmem:[%s6 + $0xcb8] sm:$0xff]
    %v1878 = vld [vmem:[%s6 + $0xcc0] sm:$0xff]
    %v1879 = vld [vmem:[%s6 + $0xcc8] sm:$0xff]
    %v1880 = vld [vmem:[%s6 + $0xcd0] sm:$0xff]
    %v1881 = vld [vmem:[%s6 + $0xcd8] sm:$0xff]
    %v1882 = vld [vmem:[%s6 + $0xce0] sm:$0xff]
    %v1883 = vld [vmem:[%s6 + $0xce8] sm:$0xff]
    %v1884 = vld [vmem:[%s6 + $0xcf0] sm:$0xff]
    %v1885 = vld [vmem:[%s6 + $0xcf8] sm:$0xff]
    %v1886 = vld [vmem:[%s6 + $0xd00] sm:$0xff]
    %v1887 = vld [vmem:[%s6 + $0xd08] sm:$0xff]
    %v1888 = vld [vmem:[%s6 + $0xd10] sm:$0xff]
    %v1889 = vld [vmem:[%s6 + $0xd18] sm:$0xff]
    %v1890 = vld [vmem:[%s6 + $0xd20] sm:$0xff]
    %v1891 = vld [vmem:[%s6 + $0xd28] sm:$0xff]
    %v1892 = vld [vmem:[%s6 + $0xd30] sm:$0xff]
    %v1893 = vld [vmem:[%s6 + $0xd38] sm:$0xff]
    %v1894 = vld [vmem:[%s6 + $0xd40] sm:$0xff]
    %v1895 = vld [vmem:[%s6 + $0xd48] sm:$0xff]
    %v1896 = vld [vmem:[%s6 + $0xd50] sm:$0xff]
    %v1897 = vld [vmem:[%s6 + $0xd58] sm:$0xff]
    %v1898 = vld [vmem:[%s6 + $0xd60] sm:$0xff]
    %v1899 = vld [vmem:[%s6 + $0xd68] sm:$0xff]
    %v1900 = vld [vmem:[%s6 + $0xd70] sm:$0xff]
    %v1901 = vld [vmem:[%s6 + $0xd78] sm:$0xff]
    %v1902 = vld [vmem:[%s6 + $0xd80] sm:$0xff]
    %v1903 = vld [vmem:[%s6 + $0xd88] sm:$0xff]
    %v1904 = vld [vmem:[%s6 + $0xd90] sm:$0xff]
    %v1905 = vld [vmem:[%s6 + $0xd98] sm:$0xff]
    %v1906 = vld [vmem:[%s6 + $0xda0] sm:$0xff]
    %v1907 = vld [vmem:[%s6 + $0xda8] sm:$0xff]
    %v1908 = vld [vmem:[%s6 + $0xdb0] sm:$0xff]
    %v1909 = vld [vmem:[%s6 + $0xdb8] sm:$0xff]
    %v1910 = vld [vmem:[%s6 + $0xdc0] sm:$0xff]
    %v1911 = vld [vmem:[%s6 + $0xdc8] sm:$0xff]
    %v1912 = vld [vmem:[%s6 + $0xdd0] sm:$0xff]
    %v1913 = vld [vmem:[%s6 + $0xdd8] sm:$0xff]
    %v1914 = vld [vmem:[%s6 + $0xde0] sm:$0xff]
    %v1915 = vld [vmem:[%s6 + $0xde8] sm:$0xff]
    %v1916 = vld [vmem:[%s6 + $0xdf0] sm:$0xff]
    %v1917 = vld [vmem:[%s6 + $0xdf8] sm:$0xff]
    %v1918 = vld [vmem:[%s7] sm:$0x7f]
    %v1920 = vlaneseq
    %v1921 = vshrl.u32 %v1920, 7
    %v1922 = vsub.s32 0, %v1921
    %v1923 = vrot.slane %v1918, %v1922
    %v1924 = vlaneseq
    %v1925 = vshrl.u32 %v1924, 7
    %v1926 = vsub.s32 1, %v1925
    %v1927 = vrot.slane %v1918, %v1926
    %v1928 = vlaneseq
    %v1929 = vshrl.u32 %v1928, 7
    %v1930 = vsub.s32 2, %v1929
    %v1931 = vrot.slane %v1918, %v1930
    %v1932 = vlaneseq
    %v1933 = vshrl.u32 %v1932, 7
    %v1934 = vsub.s32 3, %v1933
    %v1935 = vrot.slane %v1918, %v1934
    %v1936 = vlaneseq
    %v1937 = vshrl.u32 %v1936, 7
    %v1938 = vsub.s32 4, %v1937
    %v1939 = vrot.slane %v1918, %v1938
    %v1940 = vlaneseq
    %v1941 = vshrl.u32 %v1940, 7
    %v1942 = vsub.s32 5, %v1941
    %v1943 = vrot.slane %v1918, %v1942
    %v1944 = vlaneseq
    %v1945 = vshrl.u32 %v1944, 7
    %v1946 = vsub.s32 6, %v1945
    %v1947 = vrot.slane %v1918, %v1946
    %1955 = vmatprep.subr.mxu0 %v1471
    %1956 = vmatpush1.msra.mxu0 %v1470
    %1957 = vmatprep.subr.mxu0 %v1478
    %1958 = vmatpush1.msra.mxu0 %v1477
    %1959 = vmatprep.subr.mxu0 %v1485
    %1960 = vmatpush1.msra.mxu0 %v1484
    %1961 = vmatprep.subr.mxu0 %v1492
    %1962 = vmatpush1.msra.mxu0 %v1491
    %1963 = vmatprep.subr.mxu0 %v1499
    %1964 = vmatpush1.msra.mxu0 %v1498
    %1965 = vmatprep.subr.mxu0 %v1506
    %1966 = vmatpush1.msra.mxu0 %v1505
    %1967 = vmatprep.subr.mxu0 %v1513
    %1968 = vmatpush1.msra.mxu0 %v1512
    %1969 = vmatprep.subr.mxu0 %v1520
    %1970 = vmatpush1.msra.mxu0 %v1519
    %1971 = vmatprep.subr.mxu0 %v1527
    %1972 = vmatpush1.msra.mxu0 %v1526
    %1973 = vmatprep.subr.mxu0 %v1534
    %1974 = vmatpush1.msra.mxu0 %v1533
    %1975 = vmatprep.subr.mxu0 %v1541
    %1976 = vmatpush1.msra.mxu0 %v1540
    %1977 = vmatprep.subr.mxu0 %v1548
    %1978 = vmatpush1.msra.mxu0 %v1547
    %1979 = vmatprep.subr.mxu0 %v1555
    %1980 = vmatpush1.msra.mxu0 %v1554
    %1981 = vmatprep.subr.mxu0 %v1562
    %1982 = vmatpush1.msra.mxu0 %v1561
    %1983 = vmatprep.subr.mxu0 %v1569
    %1984 = vmatpush1.msra.mxu0 %v1568
    %1985 = vmatprep.subr.mxu0 %v1576
    %1986 = vmatpush1.msra.mxu0 %v1575
    %1987 = vmatprep.subr.mxu0 %v1583
    %1988 = vmatpush1.msra.mxu0 %v1582
    %1989 = vmatprep.subr.mxu0 %v1590
    %1990 = vmatpush1.msra.mxu0 %v1589
    %1991 = vmatprep.subr.mxu0 %v1597
    %1992 = vmatpush1.msra.mxu0 %v1596
    %1993 = vmatprep.subr.mxu0 %v1604
    %1994 = vmatpush1.msra.mxu0 %v1603
    %1995 = vmatprep.subr.mxu0 %v1611
    %1996 = vmatpush1.msra.mxu0 %v1610
    %1997 = vmatprep.subr.mxu0 %v1618
    %1998 = vmatpush1.msra.mxu0 %v1617
    %1999 = vmatprep.subr.mxu0 %v1625
    %2000 = vmatpush1.msra.mxu0 %v1624
    %2001 = vmatprep.subr.mxu0 %v1632
    %2002 = vmatpush1.msra.mxu0 %v1631
    %2003 = vmatprep.subr.mxu0 %v1639
    %2004 = vmatpush1.msra.mxu0 %v1638
    %2005 = vmatprep.subr.mxu0 %v1646
    %2006 = vmatpush1.msra.mxu0 %v1645
    %2007 = vmatprep.subr.mxu0 %v1653
    %2008 = vmatpush1.msra.mxu0 %v1652
    %2009 = vmatprep.subr.mxu0 %v1660
    %2010 = vmatpush1.msra.mxu0 %v1659
    %2011 = vmatprep.subr.mxu0 %v1667
    %2012 = vmatpush1.msra.mxu0 %v1666
    %2013 = vmatprep.subr.mxu0 %v1674
    %2014 = vmatpush1.msra.mxu0 %v1673
    %2015 = vmatprep.subr.mxu0 %v1681
    %2016 = vmatpush1.msra.mxu0 %v1680
    %2017 = vmatprep.subr.mxu0 %v1688
    %2018 = vmatpush1.msra.mxu0 %v1687
    %2019 = vmatprep.mubr.f32.mxu0 %v1319
    %2020 = vmatmul.mubr.f32.gmra.mrb[0].mxu0 %v1318
    %v2021 = vpop.f32.mrb[0].mxu0
    %v2022 = vadd.f32 %v1923, %v2021
    %v2023 = vpop.f32.mrb[0].mxu0
    %v2024 = vadd.f32 %v1927, %v2023
    %2025 = vmatprep.mubr.f32.mxu0 %v1323
    %2026 = vmatmul.mubr.f32.gmra.mrb[0].mxu0 %v1322
    %v2027 = vpop.f32.mrb[0].mxu0
    %v2028 = vadd.f32 %v1923, %v2027
    %v2029 = vpop.f32.mrb[0].mxu0
    %v2030 = vadd.f32 %v1927, %v2029
    %2031 = vmatprep.mubr.f32.mxu0 %v1327
    %2032 = vmatmul.mubr.f32.gmra.mrb[0].mxu0 %v1326
    %v2033 = vpop.f32.mrb[0].mxu0
    %v2034 = vadd.f32 %v1923, %v2033
    %v2035 = vpop.f32.mrb[0].mxu0
    %v2036 = vadd.f32 %v1927, %v2035
    %2037 = vmatprep.mubr.f32.mxu0 %v1331
    %2038 = vmatmul.mubr.f32.gmra.mrb[0].mxu0 %v1330
    %v2039 = vpop.f32.mrb[0].mxu0
    %v2040 = vadd.f32 %v1923, %v2039
    %v2041 = vpop.f32.mrb[0].mxu0
    %v2042 = vadd.f32 %v1927, %v2041
    %2043 = vmatprep.mubr.f32.mxu0 %v1335
    %2044 = vmatmul.mubr.f32.gmra.mrb[0].mxu0 %v1334
    %v2045 = vpop.f32.mrb[0].mxu0
    %v2046 = vadd.f32 %v1923, %v2045
    %v2047 = vpop.f32.mrb[0].mxu0
    %v2048 = vadd.f32 %v1927, %v2047
    %2049 = vmatprep.mubr.f32.mxu0 %v1339
    %2050 = vmatmul.mubr.f32.gmra.mrb[0].mxu0 %v1338
    %v2051 = vpop.f32.mrb[0].mxu0
    %v2052 = vadd.f32 %v1923, %v2051
    %v2053 = vpop.f32.mrb[0].mxu0
    %v2054 = vadd.f32 %v1927, %v2053
    %2055 = vmatprep.mubr.f32.mxu0 %v1343
    %2056 = vmatmul.mubr.f32.gmra.mrb[0].mxu0 %v1342
    %v2057 = vpop.f32.mrb[0].mxu0
    %v2058 = vadd.f32 %v1923, %v2057
    %v2059 = vpop.f32.mrb[0].mxu0
    %v2060 = vadd.f32 %v1927, %v2059
    %2061 = vmatprep.mubr.f32.mxu0 %v1347
    %2062 = vmatmul.mubr.f32.gmra.mrb[0].mxu0 %v1346
    %v2063 = vpop.f32.mrb[0].mxu0
    %v2064 = vadd.f32 %v1923, %v2063
    %v2065 = vpop.f32.mrb[0].mxu0
    %v2066 = vadd.f32 %v1927, %v2065
    %2067 = vmatprep.mubr.f32.mxu0 %v1351
    %2068 = vmatmul.mubr.f32.gmra.mrb[0].mxu0 %v1350
    %v2069 = vpop.f32.mrb[0].mxu0
    %v2070 = vadd.f32 %v1923, %v2069
    %v2071 = vpop.f32.mrb[0].mxu0
    %v2072 = vadd.f32 %v1927, %v2071
    %2073 = vmatprep.mubr.f32.mxu0 %v1355
    %2074 = vmatmul.mubr.f32.gmra.mrb[0].mxu0 %v1354
    %v2075 = vpop.f32.mrb[0].mxu0
    %v2076 = vadd.f32 %v1923, %v2075
    %v2077 = vpop.f32.mrb[0].mxu0
    %v2078 = vadd.f32 %v1927, %v2077
    %2079 = vmatprep.mubr.f32.mxu0 %v1359
    %2080 = vmatmul.mubr.f32.gmra.mrb[0].mxu0 %v1358
    %v2081 = vpop.f32.mrb[0].mxu0
    %v2082 = vadd.f32 %v1923, %v2081
    %v2083 = vpop.f32.mrb[0].mxu0
    %v2084 = vadd.f32 %v1927, %v2083
    %2085 = vmatprep.mubr.f32.mxu0 %v1363
    %2086 = vmatmul.mubr.f32.gmra.mrb[0].mxu0 %v1362
    %v2087 = vpop.f32.mrb[0].mxu0
    %v2088 = vadd.f32 %v1923, %v2087
    %v2089 = vpop.f32.mrb[0].mxu0
    %v2090 = vadd.f32 %v1927, %v2089
    %2091 = vmatprep.mubr.f32.mxu0 %v1367
    %2092 = vmatmul.mubr.f32.gmra.mrb[0].mxu0 %v1366
    %v2093 = vpop.f32.mrb[0].mxu0
    %v2094 = vadd.f32 %v1923, %v2093
    %v2095 = vpop.f32.mrb[0].mxu0
    %v2096 = vadd.f32 %v1927, %v2095
    %2097 = vmatprep.mubr.f32.mxu0 %v1371
    %2098 = vmatmul.mubr.f32.gmra.mrb[0].mxu0 %v1370
    %v2099 = vpop.f32.mrb[0].mxu0
    %v2100 = vadd.f32 %v1923, %v2099
    %v2101 = vpop.f32.mrb[0].mxu0
    %v2102 = vadd.f32 %v1927, %v2101
    %2103 = vmatprep.mubr.f32.mxu0 %v1375
    %2104 = vmatmul.mubr.f32.gmra.mrb[0].mxu0 %v1374
    %v2105 = vpop.f32.mrb[0].mxu0
    %v2106 = vadd.f32 %v1923, %v2105
    %v2107 = vpop.f32.mrb[0].mxu0
    %v2108 = vadd.f32 %v1927, %v2107
    %2109 = vmatprep.mubr.f32.mxu0 %v1379
    %2110 = vmatmul.mubr.f32.gmra.mrb[0].mxu0 %v1378
    %v2111 = vpop.f32.mrb[0].mxu0
    %v2112 = vadd.f32 %v1923, %v2111
    %v2113 = vpop.f32.mrb[0].mxu0
    %v2114 = vadd.f32 %v1927, %v2113
    %2115 = vmatprep.mubr.f32.mxu0 %v1383
    %2116 = vmatmul.mubr.f32.gmra.mrb[0].mxu0 %v1382
    %v2117 = vpop.f32.mrb[0].mxu0
    %v2118 = vadd.f32 %v1923, %v2117
    %v2119 = vpop.f32.mrb[0].mxu0
    %v2120 = vadd.f32 %v1927, %v2119
    %2121 = vmatprep.mubr.f32.mxu0 %v1387
    %2122 = vmatmul.mubr.f32.gmra.mrb[0].mxu0 %v1386
    %v2123 = vpop.f32.mrb[0].mxu0
    %v2124 = vadd.f32 %v1923, %v2123
    %v2125 = vpop.f32.mrb[0].mxu0
    %v2126 = vadd.f32 %v1927, %v2125
    %2127 = vmatprep.mubr.f32.mxu0 %v1391
    %2128 = vmatmul.mubr.f32.gmra.mrb[0].mxu0 %v1390
    %v2129 = vpop.f32.mrb[0].mxu0
    %v2130 = vadd.f32 %v1923, %v2129
    %v2131 = vpop.f32.mrb[0].mxu0
    %v2132 = vadd.f32 %v1927, %v2131
    %2133 = vmatprep.mubr.f32.mxu0 %v1395
    %2134 = vmatmul.mubr.f32.gmra.mrb[0].mxu0 %v1394
    %v2135 = vpop.f32.mrb[0].mxu0
    %v2136 = vadd.f32 %v1923, %v2135
    %v2137 = vpop.f32.mrb[0].mxu0
    %v2138 = vadd.f32 %v1927, %v2137
    %2139 = vmatprep.mubr.f32.mxu0 %v1399
    %2140 = vmatmul.mubr.f32.gmra.mrb[0].mxu0 %v1398
    %v2141 = vpop.f32.mrb[0].mxu0
    %v2142 = vadd.f32 %v1923, %v2141
    %v2143 = vpop.f32.mrb[0].mxu0
    %v2144 = vadd.f32 %v1927, %v2143
    %2145 = vmatprep.mubr.f32.mxu0 %v1403
    %2146 = vmatmul.mubr.f32.gmra.mrb[0].mxu0 %v1402
    %v2147 = vpop.f32.mrb[0].mxu0
    %v2148 = vadd.f32 %v1923, %v2147
    %v2149 = vpop.f32.mrb[0].mxu0
    %v2150 = vadd.f32 %v1927, %v2149
    %2151 = vmatprep.mubr.f32.mxu0 %v1407
    %2152 = vmatmul.mubr.f32.gmra.mrb[0].mxu0 %v1406
    %v2153 = vpop.f32.mrb[0].mxu0
    %v2154 = vadd.f32 %v1923, %v2153
    %v2155 = vpop.f32.mrb[0].mxu0
    %v2156 = vadd.f32 %v1927, %v2155
    %2157 = vmatprep.mubr.f32.mxu0 %v1411
    %2158 = vmatmul.mubr.f32.gmra.mrb[0].mxu0 %v1410
    %v2159 = vpop.f32.mrb[0].mxu0
    %v2160 = vadd.f32 %v1923, %v2159
    %v2161 = vpop.f32.mrb[0].mxu0
    %v2162 = vadd.f32 %v1927, %v2161
    %2163 = vmatprep.mubr.f32.mxu0 %v1415
    %2164 = vmatmul.mubr.f32.gmra.mrb[0].mxu0 %v1414
    %v2165 = vpop.f32.mrb[0].mxu0
    %v2166 = vadd.f32 %v1923, %v2165
    %v2167 = vpop.f32.mrb[0].mxu0
    %v2168 = vadd.f32 %v1927, %v2167
    %2169 = vmatprep.mubr.f32.mxu0 %v1419
    %2170 = vmatmul.mubr.f32.gmra.mrb[0].mxu0 %v1418
    %v2171 = vpop.f32.mrb[0].mxu0
    %v2172 = vadd.f32 %v1923, %v2171
    %v2173 = vpop.f32.mrb[0].mxu0
    %v2174 = vadd.f32 %v1927, %v2173
    %2175 = vmatprep.mubr.f32.mxu0 %v1423
    %2176 = vmatmul.mubr.f32.gmra.mrb[0].mxu0 %v1422
    %v2177 = vpop.f32.mrb[0].mxu0
    %v2178 = vadd.f32 %v1923, %v2177
    %v2179 = vpop.f32.mrb[0].mxu0
    %v2180 = vadd.f32 %v1927, %v2179
    %2181 = vmatprep.mubr.f32.mxu0 %v1427
    %2182 = vmatmul.mubr.f32.gmra.mrb[0].mxu0 %v1426
    %v2183 = vpop.f32.mrb[0].mxu0
    %v2184 = vadd.f32 %v1923, %v2183
    %v2185 = vpop.f32.mrb[0].mxu0
    %v2186 = vadd.f32 %v1927, %v2185
    %2187 = vmatprep.mubr.f32.mxu0 %v1431
    %2188 = vmatmul.mubr.f32.gmra.mrb[0].mxu0 %v1430
    %v2189 = vpop.f32.mrb[0].mxu0
    %v2190 = vadd.f32 %v1923, %v2189
    %v2191 = vpop.f32.mrb[0].mxu0
    %v2192 = vadd.f32 %v1927, %v2191
    %2193 = vmatprep.mubr.f32.mxu0 %v1435
    %2194 = vmatmul.mubr.f32.gmra.mrb[0].mxu0 %v1434
    %v2195 = vpop.f32.mrb[0].mxu0
    %v2196 = vadd.f32 %v1923, %v2195
    %v2197 = vpop.f32.mrb[0].mxu0
    %v2198 = vadd.f32 %v1927, %v2197
    %2199 = vmatprep.mubr.f32.mxu0 %v1439
    %2200 = vmatmul.mubr.f32.gmra.mrb[0].mxu0 %v1438
    %v2201 = vpop.f32.mrb[0].mxu0
    %v2202 = vadd.f32 %v1923, %v2201
    %v2203 = vpop.f32.mrb[0].mxu0
    %v2204 = vadd.f32 %v1927, %v2203
    %2205 = vmatprep.mubr.f32.mxu0 %v1443
    %2206 = vmatmul.mubr.f32.gmra.mrb[0].mxu0 %v1442
    %v2207 = vpop.f32.mrb[0].mxu0
    %v2208 = vadd.f32 %v1923, %v2207
    %v2209 = vpop.f32.mrb[0].mxu0
    %v2210 = vadd.f32 %v1927, %v2209
    %2211 = vmatprep.mubr.f32.mxu0 %v1447
    %2212 = vmatmul.mubr.f32.gmra.mrb[0].mxu0 %v1446
    %v2213 = vpop.f32.mrb[0].mxu0
    %v2214 = vadd.f32 %v1923, %v2213
    %v2215 = vpop.f32.mrb[0].mxu0
    %v2216 = vadd.f32 %v1927, %v2215
    %2217 = vmatprep.mubr.f32.mxu0 %v1451
    %2218 = vmatmul.mubr.f32.gmra.mrb[0].mxu0 %v1450
    %v2219 = vpop.f32.mrb[0].mxu0
    %v2220 = vadd.f32 %v1923, %v2219
    %v2221 = vpop.f32.mrb[0].mxu0
    %v2222 = vadd.f32 %v1927, %v2221
    %2223 = vmatprep.mubr.f32.mxu0 %v1455
    %2224 = vmatmul.mubr.f32.gmra.mrb[0].mxu0 %v1454
    %v2225 = vpop.f32.mrb[0].mxu0
    %v2226 = vadd.f32 %v1923, %v2225
    %v2227 = vpop.f32.mrb[0].mxu0
    %v2228 = vadd.f32 %v1927, %v2227
    %2229 = vmatprep.mubr.f32.mxu0 %v1459
    %2230 = vmatmul.mubr.f32.gmra.mrb[0].mxu0 %v1458
    %v2231 = vpop.f32.mrb[0].mxu0
    %v2232 = vadd.f32 %v1923, %v2231
    %v2233 = vpop.f32.mrb[0].mxu0
    %v2234 = vadd.f32 %v1927, %v2233
    %2235 = vmatprep.mubr.f32.mxu0 %v1463
    %2236 = vmatmul.mubr.f32.gmra.mrb[0].mxu0 %v1462
    %v2237 = vpop.f32.mrb[0].mxu0
    %v2238 = vadd.f32 %v1923, %v2237
    %v2239 = vpop.f32.mrb[0].mxu0
    %v2240 = vadd.f32 %v1927, %v2239
    %2241 = vmatprep.mubr.f32.mxu0 %v1467
    %2242 = vmatmul.mubr.f32.gmra.mrb[0].mxu0 %v1466
    %v2243 = vpop.f32.mrb[0].mxu0
    %v2244 = vadd.f32 %v1923, %v2243
    %v2245 = vpop.f32.mrb[0].mxu0
    %v2246 = vadd.f32 %v1927, %v2245
    %2247 = vdwg.mxu0
    %2248 = vmatprep.subr.mxu0 %v1695
    %2249 = vmatpush1.msra.mxu0 %v1694
    %2250 = vmatprep.subr.mxu0 %v1702
    %2251 = vmatpush1.msra.mxu0 %v1701
    %2252 = vmatprep.subr.mxu0 %v1709
    %2253 = vmatpush1.msra.mxu0 %v1708
    %2254 = vmatprep.subr.mxu0 %v1716
    %2255 = vmatpush1.msra.mxu0 %v1715
    %2256 = vmatprep.subr.mxu0 %v1723
    %2257 = vmatpush1.msra.mxu0 %v1722
    %2258 = vmatprep.subr.mxu0 %v1730
    %2259 = vmatpush1.msra.mxu0 %v1729
    %2260 = vmatprep.subr.mxu0 %v1737
    %2261 = vmatpush1.msra.mxu0 %v1736
    %2262 = vmatprep.subr.mxu0 %v1744
    %2263 = vmatpush1.msra.mxu0 %v1743
    %2264 = vmatprep.subr.mxu0 %v1751
    %2265 = vmatpush1.msra.mxu0 %v1750
    %2266 = vmatprep.subr.mxu0 %v1758
    %2267 = vmatpush1.msra.mxu0 %v1757
    %2268 = vmatprep.subr.mxu0 %v1765
    %2269 = vmatpush1.msra.mxu0 %v1764
    %2270 = vmatprep.subr.mxu0 %v1772
    %2271 = vmatpush1.msra.mxu0 %v1771
    %2272 = vmatprep.subr.mxu0 %v1779
    %2273 = vmatpush1.msra.mxu0 %v1778
    %2274 = vmatprep.subr.mxu0 %v1786
    %2275 = vmatpush1.msra.mxu0 %v1785
    %2276 = vmatprep.subr.mxu0 %v1793
    %2277 = vmatpush1.msra.mxu0 %v1792
    %2278 = vmatprep.subr.mxu0 %v1800
    %2279 = vmatpush1.msra.mxu0 %v1799
    %2280 = vmatprep.subr.mxu0 %v1807
    %2281 = vmatpush1.msra.mxu0 %v1806
    %2282 = vmatprep.subr.mxu0 %v1814
    %2283 = vmatpush1.msra.mxu0 %v1813
    %2284 = vmatprep.subr.mxu0 %v1821
    %2285 = vmatpush1.msra.mxu0 %v1820
    %2286 = vmatprep.subr.mxu0 %v1828
    %2287 = vmatpush1.msra.mxu0 %v1827
    %2288 = vmatprep.subr.mxu0 %v1835
    %2289 = vmatpush1.msra.mxu0 %v1834
    %2290 = vmatprep.subr.mxu0 %v1842
    %2291 = vmatpush1.msra.mxu0 %v1841
    %2292 = vmatprep.subr.mxu0 %v1849
    %2293 = vmatpush1.msra.mxu0 %v1848
    %2294 = vmatprep.subr.mxu0 %v1856
    %2295 = vmatpush1.msra.mxu0 %v1855
    %2296 = vmatprep.subr.mxu0 %v1863
    %2297 = vmatpush1.msra.mxu0 %v1862
    %2298 = vmatprep.subr.mxu0 %v1870
    %2299 = vmatpush1.msra.mxu0 %v1869
    %2300 = vmatprep.subr.mxu0 %v1877
    %2301 = vmatpush1.msra.mxu0 %v1876
    %2302 = vmatprep.subr.mxu0 %v1884
    %2303 = vmatpush1.msra.mxu0 %v1883
    %2304 = vmatprep.subr.mxu0 %v1891
    %2305 = vmatpush1.msra.mxu0 %v1890
    %2306 = vmatprep.subr.mxu0 %v1898
    %2307 = vmatpush1.msra.mxu0 %v1897
    %2308 = vmatprep.subr.mxu0 %v1905
    %2309 = vmatpush1.msra.mxu0 %v1904
    %2310 = vmatprep.subr.mxu0 %v1912
    %2311 = vmatpush1.msra.mxu0 %v1911
    %2312 = vmatprep.mubr.f32.mxu0 %v1321
    %2313 = vmatmul.mubr.f32.gmra.mrb[0].mxu0 %v1320
    %v2314 = vpop.f32.mrb[0].mxu0
    %v2315 = vadd.f32 %v2022, %v2314
    %v2316 = vpop.f32.mrb[0].mxu0
    %v2317 = vadd.f32 %v2024, %v2316
    %2318 = vmatprep.mubr.f32.mxu0 %v1325
    %2319 = vmatmul.mubr.f32.gmra.mrb[0].mxu0 %v1324
    %v2320 = vpop.f32.mrb[0].mxu0
    %v2321 = vadd.f32 %v2028, %v2320
    %v2322 = vpop.f32.mrb[0].mxu0
    %v2323 = vadd.f32 %v2030, %v2322
    %2324 = vmatprep.mubr.f32.mxu0 %v1329
    %2325 = vmatmul.mubr.f32.gmra.mrb[0].mxu0 %v1328
    %v2326 = vpop.f32.mrb[0].mxu0
    %v2327 = vadd.f32 %v2034, %v2326
    %v2328 = vpop.f32.mrb[0].mxu0
    %v2329 = vadd.f32 %v2036, %v2328
    %2330 = vmatprep.mubr.f32.mxu0 %v1333
    %2331 = vmatmul.mubr.f32.gmra.mrb[0].mxu0 %v1332
    %v2332 = vpop.f32.mrb[0].mxu0
    %v2333 = vadd.f32 %v2040, %v2332
    %v2334 = vpop.f32.mrb[0].mxu0
    %v2335 = vadd.f32 %v2042, %v2334
    %2336 = vmatprep.mubr.f32.mxu0 %v1337
    %2337 = vmatmul.mubr.f32.gmra.mrb[0].mxu0 %v1336
    %v2338 = vpop.f32.mrb[0].mxu0
    %v2339 = vadd.f32 %v2046, %v2338
    %v2340 = vpop.f32.mrb[0].mxu0
    %v2341 = vadd.f32 %v2048, %v2340
    %2342 = vmatprep.mubr.f32.mxu0 %v1341
    %2343 = vmatmul.mubr.f32.gmra.mrb[0].mxu0 %v1340
    %v2344 = vpop.f32.mrb[0].mxu0
    %v2345 = vadd.f32 %v2052, %v2344
    %v2346 = vpop.f32.mrb[0].mxu0
    %v2347 = vadd.f32 %v2054, %v2346
    %2348 = vmatprep.mubr.f32.mxu0 %v1345
    %2349 = vmatmul.mubr.f32.gmra.mrb[0].mxu0 %v1344
    %v2350 = vpop.f32.mrb[0].mxu0
    %v2351 = vadd.f32 %v2058, %v2350
    %v2352 = vpop.f32.mrb[0].mxu0
    %v2353 = vadd.f32 %v2060, %v2352
    %2354 = vmatprep.mubr.f32.mxu0 %v1349
    %2355 = vmatmul.mubr.f32.gmra.mrb[0].mxu0 %v1348
    %v2356 = vpop.f32.mrb[0].mxu0
    %v2357 = vadd.f32 %v2064, %v2356
    %v2358 = vpop.f32.mrb[0].mxu0
    %v2359 = vadd.f32 %v2066, %v2358
    %2360 = vmatprep.mubr.f32.mxu0 %v1353
    %2361 = vmatmul.mubr.f32.gmra.mrb[0].mxu0 %v1352
    %v2362 = vpop.f32.mrb[0].mxu0
    %v2363 = vadd.f32 %v2070, %v2362
    %v2364 = vpop.f32.mrb[0].mxu0
    %v2365 = vadd.f32 %v2072, %v2364
    %2366 = vmatprep.mubr.f32.mxu0 %v1357
    %2367 = vmatmul.mubr.f32.gmra.mrb[0].mxu0 %v1356
    %v2368 = vpop.f32.mrb[0].mxu0
    %v2369 = vadd.f32 %v2076, %v2368
    %v2370 = vpop.f32.mrb[0].mxu0
    %v2371 = vadd.f32 %v2078, %v2370
    %2372 = vmatprep.mubr.f32.mxu0 %v1361
    %2373 = vmatmul.mubr.f32.gmra.mrb[0].mxu0 %v1360
    %v2374 = vpop.f32.mrb[0].mxu0
    %v2375 = vadd.f32 %v2082, %v2374
    %v2376 = vpop.f32.mrb[0].mxu0
    %v2377 = vadd.f32 %v2084, %v2376
    %2378 = vmatprep.mubr.f32.mxu0 %v1365
    %2379 = vmatmul.mubr.f32.gmra.mrb[0].mxu0 %v1364
    %v2380 = vpop.f32.mrb[0].mxu0
    %v2381 = vadd.f32 %v2088, %v2380
    %v2382 = vpop.f32.mrb[0].mxu0
    %v2383 = vadd.f32 %v2090, %v2382
    %2384 = vmatprep.mubr.f32.mxu0 %v1369
    %2385 = vmatmul.mubr.f32.gmra.mrb[0].mxu0 %v1368
    %v2386 = vpop.f32.mrb[0].mxu0
    %v2387 = vadd.f32 %v2094, %v2386
    %v2388 = vpop.f32.mrb[0].mxu0
    %v2389 = vadd.f32 %v2096, %v2388
    %2390 = vmatprep.mubr.f32.mxu0 %v1373
    %2391 = vmatmul.mubr.f32.gmra.mrb[0].mxu0 %v1372
    %v2392 = vpop.f32.mrb[0].mxu0
    %v2393 = vadd.f32 %v2100, %v2392
    %v2394 = vpop.f32.mrb[0].mxu0
    %v2395 = vadd.f32 %v2102, %v2394
    %2396 = vmatprep.mubr.f32.mxu0 %v1377
    %2397 = vmatmul.mubr.f32.gmra.mrb[0].mxu0 %v1376
    %v2398 = vpop.f32.mrb[0].mxu0
    %v2399 = vadd.f32 %v2106, %v2398
    %v2400 = vpop.f32.mrb[0].mxu0
    %v2401 = vadd.f32 %v2108, %v2400
    %2402 = vmatprep.mubr.f32.mxu0 %v1381
    %2403 = vmatmul.mubr.f32.gmra.mrb[0].mxu0 %v1380
    %v2404 = vpop.f32.mrb[0].mxu0
    %v2405 = vadd.f32 %v2112, %v2404
    %v2406 = vpop.f32.mrb[0].mxu0
    %v2407 = vadd.f32 %v2114, %v2406
    %2408 = vmatprep.mubr.f32.mxu0 %v1385
    %2409 = vmatmul.mubr.f32.gmra.mrb[0].mxu0 %v1384
    %v2410 = vpop.f32.mrb[0].mxu0
    %v2411 = vadd.f32 %v2118, %v2410
    %v2412 = vpop.f32.mrb[0].mxu0
    %v2413 = vadd.f32 %v2120, %v2412
    %2414 = vmatprep.mubr.f32.mxu0 %v1389
    %2415 = vmatmul.mubr.f32.gmra.mrb[0].mxu0 %v1388
    %v2416 = vpop.f32.mrb[0].mxu0
    %v2417 = vadd.f32 %v2124, %v2416
    %v2418 = vpop.f32.mrb[0].mxu0
    %v2419 = vadd.f32 %v2126, %v2418
    %2420 = vmatprep.mubr.f32.mxu0 %v1393
    %2421 = vmatmul.mubr.f32.gmra.mrb[0].mxu0 %v1392
    %v2422 = vpop.f32.mrb[0].mxu0
    %v2423 = vadd.f32 %v2130, %v2422
    %v2424 = vpop.f32.mrb[0].mxu0
    %v2425 = vadd.f32 %v2132, %v2424
    %2426 = vmatprep.mubr.f32.mxu0 %v1397
    %2427 = vmatmul.mubr.f32.gmra.mrb[0].mxu0 %v1396
    %v2428 = vpop.f32.mrb[0].mxu0
    %v2429 = vadd.f32 %v2136, %v2428
    %v2430 = vpop.f32.mrb[0].mxu0
    %v2431 = vadd.f32 %v2138, %v2430
    %2432 = vmatprep.mubr.f32.mxu0 %v1401
    %2433 = vmatmul.mubr.f32.gmra.mrb[0].mxu0 %v1400
    %v2434 = vpop.f32.mrb[0].mxu0
    %v2435 = vadd.f32 %v2142, %v2434
    %v2436 = vpop.f32.mrb[0].mxu0
    %v2437 = vadd.f32 %v2144, %v2436
    %2438 = vmatprep.mubr.f32.mxu0 %v1405
    %2439 = vmatmul.mubr.f32.gmra.mrb[0].mxu0 %v1404
    %v2440 = vpop.f32.mrb[0].mxu0
    %v2441 = vadd.f32 %v2148, %v2440
    %v2442 = vpop.f32.mrb[0].mxu0
    %v2443 = vadd.f32 %v2150, %v2442
    %2444 = vmatprep.mubr.f32.mxu0 %v1409
    %2445 = vmatmul.mubr.f32.gmra.mrb[0].mxu0 %v1408
    %v2446 = vpop.f32.mrb[0].mxu0
    %v2447 = vadd.f32 %v2154, %v2446
    %v2448 = vpop.f32.mrb[0].mxu0
    %v2449 = vadd.f32 %v2156, %v2448
    %2450 = vmatprep.mubr.f32.mxu0 %v1413
    %2451 = vmatmul.mubr.f32.gmra.mrb[0].mxu0 %v1412
    %v2452 = vpop.f32.mrb[0].mxu0
    %v2453 = vadd.f32 %v2160, %v2452
    %v2454 = vpop.f32.mrb[0].mxu0
    %v2455 = vadd.f32 %v2162, %v2454
    %2456 = vmatprep.mubr.f32.mxu0 %v1417
    %2457 = vmatmul.mubr.f32.gmra.mrb[0].mxu0 %v1416
    %v2458 = vpop.f32.mrb[0].mxu0
    %v2459 = vadd.f32 %v2166, %v2458
    %v2460 = vpop.f32.mrb[0].mxu0
    %v2461 = vadd.f32 %v2168, %v2460
    %2462 = vmatprep.mubr.f32.mxu0 %v1421
    %2463 = vmatmul.mubr.f32.gmra.mrb[0].mxu0 %v1420
    %v2464 = vpop.f32.mrb[0].mxu0
    %v2465 = vadd.f32 %v2172, %v2464
    %v2466 = vpop.f32.mrb[0].mxu0
    %v2467 = vadd.f32 %v2174, %v2466
    %2468 = vmatprep.mubr.f32.mxu0 %v1425
    %2469 = vmatmul.mubr.f32.gmra.mrb[0].mxu0 %v1424
    %v2470 = vpop.f32.mrb[0].mxu0
    %v2471 = vadd.f32 %v2178, %v2470
    %v2472 = vpop.f32.mrb[0].mxu0
    %v2473 = vadd.f32 %v2180, %v2472
    %2474 = vmatprep.mubr.f32.mxu0 %v1429
    %2475 = vmatmul.mubr.f32.gmra.mrb[0].mxu0 %v1428
    %v2476 = vpop.f32.mrb[0].mxu0
    %v2477 = vadd.f32 %v2184, %v2476
    %v2478 = vpop.f32.mrb[0].mxu0
    %v2479 = vadd.f32 %v2186, %v2478
    %2480 = vmatprep.mubr.f32.mxu0 %v1433
    %2481 = vmatmul.mubr.f32.gmra.mrb[0].mxu0 %v1432
    %v2482 = vpop.f32.mrb[0].mxu0
    %v2483 = vadd.f32 %v2190, %v2482
    %v2484 = vpop.f32.mrb[0].mxu0
    %v2485 = vadd.f32 %v2192, %v2484
    %2486 = vmatprep.mubr.f32.mxu0 %v1437
    %2487 = vmatmul.mubr.f32.gmra.mrb[0].mxu0 %v1436
    %v2488 = vpop.f32.mrb[0].mxu0
    %v2489 = vadd.f32 %v2196, %v2488
    %v2490 = vpop.f32.mrb[0].mxu0
    %v2491 = vadd.f32 %v2198, %v2490
    %2492 = vmatprep.mubr.f32.mxu0 %v1441
    %2493 = vmatmul.mubr.f32.gmra.mrb[0].mxu0 %v1440
    %v2494 = vpop.f32.mrb[0].mxu0
    %v2495 = vadd.f32 %v2202, %v2494
    %v2496 = vpop.f32.mrb[0].mxu0
    %v2497 = vadd.f32 %v2204, %v2496
    %2498 = vmatprep.mubr.f32.mxu0 %v1445
    %2499 = vmatmul.mubr.f32.gmra.mrb[0].mxu0 %v1444
    %v2500 = vpop.f32.mrb[0].mxu0
    %v2501 = vadd.f32 %v2208, %v2500
    %v2502 = vpop.f32.mrb[0].mxu0
    %v2503 = vadd.f32 %v2210, %v2502
    %2504 = vmatprep.mubr.f32.mxu0 %v1449
    %2505 = vmatmul.mubr.f32.gmra.mrb[0].mxu0 %v1448
    %v2506 = vpop.f32.mrb[0].mxu0
    %v2507 = vadd.f32 %v2214, %v2506
    %v2508 = vpop.f32.mrb[0].mxu0
    %v2509 = vadd.f32 %v2216, %v2508
    %2510 = vmatprep.mubr.f32.mxu0 %v1453
    %2511 = vmatmul.mubr.f32.gmra.mrb[0].mxu0 %v1452
    %v2512 = vpop.f32.mrb[0].mxu0
    %v2513 = vadd.f32 %v2220, %v2512
    %v2514 = vpop.f32.mrb[0].mxu0
    %v2515 = vadd.f32 %v2222, %v2514
    %2516 = vmatprep.mubr.f32.mxu0 %v1457
    %2517 = vmatmul.mubr.f32.gmra.mrb[0].mxu0 %v1456
    %v2518 = vpop.f32.mrb[0].mxu0
    %v2519 = vadd.f32 %v2226, %v2518
    %v2520 = vpop.f32.mrb[0].mxu0
    %v2521 = vadd.f32 %v2228, %v2520
    %2522 = vmatprep.mubr.f32.mxu0 %v1461
    %2523 = vmatmul.mubr.f32.gmra.mrb[0].mxu0 %v1460
    %v2524 = vpop.f32.mrb[0].mxu0
    %v2525 = vadd.f32 %v2232, %v2524
    %v2526 = vpop.f32.mrb[0].mxu0
    %v2527 = vadd.f32 %v2234, %v2526
    %2528 = vmatprep.mubr.f32.mxu0 %v1465
    %2529 = vmatmul.mubr.f32.gmra.mrb[0].mxu0 %v1464
    %v2530 = vpop.f32.mrb[0].mxu0
    %v2531 = vadd.f32 %v2238, %v2530
    %v2532 = vpop.f32.mrb[0].mxu0
    %v2533 = vadd.f32 %v2240, %v2532
    %2534 = vmatprep.mubr.f32.mxu0 %v1469
    %2535 = vmatmul.mubr.f32.gmra.mrb[0].mxu0 %v1468
    %v2536 = vpop.f32.mrb[0].mxu0
    %v2537 = vadd.f32 %v2244, %v2536
    %v2538 = vpop.f32.mrb[0].mxu0
    %v2539 = vadd.f32 %v2246, %v2538
    %2540 = vdwg.mxu0
    %2541 = vmatprep.subr.mxu0 %v1473
    %2542 = vmatpush1.msra.mxu0 %v1472
    %2543 = vmatprep.subr.mxu0 %v1480
    %2544 = vmatpush1.msra.mxu0 %v1479
    %2545 = vmatprep.subr.mxu0 %v1487
    %2546 = vmatpush1.msra.mxu0 %v1486
    %2547 = vmatprep.subr.mxu0 %v1494
    %2548 = vmatpush1.msra.mxu0 %v1493
    %2549 = vmatprep.subr.mxu0 %v1501
    %2550 = vmatpush1.msra.mxu0 %v1500
    %2551 = vmatprep.subr.mxu0 %v1508
    %2552 = vmatpush1.msra.mxu0 %v1507
    %2553 = vmatprep.subr.mxu0 %v1515
    %2554 = vmatpush1.msra.mxu0 %v1514
    %2555 = vmatprep.subr.mxu0 %v1522
    %2556 = vmatpush1.msra.mxu0 %v1521
    %2557 = vmatprep.subr.mxu0 %v1529
    %2558 = vmatpush1.msra.mxu0 %v1528
    %2559 = vmatprep.subr.mxu0 %v1536
    %2560 = vmatpush1.msra.mxu0 %v1535
    %2561 = vmatprep.subr.mxu0 %v1543
    %2562 = vmatpush1.msra.mxu0 %v1542
    %2563 = vmatprep.subr.mxu0 %v1550
    %2564 = vmatpush1.msra.mxu0 %v1549
    %2565 = vmatprep.subr.mxu0 %v1557
    %2566 = vmatpush1.msra.mxu0 %v1556
    %2567 = vmatprep.subr.mxu0 %v1564
    %2568 = vmatpush1.msra.mxu0 %v1563
    %2569 = vmatprep.subr.mxu0 %v1571
    %2570 = vmatpush1.msra.mxu0 %v1570
    %2571 = vmatprep.subr.mxu0 %v1578
    %2572 = vmatpush1.msra.mxu0 %v1577
    %2573 = vmatprep.subr.mxu0 %v1585
    %2574 = vmatpush1.msra.mxu0 %v1584
    %2575 = vmatprep.subr.mxu0 %v1592
    %2576 = vmatpush1.msra.mxu0 %v1591
    %2577 = vmatprep.subr.mxu0 %v1599
    %2578 = vmatpush1.msra.mxu0 %v1598
    %2579 = vmatprep.subr.mxu0 %v1606
    %2580 = vmatpush1.msra.mxu0 %v1605
    %2581 = vmatprep.subr.mxu0 %v1613
    %2582 = vmatpush1.msra.mxu0 %v1612
    %2583 = vmatprep.subr.mxu0 %v1620
    %2584 = vmatpush1.msra.mxu0 %v1619
    %2585 = vmatprep.subr.mxu0 %v1627
    %2586 = vmatpush1.msra.mxu0 %v1626
    %2587 = vmatprep.subr.mxu0 %v1634
    %2588 = vmatpush1.msra.mxu0 %v1633
    %2589 = vmatprep.subr.mxu0 %v1641
    %2590 = vmatpush1.msra.mxu0 %v1640
    %2591 = vmatprep.subr.mxu0 %v1648
    %2592 = vmatpush1.msra.mxu0 %v1647
    %2593 = vmatprep.subr.mxu0 %v1655
    %2594 = vmatpush1.msra.mxu0 %v1654
    %2595 = vmatprep.subr.mxu0 %v1662
    %2596 = vmatpush1.msra.mxu0 %v1661
    %2597 = vmatprep.subr.mxu0 %v1669
    %2598 = vmatpush1.msra.mxu0 %v1668
    %2599 = vmatprep.subr.mxu0 %v1676
    %2600 = vmatpush1.msra.mxu0 %v1675
    %2601 = vmatprep.subr.mxu0 %v1683
    %2602 = vmatpush1.msra.mxu0 %v1682
    %2603 = vmatprep.subr.mxu0 %v1690
    %2604 = vmatpush1.msra.mxu0 %v1689
    %2605 = vmatprep.mubr.f32.mxu0 %v1319
    %2606 = vmatmul.mubr.f32.gmra.mrb[0].mxu0 %v1318
    %v2607 = vpop.f32.mrb[0].mxu0
    %v2608 = vadd.f32 %v1931, %v2607
    %v2609 = vpop.f32.mrb[0].mxu0
    %v2610 = vadd.f32 %v1935, %v2609
    %2611 = vmatprep.mubr.f32.mxu0 %v1323
    %2612 = vmatmul.mubr.f32.gmra.mrb[0].mxu0 %v1322
    %v2613 = vpop.f32.mrb[0].mxu0
    %v2614 = vadd.f32 %v1931, %v2613
    %v2615 = vpop.f32.mrb[0].mxu0
    %v2616 = vadd.f32 %v1935, %v2615
    %2617 = vmatprep.mubr.f32.mxu0 %v1327
    %2618 = vmatmul.mubr.f32.gmra.mrb[0].mxu0 %v1326
    %v2619 = vpop.f32.mrb[0].mxu0
    %v2620 = vadd.f32 %v1931, %v2619
    %v2621 = vpop.f32.mrb[0].mxu0
    %v2622 = vadd.f32 %v1935, %v2621
    %2623 = vmatprep.mubr.f32.mxu0 %v1331
    %2624 = vmatmul.mubr.f32.gmra.mrb[0].mxu0 %v1330
    %v2625 = vpop.f32.mrb[0].mxu0
    %v2626 = vadd.f32 %v1931, %v2625
    %v2627 = vpop.f32.mrb[0].mxu0
    %v2628 = vadd.f32 %v1935, %v2627
    %2629 = vmatprep.mubr.f32.mxu0 %v1335
    %2630 = vmatmul.mubr.f32.gmra.mrb[0].mxu0 %v1334
    %v2631 = vpop.f32.mrb[0].mxu0
    %v2632 = vadd.f32 %v1931, %v2631
    %v2633 = vpop.f32.mrb[0].mxu0
    %v2634 = vadd.f32 %v1935, %v2633
    %2635 = vmatprep.mubr.f32.mxu0 %v1339
    %2636 = vmatmul.mubr.f32.gmra.mrb[0].mxu0 %v1338
    %v2637 = vpop.f32.mrb[0].mxu0
    %v2638 = vadd.f32 %v1931, %v2637
    %v2639 = vpop.f32.mrb[0].mxu0
    %v2640 = vadd.f32 %v1935, %v2639
    %2641 = vmatprep.mubr.f32.mxu0 %v1343
    %2642 = vmatmul.mubr.f32.gmra.mrb[0].mxu0 %v1342
    %v2643 = vpop.f32.mrb[0].mxu0
    %v2644 = vadd.f32 %v1931, %v2643
    %v2645 = vpop.f32.mrb[0].mxu0
    %v2646 = vadd.f32 %v1935, %v2645
    %2647 = vmatprep.mubr.f32.mxu0 %v1347
    %2648 = vmatmul.mubr.f32.gmra.mrb[0].mxu0 %v1346
    %v2649 = vpop.f32.mrb[0].mxu0
    %v2650 = vadd.f32 %v1931, %v2649
    %v2651 = vpop.f32.mrb[0].mxu0
    %v2652 = vadd.f32 %v1935, %v2651
    %2653 = vmatprep.mubr.f32.mxu0 %v1351
    %2654 = vmatmul.mubr.f32.gmra.mrb[0].mxu0 %v1350
    %v2655 = vpop.f32.mrb[0].mxu0
    %v2656 = vadd.f32 %v1931, %v2655
    %v2657 = vpop.f32.mrb[0].mxu0
    %v2658 = vadd.f32 %v1935, %v2657
    %2659 = vmatprep.mubr.f32.mxu0 %v1355
    %2660 = vmatmul.mubr.f32.gmra.mrb[0].mxu0 %v1354
    %v2661 = vpop.f32.mrb[0].mxu0
    %v2662 = vadd.f32 %v1931, %v2661
    %v2663 = vpop.f32.mrb[0].mxu0
    %v2664 = vadd.f32 %v1935, %v2663
    %2665 = vmatprep.mubr.f32.mxu0 %v1359
    %2666 = vmatmul.mubr.f32.gmra.mrb[0].mxu0 %v1358
    %v2667 = vpop.f32.mrb[0].mxu0
    %v2668 = vadd.f32 %v1931, %v2667
    %v2669 = vpop.f32.mrb[0].mxu0
    %v2670 = vadd.f32 %v1935, %v2669
    %2671 = vmatprep.mubr.f32.mxu0 %v1363
    %2672 = vmatmul.mubr.f32.gmra.mrb[0].mxu0 %v1362
    %v2673 = vpop.f32.mrb[0].mxu0
    %v2674 = vadd.f32 %v1931, %v2673
    %v2675 = vpop.f32.mrb[0].mxu0
    %v2676 = vadd.f32 %v1935, %v2675
    %2677 = vmatprep.mubr.f32.mxu0 %v1367
    %2678 = vmatmul.mubr.f32.gmra.mrb[0].mxu0 %v1366
    %v2679 = vpop.f32.mrb[0].mxu0
    %v2680 = vadd.f32 %v1931, %v2679
    %v2681 = vpop.f32.mrb[0].mxu0
    %v2682 = vadd.f32 %v1935, %v2681
    %2683 = vmatprep.mubr.f32.mxu0 %v1371
    %2684 = vmatmul.mubr.f32.gmra.mrb[0].mxu0 %v1370
    %v2685 = vpop.f32.mrb[0].mxu0
    %v2686 = vadd.f32 %v1931, %v2685
    %v2687 = vpop.f32.mrb[0].mxu0
    %v2688 = vadd.f32 %v1935, %v2687
    %2689 = vmatprep.mubr.f32.mxu0 %v1375
    %2690 = vmatmul.mubr.f32.gmra.mrb[0].mxu0 %v1374
    %v2691 = vpop.f32.mrb[0].mxu0
    %v2692 = vadd.f32 %v1931, %v2691
    %v2693 = vpop.f32.mrb[0].mxu0
    %v2694 = vadd.f32 %v1935, %v2693
    %2695 = vmatprep.mubr.f32.mxu0 %v1379
    %2696 = vmatmul.mubr.f32.gmra.mrb[0].mxu0 %v1378
    %v2697 = vpop.f32.mrb[0].mxu0
    %v2698 = vadd.f32 %v1931, %v2697
    %v2699 = vpop.f32.mrb[0].mxu0
    %v2700 = vadd.f32 %v1935, %v2699
    %2701 = vmatprep.mubr.f32.mxu0 %v1383
    %2702 = vmatmul.mubr.f32.gmra.mrb[0].mxu0 %v1382
    %v2703 = vpop.f32.mrb[0].mxu0
    %v2704 = vadd.f32 %v1931, %v2703
    %v2705 = vpop.f32.mrb[0].mxu0
    %v2706 = vadd.f32 %v1935, %v2705
    %2707 = vmatprep.mubr.f32.mxu0 %v1387
    %2708 = vmatmul.mubr.f32.gmra.mrb[0].mxu0 %v1386
    %v2709 = vpop.f32.mrb[0].mxu0
    %v2710 = vadd.f32 %v1931, %v2709
    %v2711 = vpop.f32.mrb[0].mxu0
    %v2712 = vadd.f32 %v1935, %v2711
    %2713 = vmatprep.mubr.f32.mxu0 %v1391
    %2714 = vmatmul.mubr.f32.gmra.mrb[0].mxu0 %v1390
    %v2715 = vpop.f32.mrb[0].mxu0
    %v2716 = vadd.f32 %v1931, %v2715
    %v2717 = vpop.f32.mrb[0].mxu0
    %v2718 = vadd.f32 %v1935, %v2717
    %2719 = vmatprep.mubr.f32.mxu0 %v1395
    %2720 = vmatmul.mubr.f32.gmra.mrb[0].mxu0 %v1394
    %v2721 = vpop.f32.mrb[0].mxu0
    %v2722 = vadd.f32 %v1931, %v2721
    %v2723 = vpop.f32.mrb[0].mxu0
    %v2724 = vadd.f32 %v1935, %v2723
    %2725 = vmatprep.mubr.f32.mxu0 %v1399
    %2726 = vmatmul.mubr.f32.gmra.mrb[0].mxu0 %v1398
    %v2727 = vpop.f32.mrb[0].mxu0
    %v2728 = vadd.f32 %v1931, %v2727
    %v2729 = vpop.f32.mrb[0].mxu0
    %v2730 = vadd.f32 %v1935, %v2729
    %2731 = vmatprep.mubr.f32.mxu0 %v1403
    %2732 = vmatmul.mubr.f32.gmra.mrb[0].mxu0 %v1402
    %v2733 = vpop.f32.mrb[0].mxu0
    %v2734 = vadd.f32 %v1931, %v2733
    %v2735 = vpop.f32.mrb[0].mxu0
    %v2736 = vadd.f32 %v1935, %v2735
    %2737 = vmatprep.mubr.f32.mxu0 %v1407
    %2738 = vmatmul.mubr.f32.gmra.mrb[0].mxu0 %v1406
    %v2739 = vpop.f32.mrb[0].mxu0
    %v2740 = vadd.f32 %v1931, %v2739
    %v2741 = vpop.f32.mrb[0].mxu0
    %v2742 = vadd.f32 %v1935, %v2741
    %2743 = vmatprep.mubr.f32.mxu0 %v1411
    %2744 = vmatmul.mubr.f32.gmra.mrb[0].mxu0 %v1410
    %v2745 = vpop.f32.mrb[0].mxu0
    %v2746 = vadd.f32 %v1931, %v2745
    %v2747 = vpop.f32.mrb[0].mxu0
    %v2748 = vadd.f32 %v1935, %v2747
    %2749 = vmatprep.mubr.f32.mxu0 %v1415
    %2750 = vmatmul.mubr.f32.gmra.mrb[0].mxu0 %v1414
    %v2751 = vpop.f32.mrb[0].mxu0
    %v2752 = vadd.f32 %v1931, %v2751
    %v2753 = vpop.f32.mrb[0].mxu0
    %v2754 = vadd.f32 %v1935, %v2753
    %2755 = vmatprep.mubr.f32.mxu0 %v1419
    %2756 = vmatmul.mubr.f32.gmra.mrb[0].mxu0 %v1418
    %v2757 = vpop.f32.mrb[0].mxu0
    %v2758 = vadd.f32 %v1931, %v2757
    %v2759 = vpop.f32.mrb[0].mxu0
    %v2760 = vadd.f32 %v1935, %v2759
    %2761 = vmatprep.mubr.f32.mxu0 %v1423
    %2762 = vmatmul.mubr.f32.gmra.mrb[0].mxu0 %v1422
    %v2763 = vpop.f32.mrb[0].mxu0
    %v2764 = vadd.f32 %v1931, %v2763
    %v2765 = vpop.f32.mrb[0].mxu0
    %v2766 = vadd.f32 %v1935, %v2765
    %2767 = vmatprep.mubr.f32.mxu0 %v1427
    %2768 = vmatmul.mubr.f32.gmra.mrb[0].mxu0 %v1426
    %v2769 = vpop.f32.mrb[0].mxu0
    %v2770 = vadd.f32 %v1931, %v2769
    %v2771 = vpop.f32.mrb[0].mxu0
    %v2772 = vadd.f32 %v1935, %v2771
    %2773 = vmatprep.mubr.f32.mxu0 %v1431
    %2774 = vmatmul.mubr.f32.gmra.mrb[0].mxu0 %v1430
    %v2775 = vpop.f32.mrb[0].mxu0
    %v2776 = vadd.f32 %v1931, %v2775
    %v2777 = vpop.f32.mrb[0].mxu0
    %v2778 = vadd.f32 %v1935, %v2777
    %2779 = vmatprep.mubr.f32.mxu0 %v1435
    %2780 = vmatmul.mubr.f32.gmra.mrb[0].mxu0 %v1434
    %v2781 = vpop.f32.mrb[0].mxu0
    %v2782 = vadd.f32 %v1931, %v2781
    %v2783 = vpop.f32.mrb[0].mxu0
    %v2784 = vadd.f32 %v1935, %v2783
    %2785 = vmatprep.mubr.f32.mxu0 %v1439
    %2786 = vmatmul.mubr.f32.gmra.mrb[0].mxu0 %v1438
    %v2787 = vpop.f32.mrb[0].mxu0
    %v2788 = vadd.f32 %v1931, %v2787
    %v2789 = vpop.f32.mrb[0].mxu0
    %v2790 = vadd.f32 %v1935, %v2789
    %2791 = vmatprep.mubr.f32.mxu0 %v1443
    %2792 = vmatmul.mubr.f32.gmra.mrb[0].mxu0 %v1442
    %v2793 = vpop.f32.mrb[0].mxu0
    %v2794 = vadd.f32 %v1931, %v2793
    %v2795 = vpop.f32.mrb[0].mxu0
    %v2796 = vadd.f32 %v1935, %v2795
    %2797 = vmatprep.mubr.f32.mxu0 %v1447
    %2798 = vmatmul.mubr.f32.gmra.mrb[0].mxu0 %v1446
    %v2799 = vpop.f32.mrb[0].mxu0
    %v2800 = vadd.f32 %v1931, %v2799
    %v2801 = vpop.f32.mrb[0].mxu0
    %v2802 = vadd.f32 %v1935, %v2801
    %2803 = vmatprep.mubr.f32.mxu0 %v1451
    %2804 = vmatmul.mubr.f32.gmra.mrb[0].mxu0 %v1450
    %v2805 = vpop.f32.mrb[0].mxu0
    %v2806 = vadd.f32 %v1931, %v2805
    %v2807 = vpop.f32.mrb[0].mxu0
    %v2808 = vadd.f32 %v1935, %v2807
    %2809 = vmatprep.mubr.f32.mxu0 %v1455
    %2810 = vmatmul.mubr.f32.gmra.mrb[0].mxu0 %v1454
    %v2811 = vpop.f32.mrb[0].mxu0
    %v2812 = vadd.f32 %v1931, %v2811
    %v2813 = vpop.f32.mrb[0].mxu0
    %v2814 = vadd.f32 %v1935, %v2813
    %2815 = vmatprep.mubr.f32.mxu0 %v1459
    %2816 = vmatmul.mubr.f32.gmra.mrb[0].mxu0 %v1458
    %v2817 = vpop.f32.mrb[0].mxu0
    %v2818 = vadd.f32 %v1931, %v2817
    %v2819 = vpop.f32.mrb[0].mxu0
    %v2820 = vadd.f32 %v1935, %v2819
    %2821 = vmatprep.mubr.f32.mxu0 %v1463
    %2822 = vmatmul.mubr.f32.gmra.mrb[0].mxu0 %v1462
    %v2823 = vpop.f32.mrb[0].mxu0
    %v2824 = vadd.f32 %v1931, %v2823
    %v2825 = vpop.f32.mrb[0].mxu0
    %v2826 = vadd.f32 %v1935, %v2825
    %2827 = vmatprep.mubr.f32.mxu0 %v1467
    %2828 = vmatmul.mubr.f32.gmra.mrb[0].mxu0 %v1466
    %v2829 = vpop.f32.mrb[0].mxu0
    %v2830 = vadd.f32 %v1931, %v2829
    %v2831 = vpop.f32.mrb[0].mxu0
    %v2832 = vadd.f32 %v1935, %v2831
    %2833 = vdwg.mxu0
    %2834 = vmatprep.subr.mxu0 %v1697
    %2835 = vmatpush1.msra.mxu0 %v1696
    %2836 = vmatprep.subr.mxu0 %v1704
    %2837 = vmatpush1.msra.mxu0 %v1703
    %2838 = vmatprep.subr.mxu0 %v1711
    %2839 = vmatpush1.msra.mxu0 %v1710
    %2840 = vmatprep.subr.mxu0 %v1718
    %2841 = vmatpush1.msra.mxu0 %v1717
    %2842 = vmatprep.subr.mxu0 %v1725
    %2843 = vmatpush1.msra.mxu0 %v1724
    %2844 = vmatprep.subr.mxu0 %v1732
    %2845 = vmatpush1.msra.mxu0 %v1731
    %2846 = vmatprep.subr.mxu0 %v1739
    %2847 = vmatpush1.msra.mxu0 %v1738
    %2848 = vmatprep.subr.mxu0 %v1746
    %2849 = vmatpush1.msra.mxu0 %v1745
    %2850 = vmatprep.subr.mxu0 %v1753
    %2851 = vmatpush1.msra.mxu0 %v1752
    %2852 = vmatprep.subr.mxu0 %v1760
    %2853 = vmatpush1.msra.mxu0 %v1759
    %2854 = vmatprep.subr.mxu0 %v1767
    %2855 = vmatpush1.msra.mxu0 %v1766
    %2856 = vmatprep.subr.mxu0 %v1774
    %2857 = vmatpush1.msra.mxu0 %v1773
    %2858 = vmatprep.subr.mxu0 %v1781
    %2859 = vmatpush1.msra.mxu0 %v1780
    %2860 = vmatprep.subr.mxu0 %v1788
    %2861 = vmatpush1.msra.mxu0 %v1787
    %2862 = vmatprep.subr.mxu0 %v1795
    %2863 = vmatpush1.msra.mxu0 %v1794
    %2864 = vmatprep.subr.mxu0 %v1802
    %2865 = vmatpush1.msra.mxu0 %v1801
    %2866 = vmatprep.subr.mxu0 %v1809
    %2867 = vmatpush1.msra.mxu0 %v1808
    %2868 = vmatprep.subr.mxu0 %v1816
    %2869 = vmatpush1.msra.mxu0 %v1815
    %2870 = vmatprep.subr.mxu0 %v1823
    %2871 = vmatpush1.msra.mxu0 %v1822
    %2872 = vmatprep.subr.mxu0 %v1830
    %2873 = vmatpush1.msra.mxu0 %v1829
    %2874 = vmatprep.subr.mxu0 %v1837
    %2875 = vmatpush1.msra.mxu0 %v1836
    %2876 = vmatprep.subr.mxu0 %v1844
    %2877 = vmatpush1.msra.mxu0 %v1843
    %2878 = vmatprep.subr.mxu0 %v1851
    %2879 = vmatpush1.msra.mxu0 %v1850
    %2880 = vmatprep.subr.mxu0 %v1858
    %2881 = vmatpush1.msra.mxu0 %v1857
    %2882 = vmatprep.subr.mxu0 %v1865
    %2883 = vmatpush1.msra.mxu0 %v1864
    %2884 = vmatprep.subr.mxu0 %v1872
    %2885 = vmatpush1.msra.mxu0 %v1871
    %2886 = vmatprep.subr.mxu0 %v1879
    %2887 = vmatpush1.msra.mxu0 %v1878
    %2888 = vmatprep.subr.mxu0 %v1886
    %2889 = vmatpush1.msra.mxu0 %v1885
    %2890 = vmatprep.subr.mxu0 %v1893
    %2891 = vmatpush1.msra.mxu0 %v1892
    %2892 = vmatprep.subr.mxu0 %v1900
    %2893 = vmatpush1.msra.mxu0 %v1899
    %2894 = vmatprep.subr.mxu0 %v1907
    %2895 = vmatpush1.msra.mxu0 %v1906
    %2896 = vmatprep.subr.mxu0 %v1914
    %2897 = vmatpush1.msra.mxu0 %v1913
    %2898 = vmatprep.mubr.f32.mxu0 %v1321
    %2899 = vmatmul.mubr.f32.gmra.mrb[0].mxu0 %v1320
    %v2900 = vpop.f32.mrb[0].mxu0
    %v2901 = vadd.f32 %v2608, %v2900
    %v2902 = vpop.f32.mrb[0].mxu0
    %v2903 = vadd.f32 %v2610, %v2902
    %2904 = vmatprep.mubr.f32.mxu0 %v1325
    %2905 = vmatmul.mubr.f32.gmra.mrb[0].mxu0 %v1324
    %v2906 = vpop.f32.mrb[0].mxu0
    %v2907 = vadd.f32 %v2614, %v2906
    %v2908 = vpop.f32.mrb[0].mxu0
    %v2909 = vadd.f32 %v2616, %v2908
    %2910 = vmatprep.mubr.f32.mxu0 %v1329
    %2911 = vmatmul.mubr.f32.gmra.mrb[0].mxu0 %v1328
    %v2912 = vpop.f32.mrb[0].mxu0
    %v2913 = vadd.f32 %v2620, %v2912
    %v2914 = vpop.f32.mrb[0].mxu0
    %v2915 = vadd.f32 %v2622, %v2914
    %2916 = vmatprep.mubr.f32.mxu0 %v1333
    %2917 = vmatmul.mubr.f32.gmra.mrb[0].mxu0 %v1332
    %v2918 = vpop.f32.mrb[0].mxu0
    %v2919 = vadd.f32 %v2626, %v2918
    %v2920 = vpop.f32.mrb[0].mxu0
    %v2921 = vadd.f32 %v2628, %v2920
    %2922 = vmatprep.mubr.f32.mxu0 %v1337
    %2923 = vmatmul.mubr.f32.gmra.mrb[0].mxu0 %v1336
    %v2924 = vpop.f32.mrb[0].mxu0
    %v2925 = vadd.f32 %v2632, %v2924
    %v2926 = vpop.f32.mrb[0].mxu0
    %v2927 = vadd.f32 %v2634, %v2926
    %2928 = vmatprep.mubr.f32.mxu0 %v1341
    %2929 = vmatmul.mubr.f32.gmra.mrb[0].mxu0 %v1340
    %v2930 = vpop.f32.mrb[0].mxu0
    %v2931 = vadd.f32 %v2638, %v2930
    %v2932 = vpop.f32.mrb[0].mxu0
    %v2933 = vadd.f32 %v2640, %v2932
    %2934 = vmatprep.mubr.f32.mxu0 %v1345
    %2935 = vmatmul.mubr.f32.gmra.mrb[0].mxu0 %v1344
    %v2936 = vpop.f32.mrb[0].mxu0
    %v2937 = vadd.f32 %v2644, %v2936
    %v2938 = vpop.f32.mrb[0].mxu0
    %v2939 = vadd.f32 %v2646, %v2938
    %2940 = vmatprep.mubr.f32.mxu0 %v1349
    %2941 = vmatmul.mubr.f32.gmra.mrb[0].mxu0 %v1348
    %v2942 = vpop.f32.mrb[0].mxu0
    %v2943 = vadd.f32 %v2650, %v2942
    %v2944 = vpop.f32.mrb[0].mxu0
    %v2945 = vadd.f32 %v2652, %v2944
    %2946 = vmatprep.mubr.f32.mxu0 %v1353
    %2947 = vmatmul.mubr.f32.gmra.mrb[0].mxu0 %v1352
    %v2948 = vpop.f32.mrb[0].mxu0
    %v2949 = vadd.f32 %v2656, %v2948
    %v2950 = vpop.f32.mrb[0].mxu0
    %v2951 = vadd.f32 %v2658, %v2950
    %2952 = vmatprep.mubr.f32.mxu0 %v1357
    %2953 = vmatmul.mubr.f32.gmra.mrb[0].mxu0 %v1356
    %v2954 = vpop.f32.mrb[0].mxu0
    %v2955 = vadd.f32 %v2662, %v2954
    %v2956 = vpop.f32.mrb[0].mxu0
    %v2957 = vadd.f32 %v2664, %v2956
    %2958 = vmatprep.mubr.f32.mxu0 %v1361
    %2959 = vmatmul.mubr.f32.gmra.mrb[0].mxu0 %v1360
    %v2960 = vpop.f32.mrb[0].mxu0
    %v2961 = vadd.f32 %v2668, %v2960
    %v2962 = vpop.f32.mrb[0].mxu0
    %v2963 = vadd.f32 %v2670, %v2962
    %2964 = vmatprep.mubr.f32.mxu0 %v1365
    %2965 = vmatmul.mubr.f32.gmra.mrb[0].mxu0 %v1364
    %v2966 = vpop.f32.mrb[0].mxu0
    %v2967 = vadd.f32 %v2674, %v2966
    %v2968 = vpop.f32.mrb[0].mxu0
    %v2969 = vadd.f32 %v2676, %v2968
    %2970 = vmatprep.mubr.f32.mxu0 %v1369
    %2971 = vmatmul.mubr.f32.gmra.mrb[0].mxu0 %v1368
    %v2972 = vpop.f32.mrb[0].mxu0
    %v2973 = vadd.f32 %v2680, %v2972
    %v2974 = vpop.f32.mrb[0].mxu0
    %v2975 = vadd.f32 %v2682, %v2974
    %2976 = vmatprep.mubr.f32.mxu0 %v1373
    %2977 = vmatmul.mubr.f32.gmra.mrb[0].mxu0 %v1372
    %v2978 = vpop.f32.mrb[0].mxu0
    %v2979 = vadd.f32 %v2686, %v2978
    %v2980 = vpop.f32.mrb[0].mxu0
    %v2981 = vadd.f32 %v2688, %v2980
    %2982 = vmatprep.mubr.f32.mxu0 %v1377
    %2983 = vmatmul.mubr.f32.gmra.mrb[0].mxu0 %v1376
    %v2984 = vpop.f32.mrb[0].mxu0
    %v2985 = vadd.f32 %v2692, %v2984
    %v2986 = vpop.f32.mrb[0].mxu0
    %v2987 = vadd.f32 %v2694, %v2986
    %2988 = vmatprep.mubr.f32.mxu0 %v1381
    %2989 = vmatmul.mubr.f32.gmra.mrb[0].mxu0 %v1380
    %v2990 = vpop.f32.mrb[0].mxu0
    %v2991 = vadd.f32 %v2698, %v2990
    %v2992 = vpop.f32.mrb[0].mxu0
    %v2993 = vadd.f32 %v2700, %v2992
    %2994 = vmatprep.mubr.f32.mxu0 %v1385
    %2995 = vmatmul.mubr.f32.gmra.mrb[0].mxu0 %v1384
    %v2996 = vpop.f32.mrb[0].mxu0
    %v2997 = vadd.f32 %v2704, %v2996
    %v2998 = vpop.f32.mrb[0].mxu0
    %v2999 = vadd.f32 %v2706, %v2998
    %3000 = vmatprep.mubr.f32.mxu0 %v1389
    %3001 = vmatmul.mubr.f32.gmra.mrb[0].mxu0 %v1388
    %v3002 = vpop.f32.mrb[0].mxu0
    %v3003 = vadd.f32 %v2710, %v3002
    %v3004 = vpop.f32.mrb[0].mxu0
    %v3005 = vadd.f32 %v2712, %v3004
    %3006 = vmatprep.mubr.f32.mxu0 %v1393
    %3007 = vmatmul.mubr.f32.gmra.mrb[0].mxu0 %v1392
    %v3008 = vpop.f32.mrb[0].mxu0
    %v3009 = vadd.f32 %v2716, %v3008
    %v3010 = vpop.f32.mrb[0].mxu0
    %v3011 = vadd.f32 %v2718, %v3010
    %3012 = vmatprep.mubr.f32.mxu0 %v1397
    %3013 = vmatmul.mubr.f32.gmra.mrb[0].mxu0 %v1396
    %v3014 = vpop.f32.mrb[0].mxu0
    %v3015 = vadd.f32 %v2722, %v3014
    %v3016 = vpop.f32.mrb[0].mxu0
    %v3017 = vadd.f32 %v2724, %v3016
    %3018 = vmatprep.mubr.f32.mxu0 %v1401
    %3019 = vmatmul.mubr.f32.gmra.mrb[0].mxu0 %v1400
    %v3020 = vpop.f32.mrb[0].mxu0
    %v3021 = vadd.f32 %v2728, %v3020
    %v3022 = vpop.f32.mrb[0].mxu0
    %v3023 = vadd.f32 %v2730, %v3022
    %3024 = vmatprep.mubr.f32.mxu0 %v1405
    %3025 = vmatmul.mubr.f32.gmra.mrb[0].mxu0 %v1404
    %v3026 = vpop.f32.mrb[0].mxu0
    %v3027 = vadd.f32 %v2734, %v3026
    %v3028 = vpop.f32.mrb[0].mxu0
    %v3029 = vadd.f32 %v2736, %v3028
    %3030 = vmatprep.mubr.f32.mxu0 %v1409
    %3031 = vmatmul.mubr.f32.gmra.mrb[0].mxu0 %v1408
    %v3032 = vpop.f32.mrb[0].mxu0
    %v3033 = vadd.f32 %v2740, %v3032
    %v3034 = vpop.f32.mrb[0].mxu0
    %v3035 = vadd.f32 %v2742, %v3034
    %3036 = vmatprep.mubr.f32.mxu0 %v1413
    %3037 = vmatmul.mubr.f32.gmra.mrb[0].mxu0 %v1412
    %v3038 = vpop.f32.mrb[0].mxu0
    %v3039 = vadd.f32 %v2746, %v3038
    %v3040 = vpop.f32.mrb[0].mxu0
    %v3041 = vadd.f32 %v2748, %v3040
    %3042 = vmatprep.mubr.f32.mxu0 %v1417
    %3043 = vmatmul.mubr.f32.gmra.mrb[0].mxu0 %v1416
    %v3044 = vpop.f32.mrb[0].mxu0
    %v3045 = vadd.f32 %v2752, %v3044
    %v3046 = vpop.f32.mrb[0].mxu0
    %v3047 = vadd.f32 %v2754, %v3046
    %3048 = vmatprep.mubr.f32.mxu0 %v1421
    %3049 = vmatmul.mubr.f32.gmra.mrb[0].mxu0 %v1420
    %v3050 = vpop.f32.mrb[0].mxu0
    %v3051 = vadd.f32 %v2758, %v3050
    %v3052 = vpop.f32.mrb[0].mxu0
    %v3053 = vadd.f32 %v2760, %v3052
    %3054 = vmatprep.mubr.f32.mxu0 %v1425
    %3055 = vmatmul.mubr.f32.gmra.mrb[0].mxu0 %v1424
    %v3056 = vpop.f32.mrb[0].mxu0
    %v3057 = vadd.f32 %v2764, %v3056
    %v3058 = vpop.f32.mrb[0].mxu0
    %v3059 = vadd.f32 %v2766, %v3058
    %3060 = vmatprep.mubr.f32.mxu0 %v1429
    %3061 = vmatmul.mubr.f32.gmra.mrb[0].mxu0 %v1428
    %v3062 = vpop.f32.mrb[0].mxu0
    %v3063 = vadd.f32 %v2770, %v3062
    %v3064 = vpop.f32.mrb[0].mxu0
    %v3065 = vadd.f32 %v2772, %v3064
    %3066 = vmatprep.mubr.f32.mxu0 %v1433
    %3067 = vmatmul.mubr.f32.gmra.mrb[0].mxu0 %v1432
    %v3068 = vpop.f32.mrb[0].mxu0
    %v3069 = vadd.f32 %v2776, %v3068
    %v3070 = vpop.f32.mrb[0].mxu0
    %v3071 = vadd.f32 %v2778, %v3070
    %3072 = vmatprep.mubr.f32.mxu0 %v1437
    %3073 = vmatmul.mubr.f32.gmra.mrb[0].mxu0 %v1436
    %v3074 = vpop.f32.mrb[0].mxu0
    %v3075 = vadd.f32 %v2782, %v3074
    %v3076 = vpop.f32.mrb[0].mxu0
    %v3077 = vadd.f32 %v2784, %v3076
    %3078 = vmatprep.mubr.f32.mxu0 %v1441
    %3079 = vmatmul.mubr.f32.gmra.mrb[0].mxu0 %v1440
    %v3080 = vpop.f32.mrb[0].mxu0
    %v3081 = vadd.f32 %v2788, %v3080
    %v3082 = vpop.f32.mrb[0].mxu0
    %v3083 = vadd.f32 %v2790, %v3082
    %3084 = vmatprep.mubr.f32.mxu0 %v1445
    %3085 = vmatmul.mubr.f32.gmra.mrb[0].mxu0 %v1444
    %v3086 = vpop.f32.mrb[0].mxu0
    %v3087 = vadd.f32 %v2794, %v3086
    %v3088 = vpop.f32.mrb[0].mxu0
    %v3089 = vadd.f32 %v2796, %v3088
    %3090 = vmatprep.mubr.f32.mxu0 %v1449
    %3091 = vmatmul.mubr.f32.gmra.mrb[0].mxu0 %v1448
    %v3092 = vpop.f32.mrb[0].mxu0
    %v3093 = vadd.f32 %v2800, %v3092
    %v3094 = vpop.f32.mrb[0].mxu0
    %v3095 = vadd.f32 %v2802, %v3094
    %3096 = vmatprep.mubr.f32.mxu0 %v1453
    %3097 = vmatmul.mubr.f32.gmra.mrb[0].mxu0 %v1452
    %v3098 = vpop.f32.mrb[0].mxu0
    %v3099 = vadd.f32 %v2806, %v3098
    %v3100 = vpop.f32.mrb[0].mxu0
    %v3101 = vadd.f32 %v2808, %v3100
    %3102 = vmatprep.mubr.f32.mxu0 %v1457
    %3103 = vmatmul.mubr.f32.gmra.mrb[0].mxu0 %v1456
    %v3104 = vpop.f32.mrb[0].mxu0
    %v3105 = vadd.f32 %v2812, %v3104
    %v3106 = vpop.f32.mrb[0].mxu0
    %v3107 = vadd.f32 %v2814, %v3106
    %3108 = vmatprep.mubr.f32.mxu0 %v1461
    %3109 = vmatmul.mubr.f32.gmra.mrb[0].mxu0 %v1460
    %v3110 = vpop.f32.mrb[0].mxu0
    %v3111 = vadd.f32 %v2818, %v3110
    %v3112 = vpop.f32.mrb[0].mxu0
    %v3113 = vadd.f32 %v2820, %v3112
    %3114 = vmatprep.mubr.f32.mxu0 %v1465
    %3115 = vmatmul.mubr.f32.gmra.mrb[0].mxu0 %v1464
    %v3116 = vpop.f32.mrb[0].mxu0
    %v3117 = vadd.f32 %v2824, %v3116
    %v3118 = vpop.f32.mrb[0].mxu0
    %v3119 = vadd.f32 %v2826, %v3118
    %3120 = vmatprep.mubr.f32.mxu0 %v1469
    %3121 = vmatmul.mubr.f32.gmra.mrb[0].mxu0 %v1468
    %v3122 = vpop.f32.mrb[0].mxu0
    %v3123 = vadd.f32 %v2830, %v3122
    %v3124 = vpop.f32.mrb[0].mxu0
    %v3125 = vadd.f32 %v2832, %v3124
    %3126 = vdwg.mxu0
    %3127 = vmatprep.subr.mxu0 %v1475
    %3128 = vmatpush1.msra.mxu0 %v1474
    %3129 = vmatprep.subr.mxu0 %v1482
    %3130 = vmatpush1.msra.mxu0 %v1481
    %3131 = vmatprep.subr.mxu0 %v1489
    %3132 = vmatpush1.msra.mxu0 %v1488
    %3133 = vmatprep.subr.mxu0 %v1496
    %3134 = vmatpush1.msra.mxu0 %v1495
    %3135 = vmatprep.subr.mxu0 %v1503
    %3136 = vmatpush1.msra.mxu0 %v1502
    %3137 = vmatprep.subr.mxu0 %v1510
    %3138 = vmatpush1.msra.mxu0 %v1509
    %3139 = vmatprep.subr.mxu0 %v1517
    %3140 = vmatpush1.msra.mxu0 %v1516
    %3141 = vmatprep.subr.mxu0 %v1524
    %3142 = vmatpush1.msra.mxu0 %v1523
    %3143 = vmatprep.subr.mxu0 %v1531
    %3144 = vmatpush1.msra.mxu0 %v1530
    %3145 = vmatprep.subr.mxu0 %v1538
    %3146 = vmatpush1.msra.mxu0 %v1537
    %3147 = vmatprep.subr.mxu0 %v1545
    %3148 = vmatpush1.msra.mxu0 %v1544
    %3149 = vmatprep.subr.mxu0 %v1552
    %3150 = vmatpush1.msra.mxu0 %v1551
    %3151 = vmatprep.subr.mxu0 %v1559
    %3152 = vmatpush1.msra.mxu0 %v1558
    %3153 = vmatprep.subr.mxu0 %v1566
    %3154 = vmatpush1.msra.mxu0 %v1565
    %3155 = vmatprep.subr.mxu0 %v1573
    %3156 = vmatpush1.msra.mxu0 %v1572
    %3157 = vmatprep.subr.mxu0 %v1580
    %3158 = vmatpush1.msra.mxu0 %v1579
    %3159 = vmatprep.subr.mxu0 %v1587
    %3160 = vmatpush1.msra.mxu0 %v1586
    %3161 = vmatprep.subr.mxu0 %v1594
    %3162 = vmatpush1.msra.mxu0 %v1593
    %3163 = vmatprep.subr.mxu0 %v1601
    %3164 = vmatpush1.msra.mxu0 %v1600
    %3165 = vmatprep.subr.mxu0 %v1608
    %3166 = vmatpush1.msra.mxu0 %v1607
    %3167 = vmatprep.subr.mxu0 %v1615
    %3168 = vmatpush1.msra.mxu0 %v1614
    %3169 = vmatprep.subr.mxu0 %v1622
    %3170 = vmatpush1.msra.mxu0 %v1621
    %3171 = vmatprep.subr.mxu0 %v1629
    %3172 = vmatpush1.msra.mxu0 %v1628
    %3173 = vmatprep.subr.mxu0 %v1636
    %3174 = vmatpush1.msra.mxu0 %v1635
    %3175 = vmatprep.subr.mxu0 %v1643
    %3176 = vmatpush1.msra.mxu0 %v1642
    %3177 = vmatprep.subr.mxu0 %v1650
    %3178 = vmatpush1.msra.mxu0 %v1649
    %3179 = vmatprep.subr.mxu0 %v1657
    %3180 = vmatpush1.msra.mxu0 %v1656
    %3181 = vmatprep.subr.mxu0 %v1664
    %3182 = vmatpush1.msra.mxu0 %v1663
    %3183 = vmatprep.subr.mxu0 %v1671
    %3184 = vmatpush1.msra.mxu0 %v1670
    %3185 = vmatprep.subr.mxu0 %v1678
    %3186 = vmatpush1.msra.mxu0 %v1677
    %3187 = vmatprep.subr.mxu0 %v1685
    %3188 = vmatpush1.msra.mxu0 %v1684
    %3189 = vmatprep.subr.mxu0 %v1692
    %3190 = vmatpush1.msra.mxu0 %v1691
    %3191 = vmatprep.mubr.f32.mxu0 %v1319
    %3192 = vmatmul.mubr.f32.gmra.mrb[0].mxu0 %v1318
    %v3193 = vpop.f32.mrb[0].mxu0
    %v3194 = vadd.f32 %v1939, %v3193
    %v3195 = vpop.f32.mrb[0].mxu0
    %v3196 = vadd.f32 %v1943, %v3195
    %3197 = vmatprep.mubr.f32.mxu0 %v1323
    %3198 = vmatmul.mubr.f32.gmra.mrb[0].mxu0 %v1322
    %v3199 = vpop.f32.mrb[0].mxu0
    %v3200 = vadd.f32 %v1939, %v3199
    %v3201 = vpop.f32.mrb[0].mxu0
    %v3202 = vadd.f32 %v1943, %v3201
    %3203 = vmatprep.mubr.f32.mxu0 %v1327
    %3204 = vmatmul.mubr.f32.gmra.mrb[0].mxu0 %v1326
    %v3205 = vpop.f32.mrb[0].mxu0
    %v3206 = vadd.f32 %v1939, %v3205
    %v3207 = vpop.f32.mrb[0].mxu0
    %v3208 = vadd.f32 %v1943, %v3207
    %3209 = vmatprep.mubr.f32.mxu0 %v1331
    %3210 = vmatmul.mubr.f32.gmra.mrb[0].mxu0 %v1330
    %v3211 = vpop.f32.mrb[0].mxu0
    %v3212 = vadd.f32 %v1939, %v3211
    %v3213 = vpop.f32.mrb[0].mxu0
    %v3214 = vadd.f32 %v1943, %v3213
    %3215 = vmatprep.mubr.f32.mxu0 %v1335
    %3216 = vmatmul.mubr.f32.gmra.mrb[0].mxu0 %v1334
    %v3217 = vpop.f32.mrb[0].mxu0
    %v3218 = vadd.f32 %v1939, %v3217
    %v3219 = vpop.f32.mrb[0].mxu0
    %v3220 = vadd.f32 %v1943, %v3219
    %3221 = vmatprep.mubr.f32.mxu0 %v1339
    %3222 = vmatmul.mubr.f32.gmra.mrb[0].mxu0 %v1338
    %v3223 = vpop.f32.mrb[0].mxu0
    %v3224 = vadd.f32 %v1939, %v3223
    %v3225 = vpop.f32.mrb[0].mxu0
    %v3226 = vadd.f32 %v1943, %v3225
    %3227 = vmatprep.mubr.f32.mxu0 %v1343
    %3228 = vmatmul.mubr.f32.gmra.mrb[0].mxu0 %v1342
    %v3229 = vpop.f32.mrb[0].mxu0
    %v3230 = vadd.f32 %v1939, %v3229
    %v3231 = vpop.f32.mrb[0].mxu0
    %v3232 = vadd.f32 %v1943, %v3231
    %3233 = vmatprep.mubr.f32.mxu0 %v1347
    %3234 = vmatmul.mubr.f32.gmra.mrb[0].mxu0 %v1346
    %v3235 = vpop.f32.mrb[0].mxu0
    %v3236 = vadd.f32 %v1939, %v3235
    %v3237 = vpop.f32.mrb[0].mxu0
    %v3238 = vadd.f32 %v1943, %v3237
    %3239 = vmatprep.mubr.f32.mxu0 %v1351
    %3240 = vmatmul.mubr.f32.gmra.mrb[0].mxu0 %v1350
    %v3241 = vpop.f32.mrb[0].mxu0
    %v3242 = vadd.f32 %v1939, %v3241
    %v3243 = vpop.f32.mrb[0].mxu0
    %v3244 = vadd.f32 %v1943, %v3243
    %3245 = vmatprep.mubr.f32.mxu0 %v1355
    %3246 = vmatmul.mubr.f32.gmra.mrb[0].mxu0 %v1354
    %v3247 = vpop.f32.mrb[0].mxu0
    %v3248 = vadd.f32 %v1939, %v3247
    %v3249 = vpop.f32.mrb[0].mxu0
    %v3250 = vadd.f32 %v1943, %v3249
    %3251 = vmatprep.mubr.f32.mxu0 %v1359
    %3252 = vmatmul.mubr.f32.gmra.mrb[0].mxu0 %v1358
    %v3253 = vpop.f32.mrb[0].mxu0
    %v3254 = vadd.f32 %v1939, %v3253
    %v3255 = vpop.f32.mrb[0].mxu0
    %v3256 = vadd.f32 %v1943, %v3255
    %3257 = vmatprep.mubr.f32.mxu0 %v1363
    %3258 = vmatmul.mubr.f32.gmra.mrb[0].mxu0 %v1362
    %v3259 = vpop.f32.mrb[0].mxu0
    %v3260 = vadd.f32 %v1939, %v3259
    %v3261 = vpop.f32.mrb[0].mxu0
    %v3262 = vadd.f32 %v1943, %v3261
    %3263 = vmatprep.mubr.f32.mxu0 %v1367
    %3264 = vmatmul.mubr.f32.gmra.mrb[0].mxu0 %v1366
    %v3265 = vpop.f32.mrb[0].mxu0
    %v3266 = vadd.f32 %v1939, %v3265
    %v3267 = vpop.f32.mrb[0].mxu0
    %v3268 = vadd.f32 %v1943, %v3267
    %3269 = vmatprep.mubr.f32.mxu0 %v1371
    %3270 = vmatmul.mubr.f32.gmra.mrb[0].mxu0 %v1370
    %v3271 = vpop.f32.mrb[0].mxu0
    %v3272 = vadd.f32 %v1939, %v3271
    %v3273 = vpop.f32.mrb[0].mxu0
    %v3274 = vadd.f32 %v1943, %v3273
    %3275 = vmatprep.mubr.f32.mxu0 %v1375
    %3276 = vmatmul.mubr.f32.gmra.mrb[0].mxu0 %v1374
    %v3277 = vpop.f32.mrb[0].mxu0
    %v3278 = vadd.f32 %v1939, %v3277
    %v3279 = vpop.f32.mrb[0].mxu0
    %v3280 = vadd.f32 %v1943, %v3279
    %3281 = vmatprep.mubr.f32.mxu0 %v1379
    %3282 = vmatmul.mubr.f32.gmra.mrb[0].mxu0 %v1378
    %v3283 = vpop.f32.mrb[0].mxu0
    %v3284 = vadd.f32 %v1939, %v3283
    %v3285 = vpop.f32.mrb[0].mxu0
    %v3286 = vadd.f32 %v1943, %v3285
    %3287 = vmatprep.mubr.f32.mxu0 %v1383
    %3288 = vmatmul.mubr.f32.gmra.mrb[0].mxu0 %v1382
    %v3289 = vpop.f32.mrb[0].mxu0
    %v3290 = vadd.f32 %v1939, %v3289
    %v3291 = vpop.f32.mrb[0].mxu0
    %v3292 = vadd.f32 %v1943, %v3291
    %3293 = vmatprep.mubr.f32.mxu0 %v1387
    %3294 = vmatmul.mubr.f32.gmra.mrb[0].mxu0 %v1386
    %v3295 = vpop.f32.mrb[0].mxu0
    %v3296 = vadd.f32 %v1939, %v3295
    %v3297 = vpop.f32.mrb[0].mxu0
    %v3298 = vadd.f32 %v1943, %v3297
    %3299 = vmatprep.mubr.f32.mxu0 %v1391
    %3300 = vmatmul.mubr.f32.gmra.mrb[0].mxu0 %v1390
    %v3301 = vpop.f32.mrb[0].mxu0
    %v3302 = vadd.f32 %v1939, %v3301
    %v3303 = vpop.f32.mrb[0].mxu0
    %v3304 = vadd.f32 %v1943, %v3303
    %3305 = vmatprep.mubr.f32.mxu0 %v1395
    %3306 = vmatmul.mubr.f32.gmra.mrb[0].mxu0 %v1394
    %v3307 = vpop.f32.mrb[0].mxu0
    %v3308 = vadd.f32 %v1939, %v3307
    %v3309 = vpop.f32.mrb[0].mxu0
    %v3310 = vadd.f32 %v1943, %v3309
    %3311 = vmatprep.mubr.f32.mxu0 %v1399
    %3312 = vmatmul.mubr.f32.gmra.mrb[0].mxu0 %v1398
    %v3313 = vpop.f32.mrb[0].mxu0
    %v3314 = vadd.f32 %v1939, %v3313
    %v3315 = vpop.f32.mrb[0].mxu0
    %v3316 = vadd.f32 %v1943, %v3315
    %3317 = vmatprep.mubr.f32.mxu0 %v1403
    %3318 = vmatmul.mubr.f32.gmra.mrb[0].mxu0 %v1402
    %v3319 = vpop.f32.mrb[0].mxu0
    %v3320 = vadd.f32 %v1939, %v3319
    %v3321 = vpop.f32.mrb[0].mxu0
    %v3322 = vadd.f32 %v1943, %v3321
    %3323 = vmatprep.mubr.f32.mxu0 %v1407
    %3324 = vmatmul.mubr.f32.gmra.mrb[0].mxu0 %v1406
    %v3325 = vpop.f32.mrb[0].mxu0
    %v3326 = vadd.f32 %v1939, %v3325
    %v3327 = vpop.f32.mrb[0].mxu0
    %v3328 = vadd.f32 %v1943, %v3327
    %3329 = vmatprep.mubr.f32.mxu0 %v1411
    %3330 = vmatmul.mubr.f32.gmra.mrb[0].mxu0 %v1410
    %v3331 = vpop.f32.mrb[0].mxu0
    %v3332 = vadd.f32 %v1939, %v3331
    %v3333 = vpop.f32.mrb[0].mxu0
    %v3334 = vadd.f32 %v1943, %v3333
    %3335 = vmatprep.mubr.f32.mxu0 %v1415
    %3336 = vmatmul.mubr.f32.gmra.mrb[0].mxu0 %v1414
    %v3337 = vpop.f32.mrb[0].mxu0
    %v3338 = vadd.f32 %v1939, %v3337
    %v3339 = vpop.f32.mrb[0].mxu0
    %v3340 = vadd.f32 %v1943, %v3339
    %3341 = vmatprep.mubr.f32.mxu0 %v1419
    %3342 = vmatmul.mubr.f32.gmra.mrb[0].mxu0 %v1418
    %v3343 = vpop.f32.mrb[0].mxu0
    %v3344 = vadd.f32 %v1939, %v3343
    %v3345 = vpop.f32.mrb[0].mxu0
    %v3346 = vadd.f32 %v1943, %v3345
    %3347 = vmatprep.mubr.f32.mxu0 %v1423
    %3348 = vmatmul.mubr.f32.gmra.mrb[0].mxu0 %v1422
    %v3349 = vpop.f32.mrb[0].mxu0
    %v3350 = vadd.f32 %v1939, %v3349
    %v3351 = vpop.f32.mrb[0].mxu0
    %v3352 = vadd.f32 %v1943, %v3351
    %3353 = vmatprep.mubr.f32.mxu0 %v1427
    %3354 = vmatmul.mubr.f32.gmra.mrb[0].mxu0 %v1426
    %v3355 = vpop.f32.mrb[0].mxu0
    %v3356 = vadd.f32 %v1939, %v3355
    %v3357 = vpop.f32.mrb[0].mxu0
    %v3358 = vadd.f32 %v1943, %v3357
    %3359 = vmatprep.mubr.f32.mxu0 %v1431
    %3360 = vmatmul.mubr.f32.gmra.mrb[0].mxu0 %v1430
    %v3361 = vpop.f32.mrb[0].mxu0
    %v3362 = vadd.f32 %v1939, %v3361
    %v3363 = vpop.f32.mrb[0].mxu0
    %v3364 = vadd.f32 %v1943, %v3363
    %3365 = vmatprep.mubr.f32.mxu0 %v1435
    %3366 = vmatmul.mubr.f32.gmra.mrb[0].mxu0 %v1434
    %v3367 = vpop.f32.mrb[0].mxu0
    %v3368 = vadd.f32 %v1939, %v3367
    %v3369 = vpop.f32.mrb[0].mxu0
    %v3370 = vadd.f32 %v1943, %v3369
    %3371 = vmatprep.mubr.f32.mxu0 %v1439
    %3372 = vmatmul.mubr.f32.gmra.mrb[0].mxu0 %v1438
    %v3373 = vpop.f32.mrb[0].mxu0
    %v3374 = vadd.f32 %v1939, %v3373
    %v3375 = vpop.f32.mrb[0].mxu0
    %v3376 = vadd.f32 %v1943, %v3375
    %3377 = vmatprep.mubr.f32.mxu0 %v1443
    %3378 = vmatmul.mubr.f32.gmra.mrb[0].mxu0 %v1442
    %v3379 = vpop.f32.mrb[0].mxu0
    %v3380 = vadd.f32 %v1939, %v3379
    %v3381 = vpop.f32.mrb[0].mxu0
    %v3382 = vadd.f32 %v1943, %v3381
    %3383 = vmatprep.mubr.f32.mxu0 %v1447
    %3384 = vmatmul.mubr.f32.gmra.mrb[0].mxu0 %v1446
    %v3385 = vpop.f32.mrb[0].mxu0
    %v3386 = vadd.f32 %v1939, %v3385
    %v3387 = vpop.f32.mrb[0].mxu0
    %v3388 = vadd.f32 %v1943, %v3387
    %3389 = vmatprep.mubr.f32.mxu0 %v1451
    %3390 = vmatmul.mubr.f32.gmra.mrb[0].mxu0 %v1450
    %v3391 = vpop.f32.mrb[0].mxu0
    %v3392 = vadd.f32 %v1939, %v3391
    %v3393 = vpop.f32.mrb[0].mxu0
    %v3394 = vadd.f32 %v1943, %v3393
    %3395 = vmatprep.mubr.f32.mxu0 %v1455
    %3396 = vmatmul.mubr.f32.gmra.mrb[0].mxu0 %v1454
    %v3397 = vpop.f32.mrb[0].mxu0
    %v3398 = vadd.f32 %v1939, %v3397
    %v3399 = vpop.f32.mrb[0].mxu0
    %v3400 = vadd.f32 %v1943, %v3399
    %3401 = vmatprep.mubr.f32.mxu0 %v1459
    %3402 = vmatmul.mubr.f32.gmra.mrb[0].mxu0 %v1458
    %v3403 = vpop.f32.mrb[0].mxu0
    %v3404 = vadd.f32 %v1939, %v3403
    %v3405 = vpop.f32.mrb[0].mxu0
    %v3406 = vadd.f32 %v1943, %v3405
    %3407 = vmatprep.mubr.f32.mxu0 %v1463
    %3408 = vmatmul.mubr.f32.gmra.mrb[0].mxu0 %v1462
    %v3409 = vpop.f32.mrb[0].mxu0
    %v3410 = vadd.f32 %v1939, %v3409
    %v3411 = vpop.f32.mrb[0].mxu0
    %v3412 = vadd.f32 %v1943, %v3411
    %3413 = vmatprep.mubr.f32.mxu0 %v1467
    %3414 = vmatmul.mubr.f32.gmra.mrb[0].mxu0 %v1466
    %v3415 = vpop.f32.mrb[0].mxu0
    %v3416 = vadd.f32 %v1939, %v3415
    %v3417 = vpop.f32.mrb[0].mxu0
    %v3418 = vadd.f32 %v1943, %v3417
    %3419 = vdwg.mxu0
    %3420 = vmatprep.subr.mxu0 %v1699
    %3421 = vmatpush1.msra.mxu0 %v1698
    %3422 = vmatprep.subr.mxu0 %v1706
    %3423 = vmatpush1.msra.mxu0 %v1705
    %3424 = vmatprep.subr.mxu0 %v1713
    %3425 = vmatpush1.msra.mxu0 %v1712
    %3426 = vmatprep.subr.mxu0 %v1720
    %3427 = vmatpush1.msra.mxu0 %v1719
    %3428 = vmatprep.subr.mxu0 %v1727
    %3429 = vmatpush1.msra.mxu0 %v1726
    %3430 = vmatprep.subr.mxu0 %v1734
    %3431 = vmatpush1.msra.mxu0 %v1733
    %3432 = vmatprep.subr.mxu0 %v1741
    %3433 = vmatpush1.msra.mxu0 %v1740
    %3434 = vmatprep.subr.mxu0 %v1748
    %3435 = vmatpush1.msra.mxu0 %v1747
    %3436 = vmatprep.subr.mxu0 %v1755
    %3437 = vmatpush1.msra.mxu0 %v1754
    %3438 = vmatprep.subr.mxu0 %v1762
    %3439 = vmatpush1.msra.mxu0 %v1761
    %3440 = vmatprep.subr.mxu0 %v1769
    %3441 = vmatpush1.msra.mxu0 %v1768
    %3442 = vmatprep.subr.mxu0 %v1776
    %3443 = vmatpush1.msra.mxu0 %v1775
    %3444 = vmatprep.subr.mxu0 %v1783
    %3445 = vmatpush1.msra.mxu0 %v1782
    %3446 = vmatprep.subr.mxu0 %v1790
    %3447 = vmatpush1.msra.mxu0 %v1789
    %3448 = vmatprep.subr.mxu0 %v1797
    %3449 = vmatpush1.msra.mxu0 %v1796
    %3450 = vmatprep.subr.mxu0 %v1804
    %3451 = vmatpush1.msra.mxu0 %v1803
    %3452 = vmatprep.subr.mxu0 %v1811
    %3453 = vmatpush1.msra.mxu0 %v1810
    %3454 = vmatprep.subr.mxu0 %v1818
    %3455 = vmatpush1.msra.mxu0 %v1817
    %3456 = vmatprep.subr.mxu0 %v1825
    %3457 = vmatpush1.msra.mxu0 %v1824
    %3458 = vmatprep.subr.mxu0 %v1832
    %3459 = vmatpush1.msra.mxu0 %v1831
    %3460 = vmatprep.subr.mxu0 %v1839
    %3461 = vmatpush1.msra.mxu0 %v1838
    %3462 = vmatprep.subr.mxu0 %v1846
    %3463 = vmatpush1.msra.mxu0 %v1845
    %3464 = vmatprep.subr.mxu0 %v1853
    %3465 = vmatpush1.msra.mxu0 %v1852
    %3466 = vmatprep.subr.mxu0 %v1860
    %3467 = vmatpush1.msra.mxu0 %v1859
    %3468 = vmatprep.subr.mxu0 %v1867
    %3469 = vmatpush1.msra.mxu0 %v1866
    %3470 = vmatprep.subr.mxu0 %v1874
    %3471 = vmatpush1.msra.mxu0 %v1873
    %3472 = vmatprep.subr.mxu0 %v1881
    %3473 = vmatpush1.msra.mxu0 %v1880
    %3474 = vmatprep.subr.mxu0 %v1888
    %3475 = vmatpush1.msra.mxu0 %v1887
    %3476 = vmatprep.subr.mxu0 %v1895
    %3477 = vmatpush1.msra.mxu0 %v1894
    %3478 = vmatprep.subr.mxu0 %v1902
    %3479 = vmatpush1.msra.mxu0 %v1901
    %3480 = vmatprep.subr.mxu0 %v1909
    %3481 = vmatpush1.msra.mxu0 %v1908
    %3482 = vmatprep.subr.mxu0 %v1916
    %3483 = vmatpush1.msra.mxu0 %v1915
    %3484 = vmatprep.mubr.f32.mxu0 %v1321
    %3485 = vmatmul.mubr.f32.gmra.mrb[0].mxu0 %v1320
    %v3486 = vpop.f32.mrb[0].mxu0
    %v3487 = vadd.f32 %v3194, %v3486
    %v3488 = vpop.f32.mrb[0].mxu0
    %v3489 = vadd.f32 %v3196, %v3488
    %3490 = vmatprep.mubr.f32.mxu0 %v1325
    %3491 = vmatmul.mubr.f32.gmra.mrb[0].mxu0 %v1324
    %v3492 = vpop.f32.mrb[0].mxu0
    %v3493 = vadd.f32 %v3200, %v3492
    %v3494 = vpop.f32.mrb[0].mxu0
    %v3495 = vadd.f32 %v3202, %v3494
    %3496 = vmatprep.mubr.f32.mxu0 %v1329
    %3497 = vmatmul.mubr.f32.gmra.mrb[0].mxu0 %v1328
    %v3498 = vpop.f32.mrb[0].mxu0
    %v3499 = vadd.f32 %v3206, %v3498
    %v3500 = vpop.f32.mrb[0].mxu0
    %v3501 = vadd.f32 %v3208, %v3500
    %3502 = vmatprep.mubr.f32.mxu0 %v1333
    %3503 = vmatmul.mubr.f32.gmra.mrb[0].mxu0 %v1332
    %v3504 = vpop.f32.mrb[0].mxu0
    %v3505 = vadd.f32 %v3212, %v3504
    %v3506 = vpop.f32.mrb[0].mxu0
    %v3507 = vadd.f32 %v3214, %v3506
    %3508 = vmatprep.mubr.f32.mxu0 %v1337
    %3509 = vmatmul.mubr.f32.gmra.mrb[0].mxu0 %v1336
    %v3510 = vpop.f32.mrb[0].mxu0
    %v3511 = vadd.f32 %v3218, %v3510
    %v3512 = vpop.f32.mrb[0].mxu0
    %v3513 = vadd.f32 %v3220, %v3512
    %3514 = vmatprep.mubr.f32.mxu0 %v1341
    %3515 = vmatmul.mubr.f32.gmra.mrb[0].mxu0 %v1340
    %v3516 = vpop.f32.mrb[0].mxu0
    %v3517 = vadd.f32 %v3224, %v3516
    %v3518 = vpop.f32.mrb[0].mxu0
    %v3519 = vadd.f32 %v3226, %v3518
    %3520 = vmatprep.mubr.f32.mxu0 %v1345
    %3521 = vmatmul.mubr.f32.gmra.mrb[0].mxu0 %v1344
    %v3522 = vpop.f32.mrb[0].mxu0
    %v3523 = vadd.f32 %v3230, %v3522
    %v3524 = vpop.f32.mrb[0].mxu0
    %v3525 = vadd.f32 %v3232, %v3524
    %3526 = vmatprep.mubr.f32.mxu0 %v1349
    %3527 = vmatmul.mubr.f32.gmra.mrb[0].mxu0 %v1348
    %v3528 = vpop.f32.mrb[0].mxu0
    %v3529 = vadd.f32 %v3236, %v3528
    %v3530 = vpop.f32.mrb[0].mxu0
    %v3531 = vadd.f32 %v3238, %v3530
    %3532 = vmatprep.mubr.f32.mxu0 %v1353
    %3533 = vmatmul.mubr.f32.gmra.mrb[0].mxu0 %v1352
    %v3534 = vpop.f32.mrb[0].mxu0
    %v3535 = vadd.f32 %v3242, %v3534
    %v3536 = vpop.f32.mrb[0].mxu0
    %v3537 = vadd.f32 %v3244, %v3536
    %3538 = vmatprep.mubr.f32.mxu0 %v1357
    %3539 = vmatmul.mubr.f32.gmra.mrb[0].mxu0 %v1356
    %v3540 = vpop.f32.mrb[0].mxu0
    %v3541 = vadd.f32 %v3248, %v3540
    %v3542 = vpop.f32.mrb[0].mxu0
    %v3543 = vadd.f32 %v3250, %v3542
    %3544 = vmatprep.mubr.f32.mxu0 %v1361
    %3545 = vmatmul.mubr.f32.gmra.mrb[0].mxu0 %v1360
    %v3546 = vpop.f32.mrb[0].mxu0
    %v3547 = vadd.f32 %v3254, %v3546
    %v3548 = vpop.f32.mrb[0].mxu0
    %v3549 = vadd.f32 %v3256, %v3548
    %3550 = vmatprep.mubr.f32.mxu0 %v1365
    %3551 = vmatmul.mubr.f32.gmra.mrb[0].mxu0 %v1364
    %v3552 = vpop.f32.mrb[0].mxu0
    %v3553 = vadd.f32 %v3260, %v3552
    %v3554 = vpop.f32.mrb[0].mxu0
    %v3555 = vadd.f32 %v3262, %v3554
    %3556 = vmatprep.mubr.f32.mxu0 %v1369
    %3557 = vmatmul.mubr.f32.gmra.mrb[0].mxu0 %v1368
    %v3558 = vpop.f32.mrb[0].mxu0
    %v3559 = vadd.f32 %v3266, %v3558
    %v3560 = vpop.f32.mrb[0].mxu0
    %v3561 = vadd.f32 %v3268, %v3560
    %3562 = vmatprep.mubr.f32.mxu0 %v1373
    %3563 = vmatmul.mubr.f32.gmra.mrb[0].mxu0 %v1372
    %v3564 = vpop.f32.mrb[0].mxu0
    %v3565 = vadd.f32 %v3272, %v3564
    %v3566 = vpop.f32.mrb[0].mxu0
    %v3567 = vadd.f32 %v3274, %v3566
    %3568 = vmatprep.mubr.f32.mxu0 %v1377
    %3569 = vmatmul.mubr.f32.gmra.mrb[0].mxu0 %v1376
    %v3570 = vpop.f32.mrb[0].mxu0
    %v3571 = vadd.f32 %v3278, %v3570
    %v3572 = vpop.f32.mrb[0].mxu0
    %v3573 = vadd.f32 %v3280, %v3572
    %3574 = vmatprep.mubr.f32.mxu0 %v1381
    %3575 = vmatmul.mubr.f32.gmra.mrb[0].mxu0 %v1380
    %v3576 = vpop.f32.mrb[0].mxu0
    %v3577 = vadd.f32 %v3284, %v3576
    %v3578 = vpop.f32.mrb[0].mxu0
    %v3579 = vadd.f32 %v3286, %v3578
    %3580 = vmatprep.mubr.f32.mxu0 %v1385
    %3581 = vmatmul.mubr.f32.gmra.mrb[0].mxu0 %v1384
    %v3582 = vpop.f32.mrb[0].mxu0
    %v3583 = vadd.f32 %v3290, %v3582
    %v3584 = vpop.f32.mrb[0].mxu0
    %v3585 = vadd.f32 %v3292, %v3584
    %3586 = vmatprep.mubr.f32.mxu0 %v1389
    %3587 = vmatmul.mubr.f32.gmra.mrb[0].mxu0 %v1388
    %v3588 = vpop.f32.mrb[0].mxu0
    %v3589 = vadd.f32 %v3296, %v3588
    %v3590 = vpop.f32.mrb[0].mxu0
    %v3591 = vadd.f32 %v3298, %v3590
    %3592 = vmatprep.mubr.f32.mxu0 %v1393
    %3593 = vmatmul.mubr.f32.gmra.mrb[0].mxu0 %v1392
    %v3594 = vpop.f32.mrb[0].mxu0
    %v3595 = vadd.f32 %v3302, %v3594
    %v3596 = vpop.f32.mrb[0].mxu0
    %v3597 = vadd.f32 %v3304, %v3596
    %3598 = vmatprep.mubr.f32.mxu0 %v1397
    %3599 = vmatmul.mubr.f32.gmra.mrb[0].mxu0 %v1396
    %v3600 = vpop.f32.mrb[0].mxu0
    %v3601 = vadd.f32 %v3308, %v3600
    %v3602 = vpop.f32.mrb[0].mxu0
    %v3603 = vadd.f32 %v3310, %v3602
    %3604 = vmatprep.mubr.f32.mxu0 %v1401
    %3605 = vmatmul.mubr.f32.gmra.mrb[0].mxu0 %v1400
    %v3606 = vpop.f32.mrb[0].mxu0
    %v3607 = vadd.f32 %v3314, %v3606
    %v3608 = vpop.f32.mrb[0].mxu0
    %v3609 = vadd.f32 %v3316, %v3608
    %3610 = vmatprep.mubr.f32.mxu0 %v1405
    %3611 = vmatmul.mubr.f32.gmra.mrb[0].mxu0 %v1404
    %v3612 = vpop.f32.mrb[0].mxu0
    %v3613 = vadd.f32 %v3320, %v3612
    %v3614 = vpop.f32.mrb[0].mxu0
    %v3615 = vadd.f32 %v3322, %v3614
    %3616 = vmatprep.mubr.f32.mxu0 %v1409
    %3617 = vmatmul.mubr.f32.gmra.mrb[0].mxu0 %v1408
    %v3618 = vpop.f32.mrb[0].mxu0
    %v3619 = vadd.f32 %v3326, %v3618
    %v3620 = vpop.f32.mrb[0].mxu0
    %v3621 = vadd.f32 %v3328, %v3620
    %3622 = vmatprep.mubr.f32.mxu0 %v1413
    %3623 = vmatmul.mubr.f32.gmra.mrb[0].mxu0 %v1412
    %v3624 = vpop.f32.mrb[0].mxu0
    %v3625 = vadd.f32 %v3332, %v3624
    %v3626 = vpop.f32.mrb[0].mxu0
    %v3627 = vadd.f32 %v3334, %v3626
    %3628 = vmatprep.mubr.f32.mxu0 %v1417
    %3629 = vmatmul.mubr.f32.gmra.mrb[0].mxu0 %v1416
    %v3630 = vpop.f32.mrb[0].mxu0
    %v3631 = vadd.f32 %v3338, %v3630
    %v3632 = vpop.f32.mrb[0].mxu0
    %v3633 = vadd.f32 %v3340, %v3632
    %3634 = vmatprep.mubr.f32.mxu0 %v1421
    %3635 = vmatmul.mubr.f32.gmra.mrb[0].mxu0 %v1420
    %v3636 = vpop.f32.mrb[0].mxu0
    %v3637 = vadd.f32 %v3344, %v3636
    %v3638 = vpop.f32.mrb[0].mxu0
    %v3639 = vadd.f32 %v3346, %v3638
    %3640 = vmatprep.mubr.f32.mxu0 %v1425
    %3641 = vmatmul.mubr.f32.gmra.mrb[0].mxu0 %v1424
    %v3642 = vpop.f32.mrb[0].mxu0
    %v3643 = vadd.f32 %v3350, %v3642
    %v3644 = vpop.f32.mrb[0].mxu0
    %v3645 = vadd.f32 %v3352, %v3644
    %3646 = vmatprep.mubr.f32.mxu0 %v1429
    %3647 = vmatmul.mubr.f32.gmra.mrb[0].mxu0 %v1428
    %v3648 = vpop.f32.mrb[0].mxu0
    %v3649 = vadd.f32 %v3356, %v3648
    %v3650 = vpop.f32.mrb[0].mxu0
    %v3651 = vadd.f32 %v3358, %v3650
    %3652 = vmatprep.mubr.f32.mxu0 %v1433
    %3653 = vmatmul.mubr.f32.gmra.mrb[0].mxu0 %v1432
    %v3654 = vpop.f32.mrb[0].mxu0
    %v3655 = vadd.f32 %v3362, %v3654
    %v3656 = vpop.f32.mrb[0].mxu0
    %v3657 = vadd.f32 %v3364, %v3656
    %3658 = vmatprep.mubr.f32.mxu0 %v1437
    %3659 = vmatmul.mubr.f32.gmra.mrb[0].mxu0 %v1436
    %v3660 = vpop.f32.mrb[0].mxu0
    %v3661 = vadd.f32 %v3368, %v3660
    %v3662 = vpop.f32.mrb[0].mxu0
    %v3663 = vadd.f32 %v3370, %v3662
    %3664 = vmatprep.mubr.f32.mxu0 %v1441
    %3665 = vmatmul.mubr.f32.gmra.mrb[0].mxu0 %v1440
    %v3666 = vpop.f32.mrb[0].mxu0
    %v3667 = vadd.f32 %v3374, %v3666
    %v3668 = vpop.f32.mrb[0].mxu0
    %v3669 = vadd.f32 %v3376, %v3668
    %3670 = vmatprep.mubr.f32.mxu0 %v1445
    %3671 = vmatmul.mubr.f32.gmra.mrb[0].mxu0 %v1444
    %v3672 = vpop.f32.mrb[0].mxu0
    %v3673 = vadd.f32 %v3380, %v3672
    %v3674 = vpop.f32.mrb[0].mxu0
    %v3675 = vadd.f32 %v3382, %v3674
    %3676 = vmatprep.mubr.f32.mxu0 %v1449
    %3677 = vmatmul.mubr.f32.gmra.mrb[0].mxu0 %v1448
    %v3678 = vpop.f32.mrb[0].mxu0
    %v3679 = vadd.f32 %v3386, %v3678
    %v3680 = vpop.f32.mrb[0].mxu0
    %v3681 = vadd.f32 %v3388, %v3680
    %3682 = vmatprep.mubr.f32.mxu0 %v1453
    %3683 = vmatmul.mubr.f32.gmra.mrb[0].mxu0 %v1452
    %v3684 = vpop.f32.mrb[0].mxu0
    %v3685 = vadd.f32 %v3392, %v3684
    %v3686 = vpop.f32.mrb[0].mxu0
    %v3687 = vadd.f32 %v3394, %v3686
    %3688 = vmatprep.mubr.f32.mxu0 %v1457
    %3689 = vmatmul.mubr.f32.gmra.mrb[0].mxu0 %v1456
    %v3690 = vpop.f32.mrb[0].mxu0
    %v3691 = vadd.f32 %v3398, %v3690
    %v3692 = vpop.f32.mrb[0].mxu0
    %v3693 = vadd.f32 %v3400, %v3692
    %3694 = vmatprep.mubr.f32.mxu0 %v1461
    %3695 = vmatmul.mubr.f32.gmra.mrb[0].mxu0 %v1460
    %v3696 = vpop.f32.mrb[0].mxu0
    %v3697 = vadd.f32 %v3404, %v3696
    %v3698 = vpop.f32.mrb[0].mxu0
    %v3699 = vadd.f32 %v3406, %v3698
    %3700 = vmatprep.mubr.f32.mxu0 %v1465
    %3701 = vmatmul.mubr.f32.gmra.mrb[0].mxu0 %v1464
    %v3702 = vpop.f32.mrb[0].mxu0
    %v3703 = vadd.f32 %v3410, %v3702
    %v3704 = vpop.f32.mrb[0].mxu0
    %v3705 = vadd.f32 %v3412, %v3704
    %3706 = vmatprep.mubr.f32.mxu0 %v1469
    %3707 = vmatmul.mubr.f32.gmra.mrb[0].mxu0 %v1468
    %v3708 = vpop.f32.mrb[0].mxu0
    %v3709 = vadd.f32 %v3416, %v3708
    %v3710 = vpop.f32.mrb[0].mxu0
    %v3711 = vadd.f32 %v3418, %v3710
    %3712 = vdwg.mxu0
    %3713 = vmatprep.subr.mxu0 0.0
    %3714 = vmatpush1.msra.mxu0 %v1476
    %3715 = vmatprep.subr.mxu0 0.0
    %3716 = vmatpush1.msra.mxu0 %v1483
    %3717 = vmatprep.subr.mxu0 0.0
    %3718 = vmatpush1.msra.mxu0 %v1490
    %3719 = vmatprep.subr.mxu0 0.0
    %3720 = vmatpush1.msra.mxu0 %v1497
    %3721 = vmatprep.subr.mxu0 0.0
    %3722 = vmatpush1.msra.mxu0 %v1504
    %3723 = vmatprep.subr.mxu0 0.0
    %3724 = vmatpush1.msra.mxu0 %v1511
    %3725 = vmatprep.subr.mxu0 0.0
    %3726 = vmatpush1.msra.mxu0 %v1518
    %3727 = vmatprep.subr.mxu0 0.0
    %3728 = vmatpush1.msra.mxu0 %v1525
    %3729 = vmatprep.subr.mxu0 0.0
    %3730 = vmatpush1.msra.mxu0 %v1532
    %3731 = vmatprep.subr.mxu0 0.0
    %3732 = vmatpush1.msra.mxu0 %v1539
    %3733 = vmatprep.subr.mxu0 0.0
    %3734 = vmatpush1.msra.mxu0 %v1546
    %3735 = vmatprep.subr.mxu0 0.0
    %3736 = vmatpush1.msra.mxu0 %v1553
    %3737 = vmatprep.subr.mxu0 0.0
    %3738 = vmatpush1.msra.mxu0 %v1560
    %3739 = vmatprep.subr.mxu0 0.0
    %3740 = vmatpush1.msra.mxu0 %v1567
    %3741 = vmatprep.subr.mxu0 0.0
    %3742 = vmatpush1.msra.mxu0 %v1574
    %3743 = vmatprep.subr.mxu0 0.0
    %3744 = vmatpush1.msra.mxu0 %v1581
    %3745 = vmatprep.subr.mxu0 0.0
    %3746 = vmatpush1.msra.mxu0 %v1588
    %3747 = vmatprep.subr.mxu0 0.0
    %3748 = vmatpush1.msra.mxu0 %v1595
    %3749 = vmatprep.subr.mxu0 0.0
    %3750 = vmatpush1.msra.mxu0 %v1602
    %3751 = vmatprep.subr.mxu0 0.0
    %3752 = vmatpush1.msra.mxu0 %v1609
    %3753 = vmatprep.subr.mxu0 0.0
    %3754 = vmatpush1.msra.mxu0 %v1616
    %3755 = vmatprep.subr.mxu0 0.0
    %3756 = vmatpush1.msra.mxu0 %v1623
    %3757 = vmatprep.subr.mxu0 0.0
    %3758 = vmatpush1.msra.mxu0 %v1630
    %3759 = vmatprep.subr.mxu0 0.0
    %3760 = vmatpush1.msra.mxu0 %v1637
    %3761 = vmatprep.subr.mxu0 0.0
    %3762 = vmatpush1.msra.mxu0 %v1644
    %3763 = vmatprep.subr.mxu0 0.0
    %3764 = vmatpush1.msra.mxu0 %v1651
    %3765 = vmatprep.subr.mxu0 0.0
    %3766 = vmatpush1.msra.mxu0 %v1658
    %3767 = vmatprep.subr.mxu0 0.0
    %3768 = vmatpush1.msra.mxu0 %v1665
    %3769 = vmatprep.subr.mxu0 0.0
    %3770 = vmatpush1.msra.mxu0 %v1672
    %3771 = vmatprep.subr.mxu0 0.0
    %3772 = vmatpush1.msra.mxu0 %v1679
    %3773 = vmatprep.subr.mxu0 0.0
    %3774 = vmatpush1.msra.mxu0 %v1686
    %3775 = vmatprep.subr.mxu0 0.0
    %3776 = vmatpush1.msra.mxu0 %v1693
    %3777 = vmatprep.mubr.f32.mxu0 %v1319
    %3778 = vmatmul.mubr.f32.gmra.mrb[0].mxu0 %v1318
    %v3779 = vpop.f32.mrb[0].mxu0
    %v3780 = vadd.f32 %v1947, %v3779
    %v3781 = vpop.f32.mrb[0].mxu0
    %3782 = vmatprep.mubr.f32.mxu0 %v1323
    %3783 = vmatmul.mubr.f32.gmra.mrb[0].mxu0 %v1322
    %v3784 = vpop.f32.mrb[0].mxu0
    %v3785 = vadd.f32 %v1947, %v3784
    %v3786 = vpop.f32.mrb[0].mxu0
    %3787 = vmatprep.mubr.f32.mxu0 %v1327
    %3788 = vmatmul.mubr.f32.gmra.mrb[0].mxu0 %v1326
    %v3789 = vpop.f32.mrb[0].mxu0
    %v3790 = vadd.f32 %v1947, %v3789
    %v3791 = vpop.f32.mrb[0].mxu0
    %3792 = vmatprep.mubr.f32.mxu0 %v1331
    %3793 = vmatmul.mubr.f32.gmra.mrb[0].mxu0 %v1330
    %v3794 = vpop.f32.mrb[0].mxu0
    %v3795 = vadd.f32 %v1947, %v3794
    %v3796 = vpop.f32.mrb[0].mxu0
    %3797 = vmatprep.mubr.f32.mxu0 %v1335
    %3798 = vmatmul.mubr.f32.gmra.mrb[0].mxu0 %v1334
    %v3799 = vpop.f32.mrb[0].mxu0
    %v3800 = vadd.f32 %v1947, %v3799
    %v3801 = vpop.f32.mrb[0].mxu0
    %3802 = vmatprep.mubr.f32.mxu0 %v1339
    %3803 = vmatmul.mubr.f32.gmra.mrb[0].mxu0 %v1338
    %v3804 = vpop.f32.mrb[0].mxu0
    %v3805 = vadd.f32 %v1947, %v3804
    %v3806 = vpop.f32.mrb[0].mxu0
    %3807 = vmatprep.mubr.f32.mxu0 %v1343
    %3808 = vmatmul.mubr.f32.gmra.mrb[0].mxu0 %v1342
    %v3809 = vpop.f32.mrb[0].mxu0
    %v3810 = vadd.f32 %v1947, %v3809
    %v3811 = vpop.f32.mrb[0].mxu0
    %3812 = vmatprep.mubr.f32.mxu0 %v1347
    %3813 = vmatmul.mubr.f32.gmra.mrb[0].mxu0 %v1346
    %v3814 = vpop.f32.mrb[0].mxu0
    %v3815 = vadd.f32 %v1947, %v3814
    %v3816 = vpop.f32.mrb[0].mxu0
    %3817 = vmatprep.mubr.f32.mxu0 %v1351
    %3818 = vmatmul.mubr.f32.gmra.mrb[0].mxu0 %v1350
    %v3819 = vpop.f32.mrb[0].mxu0
    %v3820 = vadd.f32 %v1947, %v3819
    %v3821 = vpop.f32.mrb[0].mxu0
    %3822 = vmatprep.mubr.f32.mxu0 %v1355
    %3823 = vmatmul.mubr.f32.gmra.mrb[0].mxu0 %v1354
    %v3824 = vpop.f32.mrb[0].mxu0
    %v3825 = vadd.f32 %v1947, %v3824
    %v3826 = vpop.f32.mrb[0].mxu0
    %3827 = vmatprep.mubr.f32.mxu0 %v1359
    %3828 = vmatmul.mubr.f32.gmra.mrb[0].mxu0 %v1358
    %v3829 = vpop.f32.mrb[0].mxu0
    %v3830 = vadd.f32 %v1947, %v3829
    %v3831 = vpop.f32.mrb[0].mxu0
    %3832 = vmatprep.mubr.f32.mxu0 %v1363
    %3833 = vmatmul.mubr.f32.gmra.mrb[0].mxu0 %v1362
    %v3834 = vpop.f32.mrb[0].mxu0
    %v3835 = vadd.f32 %v1947, %v3834
    %v3836 = vpop.f32.mrb[0].mxu0
    %3837 = vmatprep.mubr.f32.mxu0 %v1367
    %3838 = vmatmul.mubr.f32.gmra.mrb[0].mxu0 %v1366
    %v3839 = vpop.f32.mrb[0].mxu0
    %v3840 = vadd.f32 %v1947, %v3839
    %v3841 = vpop.f32.mrb[0].mxu0
    %3842 = vmatprep.mubr.f32.mxu0 %v1371
    %3843 = vmatmul.mubr.f32.gmra.mrb[0].mxu0 %v1370
    %v3844 = vpop.f32.mrb[0].mxu0
    %v3845 = vadd.f32 %v1947, %v3844
    %v3846 = vpop.f32.mrb[0].mxu0
    %3847 = vmatprep.mubr.f32.mxu0 %v1375
    %3848 = vmatmul.mubr.f32.gmra.mrb[0].mxu0 %v1374
    %v3849 = vpop.f32.mrb[0].mxu0
    %v3850 = vadd.f32 %v1947, %v3849
    %v3851 = vpop.f32.mrb[0].mxu0
    %3852 = vmatprep.mubr.f32.mxu0 %v1379
    %3853 = vmatmul.mubr.f32.gmra.mrb[0].mxu0 %v1378
    %v3854 = vpop.f32.mrb[0].mxu0
    %v3855 = vadd.f32 %v1947, %v3854
    %v3856 = vpop.f32.mrb[0].mxu0
    %3857 = vmatprep.mubr.f32.mxu0 %v1383
    %3858 = vmatmul.mubr.f32.gmra.mrb[0].mxu0 %v1382
    %v3859 = vpop.f32.mrb[0].mxu0
    %v3860 = vadd.f32 %v1947, %v3859
    %v3861 = vpop.f32.mrb[0].mxu0
    %3862 = vmatprep.mubr.f32.mxu0 %v1387
    %3863 = vmatmul.mubr.f32.gmra.mrb[0].mxu0 %v1386
    %v3864 = vpop.f32.mrb[0].mxu0
    %v3865 = vadd.f32 %v1947, %v3864
    %v3866 = vpop.f32.mrb[0].mxu0
    %3867 = vmatprep.mubr.f32.mxu0 %v1391
    %3868 = vmatmul.mubr.f32.gmra.mrb[0].mxu0 %v1390
    %v3869 = vpop.f32.mrb[0].mxu0
    %v3870 = vadd.f32 %v1947, %v3869
    %v3871 = vpop.f32.mrb[0].mxu0
    %3872 = vmatprep.mubr.f32.mxu0 %v1395
    %3873 = vmatmul.mubr.f32.gmra.mrb[0].mxu0 %v1394
    %v3874 = vpop.f32.mrb[0].mxu0
    %v3875 = vadd.f32 %v1947, %v3874
    %v3876 = vpop.f32.mrb[0].mxu0
    %3877 = vmatprep.mubr.f32.mxu0 %v1399
    %3878 = vmatmul.mubr.f32.gmra.mrb[0].mxu0 %v1398
    %v3879 = vpop.f32.mrb[0].mxu0
    %v3880 = vadd.f32 %v1947, %v3879
    %v3881 = vpop.f32.mrb[0].mxu0
    %3882 = vmatprep.mubr.f32.mxu0 %v1403
    %3883 = vmatmul.mubr.f32.gmra.mrb[0].mxu0 %v1402
    %v3884 = vpop.f32.mrb[0].mxu0
    %v3885 = vadd.f32 %v1947, %v3884
    %v3886 = vpop.f32.mrb[0].mxu0
    %3887 = vmatprep.mubr.f32.mxu0 %v1407
    %3888 = vmatmul.mubr.f32.gmra.mrb[0].mxu0 %v1406
    %v3889 = vpop.f32.mrb[0].mxu0
    %v3890 = vadd.f32 %v1947, %v3889
    %v3891 = vpop.f32.mrb[0].mxu0
    %3892 = vmatprep.mubr.f32.mxu0 %v1411
    %3893 = vmatmul.mubr.f32.gmra.mrb[0].mxu0 %v1410
    %v3894 = vpop.f32.mrb[0].mxu0
    %v3895 = vadd.f32 %v1947, %v3894
    %v3896 = vpop.f32.mrb[0].mxu0
    %3897 = vmatprep.mubr.f32.mxu0 %v1415
    %3898 = vmatmul.mubr.f32.gmra.mrb[0].mxu0 %v1414
    %v3899 = vpop.f32.mrb[0].mxu0
    %v3900 = vadd.f32 %v1947, %v3899
    %v3901 = vpop.f32.mrb[0].mxu0
    %3902 = vmatprep.mubr.f32.mxu0 %v1419
    %3903 = vmatmul.mubr.f32.gmra.mrb[0].mxu0 %v1418
    %v3904 = vpop.f32.mrb[0].mxu0
    %v3905 = vadd.f32 %v1947, %v3904
    %v3906 = vpop.f32.mrb[0].mxu0
    %3907 = vmatprep.mubr.f32.mxu0 %v1423
    %3908 = vmatmul.mubr.f32.gmra.mrb[0].mxu0 %v1422
    %v3909 = vpop.f32.mrb[0].mxu0
    %v3910 = vadd.f32 %v1947, %v3909
    %v3911 = vpop.f32.mrb[0].mxu0
    %3912 = vmatprep.mubr.f32.mxu0 %v1427
    %3913 = vmatmul.mubr.f32.gmra.mrb[0].mxu0 %v1426
    %v3914 = vpop.f32.mrb[0].mxu0
    %v3915 = vadd.f32 %v1947, %v3914
    %v3916 = vpop.f32.mrb[0].mxu0
    %3917 = vmatprep.mubr.f32.mxu0 %v1431
    %3918 = vmatmul.mubr.f32.gmra.mrb[0].mxu0 %v1430
    %v3919 = vpop.f32.mrb[0].mxu0
    %v3920 = vadd.f32 %v1947, %v3919
    %v3921 = vpop.f32.mrb[0].mxu0
    %3922 = vmatprep.mubr.f32.mxu0 %v1435
    %3923 = vmatmul.mubr.f32.gmra.mrb[0].mxu0 %v1434
    %v3924 = vpop.f32.mrb[0].mxu0
    %v3925 = vadd.f32 %v1947, %v3924
    %v3926 = vpop.f32.mrb[0].mxu0
    %3927 = vmatprep.mubr.f32.mxu0 %v1439
    %3928 = vmatmul.mubr.f32.gmra.mrb[0].mxu0 %v1438
    %v3929 = vpop.f32.mrb[0].mxu0
    %v3930 = vadd.f32 %v1947, %v3929
    %v3931 = vpop.f32.mrb[0].mxu0
    %3932 = vmatprep.mubr.f32.mxu0 %v1443
    %3933 = vmatmul.mubr.f32.gmra.mrb[0].mxu0 %v1442
    %v3934 = vpop.f32.mrb[0].mxu0
    %v3935 = vadd.f32 %v1947, %v3934
    %v3936 = vpop.f32.mrb[0].mxu0
    %3937 = vmatprep.mubr.f32.mxu0 %v1447
    %3938 = vmatmul.mubr.f32.gmra.mrb[0].mxu0 %v1446
    %v3939 = vpop.f32.mrb[0].mxu0
    %v3940 = vadd.f32 %v1947, %v3939
    %v3941 = vpop.f32.mrb[0].mxu0
    %3942 = vmatprep.mubr.f32.mxu0 %v1451
    %3943 = vmatmul.mubr.f32.gmra.mrb[0].mxu0 %v1450
    %v3944 = vpop.f32.mrb[0].mxu0
    %v3945 = vadd.f32 %v1947, %v3944
    %v3946 = vpop.f32.mrb[0].mxu0
    %3947 = vmatprep.mubr.f32.mxu0 %v1455
    %3948 = vmatmul.mubr.f32.gmra.mrb[0].mxu0 %v1454
    %v3949 = vpop.f32.mrb[0].mxu0
    %v3950 = vadd.f32 %v1947, %v3949
    %v3951 = vpop.f32.mrb[0].mxu0
    %3952 = vmatprep.mubr.f32.mxu0 %v1459
    %3953 = vmatmul.mubr.f32.gmra.mrb[0].mxu0 %v1458
    %v3954 = vpop.f32.mrb[0].mxu0
    %v3955 = vadd.f32 %v1947, %v3954
    %v3956 = vpop.f32.mrb[0].mxu0
    %3957 = vmatprep.mubr.f32.mxu0 %v1463
    %3958 = vmatmul.mubr.f32.gmra.mrb[0].mxu0 %v1462
    %v3959 = vpop.f32.mrb[0].mxu0
    %v3960 = vadd.f32 %v1947, %v3959
    %v3961 = vpop.f32.mrb[0].mxu0
    %3962 = vmatprep.mubr.f32.mxu0 %v1467
    %3963 = vmatmul.mubr.f32.gmra.mrb[0].mxu0 %v1466
    %v3964 = vpop.f32.mrb[0].mxu0
    %v3965 = vadd.f32 %v1947, %v3964
    %v3966 = vpop.f32.mrb[0].mxu0
    %3967 = vdwg.mxu0
    %3968 = vmatprep.subr.mxu0 0.0
    %3969 = vmatpush1.msra.mxu0 %v1700
    %3970 = vmatprep.subr.mxu0 0.0
    %3971 = vmatpush1.msra.mxu0 %v1707
    %3972 = vmatprep.subr.mxu0 0.0
    %3973 = vmatpush1.msra.mxu0 %v1714
    %3974 = vmatprep.subr.mxu0 0.0
    %3975 = vmatpush1.msra.mxu0 %v1721
    %3976 = vmatprep.subr.mxu0 0.0
    %3977 = vmatpush1.msra.mxu0 %v1728
    %3978 = vmatprep.subr.mxu0 0.0
    %3979 = vmatpush1.msra.mxu0 %v1735
    %3980 = vmatprep.subr.mxu0 0.0
    %3981 = vmatpush1.msra.mxu0 %v1742
    %3982 = vmatprep.subr.mxu0 0.0
    %3983 = vmatpush1.msra.mxu0 %v1749
    %3984 = vmatprep.subr.mxu0 0.0
    %3985 = vmatpush1.msra.mxu0 %v1756
    %3986 = vmatprep.subr.mxu0 0.0
    %3987 = vmatpush1.msra.mxu0 %v1763
    %3988 = vmatprep.subr.mxu0 0.0
    %3989 = vmatpush1.msra.mxu0 %v1770
    %3990 = vmatprep.subr.mxu0 0.0
    %3991 = vmatpush1.msra.mxu0 %v1777
    %3992 = vmatprep.subr.mxu0 0.0
    %3993 = vmatpush1.msra.mxu0 %v1784
    %3994 = vmatprep.subr.mxu0 0.0
    %3995 = vmatpush1.msra.mxu0 %v1791
    %3996 = vmatprep.subr.mxu0 0.0
    %3997 = vmatpush1.msra.mxu0 %v1798
    %3998 = vmatprep.subr.mxu0 0.0
    %3999 = vmatpush1.msra.mxu0 %v1805
    %4000 = vmatprep.subr.mxu0 0.0
    %4001 = vmatpush1.msra.mxu0 %v1812
    %4002 = vmatprep.subr.mxu0 0.0
    %4003 = vmatpush1.msra.mxu0 %v1819
    %4004 = vmatprep.subr.mxu0 0.0
    %4005 = vmatpush1.msra.mxu0 %v1826
    %4006 = vmatprep.subr.mxu0 0.0
    %4007 = vmatpush1.msra.mxu0 %v1833
    %4008 = vmatprep.subr.mxu0 0.0
    %4009 = vmatpush1.msra.mxu0 %v1840
    %4010 = vmatprep.subr.mxu0 0.0
    %4011 = vmatpush1.msra.mxu0 %v1847
    %4012 = vmatprep.subr.mxu0 0.0
    %4013 = vmatpush1.msra.mxu0 %v1854
    %4014 = vmatprep.subr.mxu0 0.0
    %4015 = vmatpush1.msra.mxu0 %v1861
    %4016 = vmatprep.subr.mxu0 0.0
    %4017 = vmatpush1.msra.mxu0 %v1868
    %4018 = vmatprep.subr.mxu0 0.0
    %4019 = vmatpush1.msra.mxu0 %v1875
    %4020 = vmatprep.subr.mxu0 0.0
    %4021 = vmatpush1.msra.mxu0 %v1882
    %4022 = vmatprep.subr.mxu0 0.0
    %4023 = vmatpush1.msra.mxu0 %v1889
    %4024 = vmatprep.subr.mxu0 0.0
    %4025 = vmatpush1.msra.mxu0 %v1896
    %4026 = vmatprep.subr.mxu0 0.0
    %4027 = vmatpush1.msra.mxu0 %v1903
    %4028 = vmatprep.subr.mxu0 0.0
    %4029 = vmatpush1.msra.mxu0 %v1910
    %4030 = vmatprep.subr.mxu0 0.0
    %4031 = vmatpush1.msra.mxu0 %v1917
    %4032 = vmatprep.mubr.f32.mxu0 %v1321
    %4033 = vmatmul.mubr.f32.gmra.mrb[0].mxu0 %v1320
    %v4034 = vpop.f32.mrb[0].mxu0
    %v4035 = vadd.f32 %v3780, %v4034
    %v4036 = vpop.f32.mrb[0].mxu0
    %4037 = vmatprep.mubr.f32.mxu0 %v1325
    %4038 = vmatmul.mubr.f32.gmra.mrb[0].mxu0 %v1324
    %v4039 = vpop.f32.mrb[0].mxu0
    %v4040 = vadd.f32 %v3785, %v4039
    %v4041 = vpop.f32.mrb[0].mxu0
    %4042 = vmatprep.mubr.f32.mxu0 %v1329
    %4043 = vmatmul.mubr.f32.gmra.mrb[0].mxu0 %v1328
    %v4044 = vpop.f32.mrb[0].mxu0
    %v4045 = vadd.f32 %v3790, %v4044
    %v4046 = vpop.f32.mrb[0].mxu0
    %4047 = vmatprep.mubr.f32.mxu0 %v1333
    %4048 = vmatmul.mubr.f32.gmra.mrb[0].mxu0 %v1332
    %v4049 = vpop.f32.mrb[0].mxu0
    %v4050 = vadd.f32 %v3795, %v4049
    %v4051 = vpop.f32.mrb[0].mxu0
    %4052 = vmatprep.mubr.f32.mxu0 %v1337
    %4053 = vmatmul.mubr.f32.gmra.mrb[0].mxu0 %v1336
    %v4054 = vpop.f32.mrb[0].mxu0
    %v4055 = vadd.f32 %v3800, %v4054
    %v4056 = vpop.f32.mrb[0].mxu0
    %4057 = vmatprep.mubr.f32.mxu0 %v1341
    %4058 = vmatmul.mubr.f32.gmra.mrb[0].mxu0 %v1340
    %v4059 = vpop.f32.mrb[0].mxu0
    %v4060 = vadd.f32 %v3805, %v4059
    %v4061 = vpop.f32.mrb[0].mxu0
    %4062 = vmatprep.mubr.f32.mxu0 %v1345
    %4063 = vmatmul.mubr.f32.gmra.mrb[0].mxu0 %v1344
    %v4064 = vpop.f32.mrb[0].mxu0
    %v4065 = vadd.f32 %v3810, %v4064
    %v4066 = vpop.f32.mrb[0].mxu0
    %4067 = vmatprep.mubr.f32.mxu0 %v1349
    %4068 = vmatmul.mubr.f32.gmra.mrb[0].mxu0 %v1348
    %v4069 = vpop.f32.mrb[0].mxu0
    %v4070 = vadd.f32 %v3815, %v4069
    %v4071 = vpop.f32.mrb[0].mxu0
    %4072 = vmatprep.mubr.f32.mxu0 %v1353
    %4073 = vmatmul.mubr.f32.gmra.mrb[0].mxu0 %v1352
    %v4074 = vpop.f32.mrb[0].mxu0
    %v4075 = vadd.f32 %v3820, %v4074
    %v4076 = vpop.f32.mrb[0].mxu0
    %4077 = vmatprep.mubr.f32.mxu0 %v1357
    %4078 = vmatmul.mubr.f32.gmra.mrb[0].mxu0 %v1356
    %v4079 = vpop.f32.mrb[0].mxu0
    %v4080 = vadd.f32 %v3825, %v4079
    %v4081 = vpop.f32.mrb[0].mxu0
    %4082 = vmatprep.mubr.f32.mxu0 %v1361
    %4083 = vmatmul.mubr.f32.gmra.mrb[0].mxu0 %v1360
    %v4084 = vpop.f32.mrb[0].mxu0
    %v4085 = vadd.f32 %v3830, %v4084
    %v4086 = vpop.f32.mrb[0].mxu0
    %4087 = vmatprep.mubr.f32.mxu0 %v1365
    %4088 = vmatmul.mubr.f32.gmra.mrb[0].mxu0 %v1364
    %v4089 = vpop.f32.mrb[0].mxu0
    %v4090 = vadd.f32 %v3835, %v4089
    %v4091 = vpop.f32.mrb[0].mxu0
    %4092 = vmatprep.mubr.f32.mxu0 %v1369
    %4093 = vmatmul.mubr.f32.gmra.mrb[0].mxu0 %v1368
    %v4094 = vpop.f32.mrb[0].mxu0
    %v4095 = vadd.f32 %v3840, %v4094
    %v4096 = vpop.f32.mrb[0].mxu0
    %4097 = vmatprep.mubr.f32.mxu0 %v1373
    %4098 = vmatmul.mubr.f32.gmra.mrb[0].mxu0 %v1372
    %v4099 = vpop.f32.mrb[0].mxu0
    %v4100 = vadd.f32 %v3845, %v4099
    %v4101 = vpop.f32.mrb[0].mxu0
    %4102 = vmatprep.mubr.f32.mxu0 %v1377
    %4103 = vmatmul.mubr.f32.gmra.mrb[0].mxu0 %v1376
    %v4104 = vpop.f32.mrb[0].mxu0
    %v4105 = vadd.f32 %v3850, %v4104
    %v4106 = vpop.f32.mrb[0].mxu0
    %4107 = vmatprep.mubr.f32.mxu0 %v1381
    %4108 = vmatmul.mubr.f32.gmra.mrb[0].mxu0 %v1380
    %v4109 = vpop.f32.mrb[0].mxu0
    %v4110 = vadd.f32 %v3855, %v4109
    %v4111 = vpop.f32.mrb[0].mxu0
    %4112 = vmatprep.mubr.f32.mxu0 %v1385
    %4113 = vmatmul.mubr.f32.gmra.mrb[0].mxu0 %v1384
    %v4114 = vpop.f32.mrb[0].mxu0
    %v4115 = vadd.f32 %v3860, %v4114
    %v4116 = vpop.f32.mrb[0].mxu0
    %4117 = vmatprep.mubr.f32.mxu0 %v1389
    %4118 = vmatmul.mubr.f32.gmra.mrb[0].mxu0 %v1388
    %v4119 = vpop.f32.mrb[0].mxu0
    %v4120 = vadd.f32 %v3865, %v4119
    %v4121 = vpop.f32.mrb[0].mxu0
    %4122 = vmatprep.mubr.f32.mxu0 %v1393
    %4123 = vmatmul.mubr.f32.gmra.mrb[0].mxu0 %v1392
    %v4124 = vpop.f32.mrb[0].mxu0
    %v4125 = vadd.f32 %v3870, %v4124
    %v4126 = vpop.f32.mrb[0].mxu0
    %4127 = vmatprep.mubr.f32.mxu0 %v1397
    %4128 = vmatmul.mubr.f32.gmra.mrb[0].mxu0 %v1396
    %v4129 = vpop.f32.mrb[0].mxu0
    %v4130 = vadd.f32 %v3875, %v4129
    %v4131 = vpop.f32.mrb[0].mxu0
    %4132 = vmatprep.mubr.f32.mxu0 %v1401
    %4133 = vmatmul.mubr.f32.gmra.mrb[0].mxu0 %v1400
    %v4134 = vpop.f32.mrb[0].mxu0
    %v4135 = vadd.f32 %v3880, %v4134
    %v4136 = vpop.f32.mrb[0].mxu0
    %4137 = vmatprep.mubr.f32.mxu0 %v1405
    %4138 = vmatmul.mubr.f32.gmra.mrb[0].mxu0 %v1404
    %v4139 = vpop.f32.mrb[0].mxu0
    %v4140 = vadd.f32 %v3885, %v4139
    %v4141 = vpop.f32.mrb[0].mxu0
    %4142 = vmatprep.mubr.f32.mxu0 %v1409
    %4143 = vmatmul.mubr.f32.gmra.mrb[0].mxu0 %v1408
    %v4144 = vpop.f32.mrb[0].mxu0
    %v4145 = vadd.f32 %v3890, %v4144
    %v4146 = vpop.f32.mrb[0].mxu0
    %4147 = vmatprep.mubr.f32.mxu0 %v1413
    %4148 = vmatmul.mubr.f32.gmra.mrb[0].mxu0 %v1412
    %v4149 = vpop.f32.mrb[0].mxu0
    %v4150 = vadd.f32 %v3895, %v4149
    %v4151 = vpop.f32.mrb[0].mxu0
    %4152 = vmatprep.mubr.f32.mxu0 %v1417
    %4153 = vmatmul.mubr.f32.gmra.mrb[0].mxu0 %v1416
    %v4154 = vpop.f32.mrb[0].mxu0
    %v4155 = vadd.f32 %v3900, %v4154
    %v4156 = vpop.f32.mrb[0].mxu0
    %4157 = vmatprep.mubr.f32.mxu0 %v1421
    %4158 = vmatmul.mubr.f32.gmra.mrb[0].mxu0 %v1420
    %v4159 = vpop.f32.mrb[0].mxu0
    %v4160 = vadd.f32 %v3905, %v4159
    %v4161 = vpop.f32.mrb[0].mxu0
    %4162 = vmatprep.mubr.f32.mxu0 %v1425
    %4163 = vmatmul.mubr.f32.gmra.mrb[0].mxu0 %v1424
    %v4164 = vpop.f32.mrb[0].mxu0
    %v4165 = vadd.f32 %v3910, %v4164
    %v4166 = vpop.f32.mrb[0].mxu0
    %4167 = vmatprep.mubr.f32.mxu0 %v1429
    %4168 = vmatmul.mubr.f32.gmra.mrb[0].mxu0 %v1428
    %v4169 = vpop.f32.mrb[0].mxu0
    %v4170 = vadd.f32 %v3915, %v4169
    %v4171 = vpop.f32.mrb[0].mxu0
    %4172 = vmatprep.mubr.f32.mxu0 %v1433
    %4173 = vmatmul.mubr.f32.gmra.mrb[0].mxu0 %v1432
    %v4174 = vpop.f32.mrb[0].mxu0
    %v4175 = vadd.f32 %v3920, %v4174
    %v4176 = vpop.f32.mrb[0].mxu0
    %4177 = vmatprep.mubr.f32.mxu0 %v1437
    %4178 = vmatmul.mubr.f32.gmra.mrb[0].mxu0 %v1436
    %v4179 = vpop.f32.mrb[0].mxu0
    %v4180 = vadd.f32 %v3925, %v4179
    %v4181 = vpop.f32.mrb[0].mxu0
    %4182 = vmatprep.mubr.f32.mxu0 %v1441
    %4183 = vmatmul.mubr.f32.gmra.mrb[0].mxu0 %v1440
    %v4184 = vpop.f32.mrb[0].mxu0
    %v4185 = vadd.f32 %v3930, %v4184
    %v4186 = vpop.f32.mrb[0].mxu0
    %4187 = vmatprep.mubr.f32.mxu0 %v1445
    %4188 = vmatmul.mubr.f32.gmra.mrb[0].mxu0 %v1444
    %v4189 = vpop.f32.mrb[0].mxu0
    %v4190 = vadd.f32 %v3935, %v4189
    %v4191 = vpop.f32.mrb[0].mxu0
    %4192 = vmatprep.mubr.f32.mxu0 %v1449
    %4193 = vmatmul.mubr.f32.gmra.mrb[0].mxu0 %v1448
    %v4194 = vpop.f32.mrb[0].mxu0
    %v4195 = vadd.f32 %v3940, %v4194
    %v4196 = vpop.f32.mrb[0].mxu0
    %4197 = vmatprep.mubr.f32.mxu0 %v1453
    %4198 = vmatmul.mubr.f32.gmra.mrb[0].mxu0 %v1452
    %v4199 = vpop.f32.mrb[0].mxu0
    %v4200 = vadd.f32 %v3945, %v4199
    %v4201 = vpop.f32.mrb[0].mxu0
    %4202 = vmatprep.mubr.f32.mxu0 %v1457
    %4203 = vmatmul.mubr.f32.gmra.mrb[0].mxu0 %v1456
    %v4204 = vpop.f32.mrb[0].mxu0
    %v4205 = vadd.f32 %v3950, %v4204
    %v4206 = vpop.f32.mrb[0].mxu0
    %4207 = vmatprep.mubr.f32.mxu0 %v1461
    %4208 = vmatmul.mubr.f32.gmra.mrb[0].mxu0 %v1460
    %v4209 = vpop.f32.mrb[0].mxu0
    %v4210 = vadd.f32 %v3955, %v4209
    %v4211 = vpop.f32.mrb[0].mxu0
    %4212 = vmatprep.mubr.f32.mxu0 %v1465
    %4213 = vmatmul.mubr.f32.gmra.mrb[0].mxu0 %v1464
    %v4214 = vpop.f32.mrb[0].mxu0
    %v4215 = vadd.f32 %v3960, %v4214
    %v4216 = vpop.f32.mrb[0].mxu0
    %4217 = vmatprep.mubr.f32.mxu0 %v1469
    %4218 = vmatmul.mubr.f32.gmra.mrb[0].mxu0 %v1468
    %v4219 = vpop.f32.mrb[0].mxu0
    %v4220 = vadd.f32 %v3965, %v4219
    %v4221 = vpop.f32.mrb[0].mxu0
    %4222 = vdwg.mxu0
    %v4223 = vxor.u32 %v2315, 2147483648
    %v4224 = vxor.u32 %v2317, 2147483648
    %v4225 = vxor.u32 %v2901, 2147483648
    %v4226 = vxor.u32 %v2903, 2147483648
    %v4227 = vxor.u32 %v3487, 2147483648
    %v4228 = vxor.u32 %v3489, 2147483648
    %v4229 = vxor.u32 %v4035, 2147483648
    %v4230 = vxor.u32 %v2321, 2147483648
    %v4231 = vxor.u32 %v2323, 2147483648
    %v4232 = vxor.u32 %v2907, 2147483648
    %v4233 = vxor.u32 %v2909, 2147483648
    %v4234 = vxor.u32 %v3493, 2147483648
    %v4235 = vxor.u32 %v3495, 2147483648
    %v4236 = vxor.u32 %v4040, 2147483648
    %v4237 = vxor.u32 %v2327, 2147483648
    %v4238 = vxor.u32 %v2329, 2147483648
    %v4239 = vxor.u32 %v2913, 2147483648
    %v4240 = vxor.u32 %v2915, 2147483648
    %v4241 = vxor.u32 %v3499, 2147483648
    %v4242 = vxor.u32 %v3501, 2147483648
    %v4243 = vxor.u32 %v4045, 2147483648
    %v4244 = vxor.u32 %v2333, 2147483648
    %v4245 = vxor.u32 %v2335, 2147483648
    %v4246 = vxor.u32 %v2919, 2147483648
    %v4247 = vxor.u32 %v2921, 2147483648
    %v4248 = vxor.u32 %v3505, 2147483648
    %v4249 = vxor.u32 %v3507, 2147483648
    %v4250 = vxor.u32 %v4050, 2147483648
    %v4251 = vxor.u32 %v2339, 2147483648
    %v4252 = vxor.u32 %v2341, 2147483648
    %v4253 = vxor.u32 %v2925, 2147483648
    %v4254 = vxor.u32 %v2927, 2147483648
    %v4255 = vxor.u32 %v3511, 2147483648
    %v4256 = vxor.u32 %v3513, 2147483648
    %v4257 = vxor.u32 %v4055, 2147483648
    %v4258 = vxor.u32 %v2345, 2147483648
    %v4259 = vxor.u32 %v2347, 2147483648
    %v4260 = vxor.u32 %v2931, 2147483648
    %v4261 = vxor.u32 %v2933, 2147483648
    %v4262 = vxor.u32 %v3517, 2147483648
    %v4263 = vxor.u32 %v3519, 2147483648
    %v4264 = vxor.u32 %v4060, 2147483648
    %v4265 = vxor.u32 %v2351, 2147483648
    %v4266 = vxor.u32 %v2353, 2147483648
    %v4267 = vxor.u32 %v2937, 2147483648
    %v4268 = vxor.u32 %v2939, 2147483648
    %v4269 = vxor.u32 %v3523, 2147483648
    %v4270 = vxor.u32 %v3525, 2147483648
    %v4271 = vxor.u32 %v4065, 2147483648
    %v4272 = vxor.u32 %v2357, 2147483648
    %v4273 = vxor.u32 %v2359, 2147483648
    %v4274 = vxor.u32 %v2943, 2147483648
    %v4275 = vxor.u32 %v2945, 2147483648
    %v4276 = vxor.u32 %v3529, 2147483648
    %v4277 = vxor.u32 %v3531, 2147483648
    %v4278 = vxor.u32 %v4070, 2147483648
    %v4279 = vxor.u32 %v2363, 2147483648
    %v4280 = vxor.u32 %v2365, 2147483648
    %v4281 = vxor.u32 %v2949, 2147483648
    %v4282 = vxor.u32 %v2951, 2147483648
    %v4283 = vxor.u32 %v3535, 2147483648
    %v4284 = vxor.u32 %v3537, 2147483648
    %v4285 = vxor.u32 %v4075, 2147483648
    %v4286 = vxor.u32 %v2369, 2147483648
    %v4287 = vxor.u32 %v2371, 2147483648
    %v4288 = vxor.u32 %v2955, 2147483648
    %v4289 = vxor.u32 %v2957, 2147483648
    %v4290 = vxor.u32 %v3541, 2147483648
    %v4291 = vxor.u32 %v3543, 2147483648
    %v4292 = vxor.u32 %v4080, 2147483648
    %v4293 = vxor.u32 %v2375, 2147483648
    %v4294 = vxor.u32 %v2377, 2147483648
    %v4295 = vxor.u32 %v2961, 2147483648
    %v4296 = vxor.u32 %v2963, 2147483648
    %v4297 = vxor.u32 %v3547, 2147483648
    %v4298 = vxor.u32 %v3549, 2147483648
    %v4299 = vxor.u32 %v4085, 2147483648
    %v4300 = vxor.u32 %v2381, 2147483648
    %v4301 = vxor.u32 %v2383, 2147483648
    %v4302 = vxor.u32 %v2967, 2147483648
    %v4303 = vxor.u32 %v2969, 2147483648
    %v4304 = vxor.u32 %v3553, 2147483648
    %v4305 = vxor.u32 %v3555, 2147483648
    %v4306 = vxor.u32 %v4090, 2147483648
    %v4307 = vxor.u32 %v2387, 2147483648
    %v4308 = vxor.u32 %v2389, 2147483648
    %v4309 = vxor.u32 %v2973, 2147483648
    %v4310 = vxor.u32 %v2975, 2147483648
    %v4311 = vxor.u32 %v3559, 2147483648
    %v4312 = vxor.u32 %v3561, 2147483648
    %v4313 = vxor.u32 %v4095, 2147483648
    %v4314 = vxor.u32 %v2393, 2147483648
    %v4315 = vxor.u32 %v2395, 2147483648
    %v4316 = vxor.u32 %v2979, 2147483648
    %v4317 = vxor.u32 %v2981, 2147483648
    %v4318 = vxor.u32 %v3565, 2147483648
    %v4319 = vxor.u32 %v3567, 2147483648
    %v4320 = vxor.u32 %v4100, 2147483648
    %v4321 = vxor.u32 %v2399, 2147483648
    %v4322 = vxor.u32 %v2401, 2147483648
    %v4323 = vxor.u32 %v2985, 2147483648
    %v4324 = vxor.u32 %v2987, 2147483648
    %v4325 = vxor.u32 %v3571, 2147483648
    %v4326 = vxor.u32 %v3573, 2147483648
    %v4327 = vxor.u32 %v4105, 2147483648
    %v4328 = vxor.u32 %v2405, 2147483648
    %v4329 = vxor.u32 %v2407, 2147483648
    %v4330 = vxor.u32 %v2991, 2147483648
    %v4331 = vxor.u32 %v2993, 2147483648
    %v4332 = vxor.u32 %v3577, 2147483648
    %v4333 = vxor.u32 %v3579, 2147483648
    %v4334 = vxor.u32 %v4110, 2147483648
    %v4335 = vxor.u32 %v2411, 2147483648
    %v4336 = vxor.u32 %v2413, 2147483648
    %v4337 = vxor.u32 %v2997, 2147483648
    %v4338 = vxor.u32 %v2999, 2147483648
    %v4339 = vxor.u32 %v3583, 2147483648
    %v4340 = vxor.u32 %v3585, 2147483648
    %v4341 = vxor.u32 %v4115, 2147483648
    %v4342 = vxor.u32 %v2417, 2147483648
    %v4343 = vxor.u32 %v2419, 2147483648
    %v4344 = vxor.u32 %v3003, 2147483648
    %v4345 = vxor.u32 %v3005, 2147483648
    %v4346 = vxor.u32 %v3589, 2147483648
    %v4347 = vxor.u32 %v3591, 2147483648
    %v4348 = vxor.u32 %v4120, 2147483648
    %v4349 = vxor.u32 %v2423, 2147483648
    %v4350 = vxor.u32 %v2425, 2147483648
    %v4351 = vxor.u32 %v3009, 2147483648
    %v4352 = vxor.u32 %v3011, 2147483648
    %v4353 = vxor.u32 %v3595, 2147483648
    %v4354 = vxor.u32 %v3597, 2147483648
    %v4355 = vxor.u32 %v4125, 2147483648
    %v4356 = vxor.u32 %v2429, 2147483648
    %v4357 = vxor.u32 %v2431, 2147483648
    %v4358 = vxor.u32 %v3015, 2147483648
    %v4359 = vxor.u32 %v3017, 2147483648
    %v4360 = vxor.u32 %v3601, 2147483648
    %v4361 = vxor.u32 %v3603, 2147483648
    %v4362 = vxor.u32 %v4130, 2147483648
    %v4363 = vxor.u32 %v2435, 2147483648
    %v4364 = vxor.u32 %v2437, 2147483648
    %v4365 = vxor.u32 %v3021, 2147483648
    %v4366 = vxor.u32 %v3023, 2147483648
    %v4367 = vxor.u32 %v3607, 2147483648
    %v4368 = vxor.u32 %v3609, 2147483648
    %v4369 = vxor.u32 %v4135, 2147483648
    %v4370 = vxor.u32 %v2441, 2147483648
    %v4371 = vxor.u32 %v2443, 2147483648
    %v4372 = vxor.u32 %v3027, 2147483648
    %v4373 = vxor.u32 %v3029, 2147483648
    %v4374 = vxor.u32 %v3613, 2147483648
    %v4375 = vxor.u32 %v3615, 2147483648
    %v4376 = vxor.u32 %v4140, 2147483648
    %v4377 = vxor.u32 %v2447, 2147483648
    %v4378 = vxor.u32 %v2449, 2147483648
    %v4379 = vxor.u32 %v3033, 2147483648
    %v4380 = vxor.u32 %v3035, 2147483648
    %v4381 = vxor.u32 %v3619, 2147483648
    %v4382 = vxor.u32 %v3621, 2147483648
    %v4383 = vxor.u32 %v4145, 2147483648
    %v4384 = vxor.u32 %v2453, 2147483648
    %v4385 = vxor.u32 %v2455, 2147483648
    %v4386 = vxor.u32 %v3039, 2147483648
    %v4387 = vxor.u32 %v3041, 2147483648
    %v4388 = vxor.u32 %v3625, 2147483648
    %v4389 = vxor.u32 %v3627, 2147483648
    %v4390 = vxor.u32 %v4150, 2147483648
    %v4391 = vxor.u32 %v2459, 2147483648
    %v4392 = vxor.u32 %v2461, 2147483648
    %v4393 = vxor.u32 %v3045, 2147483648
    %v4394 = vxor.u32 %v3047, 2147483648
    %v4395 = vxor.u32 %v3631, 2147483648
    %v4396 = vxor.u32 %v3633, 2147483648
    %v4397 = vxor.u32 %v4155, 2147483648
    %v4398 = vxor.u32 %v2465, 2147483648
    %v4399 = vxor.u32 %v2467, 2147483648
    %v4400 = vxor.u32 %v3051, 2147483648
    %v4401 = vxor.u32 %v3053, 2147483648
    %v4402 = vxor.u32 %v3637, 2147483648
    %v4403 = vxor.u32 %v3639, 2147483648
    %v4404 = vxor.u32 %v4160, 2147483648
    %v4405 = vxor.u32 %v2471, 2147483648
    %v4406 = vxor.u32 %v2473, 2147483648
    %v4407 = vxor.u32 %v3057, 2147483648
    %v4408 = vxor.u32 %v3059, 2147483648
    %v4409 = vxor.u32 %v3643, 2147483648
    %v4410 = vxor.u32 %v3645, 2147483648
    %v4411 = vxor.u32 %v4165, 2147483648
    %v4412 = vxor.u32 %v2477, 2147483648
    %v4413 = vxor.u32 %v2479, 2147483648
    %v4414 = vxor.u32 %v3063, 2147483648
    %v4415 = vxor.u32 %v3065, 2147483648
    %v4416 = vxor.u32 %v3649, 2147483648
    %v4417 = vxor.u32 %v3651, 2147483648
    %v4418 = vxor.u32 %v4170, 2147483648
    %v4419 = vxor.u32 %v2483, 2147483648
    %v4420 = vxor.u32 %v2485, 2147483648
    %v4421 = vxor.u32 %v3069, 2147483648
    %v4422 = vxor.u32 %v3071, 2147483648
    %v4423 = vxor.u32 %v3655, 2147483648
    %v4424 = vxor.u32 %v3657, 2147483648
    %v4425 = vxor.u32 %v4175, 2147483648
    %v4426 = vxor.u32 %v2489, 2147483648
    %v4427 = vxor.u32 %v2491, 2147483648
    %v4428 = vxor.u32 %v3075, 2147483648
    %v4429 = vxor.u32 %v3077, 2147483648
    %v4430 = vxor.u32 %v3661, 2147483648
    %v4431 = vxor.u32 %v3663, 2147483648
    %v4432 = vxor.u32 %v4180, 2147483648
    %v4433 = vxor.u32 %v2495, 2147483648
    %v4434 = vxor.u32 %v2497, 2147483648
    %v4435 = vxor.u32 %v3081, 2147483648
    %v4436 = vxor.u32 %v3083, 2147483648
    %v4437 = vxor.u32 %v3667, 2147483648
    %v4438 = vxor.u32 %v3669, 2147483648
    %v4439 = vxor.u32 %v4185, 2147483648
    %v4440 = vxor.u32 %v2501, 2147483648
    %v4441 = vxor.u32 %v2503, 2147483648
    %v4442 = vxor.u32 %v3087, 2147483648
    %v4443 = vxor.u32 %v3089, 2147483648
    %v4444 = vxor.u32 %v3673, 2147483648
    %v4445 = vxor.u32 %v3675, 2147483648
    %v4446 = vxor.u32 %v4190, 2147483648
    %v4447 = vxor.u32 %v2507, 2147483648
    %v4448 = vxor.u32 %v2509, 2147483648
    %v4449 = vxor.u32 %v3093, 2147483648
    %v4450 = vxor.u32 %v3095, 2147483648
    %v4451 = vxor.u32 %v3679, 2147483648
    %v4452 = vxor.u32 %v3681, 2147483648
    %v4453 = vxor.u32 %v4195, 2147483648
    %v4454 = vxor.u32 %v2513, 2147483648
    %v4455 = vxor.u32 %v2515, 2147483648
    %v4456 = vxor.u32 %v3099, 2147483648
    %v4457 = vxor.u32 %v3101, 2147483648
    %v4458 = vxor.u32 %v3685, 2147483648
    %v4459 = vxor.u32 %v3687, 2147483648
    %v4460 = vxor.u32 %v4200, 2147483648
    %v4461 = vxor.u32 %v2519, 2147483648
    %v4462 = vxor.u32 %v2521, 2147483648
    %v4463 = vxor.u32 %v3105, 2147483648
    %v4464 = vxor.u32 %v3107, 2147483648
    %v4465 = vxor.u32 %v3691, 2147483648
    %v4466 = vxor.u32 %v3693, 2147483648
    %v4467 = vxor.u32 %v4205, 2147483648
    %v4468 = vxor.u32 %v2525, 2147483648
    %v4469 = vxor.u32 %v2527, 2147483648
    %v4470 = vxor.u32 %v3111, 2147483648
    %v4471 = vxor.u32 %v3113, 2147483648
    %v4472 = vxor.u32 %v3697, 2147483648
    %v4473 = vxor.u32 %v3699, 2147483648
    %v4474 = vxor.u32 %v4210, 2147483648
    %v4475 = vxor.u32 %v2531, 2147483648
    %v4476 = vxor.u32 %v2533, 2147483648
    %v4477 = vxor.u32 %v3117, 2147483648
    %v4478 = vxor.u32 %v3119, 2147483648
    %v4479 = vxor.u32 %v3703, 2147483648
    %v4480 = vxor.u32 %v3705, 2147483648
    %v4481 = vxor.u32 %v4215, 2147483648
    %v4482 = vxor.u32 %v2537, 2147483648
    %v4483 = vxor.u32 %v2539, 2147483648
    %v4484 = vxor.u32 %v3123, 2147483648
    %v4485 = vxor.u32 %v3125, 2147483648
    %v4486 = vxor.u32 %v3709, 2147483648
    %v4487 = vxor.u32 %v3711, 2147483648
    %v4488 = vxor.u32 %v4220, 2147483648
    %v4489 = vmul.f32 %v4223, 1.442695
    %v4490 = vpow.pop %v4489
    %v4491 = vmul.f32 %v4224, 1.442695
    %v4492 = vpow.pop %v4491
    %v4493 = vmul.f32 %v4225, 1.442695
    %v4494 = vpow.pop %v4493
    %v4495 = vmul.f32 %v4226, 1.442695
    %v4496 = vpow.pop %v4495
    %v4497 = vmul.f32 %v4227, 1.442695
    %v4498 = vpow.pop %v4497
    %v4499 = vmul.f32 %v4228, 1.442695
    %v4500 = vpow.pop %v4499
    %v4501 = vmul.f32 %v4229, 1.442695
    %v4502 = vpow.pop %v4501
    %v4503 = vmul.f32 %v4230, 1.442695
    %v4504 = vpow.pop %v4503
    %v4505 = vmul.f32 %v4231, 1.442695
    %v4506 = vpow.pop %v4505
    %v4507 = vmul.f32 %v4232, 1.442695
    %v4508 = vpow.pop %v4507
    %v4509 = vmul.f32 %v4233, 1.442695
    %v4510 = vpow.pop %v4509
    %v4511 = vmul.f32 %v4234, 1.442695
    %v4512 = vpow.pop %v4511
    %v4513 = vmul.f32 %v4235, 1.442695
    %v4514 = vpow.pop %v4513
    %v4515 = vmul.f32 %v4236, 1.442695
    %v4516 = vpow.pop %v4515
    %v4517 = vmul.f32 %v4237, 1.442695
    %v4518 = vpow.pop %v4517
    %v4519 = vmul.f32 %v4238, 1.442695
    %v4520 = vpow.pop %v4519
    %v4521 = vmul.f32 %v4239, 1.442695
    %v4522 = vpow.pop %v4521
    %v4523 = vmul.f32 %v4240, 1.442695
    %v4524 = vpow.pop %v4523
    %v4525 = vmul.f32 %v4241, 1.442695
    %v4526 = vpow.pop %v4525
    %v4527 = vmul.f32 %v4242, 1.442695
    %v4528 = vpow.pop %v4527
    %v4529 = vmul.f32 %v4243, 1.442695
    %v4530 = vpow.pop %v4529
    %v4531 = vmul.f32 %v4244, 1.442695
    %v4532 = vpow.pop %v4531
    %v4533 = vmul.f32 %v4245, 1.442695
    %v4534 = vpow.pop %v4533
    %v4535 = vmul.f32 %v4246, 1.442695
    %v4536 = vpow.pop %v4535
    %v4537 = vmul.f32 %v4247, 1.442695
    %v4538 = vpow.pop %v4537
    %v4539 = vmul.f32 %v4248, 1.442695
    %v4540 = vpow.pop %v4539
    %v4541 = vmul.f32 %v4249, 1.442695
    %v4542 = vpow.pop %v4541
    %v4543 = vmul.f32 %v4250, 1.442695
    %v4544 = vpow.pop %v4543
    %v4545 = vmul.f32 %v4251, 1.442695
    %v4546 = vpow.pop %v4545
    %v4547 = vmul.f32 %v4252, 1.442695
    %v4548 = vpow.pop %v4547
    %v4549 = vmul.f32 %v4253, 1.442695
    %v4550 = vpow.pop %v4549
    %v4551 = vmul.f32 %v4254, 1.442695
    %v4552 = vpow.pop %v4551
    %v4553 = vmul.f32 %v4255, 1.442695
    %v4554 = vpow.pop %v4553
    %v4555 = vmul.f32 %v4256, 1.442695
    %v4556 = vpow.pop %v4555
    %v4557 = vmul.f32 %v4257, 1.442695
    %v4558 = vpow.pop %v4557
    %v4559 = vmul.f32 %v4258, 1.442695
    %v4560 = vpow.pop %v4559
    %v4561 = vmul.f32 %v4259, 1.442695
    %v4562 = vpow.pop %v4561
    %v4563 = vmul.f32 %v4260, 1.442695
    %v4564 = vpow.pop %v4563
    %v4565 = vmul.f32 %v4261, 1.442695
    %v4566 = vpow.pop %v4565
    %v4567 = vmul.f32 %v4262, 1.442695
    %v4568 = vpow.pop %v4567
    %v4569 = vmul.f32 %v4263, 1.442695
    %v4570 = vpow.pop %v4569
    %v4571 = vmul.f32 %v4264, 1.442695
    %v4572 = vpow.pop %v4571
    %v4573 = vmul.f32 %v4265, 1.442695
    %v4574 = vpow.pop %v4573
    %v4575 = vmul.f32 %v4266, 1.442695
    %v4576 = vpow.pop %v4575
    %v4577 = vmul.f32 %v4267, 1.442695
    %v4578 = vpow.pop %v4577
    %v4579 = vmul.f32 %v4268, 1.442695
    %v4580 = vpow.pop %v4579
    %v4581 = vmul.f32 %v4269, 1.442695
    %v4582 = vpow.pop %v4581
    %v4583 = vmul.f32 %v4270, 1.442695
    %v4584 = vpow.pop %v4583
    %v4585 = vmul.f32 %v4271, 1.442695
    %v4586 = vpow.pop %v4585
    %v4587 = vmul.f32 %v4272, 1.442695
    %v4588 = vpow.pop %v4587
    %v4589 = vmul.f32 %v4273, 1.442695
    %v4590 = vpow.pop %v4589
    %v4591 = vmul.f32 %v4274, 1.442695
    %v4592 = vpow.pop %v4591
    %v4593 = vmul.f32 %v4275, 1.442695
    %v4594 = vpow.pop %v4593
    %v4595 = vmul.f32 %v4276, 1.442695
    %v4596 = vpow.pop %v4595
    %v4597 = vmul.f32 %v4277, 1.442695
    %v4598 = vpow.pop %v4597
    %v4599 = vmul.f32 %v4278, 1.442695
    %v4600 = vpow.pop %v4599
    %v4601 = vmul.f32 %v4279, 1.442695
    %v4602 = vpow.pop %v4601
    %v4603 = vmul.f32 %v4280, 1.442695
    %v4604 = vpow.pop %v4603
    %v4605 = vmul.f32 %v4281, 1.442695
    %v4606 = vpow.pop %v4605
    %v4607 = vmul.f32 %v4282, 1.442695
    %v4608 = vpow.pop %v4607
    %v4609 = vmul.f32 %v4283, 1.442695
    %v4610 = vpow.pop %v4609
    %v4611 = vmul.f32 %v4284, 1.442695
    %v4612 = vpow.pop %v4611
    %v4613 = vmul.f32 %v4285, 1.442695
    %v4614 = vpow.pop %v4613
    %v4615 = vmul.f32 %v4286, 1.442695
    %v4616 = vpow.pop %v4615
    %v4617 = vmul.f32 %v4287, 1.442695
    %v4618 = vpow.pop %v4617
    %v4619 = vmul.f32 %v4288, 1.442695
    %v4620 = vpow.pop %v4619
    %v4621 = vmul.f32 %v4289, 1.442695
    %v4622 = vpow.pop %v4621
    %v4623 = vmul.f32 %v4290, 1.442695
    %v4624 = vpow.pop %v4623
    %v4625 = vmul.f32 %v4291, 1.442695
    %v4626 = vpow.pop %v4625
    %v4627 = vmul.f32 %v4292, 1.442695
    %v4628 = vpow.pop %v4627
    %v4629 = vmul.f32 %v4293, 1.442695
    %v4630 = vpow.pop %v4629
    %v4631 = vmul.f32 %v4294, 1.442695
    %v4632 = vpow.pop %v4631
    %v4633 = vmul.f32 %v4295, 1.442695
    %v4634 = vpow.pop %v4633
    %v4635 = vmul.f32 %v4296, 1.442695
    %v4636 = vpow.pop %v4635
    %v4637 = vmul.f32 %v4297, 1.442695
    %v4638 = vpow.pop %v4637
    %v4639 = vmul.f32 %v4298, 1.442695
    %v4640 = vpow.pop %v4639
    %v4641 = vmul.f32 %v4299, 1.442695
    %v4642 = vpow.pop %v4641
    %v4643 = vmul.f32 %v4300, 1.442695
    %v4644 = vpow.pop %v4643
    %v4645 = vmul.f32 %v4301, 1.442695
    %v4646 = vpow.pop %v4645
    %v4647 = vmul.f32 %v4302, 1.442695
    %v4648 = vpow.pop %v4647
    %v4649 = vmul.f32 %v4303, 1.442695
    %v4650 = vpow.pop %v4649
    %v4651 = vmul.f32 %v4304, 1.442695
    %v4652 = vpow.pop %v4651
    %v4653 = vmul.f32 %v4305, 1.442695
    %v4654 = vpow.pop %v4653
    %v4655 = vmul.f32 %v4306, 1.442695
    %v4656 = vpow.pop %v4655
    %v4657 = vmul.f32 %v4307, 1.442695
    %v4658 = vpow.pop %v4657
    %v4659 = vmul.f32 %v4308, 1.442695
    %v4660 = vpow.pop %v4659
    %v4661 = vmul.f32 %v4309, 1.442695
    %v4662 = vpow.pop %v4661
    %v4663 = vmul.f32 %v4310, 1.442695
    %v4664 = vpow.pop %v4663
    %v4665 = vmul.f32 %v4311, 1.442695
    %v4666 = vpow.pop %v4665
    %v4667 = vmul.f32 %v4312, 1.442695
    %v4668 = vpow.pop %v4667
    %v4669 = vmul.f32 %v4313, 1.442695
    %v4670 = vpow.pop %v4669
    %v4671 = vmul.f32 %v4314, 1.442695
    %v4672 = vpow.pop %v4671
    %v4673 = vmul.f32 %v4315, 1.442695
    %v4674 = vpow.pop %v4673
    %v4675 = vmul.f32 %v4316, 1.442695
    %v4676 = vpow.pop %v4675
    %v4677 = vmul.f32 %v4317, 1.442695
    %v4678 = vpow.pop %v4677
    %v4679 = vmul.f32 %v4318, 1.442695
    %v4680 = vpow.pop %v4679
    %v4681 = vmul.f32 %v4319, 1.442695
    %v4682 = vpow.pop %v4681
    %v4683 = vmul.f32 %v4320, 1.442695
    %v4684 = vpow.pop %v4683
    %v4685 = vmul.f32 %v4321, 1.442695
    %v4686 = vpow.pop %v4685
    %v4687 = vmul.f32 %v4322, 1.442695
    %v4688 = vpow.pop %v4687
    %v4689 = vmul.f32 %v4323, 1.442695
    %v4690 = vpow.pop %v4689
    %v4691 = vmul.f32 %v4324, 1.442695
    %v4692 = vpow.pop %v4691
    %v4693 = vmul.f32 %v4325, 1.442695
    %v4694 = vpow.pop %v4693
    %v4695 = vmul.f32 %v4326, 1.442695
    %v4696 = vpow.pop %v4695
    %v4697 = vmul.f32 %v4327, 1.442695
    %v4698 = vpow.pop %v4697
    %v4699 = vmul.f32 %v4328, 1.442695
    %v4700 = vpow.pop %v4699
    %v4701 = vmul.f32 %v4329, 1.442695
    %v4702 = vpow.pop %v4701
    %v4703 = vmul.f32 %v4330, 1.442695
    %v4704 = vpow.pop %v4703
    %v4705 = vmul.f32 %v4331, 1.442695
    %v4706 = vpow.pop %v4705
    %v4707 = vmul.f32 %v4332, 1.442695
    %v4708 = vpow.pop %v4707
    %v4709 = vmul.f32 %v4333, 1.442695
    %v4710 = vpow.pop %v4709
    %v4711 = vmul.f32 %v4334, 1.442695
    %v4712 = vpow.pop %v4711
    %v4713 = vmul.f32 %v4335, 1.442695
    %v4714 = vpow.pop %v4713
    %v4715 = vmul.f32 %v4336, 1.442695
    %v4716 = vpow.pop %v4715
    %v4717 = vmul.f32 %v4337, 1.442695
    %v4718 = vpow.pop %v4717
    %v4719 = vmul.f32 %v4338, 1.442695
    %v4720 = vpow.pop %v4719
    %v4721 = vmul.f32 %v4339, 1.442695
    %v4722 = vpow.pop %v4721
    %v4723 = vmul.f32 %v4340, 1.442695
    %v4724 = vpow.pop %v4723
    %v4725 = vmul.f32 %v4341, 1.442695
    %v4726 = vpow.pop %v4725
    %v4727 = vmul.f32 %v4342, 1.442695
    %v4728 = vpow.pop %v4727
    %v4729 = vmul.f32 %v4343, 1.442695
    %v4730 = vpow.pop %v4729
    %v4731 = vmul.f32 %v4344, 1.442695
    %v4732 = vpow.pop %v4731
    %v4733 = vmul.f32 %v4345, 1.442695
    %v4734 = vpow.pop %v4733
    %v4735 = vmul.f32 %v4346, 1.442695
    %v4736 = vpow.pop %v4735
    %v4737 = vmul.f32 %v4347, 1.442695
    %v4738 = vpow.pop %v4737
    %v4739 = vmul.f32 %v4348, 1.442695
    %v4740 = vpow.pop %v4739
    %v4741 = vmul.f32 %v4349, 1.442695
    %v4742 = vpow.pop %v4741
    %v4743 = vmul.f32 %v4350, 1.442695
    %v4744 = vpow.pop %v4743
    %v4745 = vmul.f32 %v4351, 1.442695
    %v4746 = vpow.pop %v4745
    %v4747 = vmul.f32 %v4352, 1.442695
    %v4748 = vpow.pop %v4747
    %v4749 = vmul.f32 %v4353, 1.442695
    %v4750 = vpow.pop %v4749
    %v4751 = vmul.f32 %v4354, 1.442695
    %v4752 = vpow.pop %v4751
    %v4753 = vmul.f32 %v4355, 1.442695
    %v4754 = vpow.pop %v4753
    %v4755 = vmul.f32 %v4356, 1.442695
    %v4756 = vpow.pop %v4755
    %v4757 = vmul.f32 %v4357, 1.442695
    %v4758 = vpow.pop %v4757
    %v4759 = vmul.f32 %v4358, 1.442695
    %v4760 = vpow.pop %v4759
    %v4761 = vmul.f32 %v4359, 1.442695
    %v4762 = vpow.pop %v4761
    %v4763 = vmul.f32 %v4360, 1.442695
    %v4764 = vpow.pop %v4763
    %v4765 = vmul.f32 %v4361, 1.442695
    %v4766 = vpow.pop %v4765
    %v4767 = vmul.f32 %v4362, 1.442695
    %v4768 = vpow.pop %v4767
    %v4769 = vmul.f32 %v4363, 1.442695
    %v4770 = vpow.pop %v4769
    %v4771 = vmul.f32 %v4364, 1.442695
    %v4772 = vpow.pop %v4771
    %v4773 = vmul.f32 %v4365, 1.442695
    %v4774 = vpow.pop %v4773
    %v4775 = vmul.f32 %v4366, 1.442695
    %v4776 = vpow.pop %v4775
    %v4777 = vmul.f32 %v4367, 1.442695
    %v4778 = vpow.pop %v4777
    %v4779 = vmul.f32 %v4368, 1.442695
    %v4780 = vpow.pop %v4779
    %v4781 = vmul.f32 %v4369, 1.442695
    %v4782 = vpow.pop %v4781
    %v4783 = vmul.f32 %v4370, 1.442695
    %v4784 = vpow.pop %v4783
    %v4785 = vmul.f32 %v4371, 1.442695
    %v4786 = vpow.pop %v4785
    %v4787 = vmul.f32 %v4372, 1.442695
    %v4788 = vpow.pop %v4787
    %v4789 = vmul.f32 %v4373, 1.442695
    %v4790 = vpow.pop %v4789
    %v4791 = vmul.f32 %v4374, 1.442695
    %v4792 = vpow.pop %v4791
    %v4793 = vmul.f32 %v4375, 1.442695
    %v4794 = vpow.pop %v4793
    %v4795 = vmul.f32 %v4376, 1.442695
    %v4796 = vpow.pop %v4795
    %v4797 = vmul.f32 %v4377, 1.442695
    %v4798 = vpow.pop %v4797
    %v4799 = vmul.f32 %v4378, 1.442695
    %v4800 = vpow.pop %v4799
    %v4801 = vmul.f32 %v4379, 1.442695
    %v4802 = vpow.pop %v4801
    %v4803 = vmul.f32 %v4380, 1.442695
    %v4804 = vpow.pop %v4803
    %v4805 = vmul.f32 %v4381, 1.442695
    %v4806 = vpow.pop %v4805
    %v4807 = vmul.f32 %v4382, 1.442695
    %v4808 = vpow.pop %v4807
    %v4809 = vmul.f32 %v4383, 1.442695
    %v4810 = vpow.pop %v4809
    %v4811 = vmul.f32 %v4384, 1.442695
    %v4812 = vpow.pop %v4811
    %v4813 = vmul.f32 %v4385, 1.442695
    %v4814 = vpow.pop %v4813
    %v4815 = vmul.f32 %v4386, 1.442695
    %v4816 = vpow.pop %v4815
    %v4817 = vmul.f32 %v4387, 1.442695
    %v4818 = vpow.pop %v4817
    %v4819 = vmul.f32 %v4388, 1.442695
    %v4820 = vpow.pop %v4819
    %v4821 = vmul.f32 %v4389, 1.442695
    %v4822 = vpow.pop %v4821
    %v4823 = vmul.f32 %v4390, 1.442695
    %v4824 = vpow.pop %v4823
    %v4825 = vmul.f32 %v4391, 1.442695
    %v4826 = vpow.pop %v4825
    %v4827 = vmul.f32 %v4392, 1.442695
    %v4828 = vpow.pop %v4827
    %v4829 = vmul.f32 %v4393, 1.442695
    %v4830 = vpow.pop %v4829
    %v4831 = vmul.f32 %v4394, 1.442695
    %v4832 = vpow.pop %v4831
    %v4833 = vmul.f32 %v4395, 1.442695
    %v4834 = vpow.pop %v4833
    %v4835 = vmul.f32 %v4396, 1.442695
    %v4836 = vpow.pop %v4835
    %v4837 = vmul.f32 %v4397, 1.442695
    %v4838 = vpow.pop %v4837
    %v4839 = vmul.f32 %v4398, 1.442695
    %v4840 = vpow.pop %v4839
    %v4841 = vmul.f32 %v4399, 1.442695
    %v4842 = vpow.pop %v4841
    %v4843 = vmul.f32 %v4400, 1.442695
    %v4844 = vpow.pop %v4843
    %v4845 = vmul.f32 %v4401, 1.442695
    %v4846 = vpow.pop %v4845
    %v4847 = vmul.f32 %v4402, 1.442695
    %v4848 = vpow.pop %v4847
    %v4849 = vmul.f32 %v4403, 1.442695
    %v4850 = vpow.pop %v4849
    %v4851 = vmul.f32 %v4404, 1.442695
    %v4852 = vpow.pop %v4851
    %v4853 = vmul.f32 %v4405, 1.442695
    %v4854 = vpow.pop %v4853
    %v4855 = vmul.f32 %v4406, 1.442695
    %v4856 = vpow.pop %v4855
    %v4857 = vmul.f32 %v4407, 1.442695
    %v4858 = vpow.pop %v4857
    %v4859 = vmul.f32 %v4408, 1.442695
    %v4860 = vpow.pop %v4859
    %v4861 = vmul.f32 %v4409, 1.442695
    %v4862 = vpow.pop %v4861
    %v4863 = vmul.f32 %v4410, 1.442695
    %v4864 = vpow.pop %v4863
    %v4865 = vmul.f32 %v4411, 1.442695
    %v4866 = vpow.pop %v4865
    %v4867 = vmul.f32 %v4412, 1.442695
    %v4868 = vpow.pop %v4867
    %v4869 = vmul.f32 %v4413, 1.442695
    %v4870 = vpow.pop %v4869
    %v4871 = vmul.f32 %v4414, 1.442695
    %v4872 = vpow.pop %v4871
    %v4873 = vmul.f32 %v4415, 1.442695
    %v4874 = vpow.pop %v4873
    %v4875 = vmul.f32 %v4416, 1.442695
    %v4876 = vpow.pop %v4875
    %v4877 = vmul.f32 %v4417, 1.442695
    %v4878 = vpow.pop %v4877
    %v4879 = vmul.f32 %v4418, 1.442695
    %v4880 = vpow.pop %v4879
    %v4881 = vmul.f32 %v4419, 1.442695
    %v4882 = vpow.pop %v4881
    %v4883 = vmul.f32 %v4420, 1.442695
    %v4884 = vpow.pop %v4883
    %v4885 = vmul.f32 %v4421, 1.442695
    %v4886 = vpow.pop %v4885
    %v4887 = vmul.f32 %v4422, 1.442695
    %v4888 = vpow.pop %v4887
    %v4889 = vmul.f32 %v4423, 1.442695
    %v4890 = vpow.pop %v4889
    %v4891 = vmul.f32 %v4424, 1.442695
    %v4892 = vpow.pop %v4891
    %v4893 = vmul.f32 %v4425, 1.442695
    %v4894 = vpow.pop %v4893
    %v4895 = vmul.f32 %v4426, 1.442695
    %v4896 = vpow.pop %v4895
    %v4897 = vmul.f32 %v4427, 1.442695
    %v4898 = vpow.pop %v4897
    %v4899 = vmul.f32 %v4428, 1.442695
    %v4900 = vpow.pop %v4899
    %v4901 = vmul.f32 %v4429, 1.442695
    %v4902 = vpow.pop %v4901
    %v4903 = vmul.f32 %v4430, 1.442695
    %v4904 = vpow.pop %v4903
    %v4905 = vmul.f32 %v4431, 1.442695
    %v4906 = vpow.pop %v4905
    %v4907 = vmul.f32 %v4432, 1.442695
    %v4908 = vpow.pop %v4907
    %v4909 = vmul.f32 %v4433, 1.442695
    %v4910 = vpow.pop %v4909
    %v4911 = vmul.f32 %v4434, 1.442695
    %v4912 = vpow.pop %v4911
    %v4913 = vmul.f32 %v4435, 1.442695
    %v4914 = vpow.pop %v4913
    %v4915 = vmul.f32 %v4436, 1.442695
    %v4916 = vpow.pop %v4915
    %v4917 = vmul.f32 %v4437, 1.442695
    %v4918 = vpow.pop %v4917
    %v4919 = vmul.f32 %v4438, 1.442695
    %v4920 = vpow.pop %v4919
    %v4921 = vmul.f32 %v4439, 1.442695
    %v4922 = vpow.pop %v4921
    %v4923 = vmul.f32 %v4440, 1.442695
    %v4924 = vpow.pop %v4923
    %v4925 = vmul.f32 %v4441, 1.442695
    %v4926 = vpow.pop %v4925
    %v4927 = vmul.f32 %v4442, 1.442695
    %v4928 = vpow.pop %v4927
    %v4929 = vmul.f32 %v4443, 1.442695
    %v4930 = vpow.pop %v4929
    %v4931 = vmul.f32 %v4444, 1.442695
    %v4932 = vpow.pop %v4931
    %v4933 = vmul.f32 %v4445, 1.442695
    %v4934 = vpow.pop %v4933
    %v4935 = vmul.f32 %v4446, 1.442695
    %v4936 = vpow.pop %v4935
    %v4937 = vmul.f32 %v4447, 1.442695
    %v4938 = vpow.pop %v4937
    %v4939 = vmul.f32 %v4448, 1.442695
    %v4940 = vpow.pop %v4939
    %v4941 = vmul.f32 %v4449, 1.442695
    %v4942 = vpow.pop %v4941
    %v4943 = vmul.f32 %v4450, 1.442695
    %v4944 = vpow.pop %v4943
    %v4945 = vmul.f32 %v4451, 1.442695
    %v4946 = vpow.pop %v4945
    %v4947 = vmul.f32 %v4452, 1.442695
    %v4948 = vpow.pop %v4947
    %v4949 = vmul.f32 %v4453, 1.442695
    %v4950 = vpow.pop %v4949
    %v4951 = vmul.f32 %v4454, 1.442695
    %v4952 = vpow.pop %v4951
    %v4953 = vmul.f32 %v4455, 1.442695
    %v4954 = vpow.pop %v4953
    %v4955 = vmul.f32 %v4456, 1.442695
    %v4956 = vpow.pop %v4955
    %v4957 = vmul.f32 %v4457, 1.442695
    %v4958 = vpow.pop %v4957
    %v4959 = vmul.f32 %v4458, 1.442695
    %v4960 = vpow.pop %v4959
    %v4961 = vmul.f32 %v4459, 1.442695
    %v4962 = vpow.pop %v4961
    %v4963 = vmul.f32 %v4460, 1.442695
    %v4964 = vpow.pop %v4963
    %v4965 = vmul.f32 %v4461, 1.442695
    %v4966 = vpow.pop %v4965
    %v4967 = vmul.f32 %v4462, 1.442695
    %v4968 = vpow.pop %v4967
    %v4969 = vmul.f32 %v4463, 1.442695
    %v4970 = vpow.pop %v4969
    %v4971 = vmul.f32 %v4464, 1.442695
    %v4972 = vpow.pop %v4971
    %v4973 = vmul.f32 %v4465, 1.442695
    %v4974 = vpow.pop %v4973
    %v4975 = vmul.f32 %v4466, 1.442695
    %v4976 = vpow.pop %v4975
    %v4977 = vmul.f32 %v4467, 1.442695
    %v4978 = vpow.pop %v4977
    %v4979 = vmul.f32 %v4468, 1.442695
    %v4980 = vpow.pop %v4979
    %v4981 = vmul.f32 %v4469, 1.442695
    %v4982 = vpow.pop %v4981
    %v4983 = vmul.f32 %v4470, 1.442695
    %v4984 = vpow.pop %v4983
    %v4985 = vmul.f32 %v4471, 1.442695
    %v4986 = vpow.pop %v4985
    %v4987 = vmul.f32 %v4472, 1.442695
    %v4988 = vpow.pop %v4987
    %v4989 = vmul.f32 %v4473, 1.442695
    %v4990 = vpow.pop %v4989
    %v4991 = vmul.f32 %v4474, 1.442695
    %v4992 = vpow.pop %v4991
    %v4993 = vmul.f32 %v4475, 1.442695
    %v4994 = vpow.pop %v4993
    %v4995 = vmul.f32 %v4476, 1.442695
    %v4996 = vpow.pop %v4995
    %v4997 = vmul.f32 %v4477, 1.442695
    %v4998 = vpow.pop %v4997
    %v4999 = vmul.f32 %v4478, 1.442695
    %v5000 = vpow.pop %v4999
    %v5001 = vmul.f32 %v4479, 1.442695
    %v5002 = vpow.pop %v5001
    %v5003 = vmul.f32 %v4480, 1.442695
    %v5004 = vpow.pop %v5003
    %v5005 = vmul.f32 %v4481, 1.442695
    %v5006 = vpow.pop %v5005
    %v5007 = vmul.f32 %v4482, 1.442695
    %v5008 = vpow.pop %v5007
    %v5009 = vmul.f32 %v4483, 1.442695
    %v5010 = vpow.pop %v5009
    %v5011 = vmul.f32 %v4484, 1.442695
    %v5012 = vpow.pop %v5011
    %v5013 = vmul.f32 %v4485, 1.442695
    %v5014 = vpow.pop %v5013
    %v5015 = vmul.f32 %v4486, 1.442695
    %v5016 = vpow.pop %v5015
    %v5017 = vmul.f32 %v4487, 1.442695
    %v5018 = vpow.pop %v5017
    %v5019 = vmul.f32 %v4488, 1.442695
    %v5020 = vpow.pop %v5019
    %v5021 = vadd.f32 %v4490, 1.0
    %v5022 = vadd.f32 %v4492, 1.0
    %v5023 = vadd.f32 %v4494, 1.0
    %v5024 = vadd.f32 %v4496, 1.0
    %v5025 = vadd.f32 %v4498, 1.0
    %v5026 = vadd.f32 %v4500, 1.0
    %v5027 = vadd.f32 %v4502, 1.0
    %v5028 = vadd.f32 %v4504, 1.0
    %v5029 = vadd.f32 %v4506, 1.0
    %v5030 = vadd.f32 %v4508, 1.0
    %v5031 = vadd.f32 %v4510, 1.0
    %v5032 = vadd.f32 %v4512, 1.0
    %v5033 = vadd.f32 %v4514, 1.0
    %v5034 = vadd.f32 %v4516, 1.0
    %v5035 = vadd.f32 %v4518, 1.0
    %v5036 = vadd.f32 %v4520, 1.0
    %v5037 = vadd.f32 %v4522, 1.0
    %v5038 = vadd.f32 %v4524, 1.0
    %v5039 = vadd.f32 %v4526, 1.0
    %v5040 = vadd.f32 %v4528, 1.0
    %v5041 = vadd.f32 %v4530, 1.0
    %v5042 = vadd.f32 %v4532, 1.0
    %v5043 = vadd.f32 %v4534, 1.0
    %v5044 = vadd.f32 %v4536, 1.0
    %v5045 = vadd.f32 %v4538, 1.0
    %v5046 = vadd.f32 %v4540, 1.0
    %v5047 = vadd.f32 %v4542, 1.0
    %v5048 = vadd.f32 %v4544, 1.0
    %v5049 = vadd.f32 %v4546, 1.0
    %v5050 = vadd.f32 %v4548, 1.0
    %v5051 = vadd.f32 %v4550, 1.0
    %v5052 = vadd.f32 %v4552, 1.0
    %v5053 = vadd.f32 %v4554, 1.0
    %v5054 = vadd.f32 %v4556, 1.0
    %v5055 = vadd.f32 %v4558, 1.0
    %v5056 = vadd.f32 %v4560, 1.0
    %v5057 = vadd.f32 %v4562, 1.0
    %v5058 = vadd.f32 %v4564, 1.0
    %v5059 = vadd.f32 %v4566, 1.0
    %v5060 = vadd.f32 %v4568, 1.0
    %v5061 = vadd.f32 %v4570, 1.0
    %v5062 = vadd.f32 %v4572, 1.0
    %v5063 = vadd.f32 %v4574, 1.0
    %v5064 = vadd.f32 %v4576, 1.0
    %v5065 = vadd.f32 %v4578, 1.0
    %v5066 = vadd.f32 %v4580, 1.0
    %v5067 = vadd.f32 %v4582, 1.0
    %v5068 = vadd.f32 %v4584, 1.0
    %v5069 = vadd.f32 %v4586, 1.0
    %v5070 = vadd.f32 %v4588, 1.0
    %v5071 = vadd.f32 %v4590, 1.0
    %v5072 = vadd.f32 %v4592, 1.0
    %v5073 = vadd.f32 %v4594, 1.0
    %v5074 = vadd.f32 %v4596, 1.0
    %v5075 = vadd.f32 %v4598, 1.0
    %v5076 = vadd.f32 %v4600, 1.0
    %v5077 = vadd.f32 %v4602, 1.0
    %v5078 = vadd.f32 %v4604, 1.0
    %v5079 = vadd.f32 %v4606, 1.0
    %v5080 = vadd.f32 %v4608, 1.0
    %v5081 = vadd.f32 %v4610, 1.0
    %v5082 = vadd.f32 %v4612, 1.0
    %v5083 = vadd.f32 %v4614, 1.0
    %v5084 = vadd.f32 %v4616, 1.0
    %v5085 = vadd.f32 %v4618, 1.0
    %v5086 = vadd.f32 %v4620, 1.0
    %v5087 = vadd.f32 %v4622, 1.0
    %v5088 = vadd.f32 %v4624, 1.0
    %v5089 = vadd.f32 %v4626, 1.0
    %v5090 = vadd.f32 %v4628, 1.0
    %v5091 = vadd.f32 %v4630, 1.0
    %v5092 = vadd.f32 %v4632, 1.0
    %v5093 = vadd.f32 %v4634, 1.0
    %v5094 = vadd.f32 %v4636, 1.0
    %v5095 = vadd.f32 %v4638, 1.0
    %v5096 = vadd.f32 %v4640, 1.0
    %v5097 = vadd.f32 %v4642, 1.0
    %v5098 = vadd.f32 %v4644, 1.0
    %v5099 = vadd.f32 %v4646, 1.0
    %v5100 = vadd.f32 %v4648, 1.0
    %v5101 = vadd.f32 %v4650, 1.0
    %v5102 = vadd.f32 %v4652, 1.0
    %v5103 = vadd.f32 %v4654, 1.0
    %v5104 = vadd.f32 %v4656, 1.0
    %v5105 = vadd.f32 %v4658, 1.0
    %v5106 = vadd.f32 %v4660, 1.0
    %v5107 = vadd.f32 %v4662, 1.0
    %v5108 = vadd.f32 %v4664, 1.0
    %v5109 = vadd.f32 %v4666, 1.0
    %v5110 = vadd.f32 %v4668, 1.0
    %v5111 = vadd.f32 %v4670, 1.0
    %v5112 = vadd.f32 %v4672, 1.0
    %v5113 = vadd.f32 %v4674, 1.0
    %v5114 = vadd.f32 %v4676, 1.0
    %v5115 = vadd.f32 %v4678, 1.0
    %v5116 = vadd.f32 %v4680, 1.0
    %v5117 = vadd.f32 %v4682, 1.0
    %v5118 = vadd.f32 %v4684, 1.0
    %v5119 = vadd.f32 %v4686, 1.0
    %v5120 = vadd.f32 %v4688, 1.0
    %v5121 = vadd.f32 %v4690, 1.0
    %v5122 = vadd.f32 %v4692, 1.0
    %v5123 = vadd.f32 %v4694, 1.0
    %v5124 = vadd.f32 %v4696, 1.0
    %v5125 = vadd.f32 %v4698, 1.0
    %v5126 = vadd.f32 %v4700, 1.0
    %v5127 = vadd.f32 %v4702, 1.0
    %v5128 = vadd.f32 %v4704, 1.0
    %v5129 = vadd.f32 %v4706, 1.0
    %v5130 = vadd.f32 %v4708, 1.0
    %v5131 = vadd.f32 %v4710, 1.0
    %v5132 = vadd.f32 %v4712, 1.0
    %v5133 = vadd.f32 %v4714, 1.0
    %v5134 = vadd.f32 %v4716, 1.0
    %v5135 = vadd.f32 %v4718, 1.0
    %v5136 = vadd.f32 %v4720, 1.0
    %v5137 = vadd.f32 %v4722, 1.0
    %v5138 = vadd.f32 %v4724, 1.0
    %v5139 = vadd.f32 %v4726, 1.0
    %v5140 = vadd.f32 %v4728, 1.0
    %v5141 = vadd.f32 %v4730, 1.0
    %v5142 = vadd.f32 %v4732, 1.0
    %v5143 = vadd.f32 %v4734, 1.0
    %v5144 = vadd.f32 %v4736, 1.0
    %v5145 = vadd.f32 %v4738, 1.0
    %v5146 = vadd.f32 %v4740, 1.0
    %v5147 = vadd.f32 %v4742, 1.0
    %v5148 = vadd.f32 %v4744, 1.0
    %v5149 = vadd.f32 %v4746, 1.0
    %v5150 = vadd.f32 %v4748, 1.0
    %v5151 = vadd.f32 %v4750, 1.0
    %v5152 = vadd.f32 %v4752, 1.0
    %v5153 = vadd.f32 %v4754, 1.0
    %v5154 = vadd.f32 %v4756, 1.0
    %v5155 = vadd.f32 %v4758, 1.0
    %v5156 = vadd.f32 %v4760, 1.0
    %v5157 = vadd.f32 %v4762, 1.0
    %v5158 = vadd.f32 %v4764, 1.0
    %v5159 = vadd.f32 %v4766, 1.0
    %v5160 = vadd.f32 %v4768, 1.0
    %v5161 = vadd.f32 %v4770, 1.0
    %v5162 = vadd.f32 %v4772, 1.0
    %v5163 = vadd.f32 %v4774, 1.0
    %v5164 = vadd.f32 %v4776, 1.0
    %v5165 = vadd.f32 %v4778, 1.0
    %v5166 = vadd.f32 %v4780, 1.0
    %v5167 = vadd.f32 %v4782, 1.0
    %v5168 = vadd.f32 %v4784, 1.0
    %v5169 = vadd.f32 %v4786, 1.0
    %v5170 = vadd.f32 %v4788, 1.0
    %v5171 = vadd.f32 %v4790, 1.0
    %v5172 = vadd.f32 %v4792, 1.0
    %v5173 = vadd.f32 %v4794, 1.0
    %v5174 = vadd.f32 %v4796, 1.0
    %v5175 = vadd.f32 %v4798, 1.0
    %v5176 = vadd.f32 %v4800, 1.0
    %v5177 = vadd.f32 %v4802, 1.0
    %v5178 = vadd.f32 %v4804, 1.0
    %v5179 = vadd.f32 %v4806, 1.0
    %v5180 = vadd.f32 %v4808, 1.0
    %v5181 = vadd.f32 %v4810, 1.0
    %v5182 = vadd.f32 %v4812, 1.0
    %v5183 = vadd.f32 %v4814, 1.0
    %v5184 = vadd.f32 %v4816, 1.0
    %v5185 = vadd.f32 %v4818, 1.0
    %v5186 = vadd.f32 %v4820, 1.0
    %v5187 = vadd.f32 %v4822, 1.0
    %v5188 = vadd.f32 %v4824, 1.0
    %v5189 = vadd.f32 %v4826, 1.0
    %v5190 = vadd.f32 %v4828, 1.0
    %v5191 = vadd.f32 %v4830, 1.0
    %v5192 = vadd.f32 %v4832, 1.0
    %v5193 = vadd.f32 %v4834, 1.0
    %v5194 = vadd.f32 %v4836, 1.0
    %v5195 = vadd.f32 %v4838, 1.0
    %v5196 = vadd.f32 %v4840, 1.0
    %v5197 = vadd.f32 %v4842, 1.0
    %v5198 = vadd.f32 %v4844, 1.0
    %v5199 = vadd.f32 %v4846, 1.0
    %v5200 = vadd.f32 %v4848, 1.0
    %v5201 = vadd.f32 %v4850, 1.0
    %v5202 = vadd.f32 %v4852, 1.0
    %v5203 = vadd.f32 %v4854, 1.0
    %v5204 = vadd.f32 %v4856, 1.0
    %v5205 = vadd.f32 %v4858, 1.0
    %v5206 = vadd.f32 %v4860, 1.0
    %v5207 = vadd.f32 %v4862, 1.0
    %v5208 = vadd.f32 %v4864, 1.0
    %v5209 = vadd.f32 %v4866, 1.0
    %v5210 = vadd.f32 %v4868, 1.0
    %v5211 = vadd.f32 %v4870, 1.0
    %v5212 = vadd.f32 %v4872, 1.0
    %v5213 = vadd.f32 %v4874, 1.0
    %v5214 = vadd.f32 %v4876, 1.0
    %v5215 = vadd.f32 %v4878, 1.0
    %v5216 = vadd.f32 %v4880, 1.0
    %v5217 = vadd.f32 %v4882, 1.0
    %v5218 = vadd.f32 %v4884, 1.0
    %v5219 = vadd.f32 %v4886, 1.0
    %v5220 = vadd.f32 %v4888, 1.0
    %v5221 = vadd.f32 %v4890, 1.0
    %v5222 = vadd.f32 %v4892, 1.0
    %v5223 = vadd.f32 %v4894, 1.0
    %v5224 = vadd.f32 %v4896, 1.0
    %v5225 = vadd.f32 %v4898, 1.0
    %v5226 = vadd.f32 %v4900, 1.0
    %v5227 = vadd.f32 %v4902, 1.0
    %v5228 = vadd.f32 %v4904, 1.0
    %v5229 = vadd.f32 %v4906, 1.0
    %v5230 = vadd.f32 %v4908, 1.0
    %v5231 = vadd.f32 %v4910, 1.0
    %v5232 = vadd.f32 %v4912, 1.0
    %v5233 = vadd.f32 %v4914, 1.0
    %v5234 = vadd.f32 %v4916, 1.0
    %v5235 = vadd.f32 %v4918, 1.0
    %v5236 = vadd.f32 %v4920, 1.0
    %v5237 = vadd.f32 %v4922, 1.0
    %v5238 = vadd.f32 %v4924, 1.0
    %v5239 = vadd.f32 %v4926, 1.0
    %v5240 = vadd.f32 %v4928, 1.0
    %v5241 = vadd.f32 %v4930, 1.0
    %v5242 = vadd.f32 %v4932, 1.0
    %v5243 = vadd.f32 %v4934, 1.0
    %v5244 = vadd.f32 %v4936, 1.0
    %v5245 = vadd.f32 %v4938, 1.0
    %v5246 = vadd.f32 %v4940, 1.0
    %v5247 = vadd.f32 %v4942, 1.0
    %v5248 = vadd.f32 %v4944, 1.0
    %v5249 = vadd.f32 %v4946, 1.0
    %v5250 = vadd.f32 %v4948, 1.0
    %v5251 = vadd.f32 %v4950, 1.0
    %v5252 = vadd.f32 %v4952, 1.0
    %v5253 = vadd.f32 %v4954, 1.0
    %v5254 = vadd.f32 %v4956, 1.0
    %v5255 = vadd.f32 %v4958, 1.0
    %v5256 = vadd.f32 %v4960, 1.0
    %v5257 = vadd.f32 %v4962, 1.0
    %v5258 = vadd.f32 %v4964, 1.0
    %v5259 = vadd.f32 %v4966, 1.0
    %v5260 = vadd.f32 %v4968, 1.0
    %v5261 = vadd.f32 %v4970, 1.0
    %v5262 = vadd.f32 %v4972, 1.0
    %v5263 = vadd.f32 %v4974, 1.0
    %v5264 = vadd.f32 %v4976, 1.0
    %v5265 = vadd.f32 %v4978, 1.0
    %v5266 = vadd.f32 %v4980, 1.0
    %v5267 = vadd.f32 %v4982, 1.0
    %v5268 = vadd.f32 %v4984, 1.0
    %v5269 = vadd.f32 %v4986, 1.0
    %v5270 = vadd.f32 %v4988, 1.0
    %v5271 = vadd.f32 %v4990, 1.0
    %v5272 = vadd.f32 %v4992, 1.0
    %v5273 = vadd.f32 %v4994, 1.0
    %v5274 = vadd.f32 %v4996, 1.0
    %v5275 = vadd.f32 %v4998, 1.0
    %v5276 = vadd.f32 %v5000, 1.0
    %v5277 = vadd.f32 %v5002, 1.0
    %v5278 = vadd.f32 %v5004, 1.0
    %v5279 = vadd.f32 %v5006, 1.0
    %v5280 = vadd.f32 %v5008, 1.0
    %v5281 = vadd.f32 %v5010, 1.0
    %v5282 = vadd.f32 %v5012, 1.0
    %v5283 = vadd.f32 %v5014, 1.0
    %v5284 = vadd.f32 %v5016, 1.0
    %v5285 = vadd.f32 %v5018, 1.0
    %v5286 = vadd.f32 %v5020, 1.0
    %v5287 = vrcp.pop %v5021
    %v5288 = vmul.f32 1.0, %v5287
    %v5289 = vrcp.pop %v5022
    %v5290 = vmul.f32 1.0, %v5289
    %v5291 = vrcp.pop %v5023
    %v5292 = vmul.f32 1.0, %v5291
    %v5293 = vrcp.pop %v5024
    %v5294 = vmul.f32 1.0, %v5293
    %v5295 = vrcp.pop %v5025
    %v5296 = vmul.f32 1.0, %v5295
    %v5297 = vrcp.pop %v5026
    %v5298 = vmul.f32 1.0, %v5297
    %v5299 = vrcp.pop %v5027
    %v5300 = vmul.f32 1.0, %v5299
    %v5301 = vrcp.pop %v5028
    %v5302 = vmul.f32 1.0, %v5301
    %v5303 = vrcp.pop %v5029
    %v5304 = vmul.f32 1.0, %v5303
    %v5305 = vrcp.pop %v5030
    %v5306 = vmul.f32 1.0, %v5305
    %v5307 = vrcp.pop %v5031
    %v5308 = vmul.f32 1.0, %v5307
    %v5309 = vrcp.pop %v5032
    %v5310 = vmul.f32 1.0, %v5309
    %v5311 = vrcp.pop %v5033
    %v5312 = vmul.f32 1.0, %v5311
    %v5313 = vrcp.pop %v5034
    %v5314 = vmul.f32 1.0, %v5313
    %v5315 = vrcp.pop %v5035
    %v5316 = vmul.f32 1.0, %v5315
    %v5317 = vrcp.pop %v5036
    %v5318 = vmul.f32 1.0, %v5317
    %v5319 = vrcp.pop %v5037
    %v5320 = vmul.f32 1.0, %v5319
    %v5321 = vrcp.pop %v5038
    %v5322 = vmul.f32 1.0, %v5321
    %v5323 = vrcp.pop %v5039
    %v5324 = vmul.f32 1.0, %v5323
    %v5325 = vrcp.pop %v5040
    %v5326 = vmul.f32 1.0, %v5325
    %v5327 = vrcp.pop %v5041
    %v5328 = vmul.f32 1.0, %v5327
    %v5329 = vrcp.pop %v5042
    %v5330 = vmul.f32 1.0, %v5329
    %v5331 = vrcp.pop %v5043
    %v5332 = vmul.f32 1.0, %v5331
    %v5333 = vrcp.pop %v5044
    %v5334 = vmul.f32 1.0, %v5333
    %v5335 = vrcp.pop %v5045
    %v5336 = vmul.f32 1.0, %v5335
    %v5337 = vrcp.pop %v5046
    %v5338 = vmul.f32 1.0, %v5337
    %v5339 = vrcp.pop %v5047
    %v5340 = vmul.f32 1.0, %v5339
    %v5341 = vrcp.pop %v5048
    %v5342 = vmul.f32 1.0, %v5341
    %v5343 = vrcp.pop %v5049
    %v5344 = vmul.f32 1.0, %v5343
    %v5345 = vrcp.pop %v5050
    %v5346 = vmul.f32 1.0, %v5345
    %v5347 = vrcp.pop %v5051
    %v5348 = vmul.f32 1.0, %v5347
    %v5349 = vrcp.pop %v5052
    %v5350 = vmul.f32 1.0, %v5349
    %v5351 = vrcp.pop %v5053
    %v5352 = vmul.f32 1.0, %v5351
    %v5353 = vrcp.pop %v5054
    %v5354 = vmul.f32 1.0, %v5353
    %v5355 = vrcp.pop %v5055
    %v5356 = vmul.f32 1.0, %v5355
    %v5357 = vrcp.pop %v5056
    %v5358 = vmul.f32 1.0, %v5357
    %v5359 = vrcp.pop %v5057
    %v5360 = vmul.f32 1.0, %v5359
    %v5361 = vrcp.pop %v5058
    %v5362 = vmul.f32 1.0, %v5361
    %v5363 = vrcp.pop %v5059
    %v5364 = vmul.f32 1.0, %v5363
    %v5365 = vrcp.pop %v5060
    %v5366 = vmul.f32 1.0, %v5365
    %v5367 = vrcp.pop %v5061
    %v5368 = vmul.f32 1.0, %v5367
    %v5369 = vrcp.pop %v5062
    %v5370 = vmul.f32 1.0, %v5369
    %v5371 = vrcp.pop %v5063
    %v5372 = vmul.f32 1.0, %v5371
    %v5373 = vrcp.pop %v5064
    %v5374 = vmul.f32 1.0, %v5373
    %v5375 = vrcp.pop %v5065
    %v5376 = vmul.f32 1.0, %v5375
    %v5377 = vrcp.pop %v5066
    %v5378 = vmul.f32 1.0, %v5377
    %v5379 = vrcp.pop %v5067
    %v5380 = vmul.f32 1.0, %v5379
    %v5381 = vrcp.pop %v5068
    %v5382 = vmul.f32 1.0, %v5381
    %v5383 = vrcp.pop %v5069
    %v5384 = vmul.f32 1.0, %v5383
    %v5385 = vrcp.pop %v5070
    %v5386 = vmul.f32 1.0, %v5385
    %v5387 = vrcp.pop %v5071
    %v5388 = vmul.f32 1.0, %v5387
    %v5389 = vrcp.pop %v5072
    %v5390 = vmul.f32 1.0, %v5389
    %v5391 = vrcp.pop %v5073
    %v5392 = vmul.f32 1.0, %v5391
    %v5393 = vrcp.pop %v5074
    %v5394 = vmul.f32 1.0, %v5393
    %v5395 = vrcp.pop %v5075
    %v5396 = vmul.f32 1.0, %v5395
    %v5397 = vrcp.pop %v5076
    %v5398 = vmul.f32 1.0, %v5397
    %v5399 = vrcp.pop %v5077
    %v5400 = vmul.f32 1.0, %v5399
    %v5401 = vrcp.pop %v5078
    %v5402 = vmul.f32 1.0, %v5401
    %v5403 = vrcp.pop %v5079
    %v5404 = vmul.f32 1.0, %v5403
    %v5405 = vrcp.pop %v5080
    %v5406 = vmul.f32 1.0, %v5405
    %v5407 = vrcp.pop %v5081
    %v5408 = vmul.f32 1.0, %v5407
    %v5409 = vrcp.pop %v5082
    %v5410 = vmul.f32 1.0, %v5409
    %v5411 = vrcp.pop %v5083
    %v5412 = vmul.f32 1.0, %v5411
    %v5413 = vrcp.pop %v5084
    %v5414 = vmul.f32 1.0, %v5413
    %v5415 = vrcp.pop %v5085
    %v5416 = vmul.f32 1.0, %v5415
    %v5417 = vrcp.pop %v5086
    %v5418 = vmul.f32 1.0, %v5417
    %v5419 = vrcp.pop %v5087
    %v5420 = vmul.f32 1.0, %v5419
    %v5421 = vrcp.pop %v5088
    %v5422 = vmul.f32 1.0, %v5421
    %v5423 = vrcp.pop %v5089
    %v5424 = vmul.f32 1.0, %v5423
    %v5425 = vrcp.pop %v5090
    %v5426 = vmul.f32 1.0, %v5425
    %v5427 = vrcp.pop %v5091
    %v5428 = vmul.f32 1.0, %v5427
    %v5429 = vrcp.pop %v5092
    %v5430 = vmul.f32 1.0, %v5429
    %v5431 = vrcp.pop %v5093
    %v5432 = vmul.f32 1.0, %v5431
    %v5433 = vrcp.pop %v5094
    %v5434 = vmul.f32 1.0, %v5433
    %v5435 = vrcp.pop %v5095
    %v5436 = vmul.f32 1.0, %v5435
    %v5437 = vrcp.pop %v5096
    %v5438 = vmul.f32 1.0, %v5437
    %v5439 = vrcp.pop %v5097
    %v5440 = vmul.f32 1.0, %v5439
    %v5441 = vrcp.pop %v5098
    %v5442 = vmul.f32 1.0, %v5441
    %v5443 = vrcp.pop %v5099
    %v5444 = vmul.f32 1.0, %v5443
    %v5445 = vrcp.pop %v5100
    %v5446 = vmul.f32 1.0, %v5445
    %v5447 = vrcp.pop %v5101
    %v5448 = vmul.f32 1.0, %v5447
    %v5449 = vrcp.pop %v5102
    %v5450 = vmul.f32 1.0, %v5449
    %v5451 = vrcp.pop %v5103
    %v5452 = vmul.f32 1.0, %v5451
    %v5453 = vrcp.pop %v5104
    %v5454 = vmul.f32 1.0, %v5453
    %v5455 = vrcp.pop %v5105
    %v5456 = vmul.f32 1.0, %v5455
    %v5457 = vrcp.pop %v5106
    %v5458 = vmul.f32 1.0, %v5457
    %v5459 = vrcp.pop %v5107
    %v5460 = vmul.f32 1.0, %v5459
    %v5461 = vrcp.pop %v5108
    %v5462 = vmul.f32 1.0, %v5461
    %v5463 = vrcp.pop %v5109
    %v5464 = vmul.f32 1.0, %v5463
    %v5465 = vrcp.pop %v5110
    %v5466 = vmul.f32 1.0, %v5465
    %v5467 = vrcp.pop %v5111
    %v5468 = vmul.f32 1.0, %v5467
    %v5469 = vrcp.pop %v5112
    %v5470 = vmul.f32 1.0, %v5469
    %v5471 = vrcp.pop %v5113
    %v5472 = vmul.f32 1.0, %v5471
    %v5473 = vrcp.pop %v5114
    %v5474 = vmul.f32 1.0, %v5473
    %v5475 = vrcp.pop %v5115
    %v5476 = vmul.f32 1.0, %v5475
    %v5477 = vrcp.pop %v5116
    %v5478 = vmul.f32 1.0, %v5477
    %v5479 = vrcp.pop %v5117
    %v5480 = vmul.f32 1.0, %v5479
    %v5481 = vrcp.pop %v5118
    %v5482 = vmul.f32 1.0, %v5481
    %v5483 = vrcp.pop %v5119
    %v5484 = vmul.f32 1.0, %v5483
    %v5485 = vrcp.pop %v5120
    %v5486 = vmul.f32 1.0, %v5485
    %v5487 = vrcp.pop %v5121
    %v5488 = vmul.f32 1.0, %v5487
    %v5489 = vrcp.pop %v5122
    %v5490 = vmul.f32 1.0, %v5489
    %v5491 = vrcp.pop %v5123
    %v5492 = vmul.f32 1.0, %v5491
    %v5493 = vrcp.pop %v5124
    %v5494 = vmul.f32 1.0, %v5493
    %v5495 = vrcp.pop %v5125
    %v5496 = vmul.f32 1.0, %v5495
    %v5497 = vrcp.pop %v5126
    %v5498 = vmul.f32 1.0, %v5497
    %v5499 = vrcp.pop %v5127
    %v5500 = vmul.f32 1.0, %v5499
    %v5501 = vrcp.pop %v5128
    %v5502 = vmul.f32 1.0, %v5501
    %v5503 = vrcp.pop %v5129
    %v5504 = vmul.f32 1.0, %v5503
    %v5505 = vrcp.pop %v5130
    %v5506 = vmul.f32 1.0, %v5505
    %v5507 = vrcp.pop %v5131
    %v5508 = vmul.f32 1.0, %v5507
    %v5509 = vrcp.pop %v5132
    %v5510 = vmul.f32 1.0, %v5509
    %v5511 = vrcp.pop %v5133
    %v5512 = vmul.f32 1.0, %v5511
    %v5513 = vrcp.pop %v5134
    %v5514 = vmul.f32 1.0, %v5513
    %v5515 = vrcp.pop %v5135
    %v5516 = vmul.f32 1.0, %v5515
    %v5517 = vrcp.pop %v5136
    %v5518 = vmul.f32 1.0, %v5517
    %v5519 = vrcp.pop %v5137
    %v5520 = vmul.f32 1.0, %v5519
    %v5521 = vrcp.pop %v5138
    %v5522 = vmul.f32 1.0, %v5521
    %v5523 = vrcp.pop %v5139
    %v5524 = vmul.f32 1.0, %v5523
    %v5525 = vrcp.pop %v5140
    %v5526 = vmul.f32 1.0, %v5525
    %v5527 = vrcp.pop %v5141
    %v5528 = vmul.f32 1.0, %v5527
    %v5529 = vrcp.pop %v5142
    %v5530 = vmul.f32 1.0, %v5529
    %v5531 = vrcp.pop %v5143
    %v5532 = vmul.f32 1.0, %v5531
    %v5533 = vrcp.pop %v5144
    %v5534 = vmul.f32 1.0, %v5533
    %v5535 = vrcp.pop %v5145
    %v5536 = vmul.f32 1.0, %v5535
    %v5537 = vrcp.pop %v5146
    %v5538 = vmul.f32 1.0, %v5537
    %v5539 = vrcp.pop %v5147
    %v5540 = vmul.f32 1.0, %v5539
    %v5541 = vrcp.pop %v5148
    %v5542 = vmul.f32 1.0, %v5541
    %v5543 = vrcp.pop %v5149
    %v5544 = vmul.f32 1.0, %v5543
    %v5545 = vrcp.pop %v5150
    %v5546 = vmul.f32 1.0, %v5545
    %v5547 = vrcp.pop %v5151
    %v5548 = vmul.f32 1.0, %v5547
    %v5549 = vrcp.pop %v5152
    %v5550 = vmul.f32 1.0, %v5549
    %v5551 = vrcp.pop %v5153
    %v5552 = vmul.f32 1.0, %v5551
    %v5553 = vrcp.pop %v5154
    %v5554 = vmul.f32 1.0, %v5553
    %v5555 = vrcp.pop %v5155
    %v5556 = vmul.f32 1.0, %v5555
    %v5557 = vrcp.pop %v5156
    %v5558 = vmul.f32 1.0, %v5557
    %v5559 = vrcp.pop %v5157
    %v5560 = vmul.f32 1.0, %v5559
    %v5561 = vrcp.pop %v5158
    %v5562 = vmul.f32 1.0, %v5561
    %v5563 = vrcp.pop %v5159
    %v5564 = vmul.f32 1.0, %v5563
    %v5565 = vrcp.pop %v5160
    %v5566 = vmul.f32 1.0, %v5565
    %v5567 = vrcp.pop %v5161
    %v5568 = vmul.f32 1.0, %v5567
    %v5569 = vrcp.pop %v5162
    %v5570 = vmul.f32 1.0, %v5569
    %v5571 = vrcp.pop %v5163
    %v5572 = vmul.f32 1.0, %v5571
    %v5573 = vrcp.pop %v5164
    %v5574 = vmul.f32 1.0, %v5573
    %v5575 = vrcp.pop %v5165
    %v5576 = vmul.f32 1.0, %v5575
    %v5577 = vrcp.pop %v5166
    %v5578 = vmul.f32 1.0, %v5577
    %v5579 = vrcp.pop %v5167
    %v5580 = vmul.f32 1.0, %v5579
    %v5581 = vrcp.pop %v5168
    %v5582 = vmul.f32 1.0, %v5581
    %v5583 = vrcp.pop %v5169
    %v5584 = vmul.f32 1.0, %v5583
    %v5585 = vrcp.pop %v5170
    %v5586 = vmul.f32 1.0, %v5585
    %v5587 = vrcp.pop %v5171
    %v5588 = vmul.f32 1.0, %v5587
    %v5589 = vrcp.pop %v5172
    %v5590 = vmul.f32 1.0, %v5589
    %v5591 = vrcp.pop %v5173
    %v5592 = vmul.f32 1.0, %v5591
    %v5593 = vrcp.pop %v5174
    %v5594 = vmul.f32 1.0, %v5593
    %v5595 = vrcp.pop %v5175
    %v5596 = vmul.f32 1.0, %v5595
    %v5597 = vrcp.pop %v5176
    %v5598 = vmul.f32 1.0, %v5597
    %v5599 = vrcp.pop %v5177
    %v5600 = vmul.f32 1.0, %v5599
    %v5601 = vrcp.pop %v5178
    %v5602 = vmul.f32 1.0, %v5601
    %v5603 = vrcp.pop %v5179
    %v5604 = vmul.f32 1.0, %v5603
    %v5605 = vrcp.pop %v5180
    %v5606 = vmul.f32 1.0, %v5605
    %v5607 = vrcp.pop %v5181
    %v5608 = vmul.f32 1.0, %v5607
    %v5609 = vrcp.pop %v5182
    %v5610 = vmul.f32 1.0, %v5609
    %v5611 = vrcp.pop %v5183
    %v5612 = vmul.f32 1.0, %v5611
    %v5613 = vrcp.pop %v5184
    %v5614 = vmul.f32 1.0, %v5613
    %v5615 = vrcp.pop %v5185
    %v5616 = vmul.f32 1.0, %v5615
    %v5617 = vrcp.pop %v5186
    %v5618 = vmul.f32 1.0, %v5617
    %v5619 = vrcp.pop %v5187
    %v5620 = vmul.f32 1.0, %v5619
    %v5621 = vrcp.pop %v5188
    %v5622 = vmul.f32 1.0, %v5621
    %v5623 = vrcp.pop %v5189
    %v5624 = vmul.f32 1.0, %v5623
    %v5625 = vrcp.pop %v5190
    %v5626 = vmul.f32 1.0, %v5625
    %v5627 = vrcp.pop %v5191
    %v5628 = vmul.f32 1.0, %v5627
    %v5629 = vrcp.pop %v5192
    %v5630 = vmul.f32 1.0, %v5629
    %v5631 = vrcp.pop %v5193
    %v5632 = vmul.f32 1.0, %v5631
    %v5633 = vrcp.pop %v5194
    %v5634 = vmul.f32 1.0, %v5633
    %v5635 = vrcp.pop %v5195
    %v5636 = vmul.f32 1.0, %v5635
    %v5637 = vrcp.pop %v5196
    %v5638 = vmul.f32 1.0, %v5637
    %v5639 = vrcp.pop %v5197
    %v5640 = vmul.f32 1.0, %v5639
    %v5641 = vrcp.pop %v5198
    %v5642 = vmul.f32 1.0, %v5641
    %v5643 = vrcp.pop %v5199
    %v5644 = vmul.f32 1.0, %v5643
    %v5645 = vrcp.pop %v5200
    %v5646 = vmul.f32 1.0, %v5645
    %v5647 = vrcp.pop %v5201
    %v5648 = vmul.f32 1.0, %v5647
    %v5649 = vrcp.pop %v5202
    %v5650 = vmul.f32 1.0, %v5649
    %v5651 = vrcp.pop %v5203
    %v5652 = vmul.f32 1.0, %v5651
    %v5653 = vrcp.pop %v5204
    %v5654 = vmul.f32 1.0, %v5653
    %v5655 = vrcp.pop %v5205
    %v5656 = vmul.f32 1.0, %v5655
    %v5657 = vrcp.pop %v5206
    %v5658 = vmul.f32 1.0, %v5657
    %v5659 = vrcp.pop %v5207
    %v5660 = vmul.f32 1.0, %v5659
    %v5661 = vrcp.pop %v5208
    %v5662 = vmul.f32 1.0, %v5661
    %v5663 = vrcp.pop %v5209
    %v5664 = vmul.f32 1.0, %v5663
    %v5665 = vrcp.pop %v5210
    %v5666 = vmul.f32 1.0, %v5665
    %v5667 = vrcp.pop %v5211
    %v5668 = vmul.f32 1.0, %v5667
    %v5669 = vrcp.pop %v5212
    %v5670 = vmul.f32 1.0, %v5669
    %v5671 = vrcp.pop %v5213
    %v5672 = vmul.f32 1.0, %v5671
    %v5673 = vrcp.pop %v5214
    %v5674 = vmul.f32 1.0, %v5673
    %v5675 = vrcp.pop %v5215
    %v5676 = vmul.f32 1.0, %v5675
    %v5677 = vrcp.pop %v5216
    %v5678 = vmul.f32 1.0, %v5677
    %v5679 = vrcp.pop %v5217
    %v5680 = vmul.f32 1.0, %v5679
    %v5681 = vrcp.pop %v5218
    %v5682 = vmul.f32 1.0, %v5681
    %v5683 = vrcp.pop %v5219
    %v5684 = vmul.f32 1.0, %v5683
    %v5685 = vrcp.pop %v5220
    %v5686 = vmul.f32 1.0, %v5685
    %v5687 = vrcp.pop %v5221
    %v5688 = vmul.f32 1.0, %v5687
    %v5689 = vrcp.pop %v5222
    %v5690 = vmul.f32 1.0, %v5689
    %v5691 = vrcp.pop %v5223
    %v5692 = vmul.f32 1.0, %v5691
    %v5693 = vrcp.pop %v5224
    %v5694 = vmul.f32 1.0, %v5693
    %v5695 = vrcp.pop %v5225
    %v5696 = vmul.f32 1.0, %v5695
    %v5697 = vrcp.pop %v5226
    %v5698 = vmul.f32 1.0, %v5697
    %v5699 = vrcp.pop %v5227
    %v5700 = vmul.f32 1.0, %v5699
    %v5701 = vrcp.pop %v5228
    %v5702 = vmul.f32 1.0, %v5701
    %v5703 = vrcp.pop %v5229
    %v5704 = vmul.f32 1.0, %v5703
    %v5705 = vrcp.pop %v5230
    %v5706 = vmul.f32 1.0, %v5705
    %v5707 = vrcp.pop %v5231
    %v5708 = vmul.f32 1.0, %v5707
    %v5709 = vrcp.pop %v5232
    %v5710 = vmul.f32 1.0, %v5709
    %v5711 = vrcp.pop %v5233
    %v5712 = vmul.f32 1.0, %v5711
    %v5713 = vrcp.pop %v5234
    %v5714 = vmul.f32 1.0, %v5713
    %v5715 = vrcp.pop %v5235
    %v5716 = vmul.f32 1.0, %v5715
    %v5717 = vrcp.pop %v5236
    %v5718 = vmul.f32 1.0, %v5717
    %v5719 = vrcp.pop %v5237
    %v5720 = vmul.f32 1.0, %v5719
    %v5721 = vrcp.pop %v5238
    %v5722 = vmul.f32 1.0, %v5721
    %v5723 = vrcp.pop %v5239
    %v5724 = vmul.f32 1.0, %v5723
    %v5725 = vrcp.pop %v5240
    %v5726 = vmul.f32 1.0, %v5725
    %v5727 = vrcp.pop %v5241
    %v5728 = vmul.f32 1.0, %v5727
    %v5729 = vrcp.pop %v5242
    %v5730 = vmul.f32 1.0, %v5729
    %v5731 = vrcp.pop %v5243
    %v5732 = vmul.f32 1.0, %v5731
    %v5733 = vrcp.pop %v5244
    %v5734 = vmul.f32 1.0, %v5733
    %v5735 = vrcp.pop %v5245
    %v5736 = vmul.f32 1.0, %v5735
    %v5737 = vrcp.pop %v5246
    %v5738 = vmul.f32 1.0, %v5737
    %v5739 = vrcp.pop %v5247
    %v5740 = vmul.f32 1.0, %v5739
    %v5741 = vrcp.pop %v5248
    %v5742 = vmul.f32 1.0, %v5741
    %v5743 = vrcp.pop %v5249
    %v5744 = vmul.f32 1.0, %v5743
    %v5745 = vrcp.pop %v5250
    %v5746 = vmul.f32 1.0, %v5745
    %v5747 = vrcp.pop %v5251
    %v5748 = vmul.f32 1.0, %v5747
    %v5749 = vrcp.pop %v5252
    %v5750 = vmul.f32 1.0, %v5749
    %v5751 = vrcp.pop %v5253
    %v5752 = vmul.f32 1.0, %v5751
    %v5753 = vrcp.pop %v5254
    %v5754 = vmul.f32 1.0, %v5753
    %v5755 = vrcp.pop %v5255
    %v5756 = vmul.f32 1.0, %v5755
    %v5757 = vrcp.pop %v5256
    %v5758 = vmul.f32 1.0, %v5757
    %v5759 = vrcp.pop %v5257
    %v5760 = vmul.f32 1.0, %v5759
    %v5761 = vrcp.pop %v5258
    %v5762 = vmul.f32 1.0, %v5761
    %v5763 = vrcp.pop %v5259
    %v5764 = vmul.f32 1.0, %v5763
    %v5765 = vrcp.pop %v5260
    %v5766 = vmul.f32 1.0, %v5765
    %v5767 = vrcp.pop %v5261
    %v5768 = vmul.f32 1.0, %v5767
    %v5769 = vrcp.pop %v5262
    %v5770 = vmul.f32 1.0, %v5769
    %v5771 = vrcp.pop %v5263
    %v5772 = vmul.f32 1.0, %v5771
    %v5773 = vrcp.pop %v5264
    %v5774 = vmul.f32 1.0, %v5773
    %v5775 = vrcp.pop %v5265
    %v5776 = vmul.f32 1.0, %v5775
    %v5777 = vrcp.pop %v5266
    %v5778 = vmul.f32 1.0, %v5777
    %v5779 = vrcp.pop %v5267
    %v5780 = vmul.f32 1.0, %v5779
    %v5781 = vrcp.pop %v5268
    %v5782 = vmul.f32 1.0, %v5781
    %v5783 = vrcp.pop %v5269
    %v5784 = vmul.f32 1.0, %v5783
    %v5785 = vrcp.pop %v5270
    %v5786 = vmul.f32 1.0, %v5785
    %v5787 = vrcp.pop %v5271
    %v5788 = vmul.f32 1.0, %v5787
    %v5789 = vrcp.pop %v5272
    %v5790 = vmul.f32 1.0, %v5789
    %v5791 = vrcp.pop %v5273
    %v5792 = vmul.f32 1.0, %v5791
    %v5793 = vrcp.pop %v5274
    %v5794 = vmul.f32 1.0, %v5793
    %v5795 = vrcp.pop %v5275
    %v5796 = vmul.f32 1.0, %v5795
    %v5797 = vrcp.pop %v5276
    %v5798 = vmul.f32 1.0, %v5797
    %v5799 = vrcp.pop %v5277
    %v5800 = vmul.f32 1.0, %v5799
    %v5801 = vrcp.pop %v5278
    %v5802 = vmul.f32 1.0, %v5801
    %v5803 = vrcp.pop %v5279
    %v5804 = vmul.f32 1.0, %v5803
    %v5805 = vrcp.pop %v5280
    %v5806 = vmul.f32 1.0, %v5805
    %v5807 = vrcp.pop %v5281
    %v5808 = vmul.f32 1.0, %v5807
    %v5809 = vrcp.pop %v5282
    %v5810 = vmul.f32 1.0, %v5809
    %v5811 = vrcp.pop %v5283
    %v5812 = vmul.f32 1.0, %v5811
    %v5813 = vrcp.pop %v5284
    %v5814 = vmul.f32 1.0, %v5813
    %v5815 = vrcp.pop %v5285
    %v5816 = vmul.f32 1.0, %v5815
    %v5817 = vrcp.pop %v5286
    %v5818 = vmul.f32 1.0, %v5817
    %5819 = vst [vmem:[#allocation2] sm:$0xff] %v5288
    %5820 = vst [vmem:[#allocation2 + $0x8] sm:$0xff] %v5290
    %5821 = vst [vmem:[#allocation2 + $0x10] sm:$0xff] %v5292
    %5822 = vst [vmem:[#allocation2 + $0x18] sm:$0xff] %v5294
    %5823 = vst [vmem:[#allocation2 + $0x20] sm:$0xff] %v5296
    %5824 = vst [vmem:[#allocation2 + $0x28] sm:$0xff] %v5298
    %vm5825 = vcmask 130048
    %5826 = vst.msk [vmem:[#allocation2 + $0x30] sm:$0xff] %vm5825, %v5300
    %5827 = vst [vmem:[#allocation2 + $0x38] sm:$0xff] %v5302
    %5828 = vst [vmem:[#allocation2 + $0x40] sm:$0xff] %v5304
    %5829 = vst [vmem:[#allocation2 + $0x48] sm:$0xff] %v5306
    %5830 = vst [vmem:[#allocation2 + $0x50] sm:$0xff] %v5308
    %5831 = vst [vmem:[#allocation2 + $0x58] sm:$0xff] %v5310
    %5832 = vst [vmem:[#allocation2 + $0x60] sm:$0xff] %v5312
    %5833 = vst.msk [vmem:[#allocation2 + $0x68] sm:$0xff] %vm5825, %v5314
    %5834 = vst [vmem:[#allocation2 + $0x70] sm:$0xff] %v5316
    %5835 = vst [vmem:[#allocation2 + $0x78] sm:$0xff] %v5318
    %5836 = vst [vmem:[#allocation2 + $0x80] sm:$0xff] %v5320
    %5837 = vst [vmem:[#allocation2 + $0x88] sm:$0xff] %v5322
    %5838 = vst [vmem:[#allocation2 + $0x90] sm:$0xff] %v5324
    %5839 = vst [vmem:[#allocation2 + $0x98] sm:$0xff] %v5326
    %5840 = vst.msk [vmem:[#allocation2 + $0xa0] sm:$0xff] %vm5825, %v5328
    %5841 = vst [vmem:[#allocation2 + $0xa8] sm:$0xff] %v5330
    %5842 = vst [vmem:[#allocation2 + $0xb0] sm:$0xff] %v5332
    %5843 = vst [vmem:[#allocation2 + $0xb8] sm:$0xff] %v5334
    %5844 = vst [vmem:[#allocation2 + $0xc0] sm:$0xff] %v5336
    %5845 = vst [vmem:[#allocation2 + $0xc8] sm:$0xff] %v5338
    %5846 = vst [vmem:[#allocation2 + $0xd0] sm:$0xff] %v5340
    %5847 = vst.msk [vmem:[#allocation2 + $0xd8] sm:$0xff] %vm5825, %v5342
    %5848 = vst [vmem:[#allocation2 + $0xe0] sm:$0xff] %v5344
    %5849 = vst [vmem:[#allocation2 + $0xe8] sm:$0xff] %v5346
    %5850 = vst [vmem:[#allocation2 + $0xf0] sm:$0xff] %v5348
    %5851 = vst [vmem:[#allocation2 + $0xf8] sm:$0xff] %v5350
    %5852 = vst [vmem:[#allocation2 + $0x100] sm:$0xff] %v5352
    %5853 = vst [vmem:[#allocation2 + $0x108] sm:$0xff] %v5354
    %5854 = vst.msk [vmem:[#allocation2 + $0x110] sm:$0xff] %vm5825, %v5356
    %5855 = vst [vmem:[#allocation2 + $0x118] sm:$0xff] %v5358
    %5856 = vst [vmem:[#allocation2 + $0x120] sm:$0xff] %v5360
    %5857 = vst [vmem:[#allocation2 + $0x128] sm:$0xff] %v5362
    %5858 = vst [vmem:[#allocation2 + $0x130] sm:$0xff] %v5364
    %5859 = vst [vmem:[#allocation2 + $0x138] sm:$0xff] %v5366
    %5860 = vst [vmem:[#allocation2 + $0x140] sm:$0xff] %v5368
    %5861 = vst.msk [vmem:[#allocation2 + $0x148] sm:$0xff] %vm5825, %v5370
    %5862 = vst [vmem:[#allocation2 + $0x150] sm:$0xff] %v5372
    %5863 = vst [vmem:[#allocation2 + $0x158] sm:$0xff] %v5374
    %5864 = vst [vmem:[#allocation2 + $0x160] sm:$0xff] %v5376
    %5865 = vst [vmem:[#allocation2 + $0x168] sm:$0xff] %v5378
    %5866 = vst [vmem:[#allocation2 + $0x170] sm:$0xff] %v5380
    %5867 = vst [vmem:[#allocation2 + $0x178] sm:$0xff] %v5382
    %5868 = vst.msk [vmem:[#allocation2 + $0x180] sm:$0xff] %vm5825, %v5384
    %5869 = vst [vmem:[#allocation2 + $0x188] sm:$0xff] %v5386
    %5870 = vst [vmem:[#allocation2 + $0x190] sm:$0xff] %v5388
    %5871 = vst [vmem:[#allocation2 + $0x198] sm:$0xff] %v5390
    %5872 = vst [vmem:[#allocation2 + $0x1a0] sm:$0xff] %v5392
    %5873 = vst [vmem:[#allocation2 + $0x1a8] sm:$0xff] %v5394
    %5874 = vst [vmem:[#allocation2 + $0x1b0] sm:$0xff] %v5396
    %5875 = vst.msk [vmem:[#allocation2 + $0x1b8] sm:$0xff] %vm5825, %v5398
    %5876 = vst [vmem:[#allocation2 + $0x1c0] sm:$0xff] %v5400
    %5877 = vst [vmem:[#allocation2 + $0x1c8] sm:$0xff] %v5402
    %5878 = vst [vmem:[#allocation2 + $0x1d0] sm:$0xff] %v5404
    %5879 = vst [vmem:[#allocation2 + $0x1d8] sm:$0xff] %v5406
    %5880 = vst [vmem:[#allocation2 + $0x1e0] sm:$0xff] %v5408
    %5881 = vst [vmem:[#allocation2 + $0x1e8] sm:$0xff] %v5410
    %5882 = vst.msk [vmem:[#allocation2 + $0x1f0] sm:$0xff] %vm5825, %v5412
    %5883 = vst [vmem:[#allocation2 + $0x1f8] sm:$0xff] %v5414
    %5884 = vst [vmem:[#allocation2 + $0x200] sm:$0xff] %v5416
    %5885 = vst [vmem:[#allocation2 + $0x208] sm:$0xff] %v5418
    %5886 = vst [vmem:[#allocation2 + $0x210] sm:$0xff] %v5420
    %5887 = vst [vmem:[#allocation2 + $0x218] sm:$0xff] %v5422
    %5888 = vst [vmem:[#allocation2 + $0x220] sm:$0xff] %v5424
    %5889 = vst.msk [vmem:[#allocation2 + $0x228] sm:$0xff] %vm5825, %v5426
    %5890 = vst [vmem:[#allocation2 + $0x230] sm:$0xff] %v5428
    %5891 = vst [vmem:[#allocation2 + $0x238] sm:$0xff] %v5430
    %5892 = vst [vmem:[#allocation2 + $0x240] sm:$0xff] %v5432
    %5893 = vst [vmem:[#allocation2 + $0x248] sm:$0xff] %v5434
    %5894 = vst [vmem:[#allocation2 + $0x250] sm:$0xff] %v5436
    %5895 = vst [vmem:[#allocation2 + $0x258] sm:$0xff] %v5438
    %5896 = vst.msk [vmem:[#allocation2 + $0x260] sm:$0xff] %vm5825, %v5440
    %5897 = vst [vmem:[#allocation2 + $0x268] sm:$0xff] %v5442
    %5898 = vst [vmem:[#allocation2 + $0x270] sm:$0xff] %v5444
    %5899 = vst [vmem:[#allocation2 + $0x278] sm:$0xff] %v5446
    %5900 = vst [vmem:[#allocation2 + $0x280] sm:$0xff] %v5448
    %5901 = vst [vmem:[#allocation2 + $0x288] sm:$0xff] %v5450
    %5902 = vst [vmem:[#allocation2 + $0x290] sm:$0xff] %v5452
    %5903 = vst.msk [vmem:[#allocation2 + $0x298] sm:$0xff] %vm5825, %v5454
    %5904 = vst [vmem:[#allocation2 + $0x2a0] sm:$0xff] %v5456
    %5905 = vst [vmem:[#allocation2 + $0x2a8] sm:$0xff] %v5458
    %5906 = vst [vmem:[#allocation2 + $0x2b0] sm:$0xff] %v5460
    %5907 = vst [vmem:[#allocation2 + $0x2b8] sm:$0xff] %v5462
    %5908 = vst [vmem:[#allocation2 + $0x2c0] sm:$0xff] %v5464
    %5909 = vst [vmem:[#allocation2 + $0x2c8] sm:$0xff] %v5466
    %5910 = vst.msk [vmem:[#allocation2 + $0x2d0] sm:$0xff] %vm5825, %v5468
    %5911 = vst [vmem:[#allocation2 + $0x2d8] sm:$0xff] %v5470
    %5912 = vst [vmem:[#allocation2 + $0x2e0] sm:$0xff] %v5472
    %5913 = vst [vmem:[#allocation2 + $0x2e8] sm:$0xff] %v5474
    %5914 = vst [vmem:[#allocation2 + $0x2f0] sm:$0xff] %v5476
    %5915 = vst [vmem:[#allocation2 + $0x2f8] sm:$0xff] %v5478
    %5916 = vst [vmem:[#allocation2 + $0x300] sm:$0xff] %v5480
    %5917 = vst.msk [vmem:[#allocation2 + $0x308] sm:$0xff] %vm5825, %v5482
    %5918 = vst [vmem:[#allocation2 + $0x310] sm:$0xff] %v5484
    %5919 = vst [vmem:[#allocation2 + $0x318] sm:$0xff] %v5486
    %5920 = vst [vmem:[#allocation2 + $0x320] sm:$0xff] %v5488
    %5921 = vst [vmem:[#allocation2 + $0x328] sm:$0xff] %v5490
    %5922 = vst [vmem:[#allocation2 + $0x330] sm:$0xff] %v5492
    %5923 = vst [vmem:[#allocation2 + $0x338] sm:$0xff] %v5494
    %5924 = vst.msk [vmem:[#allocation2 + $0x340] sm:$0xff] %vm5825, %v5496
    %5925 = vst [vmem:[#allocation2 + $0x348] sm:$0xff] %v5498
    %5926 = vst [vmem:[#allocation2 + $0x350] sm:$0xff] %v5500
    %5927 = vst [vmem:[#allocation2 + $0x358] sm:$0xff] %v5502
    %5928 = vst [vmem:[#allocation2 + $0x360] sm:$0xff] %v5504
    %5929 = vst [vmem:[#allocation2 + $0x368] sm:$0xff] %v5506
    %5930 = vst [vmem:[#allocation2 + $0x370] sm:$0xff] %v5508
    %5931 = vst.msk [vmem:[#allocation2 + $0x378] sm:$0xff] %vm5825, %v5510
    %5932 = vst [vmem:[#allocation2 + $0x380] sm:$0xff] %v5512
    %5933 = vst [vmem:[#allocation2 + $0x388] sm:$0xff] %v5514
    %5934 = vst [vmem:[#allocation2 + $0x390] sm:$0xff] %v5516
    %5935 = vst [vmem:[#allocation2 + $0x398] sm:$0xff] %v5518
    %5936 = vst [vmem:[#allocation2 + $0x3a0] sm:$0xff] %v5520
    %5937 = vst [vmem:[#allocation2 + $0x3a8] sm:$0xff] %v5522
    %5938 = vst.msk [vmem:[#allocation2 + $0x3b0] sm:$0xff] %vm5825, %v5524
    %5939 = vst [vmem:[#allocation2 + $0x3b8] sm:$0xff] %v5526
    %5940 = vst [vmem:[#allocation2 + $0x3c0] sm:$0xff] %v5528
    %5941 = vst [vmem:[#allocation2 + $0x3c8] sm:$0xff] %v5530
    %5942 = vst [vmem:[#allocation2 + $0x3d0] sm:$0xff] %v5532
    %5943 = vst [vmem:[#allocation2 + $0x3d8] sm:$0xff] %v5534
    %5944 = vst [vmem:[#allocation2 + $0x3e0] sm:$0xff] %v5536
    %5945 = vst.msk [vmem:[#allocation2 + $0x3e8] sm:$0xff] %vm5825, %v5538
    %5946 = vst [vmem:[#allocation2 + $0x3f0] sm:$0xff] %v5540
    %5947 = vst [vmem:[#allocation2 + $0x3f8] sm:$0xff] %v5542
    %5948 = vst [vmem:[#allocation2 + $0x400] sm:$0xff] %v5544
    %5949 = vst [vmem:[#allocation2 + $0x408] sm:$0xff] %v5546
    %5950 = vst [vmem:[#allocation2 + $0x410] sm:$0xff] %v5548
    %5951 = vst [vmem:[#allocation2 + $0x418] sm:$0xff] %v5550
    %5952 = vst.msk [vmem:[#allocation2 + $0x420] sm:$0xff] %vm5825, %v5552
    %5953 = vst [vmem:[#allocation2 + $0x428] sm:$0xff] %v5554
    %5954 = vst [vmem:[#allocation2 + $0x430] sm:$0xff] %v5556
    %5955 = vst [vmem:[#allocation2 + $0x438] sm:$0xff] %v5558
    %5956 = vst [vmem:[#allocation2 + $0x440] sm:$0xff] %v5560
    %5957 = vst [vmem:[#allocation2 + $0x448] sm:$0xff] %v5562
    %5958 = vst [vmem:[#allocation2 + $0x450] sm:$0xff] %v5564
    %5959 = vst.msk [vmem:[#allocation2 + $0x458] sm:$0xff] %vm5825, %v5566
    %5960 = vst [vmem:[#allocation2 + $0x460] sm:$0xff] %v5568
    %5961 = vst [vmem:[#allocation2 + $0x468] sm:$0xff] %v5570
    %5962 = vst [vmem:[#allocation2 + $0x470] sm:$0xff] %v5572
    %5963 = vst [vmem:[#allocation2 + $0x478] sm:$0xff] %v5574
    %5964 = vst [vmem:[#allocation2 + $0x480] sm:$0xff] %v5576
    %5965 = vst [vmem:[#allocation2 + $0x488] sm:$0xff] %v5578
    %5966 = vst.msk [vmem:[#allocation2 + $0x490] sm:$0xff] %vm5825, %v5580
    %5967 = vst [vmem:[#allocation2 + $0x498] sm:$0xff] %v5582
    %5968 = vst [vmem:[#allocation2 + $0x4a0] sm:$0xff] %v5584
    %5969 = vst [vmem:[#allocation2 + $0x4a8] sm:$0xff] %v5586
    %5970 = vst [vmem:[#allocation2 + $0x4b0] sm:$0xff] %v5588
    %5971 = vst [vmem:[#allocation2 + $0x4b8] sm:$0xff] %v5590
    %5972 = vst [vmem:[#allocation2 + $0x4c0] sm:$0xff] %v5592
    %5973 = vst.msk [vmem:[#allocation2 + $0x4c8] sm:$0xff] %vm5825, %v5594
    %5974 = vst [vmem:[#allocation2 + $0x4d0] sm:$0xff] %v5596
    %5975 = vst [vmem:[#allocation2 + $0x4d8] sm:$0xff] %v5598
    %5976 = vst [vmem:[#allocation2 + $0x4e0] sm:$0xff] %v5600
    %5977 = vst [vmem:[#allocation2 + $0x4e8] sm:$0xff] %v5602
    %5978 = vst [vmem:[#allocation2 + $0x4f0] sm:$0xff] %v5604
    %5979 = vst [vmem:[#allocation2 + $0x4f8] sm:$0xff] %v5606
    %5980 = vst.msk [vmem:[#allocation2 + $0x500] sm:$0xff] %vm5825, %v5608
    %5981 = vst [vmem:[#allocation2 + $0x508] sm:$0xff] %v5610
    %5982 = vst [vmem:[#allocation2 + $0x510] sm:$0xff] %v5612
    %5983 = vst [vmem:[#allocation2 + $0x518] sm:$0xff] %v5614
    %5984 = vst [vmem:[#allocation2 + $0x520] sm:$0xff] %v5616
    %5985 = vst [vmem:[#allocation2 + $0x528] sm:$0xff] %v5618
    %5986 = vst [vmem:[#allocation2 + $0x530] sm:$0xff] %v5620
    %5987 = vst.msk [vmem:[#allocation2 + $0x538] sm:$0xff] %vm5825, %v5622
    %5988 = vst [vmem:[#allocation2 + $0x540] sm:$0xff] %v5624
    %5989 = vst [vmem:[#allocation2 + $0x548] sm:$0xff] %v5626
    %5990 = vst [vmem:[#allocation2 + $0x550] sm:$0xff] %v5628
    %5991 = vst [vmem:[#allocation2 + $0x558] sm:$0xff] %v5630
    %5992 = vst [vmem:[#allocation2 + $0x560] sm:$0xff] %v5632
    %5993 = vst [vmem:[#allocation2 + $0x568] sm:$0xff] %v5634
    %5994 = vst.msk [vmem:[#allocation2 + $0x570] sm:$0xff] %vm5825, %v5636
    %5995 = vst [vmem:[#allocation2 + $0x578] sm:$0xff] %v5638
    %5996 = vst [vmem:[#allocation2 + $0x580] sm:$0xff] %v5640
    %5997 = vst [vmem:[#allocation2 + $0x588] sm:$0xff] %v5642
    %5998 = vst [vmem:[#allocation2 + $0x590] sm:$0xff] %v5644
    %5999 = vst [vmem:[#allocation2 + $0x598] sm:$0xff] %v5646
    %6000 = vst [vmem:[#allocation2 + $0x5a0] sm:$0xff] %v5648
    %6001 = vst.msk [vmem:[#allocation2 + $0x5a8] sm:$0xff] %vm5825, %v5650
    %6002 = vst [vmem:[#allocation2 + $0x5b0] sm:$0xff] %v5652
    %6003 = vst [vmem:[#allocation2 + $0x5b8] sm:$0xff] %v5654
    %6004 = vst [vmem:[#allocation2 + $0x5c0] sm:$0xff] %v5656
    %6005 = vst [vmem:[#allocation2 + $0x5c8] sm:$0xff] %v5658
    %6006 = vst [vmem:[#allocation2 + $0x5d0] sm:$0xff] %v5660
    %6007 = vst [vmem:[#allocation2 + $0x5d8] sm:$0xff] %v5662
    %6008 = vst.msk [vmem:[#allocation2 + $0x5e0] sm:$0xff] %vm5825, %v5664
    %6009 = vst [vmem:[#allocation2 + $0x5e8] sm:$0xff] %v5666
    %6010 = vst [vmem:[#allocation2 + $0x5f0] sm:$0xff] %v5668
    %6011 = vst [vmem:[#allocation2 + $0x5f8] sm:$0xff] %v5670
    %6012 = vst [vmem:[#allocation2 + $0x600] sm:$0xff] %v5672
    %6013 = vst [vmem:[#allocation2 + $0x608] sm:$0xff] %v5674
    %6014 = vst [vmem:[#allocation2 + $0x610] sm:$0xff] %v5676
    %6015 = vst.msk [vmem:[#allocation2 + $0x618] sm:$0xff] %vm5825, %v5678
    %6016 = vst [vmem:[#allocation2 + $0x620] sm:$0xff] %v5680
    %6017 = vst [vmem:[#allocation2 + $0x628] sm:$0xff] %v5682
    %6018 = vst [vmem:[#allocation2 + $0x630] sm:$0xff] %v5684
    %6019 = vst [vmem:[#allocation2 + $0x638] sm:$0xff] %v5686
    %6020 = vst [vmem:[#allocation2 + $0x640] sm:$0xff] %v5688
    %6021 = vst [vmem:[#allocation2 + $0x648] sm:$0xff] %v5690
    %6022 = vst.msk [vmem:[#allocation2 + $0x650] sm:$0xff] %vm5825, %v5692
    %6023 = vst [vmem:[#allocation2 + $0x658] sm:$0xff] %v5694
    %6024 = vst [vmem:[#allocation2 + $0x660] sm:$0xff] %v5696
    %6025 = vst [vmem:[#allocation2 + $0x668] sm:$0xff] %v5698
    %6026 = vst [vmem:[#allocation2 + $0x670] sm:$0xff] %v5700
    %6027 = vst [vmem:[#allocation2 + $0x678] sm:$0xff] %v5702
    %6028 = vst [vmem:[#allocation2 + $0x680] sm:$0xff] %v5704
    %6029 = vst.msk [vmem:[#allocation2 + $0x688] sm:$0xff] %vm5825, %v5706
    %6030 = vst [vmem:[#allocation2 + $0x690] sm:$0xff] %v5708
    %6031 = vst [vmem:[#allocation2 + $0x698] sm:$0xff] %v5710
    %6032 = vst [vmem:[#allocation2 + $0x6a0] sm:$0xff] %v5712
    %6033 = vst [vmem:[#allocation2 + $0x6a8] sm:$0xff] %v5714
    %6034 = vst [vmem:[#allocation2 + $0x6b0] sm:$0xff] %v5716
    %6035 = vst [vmem:[#allocation2 + $0x6b8] sm:$0xff] %v5718
    %6036 = vst.msk [vmem:[#allocation2 + $0x6c0] sm:$0xff] %vm5825, %v5720
    %6037 = vst [vmem:[#allocation2 + $0x6c8] sm:$0xff] %v5722
    %6038 = vst [vmem:[#allocation2 + $0x6d0] sm:$0xff] %v5724
    %6039 = vst [vmem:[#allocation2 + $0x6d8] sm:$0xff] %v5726
    %6040 = vst [vmem:[#allocation2 + $0x6e0] sm:$0xff] %v5728
    %6041 = vst [vmem:[#allocation2 + $0x6e8] sm:$0xff] %v5730
    %6042 = vst [vmem:[#allocation2 + $0x6f0] sm:$0xff] %v5732
    %6043 = vst.msk [vmem:[#allocation2 + $0x6f8] sm:$0xff] %vm5825, %v5734
    %6044 = vst [vmem:[#allocation2 + $0x700] sm:$0xff] %v5736
    %6045 = vst [vmem:[#allocation2 + $0x708] sm:$0xff] %v5738
    %6046 = vst [vmem:[#allocation2 + $0x710] sm:$0xff] %v5740
    %6047 = vst [vmem:[#allocation2 + $0x718] sm:$0xff] %v5742
    %6048 = vst [vmem:[#allocation2 + $0x720] sm:$0xff] %v5744
    %6049 = vst [vmem:[#allocation2 + $0x728] sm:$0xff] %v5746
    %6050 = vst.msk [vmem:[#allocation2 + $0x730] sm:$0xff] %vm5825, %v5748
    %6051 = vst [vmem:[#allocation2 + $0x738] sm:$0xff] %v5750
    %6052 = vst [vmem:[#allocation2 + $0x740] sm:$0xff] %v5752
    %6053 = vst [vmem:[#allocation2 + $0x748] sm:$0xff] %v5754
    %6054 = vst [vmem:[#allocation2 + $0x750] sm:$0xff] %v5756
    %6055 = vst [vmem:[#allocation2 + $0x758] sm:$0xff] %v5758
    %6056 = vst [vmem:[#allocation2 + $0x760] sm:$0xff] %v5760
    %6057 = vst.msk [vmem:[#allocation2 + $0x768] sm:$0xff] %vm5825, %v5762
    %6058 = vst [vmem:[#allocation2 + $0x770] sm:$0xff] %v5764
    %6059 = vst [vmem:[#allocation2 + $0x778] sm:$0xff] %v5766
    %6060 = vst [vmem:[#allocation2 + $0x780] sm:$0xff] %v5768
    %6061 = vst [vmem:[#allocation2 + $0x788] sm:$0xff] %v5770
    %6062 = vst [vmem:[#allocation2 + $0x790] sm:$0xff] %v5772
    %6063 = vst [vmem:[#allocation2 + $0x798] sm:$0xff] %v5774
    %6064 = vst.msk [vmem:[#allocation2 + $0x7a0] sm:$0xff] %vm5825, %v5776
    %6065 = vst [vmem:[#allocation2 + $0x7a8] sm:$0xff] %v5778
    %6066 = vst [vmem:[#allocation2 + $0x7b0] sm:$0xff] %v5780
    %6067 = vst [vmem:[#allocation2 + $0x7b8] sm:$0xff] %v5782
    %6068 = vst [vmem:[#allocation2 + $0x7c0] sm:$0xff] %v5784
    %6069 = vst [vmem:[#allocation2 + $0x7c8] sm:$0xff] %v5786
    %6070 = vst [vmem:[#allocation2 + $0x7d0] sm:$0xff] %v5788
    %6071 = vst.msk [vmem:[#allocation2 + $0x7d8] sm:$0xff] %vm5825, %v5790
    %6072 = vst [vmem:[#allocation2 + $0x7e0] sm:$0xff] %v5792
    %6073 = vst [vmem:[#allocation2 + $0x7e8] sm:$0xff] %v5794
    %6074 = vst [vmem:[#allocation2 + $0x7f0] sm:$0xff] %v5796
    %6075 = vst [vmem:[#allocation2 + $0x7f8] sm:$0xff] %v5798
    %6076 = vst [vmem:[#allocation2 + $0x800] sm:$0xff] %v5800
    %6077 = vst [vmem:[#allocation2 + $0x808] sm:$0xff] %v5802
    %6078 = vst.msk [vmem:[#allocation2 + $0x810] sm:$0xff] %vm5825, %v5804
    %6079 = vst [vmem:[#allocation2 + $0x818] sm:$0xf] %v5806
    %6080 = vst [vmem:[#allocation2 + $0x820] sm:$0xf] %v5808
    %6081 = vst [vmem:[#allocation2 + $0x828] sm:$0xf] %v5810
    %6082 = vst [vmem:[#allocation2 + $0x830] sm:$0xf] %v5812
    %6083 = vst [vmem:[#allocation2 + $0x838] sm:$0xf] %v5814
    %6084 = vst [vmem:[#allocation2 + $0x840] sm:$0xf] %v5816
    %vm6085 = vcmask 125952
    %6086 = vst.msk [vmem:[#allocation2 + $0x848] sm:$0xf] %vm6085, %v5818
    %v6087 = vld [vmem:[%s1] sm:$0xff]
    %v6088 = vld [vmem:[%s1 + $0x8] sm:$0xff]
    %v6089 = vld [vmem:[%s1 + $0x10] sm:$0xff]
    %v6090 = vld [vmem:[%s1 + $0x18] sm:$0xff]
    %v6091 = vld [vmem:[%s1 + $0x20] sm:$0xff]
    %v6092 = vld [vmem:[%s1 + $0x28] sm:$0xff]
    %v6093 = vld [vmem:[%s1 + $0x30] sm:$0xff]
    %v6094 = vld [vmem:[%s1 + $0x38] sm:$0xff]
    %v6095 = vld [vmem:[%s1 + $0x40] sm:$0xff]
    %v6096 = vld [vmem:[%s1 + $0x48] sm:$0xff]
    %v6097 = vld [vmem:[%s1 + $0x50] sm:$0xff]
    %v6098 = vld [vmem:[%s1 + $0x58] sm:$0xff]
    %v6099 = vld [vmem:[%s1 + $0x60] sm:$0xff]
    %v6100 = vld [vmem:[%s1 + $0x68] sm:$0xff]
    %v6101 = vld [vmem:[%s1 + $0x70] sm:$0xff]
    %v6102 = vld [vmem:[%s1 + $0x78] sm:$0xff]
    %v6103 = vld [vmem:[%s1 + $0x80] sm:$0xff]
    %v6104 = vld [vmem:[%s1 + $0x88] sm:$0xff]
    %v6105 = vld [vmem:[%s1 + $0x90] sm:$0xff]
    %v6106 = vld [vmem:[%s1 + $0x98] sm:$0xff]
    %v6107 = vld [vmem:[%s1 + $0xa0] sm:$0xff]
    %v6108 = vld [vmem:[%s1 + $0xa8] sm:$0xff]
    %v6109 = vld [vmem:[%s1 + $0xb0] sm:$0xff]
    %v6110 = vld [vmem:[%s1 + $0xb8] sm:$0xff]
    %v6111 = vld [vmem:[%s1 + $0xc0] sm:$0xff]
    %v6112 = vld [vmem:[%s1 + $0xc8] sm:$0xff]
    %v6113 = vld [vmem:[%s1 + $0xd0] sm:$0xff]
    %v6114 = vld [vmem:[%s1 + $0xd8] sm:$0xff]
    %v6115 = vld [vmem:[%s1 + $0xe0] sm:$0xff]
    %v6116 = vld [vmem:[%s1 + $0xe8] sm:$0xff]
    %v6117 = vld [vmem:[%s1 + $0xf0] sm:$0xff]
    %v6118 = vld [vmem:[%s1 + $0xf8] sm:$0xff]
    %v6119 = vld [vmem:[%s1 + $0x100] sm:$0xff]
    %v6120 = vld [vmem:[%s1 + $0x108] sm:$0xff]
    %v6121 = vld [vmem:[%s1 + $0x110] sm:$0xff]
    %v6122 = vld [vmem:[%s1 + $0x118] sm:$0xff]
    %v6123 = vld [vmem:[%s1 + $0x120] sm:$0xff]
    %v6124 = vld [vmem:[%s1 + $0x128] sm:$0xff]
    %v6125 = vld [vmem:[%s1 + $0x130] sm:$0xff]
    %v6126 = vld [vmem:[%s1 + $0x138] sm:$0xff]
    %v6127 = vld [vmem:[%s1 + $0x140] sm:$0xff]
    %v6128 = vld [vmem:[%s1 + $0x148] sm:$0xff]
    %v6129 = vld [vmem:[%s1 + $0x150] sm:$0xff]
    %v6130 = vld [vmem:[%s1 + $0x158] sm:$0xff]
    %v6131 = vld [vmem:[%s1 + $0x160] sm:$0xff]
    %v6132 = vld [vmem:[%s1 + $0x168] sm:$0xff]
    %v6133 = vld [vmem:[%s1 + $0x170] sm:$0xff]
    %v6134 = vld [vmem:[%s1 + $0x178] sm:$0xff]
    %v6135 = vld [vmem:[%s1 + $0x180] sm:$0xff]
    %v6136 = vld [vmem:[%s1 + $0x188] sm:$0xff]
    %v6137 = vld [vmem:[%s1 + $0x190] sm:$0xff]
    %v6138 = vld [vmem:[%s1 + $0x198] sm:$0xff]
    %v6139 = vld [vmem:[%s1 + $0x1a0] sm:$0xff]
    %v6140 = vld [vmem:[%s1 + $0x1a8] sm:$0xff]
    %v6141 = vld [vmem:[%s1 + $0x1b0] sm:$0xff]
    %v6142 = vld [vmem:[%s1 + $0x1b8] sm:$0xff]
    %v6143 = vld [vmem:[%s1 + $0x1c0] sm:$0xff]
    %v6144 = vld [vmem:[%s1 + $0x1c8] sm:$0xff]
    %v6145 = vld [vmem:[%s1 + $0x1d0] sm:$0xff]
    %v6146 = vld [vmem:[%s1 + $0x1d8] sm:$0xff]
    %v6147 = vld [vmem:[%s1 + $0x1e0] sm:$0xff]
    %v6148 = vld [vmem:[%s1 + $0x1e8] sm:$0xff]
    %v6149 = vld [vmem:[%s1 + $0x1f0] sm:$0xff]
    %v6150 = vld [vmem:[%s1 + $0x1f8] sm:$0xff]
    %v6151 = vld [vmem:[%s1 + $0x200] sm:$0xff]
    %v6152 = vld [vmem:[%s1 + $0x208] sm:$0xff]
    %v6153 = vld [vmem:[%s1 + $0x210] sm:$0xff]
    %v6154 = vld [vmem:[%s1 + $0x218] sm:$0xff]
    %v6155 = vld [vmem:[%s1 + $0x220] sm:$0xff]
    %v6156 = vld [vmem:[%s1 + $0x228] sm:$0xff]
    %v6157 = vld [vmem:[%s1 + $0x230] sm:$0xff]
    %v6158 = vld [vmem:[%s1 + $0x238] sm:$0xff]
    %v6159 = vld [vmem:[%s1 + $0x240] sm:$0xff]
    %v6160 = vld [vmem:[%s1 + $0x248] sm:$0xff]
    %v6161 = vld [vmem:[%s1 + $0x250] sm:$0xff]
    %v6162 = vld [vmem:[%s1 + $0x258] sm:$0xff]
    %v6163 = vld [vmem:[%s1 + $0x260] sm:$0xff]
    %v6164 = vld [vmem:[%s1 + $0x268] sm:$0xff]
    %v6165 = vld [vmem:[%s1 + $0x270] sm:$0xff]
    %v6166 = vld [vmem:[%s1 + $0x278] sm:$0xff]
    %v6167 = vld [vmem:[%s1 + $0x280] sm:$0xff]
    %v6168 = vld [vmem:[%s1 + $0x288] sm:$0xff]
    %v6169 = vld [vmem:[%s1 + $0x290] sm:$0xff]
    %v6170 = vld [vmem:[%s1 + $0x298] sm:$0xff]
    %v6171 = vld [vmem:[%s1 + $0x2a0] sm:$0xff]
    %v6172 = vld [vmem:[%s1 + $0x2a8] sm:$0xff]
    %v6173 = vld [vmem:[%s1 + $0x2b0] sm:$0xff]
    %v6174 = vld [vmem:[%s1 + $0x2b8] sm:$0xff]
    %v6175 = vld [vmem:[%s1 + $0x2c0] sm:$0xff]
    %v6176 = vld [vmem:[%s1 + $0x2c8] sm:$0xff]
    %v6177 = vld [vmem:[%s1 + $0x2d0] sm:$0xff]
    %v6178 = vld [vmem:[%s1 + $0x2d8] sm:$0xff]
    %v6179 = vld [vmem:[%s1 + $0x2e0] sm:$0xff]
    %v6180 = vld [vmem:[%s1 + $0x2e8] sm:$0xff]
    %v6181 = vld [vmem:[%s1 + $0x2f0] sm:$0xff]
    %v6182 = vld [vmem:[%s1 + $0x2f8] sm:$0xff]
    %v6183 = vld [vmem:[%s1 + $0x300] sm:$0xff]
    %v6184 = vld [vmem:[%s1 + $0x308] sm:$0xff]
    %v6185 = vld [vmem:[%s1 + $0x310] sm:$0xff]
    %v6186 = vld [vmem:[%s1 + $0x318] sm:$0xff]
    %v6187 = vld [vmem:[%s1 + $0x320] sm:$0xff]
    %v6188 = vld [vmem:[%s1 + $0x328] sm:$0xff]
    %v6189 = vld [vmem:[%s1 + $0x330] sm:$0xff]
    %v6190 = vld [vmem:[%s1 + $0x338] sm:$0xff]
    %v6191 = vld [vmem:[%s1 + $0x340] sm:$0xff]
    %v6192 = vld [vmem:[%s1 + $0x348] sm:$0xff]
    %v6193 = vld [vmem:[%s1 + $0x350] sm:$0xff]
    %v6194 = vld [vmem:[%s1 + $0x358] sm:$0xff]
    %v6195 = vld [vmem:[%s1 + $0x360] sm:$0xff]
    %v6196 = vld [vmem:[%s1 + $0x368] sm:$0xff]
    %v6197 = vld [vmem:[%s1 + $0x370] sm:$0xff]
    %v6198 = vld [vmem:[%s1 + $0x378] sm:$0xff]
    %v6199 = vld [vmem:[%s1 + $0x380] sm:$0xff]
    %v6200 = vld [vmem:[%s1 + $0x388] sm:$0xff]
    %v6201 = vld [vmem:[%s1 + $0x390] sm:$0xff]
    %v6202 = vld [vmem:[%s1 + $0x398] sm:$0xff]
    %v6203 = vld [vmem:[%s1 + $0x3a0] sm:$0xff]
    %v6204 = vld [vmem:[%s1 + $0x3a8] sm:$0xff]
    %v6205 = vld [vmem:[%s1 + $0x3b0] sm:$0xff]
    %v6206 = vld [vmem:[%s1 + $0x3b8] sm:$0xff]
    %v6207 = vld [vmem:[%s1 + $0x3c0] sm:$0xff]
    %v6208 = vld [vmem:[%s1 + $0x3c8] sm:$0xff]
    %v6209 = vld [vmem:[%s1 + $0x3d0] sm:$0xff]
    %v6210 = vld [vmem:[%s1 + $0x3d8] sm:$0xff]
    %v6211 = vld [vmem:[%s1 + $0x3e0] sm:$0xff]
    %v6212 = vld [vmem:[%s1 + $0x3e8] sm:$0xff]
    %v6213 = vld [vmem:[%s1 + $0x3f0] sm:$0xff]
    %v6214 = vld [vmem:[%s1 + $0x3f8] sm:$0xff]
    %v6215 = vld [vmem:[%s1 + $0x400] sm:$0xff]
    %v6216 = vld [vmem:[%s1 + $0x408] sm:$0xff]
    %v6217 = vld [vmem:[%s1 + $0x410] sm:$0xff]
    %v6218 = vld [vmem:[%s1 + $0x418] sm:$0xff]
    %v6219 = vld [vmem:[%s1 + $0x420] sm:$0xff]
    %v6220 = vld [vmem:[%s1 + $0x428] sm:$0xff]
    %v6221 = vld [vmem:[%s1 + $0x430] sm:$0xff]
    %v6222 = vld [vmem:[%s1 + $0x438] sm:$0xff]
    %v6223 = vld [vmem:[%s1 + $0x440] sm:$0xff]
    %v6224 = vld [vmem:[%s1 + $0x448] sm:$0xff]
    %v6225 = vld [vmem:[%s1 + $0x450] sm:$0xff]
    %v6226 = vld [vmem:[%s1 + $0x458] sm:$0xff]
    %v6227 = vld [vmem:[%s1 + $0x460] sm:$0xff]
    %v6228 = vld [vmem:[%s1 + $0x468] sm:$0xff]
    %v6229 = vld [vmem:[%s1 + $0x470] sm:$0xff]
    %v6230 = vld [vmem:[%s1 + $0x478] sm:$0xff]
    %v6231 = vld [vmem:[%s1 + $0x480] sm:$0xff]
    %v6232 = vld [vmem:[%s1 + $0x488] sm:$0xff]
    %v6233 = vld [vmem:[%s1 + $0x490] sm:$0xff]
    %v6234 = vld [vmem:[%s1 + $0x498] sm:$0xff]
    %v6235 = vld [vmem:[%s1 + $0x4a0] sm:$0xff]
    %v6236 = vld [vmem:[%s1 + $0x4a8] sm:$0xff]
    %v6237 = vld [vmem:[%s1 + $0x4b0] sm:$0xff]
    %v6238 = vld [vmem:[%s1 + $0x4b8] sm:$0xff]
    %v6239 = vld [vmem:[%s1 + $0x4c0] sm:$0xff]
    %v6240 = vld [vmem:[%s1 + $0x4c8] sm:$0xff]
    %v6241 = vld [vmem:[%s1 + $0x4d0] sm:$0xff]
    %v6242 = vld [vmem:[%s1 + $0x4d8] sm:$0xff]
    %v6243 = vld [vmem:[%s1 + $0x4e0] sm:$0xff]
    %v6244 = vld [vmem:[%s1 + $0x4e8] sm:$0xff]
    %v6245 = vld [vmem:[%s1 + $0x4f0] sm:$0xff]
    %v6246 = vld [vmem:[%s1 + $0x4f8] sm:$0xff]
    %v6247 = vld [vmem:[%s1 + $0x500] sm:$0xff]
    %v6248 = vld [vmem:[%s1 + $0x508] sm:$0xff]
    %v6249 = vld [vmem:[%s1 + $0x510] sm:$0xff]
    %v6250 = vld [vmem:[%s1 + $0x518] sm:$0xff]
    %v6251 = vld [vmem:[%s1 + $0x520] sm:$0xff]
    %v6252 = vld [vmem:[%s1 + $0x528] sm:$0xff]
    %v6253 = vld [vmem:[%s1 + $0x530] sm:$0xff]
    %v6254 = vld [vmem:[%s1 + $0x538] sm:$0xff]
    %v6255 = vld [vmem:[%s1 + $0x540] sm:$0xff]
    %v6256 = vld [vmem:[%s1 + $0x548] sm:$0xff]
    %v6257 = vld [vmem:[%s1 + $0x550] sm:$0xff]
    %v6258 = vld [vmem:[%s1 + $0x558] sm:$0xff]
    %v6259 = vld [vmem:[%s1 + $0x560] sm:$0xff]
    %v6260 = vld [vmem:[%s1 + $0x568] sm:$0xff]
    %v6261 = vld [vmem:[%s1 + $0x570] sm:$0xff]
    %v6262 = vld [vmem:[%s1 + $0x578] sm:$0xff]
    %v6263 = vld [vmem:[%s1 + $0x580] sm:$0xff]
    %v6264 = vld [vmem:[%s1 + $0x588] sm:$0xff]
    %v6265 = vld [vmem:[%s1 + $0x590] sm:$0xff]
    %v6266 = vld [vmem:[%s1 + $0x598] sm:$0xff]
    %v6267 = vld [vmem:[%s1 + $0x5a0] sm:$0xff]
    %v6268 = vld [vmem:[%s1 + $0x5a8] sm:$0xff]
    %v6269 = vld [vmem:[%s1 + $0x5b0] sm:$0xff]
    %v6270 = vld [vmem:[%s1 + $0x5b8] sm:$0xff]
    %v6271 = vld [vmem:[%s1 + $0x5c0] sm:$0xff]
    %v6272 = vld [vmem:[%s1 + $0x5c8] sm:$0xff]
    %v6273 = vld [vmem:[%s1 + $0x5d0] sm:$0xff]
    %v6274 = vld [vmem:[%s1 + $0x5d8] sm:$0xff]
    %v6275 = vld [vmem:[%s1 + $0x5e0] sm:$0xff]
    %v6276 = vld [vmem:[%s1 + $0x5e8] sm:$0xff]
    %v6277 = vld [vmem:[%s1 + $0x5f0] sm:$0xff]
    %v6278 = vld [vmem:[%s1 + $0x5f8] sm:$0xff]
    %v6279 = vld [vmem:[%s1 + $0x600] sm:$0xff]
    %v6280 = vld [vmem:[%s1 + $0x608] sm:$0xff]
    %v6281 = vld [vmem:[%s1 + $0x610] sm:$0xff]
    %v6282 = vld [vmem:[%s1 + $0x618] sm:$0xff]
    %v6283 = vld [vmem:[%s1 + $0x620] sm:$0xff]
    %v6284 = vld [vmem:[%s1 + $0x628] sm:$0xff]
    %v6285 = vld [vmem:[%s1 + $0x630] sm:$0xff]
    %v6286 = vld [vmem:[%s1 + $0x638] sm:$0xff]
    %v6287 = vld [vmem:[%s1 + $0x640] sm:$0xff]
    %v6288 = vld [vmem:[%s1 + $0x648] sm:$0xff]
    %v6289 = vld [vmem:[%s1 + $0x650] sm:$0xff]
    %v6290 = vld [vmem:[%s1 + $0x658] sm:$0xff]
    %v6291 = vld [vmem:[%s1 + $0x660] sm:$0xff]
    %v6292 = vld [vmem:[%s1 + $0x668] sm:$0xff]
    %v6293 = vld [vmem:[%s1 + $0x670] sm:$0xff]
    %v6294 = vld [vmem:[%s1 + $0x678] sm:$0xff]
    %v6295 = vld [vmem:[%s1 + $0x680] sm:$0xff]
    %v6296 = vld [vmem:[%s1 + $0x688] sm:$0xff]
    %v6297 = vld [vmem:[%s1 + $0x690] sm:$0xff]
    %v6298 = vld [vmem:[%s1 + $0x698] sm:$0xff]
    %v6299 = vld [vmem:[%s1 + $0x6a0] sm:$0xff]
    %v6300 = vld [vmem:[%s1 + $0x6a8] sm:$0xff]
    %v6301 = vld [vmem:[%s1 + $0x6b0] sm:$0xff]
    %v6302 = vld [vmem:[%s1 + $0x6b8] sm:$0xff]
    %v6303 = vld [vmem:[%s1 + $0x6c0] sm:$0xff]
    %v6304 = vld [vmem:[%s1 + $0x6c8] sm:$0xff]
    %v6305 = vld [vmem:[%s1 + $0x6d0] sm:$0xff]
    %v6306 = vld [vmem:[%s1 + $0x6d8] sm:$0xff]
    %v6307 = vld [vmem:[%s1 + $0x6e0] sm:$0xff]
    %v6308 = vld [vmem:[%s1 + $0x6e8] sm:$0xff]
    %v6309 = vld [vmem:[%s1 + $0x6f0] sm:$0xff]
    %v6310 = vld [vmem:[%s1 + $0x6f8] sm:$0xff]
    %v6311 = vld [vmem:[%s1 + $0x700] sm:$0xff]
    %v6312 = vld [vmem:[%s1 + $0x708] sm:$0xff]
    %v6313 = vld [vmem:[%s1 + $0x710] sm:$0xff]
    %v6314 = vld [vmem:[%s1 + $0x718] sm:$0xff]
    %v6315 = vld [vmem:[%s1 + $0x720] sm:$0xff]
    %v6316 = vld [vmem:[%s1 + $0x728] sm:$0xff]
    %v6317 = vld [vmem:[%s1 + $0x730] sm:$0xff]
    %v6318 = vld [vmem:[%s1 + $0x738] sm:$0xff]
    %v6319 = vld [vmem:[%s1 + $0x740] sm:$0xff]
    %v6320 = vld [vmem:[%s1 + $0x748] sm:$0xff]
    %v6321 = vld [vmem:[%s1 + $0x750] sm:$0xff]
    %v6322 = vld [vmem:[%s1 + $0x758] sm:$0xff]
    %v6323 = vld [vmem:[%s1 + $0x760] sm:$0xff]
    %v6324 = vld [vmem:[%s1 + $0x768] sm:$0xff]
    %v6325 = vld [vmem:[%s1 + $0x770] sm:$0xff]
    %v6326 = vld [vmem:[%s1 + $0x778] sm:$0xff]
    %v6327 = vld [vmem:[%s1 + $0x780] sm:$0xff]
    %v6328 = vld [vmem:[%s1 + $0x788] sm:$0xff]
    %v6329 = vld [vmem:[%s1 + $0x790] sm:$0xff]
    %v6330 = vld [vmem:[%s1 + $0x798] sm:$0xff]
    %v6331 = vld [vmem:[%s1 + $0x7a0] sm:$0xff]
    %v6332 = vld [vmem:[%s1 + $0x7a8] sm:$0xff]
    %v6333 = vld [vmem:[%s1 + $0x7b0] sm:$0xff]
    %v6334 = vld [vmem:[%s1 + $0x7b8] sm:$0xff]
    %v6335 = vld [vmem:[%s1 + $0x7c0] sm:$0xff]
    %v6336 = vld [vmem:[%s1 + $0x7c8] sm:$0xff]
    %v6337 = vld [vmem:[%s1 + $0x7d0] sm:$0xff]
    %v6338 = vld [vmem:[%s1 + $0x7d8] sm:$0xff]
    %v6339 = vld [vmem:[%s1 + $0x7e0] sm:$0xff]
    %v6340 = vld [vmem:[%s1 + $0x7e8] sm:$0xff]
    %v6341 = vld [vmem:[%s1 + $0x7f0] sm:$0xff]
    %v6342 = vld [vmem:[%s1 + $0x7f8] sm:$0xff]
    %v6343 = vld [vmem:[%s1 + $0x800] sm:$0xff]
    %v6344 = vld [vmem:[%s1 + $0x808] sm:$0xff]
    %v6345 = vld [vmem:[%s1 + $0x810] sm:$0xff]
    %v6346 = vld [vmem:[%s1 + $0x818] sm:$0xf]
    %v6347 = vld [vmem:[%s1 + $0x820] sm:$0xf]
    %v6348 = vld [vmem:[%s1 + $0x828] sm:$0xf]
    %v6349 = vld [vmem:[%s1 + $0x830] sm:$0xf]
    %v6350 = vld [vmem:[%s1 + $0x838] sm:$0xf]
    %v6351 = vld [vmem:[%s1 + $0x840] sm:$0xf]
    %v6352 = vld [vmem:[%s1 + $0x848] sm:$0xf]
    %v6353 = vmax.f32 %v2315, 0.0
    %v6354 = vmax.f32 %v2317, 0.0
    %v6355 = vmax.f32 %v2901, 0.0
    %v6356 = vmax.f32 %v2903, 0.0
    %v6357 = vmax.f32 %v3487, 0.0
    %v6358 = vmax.f32 %v3489, 0.0
    %v6359 = vmax.f32 %v4035, 0.0
    %v6360 = vmax.f32 %v2321, 0.0
    %v6361 = vmax.f32 %v2323, 0.0
    %v6362 = vmax.f32 %v2907, 0.0
    %v6363 = vmax.f32 %v2909, 0.0
    %v6364 = vmax.f32 %v3493, 0.0
    %v6365 = vmax.f32 %v3495, 0.0
    %v6366 = vmax.f32 %v4040, 0.0
    %v6367 = vmax.f32 %v2327, 0.0
    %v6368 = vmax.f32 %v2329, 0.0
    %v6369 = vmax.f32 %v2913, 0.0
    %v6370 = vmax.f32 %v2915, 0.0
    %v6371 = vmax.f32 %v3499, 0.0
    %v6372 = vmax.f32 %v3501, 0.0
    %v6373 = vmax.f32 %v4045, 0.0
    %v6374 = vmax.f32 %v2333, 0.0
    %v6375 = vmax.f32 %v2335, 0.0
    %v6376 = vmax.f32 %v2919, 0.0
    %v6377 = vmax.f32 %v2921, 0.0
    %v6378 = vmax.f32 %v3505, 0.0
    %v6379 = vmax.f32 %v3507, 0.0
    %v6380 = vmax.f32 %v4050, 0.0
    %v6381 = vmax.f32 %v2339, 0.0
    %v6382 = vmax.f32 %v2341, 0.0
    %v6383 = vmax.f32 %v2925, 0.0
    %v6384 = vmax.f32 %v2927, 0.0
    %v6385 = vmax.f32 %v3511, 0.0
    %v6386 = vmax.f32 %v3513, 0.0
    %v6387 = vmax.f32 %v4055, 0.0
    %v6388 = vmax.f32 %v2345, 0.0
    %v6389 = vmax.f32 %v2347, 0.0
    %v6390 = vmax.f32 %v2931, 0.0
    %v6391 = vmax.f32 %v2933, 0.0
    %v6392 = vmax.f32 %v3517, 0.0
    %v6393 = vmax.f32 %v3519, 0.0
    %v6394 = vmax.f32 %v4060, 0.0
    %v6395 = vmax.f32 %v2351, 0.0
    %v6396 = vmax.f32 %v2353, 0.0
    %v6397 = vmax.f32 %v2937, 0.0
    %v6398 = vmax.f32 %v2939, 0.0
    %v6399 = vmax.f32 %v3523, 0.0
    %v6400 = vmax.f32 %v3525, 0.0
    %v6401 = vmax.f32 %v4065, 0.0
    %v6402 = vmax.f32 %v2357, 0.0
    %v6403 = vmax.f32 %v2359, 0.0
    %v6404 = vmax.f32 %v2943, 0.0
    %v6405 = vmax.f32 %v2945, 0.0
    %v6406 = vmax.f32 %v3529, 0.0
    %v6407 = vmax.f32 %v3531, 0.0
    %v6408 = vmax.f32 %v4070, 0.0
    %v6409 = vmax.f32 %v2363, 0.0
    %v6410 = vmax.f32 %v2365, 0.0
    %v6411 = vmax.f32 %v2949, 0.0
    %v6412 = vmax.f32 %v2951, 0.0
    %v6413 = vmax.f32 %v3535, 0.0
    %v6414 = vmax.f32 %v3537, 0.0
    %v6415 = vmax.f32 %v4075, 0.0
    %v6416 = vmax.f32 %v2369, 0.0
    %v6417 = vmax.f32 %v2371, 0.0
    %v6418 = vmax.f32 %v2955, 0.0
    %v6419 = vmax.f32 %v2957, 0.0
    %v6420 = vmax.f32 %v3541, 0.0
    %v6421 = vmax.f32 %v3543, 0.0
    %v6422 = vmax.f32 %v4080, 0.0
    %v6423 = vmax.f32 %v2375, 0.0
    %v6424 = vmax.f32 %v2377, 0.0
    %v6425 = vmax.f32 %v2961, 0.0
    %v6426 = vmax.f32 %v2963, 0.0
    %v6427 = vmax.f32 %v3547, 0.0
    %v6428 = vmax.f32 %v3549, 0.0
    %v6429 = vmax.f32 %v4085, 0.0
    %v6430 = vmax.f32 %v2381, 0.0
    %v6431 = vmax.f32 %v2383, 0.0
    %v6432 = vmax.f32 %v2967, 0.0
    %v6433 = vmax.f32 %v2969, 0.0
    %v6434 = vmax.f32 %v3553, 0.0
    %v6435 = vmax.f32 %v3555, 0.0
    %v6436 = vmax.f32 %v4090, 0.0
    %v6437 = vmax.f32 %v2387, 0.0
    %v6438 = vmax.f32 %v2389, 0.0
    %v6439 = vmax.f32 %v2973, 0.0
    %v6440 = vmax.f32 %v2975, 0.0
    %v6441 = vmax.f32 %v3559, 0.0
    %v6442 = vmax.f32 %v3561, 0.0
    %v6443 = vmax.f32 %v4095, 0.0
    %v6444 = vmax.f32 %v2393, 0.0
    %v6445 = vmax.f32 %v2395, 0.0
    %v6446 = vmax.f32 %v2979, 0.0
    %v6447 = vmax.f32 %v2981, 0.0
    %v6448 = vmax.f32 %v3565, 0.0
    %v6449 = vmax.f32 %v3567, 0.0
    %v6450 = vmax.f32 %v4100, 0.0
    %v6451 = vmax.f32 %v2399, 0.0
    %v6452 = vmax.f32 %v2401, 0.0
    %v6453 = vmax.f32 %v2985, 0.0
    %v6454 = vmax.f32 %v2987, 0.0
    %v6455 = vmax.f32 %v3571, 0.0
    %v6456 = vmax.f32 %v3573, 0.0
    %v6457 = vmax.f32 %v4105, 0.0
    %v6458 = vmax.f32 %v2405, 0.0
    %v6459 = vmax.f32 %v2407, 0.0
    %v6460 = vmax.f32 %v2991, 0.0
    %v6461 = vmax.f32 %v2993, 0.0
    %v6462 = vmax.f32 %v3577, 0.0
    %v6463 = vmax.f32 %v3579, 0.0
    %v6464 = vmax.f32 %v4110, 0.0
    %v6465 = vmax.f32 %v2411, 0.0
    %v6466 = vmax.f32 %v2413, 0.0
    %v6467 = vmax.f32 %v2997, 0.0
    %v6468 = vmax.f32 %v2999, 0.0
    %v6469 = vmax.f32 %v3583, 0.0
    %v6470 = vmax.f32 %v3585, 0.0
    %v6471 = vmax.f32 %v4115, 0.0
    %v6472 = vmax.f32 %v2417, 0.0
    %v6473 = vmax.f32 %v2419, 0.0
    %v6474 = vmax.f32 %v3003, 0.0
    %v6475 = vmax.f32 %v3005, 0.0
    %v6476 = vmax.f32 %v3589, 0.0
    %v6477 = vmax.f32 %v3591, 0.0
    %v6478 = vmax.f32 %v4120, 0.0
    %v6479 = vmax.f32 %v2423, 0.0
    %v6480 = vmax.f32 %v2425, 0.0
    %v6481 = vmax.f32 %v3009, 0.0
    %v6482 = vmax.f32 %v3011, 0.0
    %v6483 = vmax.f32 %v3595, 0.0
    %v6484 = vmax.f32 %v3597, 0.0
    %v6485 = vmax.f32 %v4125, 0.0
    %v6486 = vmax.f32 %v2429, 0.0
    %v6487 = vmax.f32 %v2431, 0.0
    %v6488 = vmax.f32 %v3015, 0.0
    %v6489 = vmax.f32 %v3017, 0.0
    %v6490 = vmax.f32 %v3601, 0.0
    %v6491 = vmax.f32 %v3603, 0.0
    %v6492 = vmax.f32 %v4130, 0.0
    %v6493 = vmax.f32 %v2435, 0.0
    %v6494 = vmax.f32 %v2437, 0.0
    %v6495 = vmax.f32 %v3021, 0.0
    %v6496 = vmax.f32 %v3023, 0.0
    %v6497 = vmax.f32 %v3607, 0.0
    %v6498 = vmax.f32 %v3609, 0.0
    %v6499 = vmax.f32 %v4135, 0.0
    %v6500 = vmax.f32 %v2441, 0.0
    %v6501 = vmax.f32 %v2443, 0.0
    %v6502 = vmax.f32 %v3027, 0.0
    %v6503 = vmax.f32 %v3029, 0.0
    %v6504 = vmax.f32 %v3613, 0.0
    %v6505 = vmax.f32 %v3615, 0.0
    %v6506 = vmax.f32 %v4140, 0.0
    %v6507 = vmax.f32 %v2447, 0.0
    %v6508 = vmax.f32 %v2449, 0.0
    %v6509 = vmax.f32 %v3033, 0.0
    %v6510 = vmax.f32 %v3035, 0.0
    %v6511 = vmax.f32 %v3619, 0.0
    %v6512 = vmax.f32 %v3621, 0.0
    %v6513 = vmax.f32 %v4145, 0.0
    %v6514 = vmax.f32 %v2453, 0.0
    %v6515 = vmax.f32 %v2455, 0.0
    %v6516 = vmax.f32 %v3039, 0.0
    %v6517 = vmax.f32 %v3041, 0.0
    %v6518 = vmax.f32 %v3625, 0.0
    %v6519 = vmax.f32 %v3627, 0.0
    %v6520 = vmax.f32 %v4150, 0.0
    %v6521 = vmax.f32 %v2459, 0.0
    %v6522 = vmax.f32 %v2461, 0.0
    %v6523 = vmax.f32 %v3045, 0.0
    %v6524 = vmax.f32 %v3047, 0.0
    %v6525 = vmax.f32 %v3631, 0.0
    %v6526 = vmax.f32 %v3633, 0.0
    %v6527 = vmax.f32 %v4155, 0.0
    %v6528 = vmax.f32 %v2465, 0.0
    %v6529 = vmax.f32 %v2467, 0.0
    %v6530 = vmax.f32 %v3051, 0.0
    %v6531 = vmax.f32 %v3053, 0.0
    %v6532 = vmax.f32 %v3637, 0.0
    %v6533 = vmax.f32 %v3639, 0.0
    %v6534 = vmax.f32 %v4160, 0.0
    %v6535 = vmax.f32 %v2471, 0.0
    %v6536 = vmax.f32 %v2473, 0.0
    %v6537 = vmax.f32 %v3057, 0.0
    %v6538 = vmax.f32 %v3059, 0.0
    %v6539 = vmax.f32 %v3643, 0.0
    %v6540 = vmax.f32 %v3645, 0.0
    %v6541 = vmax.f32 %v4165, 0.0
    %v6542 = vmax.f32 %v2477, 0.0
    %v6543 = vmax.f32 %v2479, 0.0
    %v6544 = vmax.f32 %v3063, 0.0
    %v6545 = vmax.f32 %v3065, 0.0
    %v6546 = vmax.f32 %v3649, 0.0
    %v6547 = vmax.f32 %v3651, 0.0
    %v6548 = vmax.f32 %v4170, 0.0
    %v6549 = vmax.f32 %v2483, 0.0
    %v6550 = vmax.f32 %v2485, 0.0
    %v6551 = vmax.f32 %v3069, 0.0
    %v6552 = vmax.f32 %v3071, 0.0
    %v6553 = vmax.f32 %v3655, 0.0
    %v6554 = vmax.f32 %v3657, 0.0
    %v6555 = vmax.f32 %v4175, 0.0
    %v6556 = vmax.f32 %v2489, 0.0
    %v6557 = vmax.f32 %v2491, 0.0
    %v6558 = vmax.f32 %v3075, 0.0
    %v6559 = vmax.f32 %v3077, 0.0
    %v6560 = vmax.f32 %v3661, 0.0
    %v6561 = vmax.f32 %v3663, 0.0
    %v6562 = vmax.f32 %v4180, 0.0
    %v6563 = vmax.f32 %v2495, 0.0
    %v6564 = vmax.f32 %v2497, 0.0
    %v6565 = vmax.f32 %v3081, 0.0
    %v6566 = vmax.f32 %v3083, 0.0
    %v6567 = vmax.f32 %v3667, 0.0
    %v6568 = vmax.f32 %v3669, 0.0
    %v6569 = vmax.f32 %v4185, 0.0
    %v6570 = vmax.f32 %v2501, 0.0
    %v6571 = vmax.f32 %v2503, 0.0
    %v6572 = vmax.f32 %v3087, 0.0
    %v6573 = vmax.f32 %v3089, 0.0
    %v6574 = vmax.f32 %v3673, 0.0
    %v6575 = vmax.f32 %v3675, 0.0
    %v6576 = vmax.f32 %v4190, 0.0
    %v6577 = vmax.f32 %v2507, 0.0
    %v6578 = vmax.f32 %v2509, 0.0
    %v6579 = vmax.f32 %v3093, 0.0
    %v6580 = vmax.f32 %v3095, 0.0
    %v6581 = vmax.f32 %v3679, 0.0
    %v6582 = vmax.f32 %v3681, 0.0
    %v6583 = vmax.f32 %v4195, 0.0
    %v6584 = vmax.f32 %v2513, 0.0
    %v6585 = vmax.f32 %v2515, 0.0
    %v6586 = vmax.f32 %v3099, 0.0
    %v6587 = vmax.f32 %v3101, 0.0
    %v6588 = vmax.f32 %v3685, 0.0
    %v6589 = vmax.f32 %v3687, 0.0
    %v6590 = vmax.f32 %v4200, 0.0
    %v6591 = vmax.f32 %v2519, 0.0
    %v6592 = vmax.f32 %v2521, 0.0
    %v6593 = vmax.f32 %v3105, 0.0
    %v6594 = vmax.f32 %v3107, 0.0
    %v6595 = vmax.f32 %v3691, 0.0
    %v6596 = vmax.f32 %v3693, 0.0
    %v6597 = vmax.f32 %v4205, 0.0
    %v6598 = vmax.f32 %v2525, 0.0
    %v6599 = vmax.f32 %v2527, 0.0
    %v6600 = vmax.f32 %v3111, 0.0
    %v6601 = vmax.f32 %v3113, 0.0
    %v6602 = vmax.f32 %v3697, 0.0
    %v6603 = vmax.f32 %v3699, 0.0
    %v6604 = vmax.f32 %v4210, 0.0
    %v6605 = vmax.f32 %v2531, 0.0
    %v6606 = vmax.f32 %v2533, 0.0
    %v6607 = vmax.f32 %v3117, 0.0
    %v6608 = vmax.f32 %v3119, 0.0
    %v6609 = vmax.f32 %v3703, 0.0
    %v6610 = vmax.f32 %v3705, 0.0
    %v6611 = vmax.f32 %v4215, 0.0
    %v6612 = vmax.f32 %v2537, 0.0
    %v6613 = vmax.f32 %v2539, 0.0
    %v6614 = vmax.f32 %v3123, 0.0
    %v6615 = vmax.f32 %v3125, 0.0
    %v6616 = vmax.f32 %v3709, 0.0
    %v6617 = vmax.f32 %v3711, 0.0
    %v6618 = vmax.f32 %v4220, 0.0
    %v6619 = vand.u32 2147483647, %v2315
    %v6620 = vand.u32 2147483647, %v2317
    %v6621 = vand.u32 2147483647, %v2901
    %v6622 = vand.u32 2147483647, %v2903
    %v6623 = vand.u32 2147483647, %v3487
    %v6624 = vand.u32 2147483647, %v3489
    %v6625 = vand.u32 2147483647, %v4035
    %v6626 = vand.u32 2147483647, %v2321
    %v6627 = vand.u32 2147483647, %v2323
    %v6628 = vand.u32 2147483647, %v2907
    %v6629 = vand.u32 2147483647, %v2909
    %v6630 = vand.u32 2147483647, %v3493
    %v6631 = vand.u32 2147483647, %v3495
    %v6632 = vand.u32 2147483647, %v4040
    %v6633 = vand.u32 2147483647, %v2327
    %v6634 = vand.u32 2147483647, %v2329
    %v6635 = vand.u32 2147483647, %v2913
    %v6636 = vand.u32 2147483647, %v2915
    %v6637 = vand.u32 2147483647, %v3499
    %v6638 = vand.u32 2147483647, %v3501
    %v6639 = vand.u32 2147483647, %v4045
    %v6640 = vand.u32 2147483647, %v2333
    %v6641 = vand.u32 2147483647, %v2335
    %v6642 = vand.u32 2147483647, %v2919
    %v6643 = vand.u32 2147483647, %v2921
    %v6644 = vand.u32 2147483647, %v3505
    %v6645 = vand.u32 2147483647, %v3507
    %v6646 = vand.u32 2147483647, %v4050
    %v6647 = vand.u32 2147483647, %v2339
    %v6648 = vand.u32 2147483647, %v2341
    %v6649 = vand.u32 2147483647, %v2925
    %v6650 = vand.u32 2147483647, %v2927
    %v6651 = vand.u32 2147483647, %v3511
    %v6652 = vand.u32 2147483647, %v3513
    %v6653 = vand.u32 2147483647, %v4055
    %v6654 = vand.u32 2147483647, %v2345
    %v6655 = vand.u32 2147483647, %v2347
    %v6656 = vand.u32 2147483647, %v2931
    %v6657 = vand.u32 2147483647, %v2933
    %v6658 = vand.u32 2147483647, %v3517
    %v6659 = vand.u32 2147483647, %v3519
    %v6660 = vand.u32 2147483647, %v4060
    %v6661 = vand.u32 2147483647, %v2351
    %v6662 = vand.u32 2147483647, %v2353
    %v6663 = vand.u32 2147483647, %v2937
    %v6664 = vand.u32 2147483647, %v2939
    %v6665 = vand.u32 2147483647, %v3523
    %v6666 = vand.u32 2147483647, %v3525
    %v6667 = vand.u32 2147483647, %v4065
    %v6668 = vand.u32 2147483647, %v2357
    %v6669 = vand.u32 2147483647, %v2359
    %v6670 = vand.u32 2147483647, %v2943
    %v6671 = vand.u32 2147483647, %v2945
    %v6672 = vand.u32 2147483647, %v3529
    %v6673 = vand.u32 2147483647, %v3531
    %v6674 = vand.u32 2147483647, %v4070
    %v6675 = vand.u32 2147483647, %v2363
    %v6676 = vand.u32 2147483647, %v2365
    %v6677 = vand.u32 2147483647, %v2949
    %v6678 = vand.u32 2147483647, %v2951
    %v6679 = vand.u32 2147483647, %v3535
    %v6680 = vand.u32 2147483647, %v3537
    %v6681 = vand.u32 2147483647, %v4075
    %v6682 = vand.u32 2147483647, %v2369
    %v6683 = vand.u32 2147483647, %v2371
    %v6684 = vand.u32 2147483647, %v2955
    %v6685 = vand.u32 2147483647, %v2957
    %v6686 = vand.u32 2147483647, %v3541
    %v6687 = vand.u32 2147483647, %v3543
    %v6688 = vand.u32 2147483647, %v4080
    %v6689 = vand.u32 2147483647, %v2375
    %v6690 = vand.u32 2147483647, %v2377
    %v6691 = vand.u32 2147483647, %v2961
    %v6692 = vand.u32 2147483647, %v2963
    %v6693 = vand.u32 2147483647, %v3547
    %v6694 = vand.u32 2147483647, %v3549
    %v6695 = vand.u32 2147483647, %v4085
    %v6696 = vand.u32 2147483647, %v2381
    %v6697 = vand.u32 2147483647, %v2383
    %v6698 = vand.u32 2147483647, %v2967
    %v6699 = vand.u32 2147483647, %v2969
    %v6700 = vand.u32 2147483647, %v3553
    %v6701 = vand.u32 2147483647, %v3555
    %v6702 = vand.u32 2147483647, %v4090
    %v6703 = vand.u32 2147483647, %v2387
    %v6704 = vand.u32 2147483647, %v2389
    %v6705 = vand.u32 2147483647, %v2973
    %v6706 = vand.u32 2147483647, %v2975
    %v6707 = vand.u32 2147483647, %v3559
    %v6708 = vand.u32 2147483647, %v3561
    %v6709 = vand.u32 2147483647, %v4095
    %v6710 = vand.u32 2147483647, %v2393
    %v6711 = vand.u32 2147483647, %v2395
    %v6712 = vand.u32 2147483647, %v2979
    %v6713 = vand.u32 2147483647, %v2981
    %v6714 = vand.u32 2147483647, %v3565
    %v6715 = vand.u32 2147483647, %v3567
    %v6716 = vand.u32 2147483647, %v4100
    %v6717 = vand.u32 2147483647, %v2399
    %v6718 = vand.u32 2147483647, %v2401
    %v6719 = vand.u32 2147483647, %v2985
    %v6720 = vand.u32 2147483647, %v2987
    %v6721 = vand.u32 2147483647, %v3571
    %v6722 = vand.u32 2147483647, %v3573
    %v6723 = vand.u32 2147483647, %v4105
    %v6724 = vand.u32 2147483647, %v2405
    %v6725 = vand.u32 2147483647, %v2407
    %v6726 = vand.u32 2147483647, %v2991
    %v6727 = vand.u32 2147483647, %v2993
    %v6728 = vand.u32 2147483647, %v3577
    %v6729 = vand.u32 2147483647, %v3579
    %v6730 = vand.u32 2147483647, %v4110
    %v6731 = vand.u32 2147483647, %v2411
    %v6732 = vand.u32 2147483647, %v2413
    %v6733 = vand.u32 2147483647, %v2997
    %v6734 = vand.u32 2147483647, %v2999
    %v6735 = vand.u32 2147483647, %v3583
    %v6736 = vand.u32 2147483647, %v3585
    %v6737 = vand.u32 2147483647, %v4115
    %v6738 = vand.u32 2147483647, %v2417
    %v6739 = vand.u32 2147483647, %v2419
    %v6740 = vand.u32 2147483647, %v3003
    %v6741 = vand.u32 2147483647, %v3005
    %v6742 = vand.u32 2147483647, %v3589
    %v6743 = vand.u32 2147483647, %v3591
    %v6744 = vand.u32 2147483647, %v4120
    %v6745 = vand.u32 2147483647, %v2423
    %v6746 = vand.u32 2147483647, %v2425
    %v6747 = vand.u32 2147483647, %v3009
    %v6748 = vand.u32 2147483647, %v3011
    %v6749 = vand.u32 2147483647, %v3595
    %v6750 = vand.u32 2147483647, %v3597
    %v6751 = vand.u32 2147483647, %v4125
    %v6752 = vand.u32 2147483647, %v2429
    %v6753 = vand.u32 2147483647, %v2431
    %v6754 = vand.u32 2147483647, %v3015
    %v6755 = vand.u32 2147483647, %v3017
    %v6756 = vand.u32 2147483647, %v3601
    %v6757 = vand.u32 2147483647, %v3603
    %v6758 = vand.u32 2147483647, %v4130
    %v6759 = vand.u32 2147483647, %v2435
    %v6760 = vand.u32 2147483647, %v2437
    %v6761 = vand.u32 2147483647, %v3021
    %v6762 = vand.u32 2147483647, %v3023
    %v6763 = vand.u32 2147483647, %v3607
    %v6764 = vand.u32 2147483647, %v3609
    %v6765 = vand.u32 2147483647, %v4135
    %v6766 = vand.u32 2147483647, %v2441
    %v6767 = vand.u32 2147483647, %v2443
    %v6768 = vand.u32 2147483647, %v3027
    %v6769 = vand.u32 2147483647, %v3029
    %v6770 = vand.u32 2147483647, %v3613
    %v6771 = vand.u32 2147483647, %v3615
    %v6772 = vand.u32 2147483647, %v4140
    %v6773 = vand.u32 2147483647, %v2447
    %v6774 = vand.u32 2147483647, %v2449
    %v6775 = vand.u32 2147483647, %v3033
    %v6776 = vand.u32 2147483647, %v3035
    %v6777 = vand.u32 2147483647, %v3619
    %v6778 = vand.u32 2147483647, %v3621
    %v6779 = vand.u32 2147483647, %v4145
    %v6780 = vand.u32 2147483647, %v2453
    %v6781 = vand.u32 2147483647, %v2455
    %v6782 = vand.u32 2147483647, %v3039
    %v6783 = vand.u32 2147483647, %v3041
    %v6784 = vand.u32 2147483647, %v3625
    %v6785 = vand.u32 2147483647, %v3627
    %v6786 = vand.u32 2147483647, %v4150
    %v6787 = vand.u32 2147483647, %v2459
    %v6788 = vand.u32 2147483647, %v2461
    %v6789 = vand.u32 2147483647, %v3045
    %v6790 = vand.u32 2147483647, %v3047
    %v6791 = vand.u32 2147483647, %v3631
    %v6792 = vand.u32 2147483647, %v3633
    %v6793 = vand.u32 2147483647, %v4155
    %v6794 = vand.u32 2147483647, %v2465
    %v6795 = vand.u32 2147483647, %v2467
    %v6796 = vand.u32 2147483647, %v3051
    %v6797 = vand.u32 2147483647, %v3053
    %v6798 = vand.u32 2147483647, %v3637
    %v6799 = vand.u32 2147483647, %v3639
    %v6800 = vand.u32 2147483647, %v4160
    %v6801 = vand.u32 2147483647, %v2471
    %v6802 = vand.u32 2147483647, %v2473
    %v6803 = vand.u32 2147483647, %v3057
    %v6804 = vand.u32 2147483647, %v3059
    %v6805 = vand.u32 2147483647, %v3643
    %v6806 = vand.u32 2147483647, %v3645
    %v6807 = vand.u32 2147483647, %v4165
    %v6808 = vand.u32 2147483647, %v2477
    %v6809 = vand.u32 2147483647, %v2479
    %v6810 = vand.u32 2147483647, %v3063
    %v6811 = vand.u32 2147483647, %v3065
    %v6812 = vand.u32 2147483647, %v3649
    %v6813 = vand.u32 2147483647, %v3651
    %v6814 = vand.u32 2147483647, %v4170
    %v6815 = vand.u32 2147483647, %v2483
    %v6816 = vand.u32 2147483647, %v2485
    %v6817 = vand.u32 2147483647, %v3069
    %v6818 = vand.u32 2147483647, %v3071
    %v6819 = vand.u32 2147483647, %v3655
    %v6820 = vand.u32 2147483647, %v3657
    %v6821 = vand.u32 2147483647, %v4175
    %v6822 = vand.u32 2147483647, %v2489
    %v6823 = vand.u32 2147483647, %v2491
    %v6824 = vand.u32 2147483647, %v3075
    %v6825 = vand.u32 2147483647, %v3077
    %v6826 = vand.u32 2147483647, %v3661
    %v6827 = vand.u32 2147483647, %v3663
    %v6828 = vand.u32 2147483647, %v4180
    %v6829 = vand.u32 2147483647, %v2495
    %v6830 = vand.u32 2147483647, %v2497
    %v6831 = vand.u32 2147483647, %v3081
    %v6832 = vand.u32 2147483647, %v3083
    %v6833 = vand.u32 2147483647, %v3667
    %v6834 = vand.u32 2147483647, %v3669
    %v6835 = vand.u32 2147483647, %v4185
    %v6836 = vand.u32 2147483647, %v2501
    %v6837 = vand.u32 2147483647, %v2503
    %v6838 = vand.u32 2147483647, %v3087
    %v6839 = vand.u32 2147483647, %v3089
    %v6840 = vand.u32 2147483647, %v3673
    %v6841 = vand.u32 2147483647, %v3675
    %v6842 = vand.u32 2147483647, %v4190
    %v6843 = vand.u32 2147483647, %v2507
    %v6844 = vand.u32 2147483647, %v2509
    %v6845 = vand.u32 2147483647, %v3093
    %v6846 = vand.u32 2147483647, %v3095
    %v6847 = vand.u32 2147483647, %v3679
    %v6848 = vand.u32 2147483647, %v3681
    %v6849 = vand.u32 2147483647, %v4195
    %v6850 = vand.u32 2147483647, %v2513
    %v6851 = vand.u32 2147483647, %v2515
    %v6852 = vand.u32 2147483647, %v3099
    %v6853 = vand.u32 2147483647, %v3101
    %v6854 = vand.u32 2147483647, %v3685
    %v6855 = vand.u32 2147483647, %v3687
    %v6856 = vand.u32 2147483647, %v4200
    %v6857 = vand.u32 2147483647, %v2519
    %v6858 = vand.u32 2147483647, %v2521
    %v6859 = vand.u32 2147483647, %v3105
    %v6860 = vand.u32 2147483647, %v3107
    %v6861 = vand.u32 2147483647, %v3691
    %v6862 = vand.u32 2147483647, %v3693
    %v6863 = vand.u32 2147483647, %v4205
    %v6864 = vand.u32 2147483647, %v2525
    %v6865 = vand.u32 2147483647, %v2527
    %v6866 = vand.u32 2147483647, %v3111
    %v6867 = vand.u32 2147483647, %v3113
    %v6868 = vand.u32 2147483647, %v3697
    %v6869 = vand.u32 2147483647, %v3699
    %v6870 = vand.u32 2147483647, %v4210
    %v6871 = vand.u32 2147483647, %v2531
    %v6872 = vand.u32 2147483647, %v2533
    %v6873 = vand.u32 2147483647, %v3117
    %v6874 = vand.u32 2147483647, %v3119
    %v6875 = vand.u32 2147483647, %v3703
    %v6876 = vand.u32 2147483647, %v3705
    %v6877 = vand.u32 2147483647, %v4215
    %v6878 = vand.u32 2147483647, %v2537
    %v6879 = vand.u32 2147483647, %v2539
    %v6880 = vand.u32 2147483647, %v3123
    %v6881 = vand.u32 2147483647, %v3125
    %v6882 = vand.u32 2147483647, %v3709
    %v6883 = vand.u32 2147483647, %v3711
    %v6884 = vand.u32 2147483647, %v4220
    %v6885 = vsub.f32 0.0, %v6619
    %v6886 = vsub.f32 0.0, %v6620
    %v6887 = vsub.f32 0.0, %v6621
    %v6888 = vsub.f32 0.0, %v6622
    %v6889 = vsub.f32 0.0, %v6623
    %v6890 = vsub.f32 0.0, %v6624
    %v6891 = vsub.f32 0.0, %v6625
    %v6892 = vsub.f32 0.0, %v6626
    %v6893 = vsub.f32 0.0, %v6627
    %v6894 = vsub.f32 0.0, %v6628
    %v6895 = vsub.f32 0.0, %v6629
    %v6896 = vsub.f32 0.0, %v6630
    %v6897 = vsub.f32 0.0, %v6631
    %v6898 = vsub.f32 0.0, %v6632
    %v6899 = vsub.f32 0.0, %v6633
    %v6900 = vsub.f32 0.0, %v6634
    %v6901 = vsub.f32 0.0, %v6635
    %v6902 = vsub.f32 0.0, %v6636
    %v6903 = vsub.f32 0.0, %v6637
    %v6904 = vsub.f32 0.0, %v6638
    %v6905 = vsub.f32 0.0, %v6639
    %v6906 = vsub.f32 0.0, %v6640
    %v6907 = vsub.f32 0.0, %v6641
    %v6908 = vsub.f32 0.0, %v6642
    %v6909 = vsub.f32 0.0, %v6643
    %v6910 = vsub.f32 0.0, %v6644
    %v6911 = vsub.f32 0.0, %v6645
    %v6912 = vsub.f32 0.0, %v6646
    %v6913 = vsub.f32 0.0, %v6647
    %v6914 = vsub.f32 0.0, %v6648
    %v6915 = vsub.f32 0.0, %v6649
    %v6916 = vsub.f32 0.0, %v6650
    %v6917 = vsub.f32 0.0, %v6651
    %v6918 = vsub.f32 0.0, %v6652
    %v6919 = vsub.f32 0.0, %v6653
    %v6920 = vsub.f32 0.0, %v6654
    %v6921 = vsub.f32 0.0, %v6655
    %v6922 = vsub.f32 0.0, %v6656
    %v6923 = vsub.f32 0.0, %v6657
    %v6924 = vsub.f32 0.0, %v6658
    %v6925 = vsub.f32 0.0, %v6659
    %v6926 = vsub.f32 0.0, %v6660
    %v6927 = vsub.f32 0.0, %v6661
    %v6928 = vsub.f32 0.0, %v6662
    %v6929 = vsub.f32 0.0, %v6663
    %v6930 = vsub.f32 0.0, %v6664
    %v6931 = vsub.f32 0.0, %v6665
    %v6932 = vsub.f32 0.0, %v6666
    %v6933 = vsub.f32 0.0, %v6667
    %v6934 = vsub.f32 0.0, %v6668
    %v6935 = vsub.f32 0.0, %v6669
    %v6936 = vsub.f32 0.0, %v6670
    %v6937 = vsub.f32 0.0, %v6671
    %v6938 = vsub.f32 0.0, %v6672
    %v6939 = vsub.f32 0.0, %v6673
    %v6940 = vsub.f32 0.0, %v6674
    %v6941 = vsub.f32 0.0, %v6675
    %v6942 = vsub.f32 0.0, %v6676
    %v6943 = vsub.f32 0.0, %v6677
    %v6944 = vsub.f32 0.0, %v6678
    %v6945 = vsub.f32 0.0, %v6679
    %v6946 = vsub.f32 0.0, %v6680
    %v6947 = vsub.f32 0.0, %v6681
    %v6948 = vsub.f32 0.0, %v6682
    %v6949 = vsub.f32 0.0, %v6683
    %v6950 = vsub.f32 0.0, %v6684
    %v6951 = vsub.f32 0.0, %v6685
    %v6952 = vsub.f32 0.0, %v6686
    %v6953 = vsub.f32 0.0, %v6687
    %v6954 = vsub.f32 0.0, %v6688
    %v6955 = vsub.f32 0.0, %v6689
    %v6956 = vsub.f32 0.0, %v6690
    %v6957 = vsub.f32 0.0, %v6691
    %v6958 = vsub.f32 0.0, %v6692
    %v6959 = vsub.f32 0.0, %v6693
    %v6960 = vsub.f32 0.0, %v6694
    %v6961 = vsub.f32 0.0, %v6695
    %v6962 = vsub.f32 0.0, %v6696
    %v6963 = vsub.f32 0.0, %v6697
    %v6964 = vsub.f32 0.0, %v6698
    %v6965 = vsub.f32 0.0, %v6699
    %v6966 = vsub.f32 0.0, %v6700
    %v6967 = vsub.f32 0.0, %v6701
    %v6968 = vsub.f32 0.0, %v6702
    %v6969 = vsub.f32 0.0, %v6703
    %v6970 = vsub.f32 0.0, %v6704
    %v6971 = vsub.f32 0.0, %v6705
    %v6972 = vsub.f32 0.0, %v6706
    %v6973 = vsub.f32 0.0, %v6707
    %v6974 = vsub.f32 0.0, %v6708
    %v6975 = vsub.f32 0.0, %v6709
    %v6976 = vsub.f32 0.0, %v6710
    %v6977 = vsub.f32 0.0, %v6711
    %v6978 = vsub.f32 0.0, %v6712
    %v6979 = vsub.f32 0.0, %v6713
    %v6980 = vsub.f32 0.0, %v6714
    %v6981 = vsub.f32 0.0, %v6715
    %v6982 = vsub.f32 0.0, %v6716
    %v6983 = vsub.f32 0.0, %v6717
    %v6984 = vsub.f32 0.0, %v6718
    %v6985 = vsub.f32 0.0, %v6719
    %v6986 = vsub.f32 0.0, %v6720
    %v6987 = vsub.f32 0.0, %v6721
    %v6988 = vsub.f32 0.0, %v6722
    %v6989 = vsub.f32 0.0, %v6723
    %v6990 = vsub.f32 0.0, %v6724
    %v6991 = vsub.f32 0.0, %v6725
    %v6992 = vsub.f32 0.0, %v6726
    %v6993 = vsub.f32 0.0, %v6727
    %v6994 = vsub.f32 0.0, %v6728
    %v6995 = vsub.f32 0.0, %v6729
    %v6996 = vsub.f32 0.0, %v6730
    %v6997 = vsub.f32 0.0, %v6731
    %v6998 = vsub.f32 0.0, %v6732
    %v6999 = vsub.f32 0.0, %v6733
    %v7000 = vsub.f32 0.0, %v6734
    %v7001 = vsub.f32 0.0, %v6735
    %v7002 = vsub.f32 0.0, %v6736
    %v7003 = vsub.f32 0.0, %v6737
    %v7004 = vsub.f32 0.0, %v6738
    %v7005 = vsub.f32 0.0, %v6739
    %v7006 = vsub.f32 0.0, %v6740
    %v7007 = vsub.f32 0.0, %v6741
    %v7008 = vsub.f32 0.0, %v6742
    %v7009 = vsub.f32 0.0, %v6743
    %v7010 = vsub.f32 0.0, %v6744
    %v7011 = vsub.f32 0.0, %v6745
    %v7012 = vsub.f32 0.0, %v6746
    %v7013 = vsub.f32 0.0, %v6747
    %v7014 = vsub.f32 0.0, %v6748
    %v7015 = vsub.f32 0.0, %v6749
    %v7016 = vsub.f32 0.0, %v6750
    %v7017 = vsub.f32 0.0, %v6751
    %v7018 = vsub.f32 0.0, %v6752
    %v7019 = vsub.f32 0.0, %v6753
    %v7020 = vsub.f32 0.0, %v6754
    %v7021 = vsub.f32 0.0, %v6755
    %v7022 = vsub.f32 0.0, %v6756
    %v7023 = vsub.f32 0.0, %v6757
    %v7024 = vsub.f32 0.0, %v6758
    %v7025 = vsub.f32 0.0, %v6759
    %v7026 = vsub.f32 0.0, %v6760
    %v7027 = vsub.f32 0.0, %v6761
    %v7028 = vsub.f32 0.0, %v6762
    %v7029 = vsub.f32 0.0, %v6763
    %v7030 = vsub.f32 0.0, %v6764
    %v7031 = vsub.f32 0.0, %v6765
    %v7032 = vsub.f32 0.0, %v6766
    %v7033 = vsub.f32 0.0, %v6767
    %v7034 = vsub.f32 0.0, %v6768
    %v7035 = vsub.f32 0.0, %v6769
    %v7036 = vsub.f32 0.0, %v6770
    %v7037 = vsub.f32 0.0, %v6771
    %v7038 = vsub.f32 0.0, %v6772
    %v7039 = vsub.f32 0.0, %v6773
    %v7040 = vsub.f32 0.0, %v6774
    %v7041 = vsub.f32 0.0, %v6775
    %v7042 = vsub.f32 0.0, %v6776
    %v7043 = vsub.f32 0.0, %v6777
    %v7044 = vsub.f32 0.0, %v6778
    %v7045 = vsub.f32 0.0, %v6779
    %v7046 = vsub.f32 0.0, %v6780
    %v7047 = vsub.f32 0.0, %v6781
    %v7048 = vsub.f32 0.0, %v6782
    %v7049 = vsub.f32 0.0, %v6783
    %v7050 = vsub.f32 0.0, %v6784
    %v7051 = vsub.f32 0.0, %v6785
    %v7052 = vsub.f32 0.0, %v6786
    %v7053 = vsub.f32 0.0, %v6787
    %v7054 = vsub.f32 0.0, %v6788
    %v7055 = vsub.f32 0.0, %v6789
    %v7056 = vsub.f32 0.0, %v6790
    %v7057 = vsub.f32 0.0, %v6791
    %v7058 = vsub.f32 0.0, %v6792
    %v7059 = vsub.f32 0.0, %v6793
    %v7060 = vsub.f32 0.0, %v6794
    %v7061 = vsub.f32 0.0, %v6795
    %v7062 = vsub.f32 0.0, %v6796
    %v7063 = vsub.f32 0.0, %v6797
    %v7064 = vsub.f32 0.0, %v6798
    %v7065 = vsub.f32 0.0, %v6799
    %v7066 = vsub.f32 0.0, %v6800
    %v7067 = vsub.f32 0.0, %v6801
    %v7068 = vsub.f32 0.0, %v6802
    %v7069 = vsub.f32 0.0, %v6803
    %v7070 = vsub.f32 0.0, %v6804
    %v7071 = vsub.f32 0.0, %v6805
    %v7072 = vsub.f32 0.0, %v6806
    %v7073 = vsub.f32 0.0, %v6807
    %v7074 = vsub.f32 0.0, %v6808
    %v7075 = vsub.f32 0.0, %v6809
    %v7076 = vsub.f32 0.0, %v6810
    %v7077 = vsub.f32 0.0, %v6811
    %v7078 = vsub.f32 0.0, %v6812
    %v7079 = vsub.f32 0.0, %v6813
    %v7080 = vsub.f32 0.0, %v6814
    %v7081 = vsub.f32 0.0, %v6815
    %v7082 = vsub.f32 0.0, %v6816
    %v7083 = vsub.f32 0.0, %v6817
    %v7084 = vsub.f32 0.0, %v6818
    %v7085 = vsub.f32 0.0, %v6819
    %v7086 = vsub.f32 0.0, %v6820
    %v7087 = vsub.f32 0.0, %v6821
    %v7088 = vsub.f32 0.0, %v6822
    %v7089 = vsub.f32 0.0, %v6823
    %v7090 = vsub.f32 0.0, %v6824
    %v7091 = vsub.f32 0.0, %v6825
    %v7092 = vsub.f32 0.0, %v6826
    %v7093 = vsub.f32 0.0, %v6827
    %v7094 = vsub.f32 0.0, %v6828
    %v7095 = vsub.f32 0.0, %v6829
    %v7096 = vsub.f32 0.0, %v6830
    %v7097 = vsub.f32 0.0, %v6831
    %v7098 = vsub.f32 0.0, %v6832
    %v7099 = vsub.f32 0.0, %v6833
    %v7100 = vsub.f32 0.0, %v6834
    %v7101 = vsub.f32 0.0, %v6835
    %v7102 = vsub.f32 0.0, %v6836
    %v7103 = vsub.f32 0.0, %v6837
    %v7104 = vsub.f32 0.0, %v6838
    %v7105 = vsub.f32 0.0, %v6839
    %v7106 = vsub.f32 0.0, %v6840
    %v7107 = vsub.f32 0.0, %v6841
    %v7108 = vsub.f32 0.0, %v6842
    %v7109 = vsub.f32 0.0, %v6843
    %v7110 = vsub.f32 0.0, %v6844
    %v7111 = vsub.f32 0.0, %v6845
    %v7112 = vsub.f32 0.0, %v6846
    %v7113 = vsub.f32 0.0, %v6847
    %v7114 = vsub.f32 0.0, %v6848
    %v7115 = vsub.f32 0.0, %v6849
    %v7116 = vsub.f32 0.0, %v6850
    %v7117 = vsub.f32 0.0, %v6851
    %v7118 = vsub.f32 0.0, %v6852
    %v7119 = vsub.f32 0.0, %v6853
    %v7120 = vsub.f32 0.0, %v6854
    %v7121 = vsub.f32 0.0, %v6855
    %v7122 = vsub.f32 0.0, %v6856
    %v7123 = vsub.f32 0.0, %v6857
    %v7124 = vsub.f32 0.0, %v6858
    %v7125 = vsub.f32 0.0, %v6859
    %v7126 = vsub.f32 0.0, %v6860
    %v7127 = vsub.f32 0.0, %v6861
    %v7128 = vsub.f32 0.0, %v6862
    %v7129 = vsub.f32 0.0, %v6863
    %v7130 = vsub.f32 0.0, %v6864
    %v7131 = vsub.f32 0.0, %v6865
    %v7132 = vsub.f32 0.0, %v6866
    %v7133 = vsub.f32 0.0, %v6867
    %v7134 = vsub.f32 0.0, %v6868
    %v7135 = vsub.f32 0.0, %v6869
    %v7136 = vsub.f32 0.0, %v6870
    %v7137 = vsub.f32 0.0, %v6871
    %v7138 = vsub.f32 0.0, %v6872
    %v7139 = vsub.f32 0.0, %v6873
    %v7140 = vsub.f32 0.0, %v6874
    %v7141 = vsub.f32 0.0, %v6875
    %v7142 = vsub.f32 0.0, %v6876
    %v7143 = vsub.f32 0.0, %v6877
    %v7144 = vsub.f32 0.0, %v6878
    %v7145 = vsub.f32 0.0, %v6879
    %v7146 = vsub.f32 0.0, %v6880
    %v7147 = vsub.f32 0.0, %v6881
    %v7148 = vsub.f32 0.0, %v6882
    %v7149 = vsub.f32 0.0, %v6883
    %v7150 = vsub.f32 0.0, %v6884
    %v7151 = vmul.f32 %v6885, 1.442695
    %v7152 = vpow.pop %v7151
    %v7153 = vmul.f32 %v6886, 1.442695
    %v7154 = vpow.pop %v7153
    %v7155 = vmul.f32 %v6887, 1.442695
    %v7156 = vpow.pop %v7155
    %v7157 = vmul.f32 %v6888, 1.442695
    %v7158 = vpow.pop %v7157
    %v7159 = vmul.f32 %v6889, 1.442695
    %v7160 = vpow.pop %v7159
    %v7161 = vmul.f32 %v6890, 1.442695
    %v7162 = vpow.pop %v7161
    %v7163 = vmul.f32 %v6891, 1.442695
    %v7164 = vpow.pop %v7163
    %v7165 = vmul.f32 %v6892, 1.442695
    %v7166 = vpow.pop %v7165
    %v7167 = vmul.f32 %v6893, 1.442695
    %v7168 = vpow.pop %v7167
    %v7169 = vmul.f32 %v6894, 1.442695
    %v7170 = vpow.pop %v7169
    %v7171 = vmul.f32 %v6895, 1.442695
    %v7172 = vpow.pop %v7171
    %v7173 = vmul.f32 %v6896, 1.442695
    %v7174 = vpow.pop %v7173
    %v7175 = vmul.f32 %v6897, 1.442695
    %v7176 = vpow.pop %v7175
    %v7177 = vmul.f32 %v6898, 1.442695
    %v7178 = vpow.pop %v7177
    %v7179 = vmul.f32 %v6899, 1.442695
    %v7180 = vpow.pop %v7179
    %v7181 = vmul.f32 %v6900, 1.442695
    %v7182 = vpow.pop %v7181
    %v7183 = vmul.f32 %v6901, 1.442695
    %v7184 = vpow.pop %v7183
    %v7185 = vmul.f32 %v6902, 1.442695
    %v7186 = vpow.pop %v7185
    %v7187 = vmul.f32 %v6903, 1.442695
    %v7188 = vpow.pop %v7187
    %v7189 = vmul.f32 %v6904, 1.442695
    %v7190 = vpow.pop %v7189
    %v7191 = vmul.f32 %v6905, 1.442695
    %v7192 = vpow.pop %v7191
    %v7193 = vmul.f32 %v6906, 1.442695
    %v7194 = vpow.pop %v7193
    %v7195 = vmul.f32 %v6907, 1.442695
    %v7196 = vpow.pop %v7195
    %v7197 = vmul.f32 %v6908, 1.442695
    %v7198 = vpow.pop %v7197
    %v7199 = vmul.f32 %v6909, 1.442695
    %v7200 = vpow.pop %v7199
    %v7201 = vmul.f32 %v6910, 1.442695
    %v7202 = vpow.pop %v7201
    %v7203 = vmul.f32 %v6911, 1.442695
    %v7204 = vpow.pop %v7203
    %v7205 = vmul.f32 %v6912, 1.442695
    %v7206 = vpow.pop %v7205
    %v7207 = vmul.f32 %v6913, 1.442695
    %v7208 = vpow.pop %v7207
    %v7209 = vmul.f32 %v6914, 1.442695
    %v7210 = vpow.pop %v7209
    %v7211 = vmul.f32 %v6915, 1.442695
    %v7212 = vpow.pop %v7211
    %v7213 = vmul.f32 %v6916, 1.442695
    %v7214 = vpow.pop %v7213
    %v7215 = vmul.f32 %v6917, 1.442695
    %v7216 = vpow.pop %v7215
    %v7217 = vmul.f32 %v6918, 1.442695
    %v7218 = vpow.pop %v7217
    %v7219 = vmul.f32 %v6919, 1.442695
    %v7220 = vpow.pop %v7219
    %v7221 = vmul.f32 %v6920, 1.442695
    %v7222 = vpow.pop %v7221
    %v7223 = vmul.f32 %v6921, 1.442695
    %v7224 = vpow.pop %v7223
    %v7225 = vmul.f32 %v6922, 1.442695
    %v7226 = vpow.pop %v7225
    %v7227 = vmul.f32 %v6923, 1.442695
    %v7228 = vpow.pop %v7227
    %v7229 = vmul.f32 %v6924, 1.442695
    %v7230 = vpow.pop %v7229
    %v7231 = vmul.f32 %v6925, 1.442695
    %v7232 = vpow.pop %v7231
    %v7233 = vmul.f32 %v6926, 1.442695
    %v7234 = vpow.pop %v7233
    %v7235 = vmul.f32 %v6927, 1.442695
    %v7236 = vpow.pop %v7235
    %v7237 = vmul.f32 %v6928, 1.442695
    %v7238 = vpow.pop %v7237
    %v7239 = vmul.f32 %v6929, 1.442695
    %v7240 = vpow.pop %v7239
    %v7241 = vmul.f32 %v6930, 1.442695
    %v7242 = vpow.pop %v7241
    %v7243 = vmul.f32 %v6931, 1.442695
    %v7244 = vpow.pop %v7243
    %v7245 = vmul.f32 %v6932, 1.442695
    %v7246 = vpow.pop %v7245
    %v7247 = vmul.f32 %v6933, 1.442695
    %v7248 = vpow.pop %v7247
    %v7249 = vmul.f32 %v6934, 1.442695
    %v7250 = vpow.pop %v7249
    %v7251 = vmul.f32 %v6935, 1.442695
    %v7252 = vpow.pop %v7251
    %v7253 = vmul.f32 %v6936, 1.442695
    %v7254 = vpow.pop %v7253
    %v7255 = vmul.f32 %v6937, 1.442695
    %v7256 = vpow.pop %v7255
    %v7257 = vmul.f32 %v6938, 1.442695
    %v7258 = vpow.pop %v7257
    %v7259 = vmul.f32 %v6939, 1.442695
    %v7260 = vpow.pop %v7259
    %v7261 = vmul.f32 %v6940, 1.442695
    %v7262 = vpow.pop %v7261
    %v7263 = vmul.f32 %v6941, 1.442695
    %v7264 = vpow.pop %v7263
    %v7265 = vmul.f32 %v6942, 1.442695
    %v7266 = vpow.pop %v7265
    %v7267 = vmul.f32 %v6943, 1.442695
    %v7268 = vpow.pop %v7267
    %v7269 = vmul.f32 %v6944, 1.442695
    %v7270 = vpow.pop %v7269
    %v7271 = vmul.f32 %v6945, 1.442695
    %v7272 = vpow.pop %v7271
    %v7273 = vmul.f32 %v6946, 1.442695
    %v7274 = vpow.pop %v7273
    %v7275 = vmul.f32 %v6947, 1.442695
    %v7276 = vpow.pop %v7275
    %v7277 = vmul.f32 %v6948, 1.442695
    %v7278 = vpow.pop %v7277
    %v7279 = vmul.f32 %v6949, 1.442695
    %v7280 = vpow.pop %v7279
    %v7281 = vmul.f32 %v6950, 1.442695
    %v7282 = vpow.pop %v7281
    %v7283 = vmul.f32 %v6951, 1.442695
    %v7284 = vpow.pop %v7283
    %v7285 = vmul.f32 %v6952, 1.442695
    %v7286 = vpow.pop %v7285
    %v7287 = vmul.f32 %v6953, 1.442695
    %v7288 = vpow.pop %v7287
    %v7289 = vmul.f32 %v6954, 1.442695
    %v7290 = vpow.pop %v7289
    %v7291 = vmul.f32 %v6955, 1.442695
    %v7292 = vpow.pop %v7291
    %v7293 = vmul.f32 %v6956, 1.442695
    %v7294 = vpow.pop %v7293
    %v7295 = vmul.f32 %v6957, 1.442695
    %v7296 = vpow.pop %v7295
    %v7297 = vmul.f32 %v6958, 1.442695
    %v7298 = vpow.pop %v7297
    %v7299 = vmul.f32 %v6959, 1.442695
    %v7300 = vpow.pop %v7299
    %v7301 = vmul.f32 %v6960, 1.442695
    %v7302 = vpow.pop %v7301
    %v7303 = vmul.f32 %v6961, 1.442695
    %v7304 = vpow.pop %v7303
    %v7305 = vmul.f32 %v6962, 1.442695
    %v7306 = vpow.pop %v7305
    %v7307 = vmul.f32 %v6963, 1.442695
    %v7308 = vpow.pop %v7307
    %v7309 = vmul.f32 %v6964, 1.442695
    %v7310 = vpow.pop %v7309
    %v7311 = vmul.f32 %v6965, 1.442695
    %v7312 = vpow.pop %v7311
    %v7313 = vmul.f32 %v6966, 1.442695
    %v7314 = vpow.pop %v7313
    %v7315 = vmul.f32 %v6967, 1.442695
    %v7316 = vpow.pop %v7315
    %v7317 = vmul.f32 %v6968, 1.442695
    %v7318 = vpow.pop %v7317
    %v7319 = vmul.f32 %v6969, 1.442695
    %v7320 = vpow.pop %v7319
    %v7321 = vmul.f32 %v6970, 1.442695
    %v7322 = vpow.pop %v7321
    %v7323 = vmul.f32 %v6971, 1.442695
    %v7324 = vpow.pop %v7323
    %v7325 = vmul.f32 %v6972, 1.442695
    %v7326 = vpow.pop %v7325
    %v7327 = vmul.f32 %v6973, 1.442695
    %v7328 = vpow.pop %v7327
    %v7329 = vmul.f32 %v6974, 1.442695
    %v7330 = vpow.pop %v7329
    %v7331 = vmul.f32 %v6975, 1.442695
    %v7332 = vpow.pop %v7331
    %v7333 = vmul.f32 %v6976, 1.442695
    %v7334 = vpow.pop %v7333
    %v7335 = vmul.f32 %v6977, 1.442695
    %v7336 = vpow.pop %v7335
    %v7337 = vmul.f32 %v6978, 1.442695
    %v7338 = vpow.pop %v7337
    %v7339 = vmul.f32 %v6979, 1.442695
    %v7340 = vpow.pop %v7339
    %v7341 = vmul.f32 %v6980, 1.442695
    %v7342 = vpow.pop %v7341
    %v7343 = vmul.f32 %v6981, 1.442695
    %v7344 = vpow.pop %v7343
    %v7345 = vmul.f32 %v6982, 1.442695
    %v7346 = vpow.pop %v7345
    %v7347 = vmul.f32 %v6983, 1.442695
    %v7348 = vpow.pop %v7347
    %v7349 = vmul.f32 %v6984, 1.442695
    %v7350 = vpow.pop %v7349
    %v7351 = vmul.f32 %v6985, 1.442695
    %v7352 = vpow.pop %v7351
    %v7353 = vmul.f32 %v6986, 1.442695
    %v7354 = vpow.pop %v7353
    %v7355 = vmul.f32 %v6987, 1.442695
    %v7356 = vpow.pop %v7355
    %v7357 = vmul.f32 %v6988, 1.442695
    %v7358 = vpow.pop %v7357
    %v7359 = vmul.f32 %v6989, 1.442695
    %v7360 = vpow.pop %v7359
    %v7361 = vmul.f32 %v6990, 1.442695
    %v7362 = vpow.pop %v7361
    %v7363 = vmul.f32 %v6991, 1.442695
    %v7364 = vpow.pop %v7363
    %v7365 = vmul.f32 %v6992, 1.442695
    %v7366 = vpow.pop %v7365
    %v7367 = vmul.f32 %v6993, 1.442695
    %v7368 = vpow.pop %v7367
    %v7369 = vmul.f32 %v6994, 1.442695
    %v7370 = vpow.pop %v7369
    %v7371 = vmul.f32 %v6995, 1.442695
    %v7372 = vpow.pop %v7371
    %v7373 = vmul.f32 %v6996, 1.442695
    %v7374 = vpow.pop %v7373
    %v7375 = vmul.f32 %v6997, 1.442695
    %v7376 = vpow.pop %v7375
    %v7377 = vmul.f32 %v6998, 1.442695
    %v7378 = vpow.pop %v7377
    %v7379 = vmul.f32 %v6999, 1.442695
    %v7380 = vpow.pop %v7379
    %v7381 = vmul.f32 %v7000, 1.442695
    %v7382 = vpow.pop %v7381
    %v7383 = vmul.f32 %v7001, 1.442695
    %v7384 = vpow.pop %v7383
    %v7385 = vmul.f32 %v7002, 1.442695
    %v7386 = vpow.pop %v7385
    %v7387 = vmul.f32 %v7003, 1.442695
    %v7388 = vpow.pop %v7387
    %v7389 = vmul.f32 %v7004, 1.442695
    %v7390 = vpow.pop %v7389
    %v7391 = vmul.f32 %v7005, 1.442695
    %v7392 = vpow.pop %v7391
    %v7393 = vmul.f32 %v7006, 1.442695
    %v7394 = vpow.pop %v7393
    %v7395 = vmul.f32 %v7007, 1.442695
    %v7396 = vpow.pop %v7395
    %v7397 = vmul.f32 %v7008, 1.442695
    %v7398 = vpow.pop %v7397
    %v7399 = vmul.f32 %v7009, 1.442695
    %v7400 = vpow.pop %v7399
    %v7401 = vmul.f32 %v7010, 1.442695
    %v7402 = vpow.pop %v7401
    %v7403 = vmul.f32 %v7011, 1.442695
    %v7404 = vpow.pop %v7403
    %v7405 = vmul.f32 %v7012, 1.442695
    %v7406 = vpow.pop %v7405
    %v7407 = vmul.f32 %v7013, 1.442695
    %v7408 = vpow.pop %v7407
    %v7409 = vmul.f32 %v7014, 1.442695
    %v7410 = vpow.pop %v7409
    %v7411 = vmul.f32 %v7015, 1.442695
    %v7412 = vpow.pop %v7411
    %v7413 = vmul.f32 %v7016, 1.442695
    %v7414 = vpow.pop %v7413
    %v7415 = vmul.f32 %v7017, 1.442695
    %v7416 = vpow.pop %v7415
    %v7417 = vmul.f32 %v7018, 1.442695
    %v7418 = vpow.pop %v7417
    %v7419 = vmul.f32 %v7019, 1.442695
    %v7420 = vpow.pop %v7419
    %v7421 = vmul.f32 %v7020, 1.442695
    %v7422 = vpow.pop %v7421
    %v7423 = vmul.f32 %v7021, 1.442695
    %v7424 = vpow.pop %v7423
    %v7425 = vmul.f32 %v7022, 1.442695
    %v7426 = vpow.pop %v7425
    %v7427 = vmul.f32 %v7023, 1.442695
    %v7428 = vpow.pop %v7427
    %v7429 = vmul.f32 %v7024, 1.442695
    %v7430 = vpow.pop %v7429
    %v7431 = vmul.f32 %v7025, 1.442695
    %v7432 = vpow.pop %v7431
    %v7433 = vmul.f32 %v7026, 1.442695
    %v7434 = vpow.pop %v7433
    %v7435 = vmul.f32 %v7027, 1.442695
    %v7436 = vpow.pop %v7435
    %v7437 = vmul.f32 %v7028, 1.442695
    %v7438 = vpow.pop %v7437
    %v7439 = vmul.f32 %v7029, 1.442695
    %v7440 = vpow.pop %v7439
    %v7441 = vmul.f32 %v7030, 1.442695
    %v7442 = vpow.pop %v7441
    %v7443 = vmul.f32 %v7031, 1.442695
    %v7444 = vpow.pop %v7443
    %v7445 = vmul.f32 %v7032, 1.442695
    %v7446 = vpow.pop %v7445
    %v7447 = vmul.f32 %v7033, 1.442695
    %v7448 = vpow.pop %v7447
    %v7449 = vmul.f32 %v7034, 1.442695
    %v7450 = vpow.pop %v7449
    %v7451 = vmul.f32 %v7035, 1.442695
    %v7452 = vpow.pop %v7451
    %v7453 = vmul.f32 %v7036, 1.442695
    %v7454 = vpow.pop %v7453
    %v7455 = vmul.f32 %v7037, 1.442695
    %v7456 = vpow.pop %v7455
    %v7457 = vmul.f32 %v7038, 1.442695
    %v7458 = vpow.pop %v7457
    %v7459 = vmul.f32 %v7039, 1.442695
    %v7460 = vpow.pop %v7459
    %v7461 = vmul.f32 %v7040, 1.442695
    %v7462 = vpow.pop %v7461
    %v7463 = vmul.f32 %v7041, 1.442695
    %v7464 = vpow.pop %v7463
    %v7465 = vmul.f32 %v7042, 1.442695
    %v7466 = vpow.pop %v7465
    %v7467 = vmul.f32 %v7043, 1.442695
    %v7468 = vpow.pop %v7467
    %v7469 = vmul.f32 %v7044, 1.442695
    %v7470 = vpow.pop %v7469
    %v7471 = vmul.f32 %v7045, 1.442695
    %v7472 = vpow.pop %v7471
    %v7473 = vmul.f32 %v7046, 1.442695
    %v7474 = vpow.pop %v7473
    %v7475 = vmul.f32 %v7047, 1.442695
    %v7476 = vpow.pop %v7475
    %v7477 = vmul.f32 %v7048, 1.442695
    %v7478 = vpow.pop %v7477
    %v7479 = vmul.f32 %v7049, 1.442695
    %v7480 = vpow.pop %v7479
    %v7481 = vmul.f32 %v7050, 1.442695
    %v7482 = vpow.pop %v7481
    %v7483 = vmul.f32 %v7051, 1.442695
    %v7484 = vpow.pop %v7483
    %v7485 = vmul.f32 %v7052, 1.442695
    %v7486 = vpow.pop %v7485
    %v7487 = vmul.f32 %v7053, 1.442695
    %v7488 = vpow.pop %v7487
    %v7489 = vmul.f32 %v7054, 1.442695
    %v7490 = vpow.pop %v7489
    %v7491 = vmul.f32 %v7055, 1.442695
    %v7492 = vpow.pop %v7491
    %v7493 = vmul.f32 %v7056, 1.442695
    %v7494 = vpow.pop %v7493
    %v7495 = vmul.f32 %v7057, 1.442695
    %v7496 = vpow.pop %v7495
    %v7497 = vmul.f32 %v7058, 1.442695
    %v7498 = vpow.pop %v7497
    %v7499 = vmul.f32 %v7059, 1.442695
    %v7500 = vpow.pop %v7499
    %v7501 = vmul.f32 %v7060, 1.442695
    %v7502 = vpow.pop %v7501
    %v7503 = vmul.f32 %v7061, 1.442695
    %v7504 = vpow.pop %v7503
    %v7505 = vmul.f32 %v7062, 1.442695
    %v7506 = vpow.pop %v7505
    %v7507 = vmul.f32 %v7063, 1.442695
    %v7508 = vpow.pop %v7507
    %v7509 = vmul.f32 %v7064, 1.442695
    %v7510 = vpow.pop %v7509
    %v7511 = vmul.f32 %v7065, 1.442695
    %v7512 = vpow.pop %v7511
    %v7513 = vmul.f32 %v7066, 1.442695
    %v7514 = vpow.pop %v7513
    %v7515 = vmul.f32 %v7067, 1.442695
    %v7516 = vpow.pop %v7515
    %v7517 = vmul.f32 %v7068, 1.442695
    %v7518 = vpow.pop %v7517
    %v7519 = vmul.f32 %v7069, 1.442695
    %v7520 = vpow.pop %v7519
    %v7521 = vmul.f32 %v7070, 1.442695
    %v7522 = vpow.pop %v7521
    %v7523 = vmul.f32 %v7071, 1.442695
    %v7524 = vpow.pop %v7523
    %v7525 = vmul.f32 %v7072, 1.442695
    %v7526 = vpow.pop %v7525
    %v7527 = vmul.f32 %v7073, 1.442695
    %v7528 = vpow.pop %v7527
    %v7529 = vmul.f32 %v7074, 1.442695
    %v7530 = vpow.pop %v7529
    %v7531 = vmul.f32 %v7075, 1.442695
    %v7532 = vpow.pop %v7531
    %v7533 = vmul.f32 %v7076, 1.442695
    %v7534 = vpow.pop %v7533
    %v7535 = vmul.f32 %v7077, 1.442695
    %v7536 = vpow.pop %v7535
    %v7537 = vmul.f32 %v7078, 1.442695
    %v7538 = vpow.pop %v7537
    %v7539 = vmul.f32 %v7079, 1.442695
    %v7540 = vpow.pop %v7539
    %v7541 = vmul.f32 %v7080, 1.442695
    %v7542 = vpow.pop %v7541
    %v7543 = vmul.f32 %v7081, 1.442695
    %v7544 = vpow.pop %v7543
    %v7545 = vmul.f32 %v7082, 1.442695
    %v7546 = vpow.pop %v7545
    %v7547 = vmul.f32 %v7083, 1.442695
    %v7548 = vpow.pop %v7547
    %v7549 = vmul.f32 %v7084, 1.442695
    %v7550 = vpow.pop %v7549
    %v7551 = vmul.f32 %v7085, 1.442695
    %v7552 = vpow.pop %v7551
    %v7553 = vmul.f32 %v7086, 1.442695
    %v7554 = vpow.pop %v7553
    %v7555 = vmul.f32 %v7087, 1.442695
    %v7556 = vpow.pop %v7555
    %v7557 = vmul.f32 %v7088, 1.442695
    %v7558 = vpow.pop %v7557
    %v7559 = vmul.f32 %v7089, 1.442695
    %v7560 = vpow.pop %v7559
    %v7561 = vmul.f32 %v7090, 1.442695
    %v7562 = vpow.pop %v7561
    %v7563 = vmul.f32 %v7091, 1.442695
    %v7564 = vpow.pop %v7563
    %v7565 = vmul.f32 %v7092, 1.442695
    %v7566 = vpow.pop %v7565
    %v7567 = vmul.f32 %v7093, 1.442695
    %v7568 = vpow.pop %v7567
    %v7569 = vmul.f32 %v7094, 1.442695
    %v7570 = vpow.pop %v7569
    %v7571 = vmul.f32 %v7095, 1.442695
    %v7572 = vpow.pop %v7571
    %v7573 = vmul.f32 %v7096, 1.442695
    %v7574 = vpow.pop %v7573
    %v7575 = vmul.f32 %v7097, 1.442695
    %v7576 = vpow.pop %v7575
    %v7577 = vmul.f32 %v7098, 1.442695
    %v7578 = vpow.pop %v7577
    %v7579 = vmul.f32 %v7099, 1.442695
    %v7580 = vpow.pop %v7579
    %v7581 = vmul.f32 %v7100, 1.442695
    %v7582 = vpow.pop %v7581
    %v7583 = vmul.f32 %v7101, 1.442695
    %v7584 = vpow.pop %v7583
    %v7585 = vmul.f32 %v7102, 1.442695
    %v7586 = vpow.pop %v7585
    %v7587 = vmul.f32 %v7103, 1.442695
    %v7588 = vpow.pop %v7587
    %v7589 = vmul.f32 %v7104, 1.442695
    %v7590 = vpow.pop %v7589
    %v7591 = vmul.f32 %v7105, 1.442695
    %v7592 = vpow.pop %v7591
    %v7593 = vmul.f32 %v7106, 1.442695
    %v7594 = vpow.pop %v7593
    %v7595 = vmul.f32 %v7107, 1.442695
    %v7596 = vpow.pop %v7595
    %v7597 = vmul.f32 %v7108, 1.442695
    %v7598 = vpow.pop %v7597
    %v7599 = vmul.f32 %v7109, 1.442695
    %v7600 = vpow.pop %v7599
    %v7601 = vmul.f32 %v7110, 1.442695
    %v7602 = vpow.pop %v7601
    %v7603 = vmul.f32 %v7111, 1.442695
    %v7604 = vpow.pop %v7603
    %v7605 = vmul.f32 %v7112, 1.442695
    %v7606 = vpow.pop %v7605
    %v7607 = vmul.f32 %v7113, 1.442695
    %v7608 = vpow.pop %v7607
    %v7609 = vmul.f32 %v7114, 1.442695
    %v7610 = vpow.pop %v7609
    %v7611 = vmul.f32 %v7115, 1.442695
    %v7612 = vpow.pop %v7611
    %v7613 = vmul.f32 %v7116, 1.442695
    %v7614 = vpow.pop %v7613
    %v7615 = vmul.f32 %v7117, 1.442695
    %v7616 = vpow.pop %v7615
    %v7617 = vmul.f32 %v7118, 1.442695
    %v7618 = vpow.pop %v7617
    %v7619 = vmul.f32 %v7119, 1.442695
    %v7620 = vpow.pop %v7619
    %v7621 = vmul.f32 %v7120, 1.442695
    %v7622 = vpow.pop %v7621
    %v7623 = vmul.f32 %v7121, 1.442695
    %v7624 = vpow.pop %v7623
    %v7625 = vmul.f32 %v7122, 1.442695
    %v7626 = vpow.pop %v7625
    %v7627 = vmul.f32 %v7123, 1.442695
    %v7628 = vpow.pop %v7627
    %v7629 = vmul.f32 %v7124, 1.442695
    %v7630 = vpow.pop %v7629
    %v7631 = vmul.f32 %v7125, 1.442695
    %v7632 = vpow.pop %v7631
    %v7633 = vmul.f32 %v7126, 1.442695
    %v7634 = vpow.pop %v7633
    %v7635 = vmul.f32 %v7127, 1.442695
    %v7636 = vpow.pop %v7635
    %v7637 = vmul.f32 %v7128, 1.442695
    %v7638 = vpow.pop %v7637
    %v7639 = vmul.f32 %v7129, 1.442695
    %v7640 = vpow.pop %v7639
    %v7641 = vmul.f32 %v7130, 1.442695
    %v7642 = vpow.pop %v7641
    %v7643 = vmul.f32 %v7131, 1.442695
    %v7644 = vpow.pop %v7643
    %v7645 = vmul.f32 %v7132, 1.442695
    %v7646 = vpow.pop %v7645
    %v7647 = vmul.f32 %v7133, 1.442695
    %v7648 = vpow.pop %v7647
    %v7649 = vmul.f32 %v7134, 1.442695
    %v7650 = vpow.pop %v7649
    %v7651 = vmul.f32 %v7135, 1.442695
    %v7652 = vpow.pop %v7651
    %v7653 = vmul.f32 %v7136, 1.442695
    %v7654 = vpow.pop %v7653
    %v7655 = vmul.f32 %v7137, 1.442695
    %v7656 = vpow.pop %v7655
    %v7657 = vmul.f32 %v7138, 1.442695
    %v7658 = vpow.pop %v7657
    %v7659 = vmul.f32 %v7139, 1.442695
    %v7660 = vpow.pop %v7659
    %v7661 = vmul.f32 %v7140, 1.442695
    %v7662 = vpow.pop %v7661
    %v7663 = vmul.f32 %v7141, 1.442695
    %v7664 = vpow.pop %v7663
    %v7665 = vmul.f32 %v7142, 1.442695
    %v7666 = vpow.pop %v7665
    %v7667 = vmul.f32 %v7143, 1.442695
    %v7668 = vpow.pop %v7667
    %v7669 = vmul.f32 %v7144, 1.442695
    %v7670 = vpow.pop %v7669
    %v7671 = vmul.f32 %v7145, 1.442695
    %v7672 = vpow.pop %v7671
    %v7673 = vmul.f32 %v7146, 1.442695
    %v7674 = vpow.pop %v7673
    %v7675 = vmul.f32 %v7147, 1.442695
    %v7676 = vpow.pop %v7675
    %v7677 = vmul.f32 %v7148, 1.442695
    %v7678 = vpow.pop %v7677
    %v7679 = vmul.f32 %v7149, 1.442695
    %v7680 = vpow.pop %v7679
    %v7681 = vmul.f32 %v7150, 1.442695
    %v7682 = vpow.pop %v7681
    %v7683 = vadd.f32 %v7152, 1.0
    %v7684 = vadd.f32 %v7154, 1.0
    %v7685 = vadd.f32 %v7156, 1.0
    %v7686 = vadd.f32 %v7158, 1.0
    %v7687 = vadd.f32 %v7160, 1.0
    %v7688 = vadd.f32 %v7162, 1.0
    %v7689 = vadd.f32 %v7164, 1.0
    %v7690 = vadd.f32 %v7166, 1.0
    %v7691 = vadd.f32 %v7168, 1.0
    %v7692 = vadd.f32 %v7170, 1.0
    %v7693 = vadd.f32 %v7172, 1.0
    %v7694 = vadd.f32 %v7174, 1.0
    %v7695 = vadd.f32 %v7176, 1.0
    %v7696 = vadd.f32 %v7178, 1.0
    %v7697 = vadd.f32 %v7180, 1.0
    %v7698 = vadd.f32 %v7182, 1.0
    %v7699 = vadd.f32 %v7184, 1.0
    %v7700 = vadd.f32 %v7186, 1.0
    %v7701 = vadd.f32 %v7188, 1.0
    %v7702 = vadd.f32 %v7190, 1.0
    %v7703 = vadd.f32 %v7192, 1.0
    %v7704 = vadd.f32 %v7194, 1.0
    %v7705 = vadd.f32 %v7196, 1.0
    %v7706 = vadd.f32 %v7198, 1.0
    %v7707 = vadd.f32 %v7200, 1.0
    %v7708 = vadd.f32 %v7202, 1.0
    %v7709 = vadd.f32 %v7204, 1.0
    %v7710 = vadd.f32 %v7206, 1.0
    %v7711 = vadd.f32 %v7208, 1.0
    %v7712 = vadd.f32 %v7210, 1.0
    %v7713 = vadd.f32 %v7212, 1.0
    %v7714 = vadd.f32 %v7214, 1.0
    %v7715 = vadd.f32 %v7216, 1.0
    %v7716 = vadd.f32 %v7218, 1.0
    %v7717 = vadd.f32 %v7220, 1.0
    %v7718 = vadd.f32 %v7222, 1.0
    %v7719 = vadd.f32 %v7224, 1.0
    %v7720 = vadd.f32 %v7226, 1.0
    %v7721 = vadd.f32 %v7228, 1.0
    %v7722 = vadd.f32 %v7230, 1.0
    %v7723 = vadd.f32 %v7232, 1.0
    %v7724 = vadd.f32 %v7234, 1.0
    %v7725 = vadd.f32 %v7236, 1.0
    %v7726 = vadd.f32 %v7238, 1.0
    %v7727 = vadd.f32 %v7240, 1.0
    %v7728 = vadd.f32 %v7242, 1.0
    %v7729 = vadd.f32 %v7244, 1.0
    %v7730 = vadd.f32 %v7246, 1.0
    %v7731 = vadd.f32 %v7248, 1.0
    %v7732 = vadd.f32 %v7250, 1.0
    %v7733 = vadd.f32 %v7252, 1.0
    %v7734 = vadd.f32 %v7254, 1.0
    %v7735 = vadd.f32 %v7256, 1.0
    %v7736 = vadd.f32 %v7258, 1.0
    %v7737 = vadd.f32 %v7260, 1.0
    %v7738 = vadd.f32 %v7262, 1.0
    %v7739 = vadd.f32 %v7264, 1.0
    %v7740 = vadd.f32 %v7266, 1.0
    %v7741 = vadd.f32 %v7268, 1.0
    %v7742 = vadd.f32 %v7270, 1.0
    %v7743 = vadd.f32 %v7272, 1.0
    %v7744 = vadd.f32 %v7274, 1.0
    %v7745 = vadd.f32 %v7276, 1.0
    %v7746 = vadd.f32 %v7278, 1.0
    %v7747 = vadd.f32 %v7280, 1.0
    %v7748 = vadd.f32 %v7282, 1.0
    %v7749 = vadd.f32 %v7284, 1.0
    %v7750 = vadd.f32 %v7286, 1.0
    %v7751 = vadd.f32 %v7288, 1.0
    %v7752 = vadd.f32 %v7290, 1.0
    %v7753 = vadd.f32 %v7292, 1.0
    %v7754 = vadd.f32 %v7294, 1.0
    %v7755 = vadd.f32 %v7296, 1.0
    %v7756 = vadd.f32 %v7298, 1.0
    %v7757 = vadd.f32 %v7300, 1.0
    %v7758 = vadd.f32 %v7302, 1.0
    %v7759 = vadd.f32 %v7304, 1.0
    %v7760 = vadd.f32 %v7306, 1.0
    %v7761 = vadd.f32 %v7308, 1.0
    %v7762 = vadd.f32 %v7310, 1.0
    %v7763 = vadd.f32 %v7312, 1.0
    %v7764 = vadd.f32 %v7314, 1.0
    %v7765 = vadd.f32 %v7316, 1.0
    %v7766 = vadd.f32 %v7318, 1.0
    %v7767 = vadd.f32 %v7320, 1.0
    %v7768 = vadd.f32 %v7322, 1.0
    %v7769 = vadd.f32 %v7324, 1.0
    %v7770 = vadd.f32 %v7326, 1.0
    %v7771 = vadd.f32 %v7328, 1.0
    %v7772 = vadd.f32 %v7330, 1.0
    %v7773 = vadd.f32 %v7332, 1.0
    %v7774 = vadd.f32 %v7334, 1.0
    %v7775 = vadd.f32 %v7336, 1.0
    %v7776 = vadd.f32 %v7338, 1.0
    %v7777 = vadd.f32 %v7340, 1.0
    %v7778 = vadd.f32 %v7342, 1.0
    %v7779 = vadd.f32 %v7344, 1.0
    %v7780 = vadd.f32 %v7346, 1.0
    %v7781 = vadd.f32 %v7348, 1.0
    %v7782 = vadd.f32 %v7350, 1.0
    %v7783 = vadd.f32 %v7352, 1.0
    %v7784 = vadd.f32 %v7354, 1.0
    %v7785 = vadd.f32 %v7356, 1.0
    %v7786 = vadd.f32 %v7358, 1.0
    %v7787 = vadd.f32 %v7360, 1.0
    %v7788 = vadd.f32 %v7362, 1.0
    %v7789 = vadd.f32 %v7364, 1.0
    %v7790 = vadd.f32 %v7366, 1.0
    %v7791 = vadd.f32 %v7368, 1.0
    %v7792 = vadd.f32 %v7370, 1.0
    %v7793 = vadd.f32 %v7372, 1.0
    %v7794 = vadd.f32 %v7374, 1.0
    %v7795 = vadd.f32 %v7376, 1.0
    %v7796 = vadd.f32 %v7378, 1.0
    %v7797 = vadd.f32 %v7380, 1.0
    %v7798 = vadd.f32 %v7382, 1.0
    %v7799 = vadd.f32 %v7384, 1.0
    %v7800 = vadd.f32 %v7386, 1.0
    %v7801 = vadd.f32 %v7388, 1.0
    %v7802 = vadd.f32 %v7390, 1.0
    %v7803 = vadd.f32 %v7392, 1.0
    %v7804 = vadd.f32 %v7394, 1.0
    %v7805 = vadd.f32 %v7396, 1.0
    %v7806 = vadd.f32 %v7398, 1.0
    %v7807 = vadd.f32 %v7400, 1.0
    %v7808 = vadd.f32 %v7402, 1.0
    %v7809 = vadd.f32 %v7404, 1.0
    %v7810 = vadd.f32 %v7406, 1.0
    %v7811 = vadd.f32 %v7408, 1.0
    %v7812 = vadd.f32 %v7410, 1.0
    %v7813 = vadd.f32 %v7412, 1.0
    %v7814 = vadd.f32 %v7414, 1.0
    %v7815 = vadd.f32 %v7416, 1.0
    %v7816 = vadd.f32 %v7418, 1.0
    %v7817 = vadd.f32 %v7420, 1.0
    %v7818 = vadd.f32 %v7422, 1.0
    %v7819 = vadd.f32 %v7424, 1.0
    %v7820 = vadd.f32 %v7426, 1.0
    %v7821 = vadd.f32 %v7428, 1.0
    %v7822 = vadd.f32 %v7430, 1.0
    %v7823 = vadd.f32 %v7432, 1.0
    %v7824 = vadd.f32 %v7434, 1.0
    %v7825 = vadd.f32 %v7436, 1.0
    %v7826 = vadd.f32 %v7438, 1.0
    %v7827 = vadd.f32 %v7440, 1.0
    %v7828 = vadd.f32 %v7442, 1.0
    %v7829 = vadd.f32 %v7444, 1.0
    %v7830 = vadd.f32 %v7446, 1.0
    %v7831 = vadd.f32 %v7448, 1.0
    %v7832 = vadd.f32 %v7450, 1.0
    %v7833 = vadd.f32 %v7452, 1.0
    %v7834 = vadd.f32 %v7454, 1.0
    %v7835 = vadd.f32 %v7456, 1.0
    %v7836 = vadd.f32 %v7458, 1.0
    %v7837 = vadd.f32 %v7460, 1.0
    %v7838 = vadd.f32 %v7462, 1.0
    %v7839 = vadd.f32 %v7464, 1.0
    %v7840 = vadd.f32 %v7466, 1.0
    %v7841 = vadd.f32 %v7468, 1.0
    %v7842 = vadd.f32 %v7470, 1.0
    %v7843 = vadd.f32 %v7472, 1.0
    %v7844 = vadd.f32 %v7474, 1.0
    %v7845 = vadd.f32 %v7476, 1.0
    %v7846 = vadd.f32 %v7478, 1.0
    %v7847 = vadd.f32 %v7480, 1.0
    %v7848 = vadd.f32 %v7482, 1.0
    %v7849 = vadd.f32 %v7484, 1.0
    %v7850 = vadd.f32 %v7486, 1.0
    %v7851 = vadd.f32 %v7488, 1.0
    %v7852 = vadd.f32 %v7490, 1.0
    %v7853 = vadd.f32 %v7492, 1.0
    %v7854 = vadd.f32 %v7494, 1.0
    %v7855 = vadd.f32 %v7496, 1.0
    %v7856 = vadd.f32 %v7498, 1.0
    %v7857 = vadd.f32 %v7500, 1.0
    %v7858 = vadd.f32 %v7502, 1.0
    %v7859 = vadd.f32 %v7504, 1.0
    %v7860 = vadd.f32 %v7506, 1.0
    %v7861 = vadd.f32 %v7508, 1.0
    %v7862 = vadd.f32 %v7510, 1.0
    %v7863 = vadd.f32 %v7512, 1.0
    %v7864 = vadd.f32 %v7514, 1.0
    %v7865 = vadd.f32 %v7516, 1.0
    %v7866 = vadd.f32 %v7518, 1.0
    %v7867 = vadd.f32 %v7520, 1.0
    %v7868 = vadd.f32 %v7522, 1.0
    %v7869 = vadd.f32 %v7524, 1.0
    %v7870 = vadd.f32 %v7526, 1.0
    %v7871 = vadd.f32 %v7528, 1.0
    %v7872 = vadd.f32 %v7530, 1.0
    %v7873 = vadd.f32 %v7532, 1.0
    %v7874 = vadd.f32 %v7534, 1.0
    %v7875 = vadd.f32 %v7536, 1.0
    %v7876 = vadd.f32 %v7538, 1.0
    %v7877 = vadd.f32 %v7540, 1.0
    %v7878 = vadd.f32 %v7542, 1.0
    %v7879 = vadd.f32 %v7544, 1.0
    %v7880 = vadd.f32 %v7546, 1.0
    %v7881 = vadd.f32 %v7548, 1.0
    %v7882 = vadd.f32 %v7550, 1.0
    %v7883 = vadd.f32 %v7552, 1.0
    %v7884 = vadd.f32 %v7554, 1.0
    %v7885 = vadd.f32 %v7556, 1.0
    %v7886 = vadd.f32 %v7558, 1.0
    %v7887 = vadd.f32 %v7560, 1.0
    %v7888 = vadd.f32 %v7562, 1.0
    %v7889 = vadd.f32 %v7564, 1.0
    %v7890 = vadd.f32 %v7566, 1.0
    %v7891 = vadd.f32 %v7568, 1.0
    %v7892 = vadd.f32 %v7570, 1.0
    %v7893 = vadd.f32 %v7572, 1.0
    %v7894 = vadd.f32 %v7574, 1.0
    %v7895 = vadd.f32 %v7576, 1.0
    %v7896 = vadd.f32 %v7578, 1.0
    %v7897 = vadd.f32 %v7580, 1.0
    %v7898 = vadd.f32 %v7582, 1.0
    %v7899 = vadd.f32 %v7584, 1.0
    %v7900 = vadd.f32 %v7586, 1.0
    %v7901 = vadd.f32 %v7588, 1.0
    %v7902 = vadd.f32 %v7590, 1.0
    %v7903 = vadd.f32 %v7592, 1.0
    %v7904 = vadd.f32 %v7594, 1.0
    %v7905 = vadd.f32 %v7596, 1.0
    %v7906 = vadd.f32 %v7598, 1.0
    %v7907 = vadd.f32 %v7600, 1.0
    %v7908 = vadd.f32 %v7602, 1.0
    %v7909 = vadd.f32 %v7604, 1.0
    %v7910 = vadd.f32 %v7606, 1.0
    %v7911 = vadd.f32 %v7608, 1.0
    %v7912 = vadd.f32 %v7610, 1.0
    %v7913 = vadd.f32 %v7612, 1.0
    %v7914 = vadd.f32 %v7614, 1.0
    %v7915 = vadd.f32 %v7616, 1.0
    %v7916 = vadd.f32 %v7618, 1.0
    %v7917 = vadd.f32 %v7620, 1.0
    %v7918 = vadd.f32 %v7622, 1.0
    %v7919 = vadd.f32 %v7624, 1.0
    %v7920 = vadd.f32 %v7626, 1.0
    %v7921 = vadd.f32 %v7628, 1.0
    %v7922 = vadd.f32 %v7630, 1.0
    %v7923 = vadd.f32 %v7632, 1.0
    %v7924 = vadd.f32 %v7634, 1.0
    %v7925 = vadd.f32 %v7636, 1.0
    %v7926 = vadd.f32 %v7638, 1.0
    %v7927 = vadd.f32 %v7640, 1.0
    %v7928 = vadd.f32 %v7642, 1.0
    %v7929 = vadd.f32 %v7644, 1.0
    %v7930 = vadd.f32 %v7646, 1.0
    %v7931 = vadd.f32 %v7648, 1.0
    %v7932 = vadd.f32 %v7650, 1.0
    %v7933 = vadd.f32 %v7652, 1.0
    %v7934 = vadd.f32 %v7654, 1.0
    %v7935 = vadd.f32 %v7656, 1.0
    %v7936 = vadd.f32 %v7658, 1.0
    %v7937 = vadd.f32 %v7660, 1.0
    %v7938 = vadd.f32 %v7662, 1.0
    %v7939 = vadd.f32 %v7664, 1.0
    %v7940 = vadd.f32 %v7666, 1.0
    %v7941 = vadd.f32 %v7668, 1.0
    %v7942 = vadd.f32 %v7670, 1.0
    %v7943 = vadd.f32 %v7672, 1.0
    %v7944 = vadd.f32 %v7674, 1.0
    %v7945 = vadd.f32 %v7676, 1.0
    %v7946 = vadd.f32 %v7678, 1.0
    %v7947 = vadd.f32 %v7680, 1.0
    %v7948 = vadd.f32 %v7682, 1.0
    %v7949 = vlog2.pop %v7683
    %v7950 = vmul.f32 %v7949, 0.6931472
    %v7951 = vlog2.pop %v7684
    %v7952 = vmul.f32 %v7951, 0.6931472
    %v7953 = vlog2.pop %v7685
    %v7954 = vmul.f32 %v7953, 0.6931472
    %v7955 = vlog2.pop %v7686
    %v7956 = vmul.f32 %v7955, 0.6931472
    %v7957 = vlog2.pop %v7687
    %v7958 = vmul.f32 %v7957, 0.6931472
    %v7959 = vlog2.pop %v7688
    %v7960 = vmul.f32 %v7959, 0.6931472
    %v7961 = vlog2.pop %v7689
    %v7962 = vmul.f32 %v7961, 0.6931472
    %v7963 = vlog2.pop %v7690
    %v7964 = vmul.f32 %v7963, 0.6931472
    %v7965 = vlog2.pop %v7691
    %v7966 = vmul.f32 %v7965, 0.6931472
    %v7967 = vlog2.pop %v7692
    %v7968 = vmul.f32 %v7967, 0.6931472
    %v7969 = vlog2.pop %v7693
    %v7970 = vmul.f32 %v7969, 0.6931472
    %v7971 = vlog2.pop %v7694
    %v7972 = vmul.f32 %v7971, 0.6931472
    %v7973 = vlog2.pop %v7695
    %v7974 = vmul.f32 %v7973, 0.6931472
    %v7975 = vlog2.pop %v7696
    %v7976 = vmul.f32 %v7975, 0.6931472
    %v7977 = vlog2.pop %v7697
    %v7978 = vmul.f32 %v7977, 0.6931472
    %v7979 = vlog2.pop %v7698
    %v7980 = vmul.f32 %v7979, 0.6931472
    %v7981 = vlog2.pop %v7699
    %v7982 = vmul.f32 %v7981, 0.6931472
    %v7983 = vlog2.pop %v7700
    %v7984 = vmul.f32 %v7983, 0.6931472
    %v7985 = vlog2.pop %v7701
    %v7986 = vmul.f32 %v7985, 0.6931472
    %v7987 = vlog2.pop %v7702
    %v7988 = vmul.f32 %v7987, 0.6931472
    %v7989 = vlog2.pop %v7703
    %v7990 = vmul.f32 %v7989, 0.6931472
    %v7991 = vlog2.pop %v7704
    %v7992 = vmul.f32 %v7991, 0.6931472
    %v7993 = vlog2.pop %v7705
    %v7994 = vmul.f32 %v7993, 0.6931472
    %v7995 = vlog2.pop %v7706
    %v7996 = vmul.f32 %v7995, 0.6931472
    %v7997 = vlog2.pop %v7707
    %v7998 = vmul.f32 %v7997, 0.6931472
    %v7999 = vlog2.pop %v7708
    %v8000 = vmul.f32 %v7999, 0.6931472
    %v8001 = vlog2.pop %v7709
    %v8002 = vmul.f32 %v8001, 0.6931472
    %v8003 = vlog2.pop %v7710
    %v8004 = vmul.f32 %v8003, 0.6931472
    %v8005 = vlog2.pop %v7711
    %v8006 = vmul.f32 %v8005, 0.6931472
    %v8007 = vlog2.pop %v7712
    %v8008 = vmul.f32 %v8007, 0.6931472
    %v8009 = vlog2.pop %v7713
    %v8010 = vmul.f32 %v8009, 0.6931472
    %v8011 = vlog2.pop %v7714
    %v8012 = vmul.f32 %v8011, 0.6931472
    %v8013 = vlog2.pop %v7715
    %v8014 = vmul.f32 %v8013, 0.6931472
    %v8015 = vlog2.pop %v7716
    %v8016 = vmul.f32 %v8015, 0.6931472
    %v8017 = vlog2.pop %v7717
    %v8018 = vmul.f32 %v8017, 0.6931472
    %v8019 = vlog2.pop %v7718
    %v8020 = vmul.f32 %v8019, 0.6931472
    %v8021 = vlog2.pop %v7719
    %v8022 = vmul.f32 %v8021, 0.6931472
    %v8023 = vlog2.pop %v7720
    %v8024 = vmul.f32 %v8023, 0.6931472
    %v8025 = vlog2.pop %v7721
    %v8026 = vmul.f32 %v8025, 0.6931472
    %v8027 = vlog2.pop %v7722
    %v8028 = vmul.f32 %v8027, 0.6931472
    %v8029 = vlog2.pop %v7723
    %v8030 = vmul.f32 %v8029, 0.6931472
    %v8031 = vlog2.pop %v7724
    %v8032 = vmul.f32 %v8031, 0.6931472
    %v8033 = vlog2.pop %v7725
    %v8034 = vmul.f32 %v8033, 0.6931472
    %v8035 = vlog2.pop %v7726
    %v8036 = vmul.f32 %v8035, 0.6931472
    %v8037 = vlog2.pop %v7727
    %v8038 = vmul.f32 %v8037, 0.6931472
    %v8039 = vlog2.pop %v7728
    %v8040 = vmul.f32 %v8039, 0.6931472
    %v8041 = vlog2.pop %v7729
    %v8042 = vmul.f32 %v8041, 0.6931472
    %v8043 = vlog2.pop %v7730
    %v8044 = vmul.f32 %v8043, 0.6931472
    %v8045 = vlog2.pop %v7731
    %v8046 = vmul.f32 %v8045, 0.6931472
    %v8047 = vlog2.pop %v7732
    %v8048 = vmul.f32 %v8047, 0.6931472
    %v8049 = vlog2.pop %v7733
    %v8050 = vmul.f32 %v8049, 0.6931472
    %v8051 = vlog2.pop %v7734
    %v8052 = vmul.f32 %v8051, 0.6931472
    %v8053 = vlog2.pop %v7735
    %v8054 = vmul.f32 %v8053, 0.6931472
    %v8055 = vlog2.pop %v7736
    %v8056 = vmul.f32 %v8055, 0.6931472
    %v8057 = vlog2.pop %v7737
    %v8058 = vmul.f32 %v8057, 0.6931472
    %v8059 = vlog2.pop %v7738
    %v8060 = vmul.f32 %v8059, 0.6931472
    %v8061 = vlog2.pop %v7739
    %v8062 = vmul.f32 %v8061, 0.6931472
    %v8063 = vlog2.pop %v7740
    %v8064 = vmul.f32 %v8063, 0.6931472
    %v8065 = vlog2.pop %v7741
    %v8066 = vmul.f32 %v8065, 0.6931472
    %v8067 = vlog2.pop %v7742
    %v8068 = vmul.f32 %v8067, 0.6931472
    %v8069 = vlog2.pop %v7743
    %v8070 = vmul.f32 %v8069, 0.6931472
    %v8071 = vlog2.pop %v7744
    %v8072 = vmul.f32 %v8071, 0.6931472
    %v8073 = vlog2.pop %v7745
    %v8074 = vmul.f32 %v8073, 0.6931472
    %v8075 = vlog2.pop %v7746
    %v8076 = vmul.f32 %v8075, 0.6931472
    %v8077 = vlog2.pop %v7747
    %v8078 = vmul.f32 %v8077, 0.6931472
    %v8079 = vlog2.pop %v7748
    %v8080 = vmul.f32 %v8079, 0.6931472
    %v8081 = vlog2.pop %v7749
    %v8082 = vmul.f32 %v8081, 0.6931472
    %v8083 = vlog2.pop %v7750
    %v8084 = vmul.f32 %v8083, 0.6931472
    %v8085 = vlog2.pop %v7751
    %v8086 = vmul.f32 %v8085, 0.6931472
    %v8087 = vlog2.pop %v7752
    %v8088 = vmul.f32 %v8087, 0.6931472
    %v8089 = vlog2.pop %v7753
    %v8090 = vmul.f32 %v8089, 0.6931472
    %v8091 = vlog2.pop %v7754
    %v8092 = vmul.f32 %v8091, 0.6931472
    %v8093 = vlog2.pop %v7755
    %v8094 = vmul.f32 %v8093, 0.6931472
    %v8095 = vlog2.pop %v7756
    %v8096 = vmul.f32 %v8095, 0.6931472
    %v8097 = vlog2.pop %v7757
    %v8098 = vmul.f32 %v8097, 0.6931472
    %v8099 = vlog2.pop %v7758
    %v8100 = vmul.f32 %v8099, 0.6931472
    %v8101 = vlog2.pop %v7759
    %v8102 = vmul.f32 %v8101, 0.6931472
    %v8103 = vlog2.pop %v7760
    %v8104 = vmul.f32 %v8103, 0.6931472
    %v8105 = vlog2.pop %v7761
    %v8106 = vmul.f32 %v8105, 0.6931472
    %v8107 = vlog2.pop %v7762
    %v8108 = vmul.f32 %v8107, 0.6931472
    %v8109 = vlog2.pop %v7763
    %v8110 = vmul.f32 %v8109, 0.6931472
    %v8111 = vlog2.pop %v7764
    %v8112 = vmul.f32 %v8111, 0.6931472
    %v8113 = vlog2.pop %v7765
    %v8114 = vmul.f32 %v8113, 0.6931472
    %v8115 = vlog2.pop %v7766
    %v8116 = vmul.f32 %v8115, 0.6931472
    %v8117 = vlog2.pop %v7767
    %v8118 = vmul.f32 %v8117, 0.6931472
    %v8119 = vlog2.pop %v7768
    %v8120 = vmul.f32 %v8119, 0.6931472
    %v8121 = vlog2.pop %v7769
    %v8122 = vmul.f32 %v8121, 0.6931472
    %v8123 = vlog2.pop %v7770
    %v8124 = vmul.f32 %v8123, 0.6931472
    %v8125 = vlog2.pop %v7771
    %v8126 = vmul.f32 %v8125, 0.6931472
    %v8127 = vlog2.pop %v7772
    %v8128 = vmul.f32 %v8127, 0.6931472
    %v8129 = vlog2.pop %v7773
    %v8130 = vmul.f32 %v8129, 0.6931472
    %v8131 = vlog2.pop %v7774
    %v8132 = vmul.f32 %v8131, 0.6931472
    %v8133 = vlog2.pop %v7775
    %v8134 = vmul.f32 %v8133, 0.6931472
    %v8135 = vlog2.pop %v7776
    %v8136 = vmul.f32 %v8135, 0.6931472
    %v8137 = vlog2.pop %v7777
    %v8138 = vmul.f32 %v8137, 0.6931472
    %v8139 = vlog2.pop %v7778
    %v8140 = vmul.f32 %v8139, 0.6931472
    %v8141 = vlog2.pop %v7779
    %v8142 = vmul.f32 %v8141, 0.6931472
    %v8143 = vlog2.pop %v7780
    %v8144 = vmul.f32 %v8143, 0.6931472
    %v8145 = vlog2.pop %v7781
    %v8146 = vmul.f32 %v8145, 0.6931472
    %v8147 = vlog2.pop %v7782
    %v8148 = vmul.f32 %v8147, 0.6931472
    %v8149 = vlog2.pop %v7783
    %v8150 = vmul.f32 %v8149, 0.6931472
    %v8151 = vlog2.pop %v7784
    %v8152 = vmul.f32 %v8151, 0.6931472
    %v8153 = vlog2.pop %v7785
    %v8154 = vmul.f32 %v8153, 0.6931472
    %v8155 = vlog2.pop %v7786
    %v8156 = vmul.f32 %v8155, 0.6931472
    %v8157 = vlog2.pop %v7787
    %v8158 = vmul.f32 %v8157, 0.6931472
    %v8159 = vlog2.pop %v7788
    %v8160 = vmul.f32 %v8159, 0.6931472
    %v8161 = vlog2.pop %v7789
    %v8162 = vmul.f32 %v8161, 0.6931472
    %v8163 = vlog2.pop %v7790
    %v8164 = vmul.f32 %v8163, 0.6931472
    %v8165 = vlog2.pop %v7791
    %v8166 = vmul.f32 %v8165, 0.6931472
    %v8167 = vlog2.pop %v7792
    %v8168 = vmul.f32 %v8167, 0.6931472
    %v8169 = vlog2.pop %v7793
    %v8170 = vmul.f32 %v8169, 0.6931472
    %v8171 = vlog2.pop %v7794
    %v8172 = vmul.f32 %v8171, 0.6931472
    %v8173 = vlog2.pop %v7795
    %v8174 = vmul.f32 %v8173, 0.6931472
    %v8175 = vlog2.pop %v7796
    %v8176 = vmul.f32 %v8175, 0.6931472
    %v8177 = vlog2.pop %v7797
    %v8178 = vmul.f32 %v8177, 0.6931472
    %v8179 = vlog2.pop %v7798
    %v8180 = vmul.f32 %v8179, 0.6931472
    %v8181 = vlog2.pop %v7799
    %v8182 = vmul.f32 %v8181, 0.6931472
    %v8183 = vlog2.pop %v7800
    %v8184 = vmul.f32 %v8183, 0.6931472
    %v8185 = vlog2.pop %v7801
    %v8186 = vmul.f32 %v8185, 0.6931472
    %v8187 = vlog2.pop %v7802
    %v8188 = vmul.f32 %v8187, 0.6931472
    %v8189 = vlog2.pop %v7803
    %v8190 = vmul.f32 %v8189, 0.6931472
    %v8191 = vlog2.pop %v7804
    %v8192 = vmul.f32 %v8191, 0.6931472
    %v8193 = vlog2.pop %v7805
    %v8194 = vmul.f32 %v8193, 0.6931472
    %v8195 = vlog2.pop %v7806
    %v8196 = vmul.f32 %v8195, 0.6931472
    %v8197 = vlog2.pop %v7807
    %v8198 = vmul.f32 %v8197, 0.6931472
    %v8199 = vlog2.pop %v7808
    %v8200 = vmul.f32 %v8199, 0.6931472
    %v8201 = vlog2.pop %v7809
    %v8202 = vmul.f32 %v8201, 0.6931472
    %v8203 = vlog2.pop %v7810
    %v8204 = vmul.f32 %v8203, 0.6931472
    %v8205 = vlog2.pop %v7811
    %v8206 = vmul.f32 %v8205, 0.6931472
    %v8207 = vlog2.pop %v7812
    %v8208 = vmul.f32 %v8207, 0.6931472
    %v8209 = vlog2.pop %v7813
    %v8210 = vmul.f32 %v8209, 0.6931472
    %v8211 = vlog2.pop %v7814
    %v8212 = vmul.f32 %v8211, 0.6931472
    %v8213 = vlog2.pop %v7815
    %v8214 = vmul.f32 %v8213, 0.6931472
    %v8215 = vlog2.pop %v7816
    %v8216 = vmul.f32 %v8215, 0.6931472
    %v8217 = vlog2.pop %v7817
    %v8218 = vmul.f32 %v8217, 0.6931472
    %v8219 = vlog2.pop %v7818
    %v8220 = vmul.f32 %v8219, 0.6931472
    %v8221 = vlog2.pop %v7819
    %v8222 = vmul.f32 %v8221, 0.6931472
    %v8223 = vlog2.pop %v7820
    %v8224 = vmul.f32 %v8223, 0.6931472
    %v8225 = vlog2.pop %v7821
    %v8226 = vmul.f32 %v8225, 0.6931472
    %v8227 = vlog2.pop %v7822
    %v8228 = vmul.f32 %v8227, 0.6931472
    %v8229 = vlog2.pop %v7823
    %v8230 = vmul.f32 %v8229, 0.6931472
    %v8231 = vlog2.pop %v7824
    %v8232 = vmul.f32 %v8231, 0.6931472
    %v8233 = vlog2.pop %v7825
    %v8234 = vmul.f32 %v8233, 0.6931472
    %v8235 = vlog2.pop %v7826
    %v8236 = vmul.f32 %v8235, 0.6931472
    %v8237 = vlog2.pop %v7827
    %v8238 = vmul.f32 %v8237, 0.6931472
    %v8239 = vlog2.pop %v7828
    %v8240 = vmul.f32 %v8239, 0.6931472
    %v8241 = vlog2.pop %v7829
    %v8242 = vmul.f32 %v8241, 0.6931472
    %v8243 = vlog2.pop %v7830
    %v8244 = vmul.f32 %v8243, 0.6931472
    %v8245 = vlog2.pop %v7831
    %v8246 = vmul.f32 %v8245, 0.6931472
    %v8247 = vlog2.pop %v7832
    %v8248 = vmul.f32 %v8247, 0.6931472
    %v8249 = vlog2.pop %v7833
    %v8250 = vmul.f32 %v8249, 0.6931472
    %v8251 = vlog2.pop %v7834
    %v8252 = vmul.f32 %v8251, 0.6931472
    %v8253 = vlog2.pop %v7835
    %v8254 = vmul.f32 %v8253, 0.6931472
    %v8255 = vlog2.pop %v7836
    %v8256 = vmul.f32 %v8255, 0.6931472
    %v8257 = vlog2.pop %v7837
    %v8258 = vmul.f32 %v8257, 0.6931472
    %v8259 = vlog2.pop %v7838
    %v8260 = vmul.f32 %v8259, 0.6931472
    %v8261 = vlog2.pop %v7839
    %v8262 = vmul.f32 %v8261, 0.6931472
    %v8263 = vlog2.pop %v7840
    %v8264 = vmul.f32 %v8263, 0.6931472
    %v8265 = vlog2.pop %v7841
    %v8266 = vmul.f32 %v8265, 0.6931472
    %v8267 = vlog2.pop %v7842
    %v8268 = vmul.f32 %v8267, 0.6931472
    %v8269 = vlog2.pop %v7843
    %v8270 = vmul.f32 %v8269, 0.6931472
    %v8271 = vlog2.pop %v7844
    %v8272 = vmul.f32 %v8271, 0.6931472
    %v8273 = vlog2.pop %v7845
    %v8274 = vmul.f32 %v8273, 0.6931472
    %v8275 = vlog2.pop %v7846
    %v8276 = vmul.f32 %v8275, 0.6931472
    %v8277 = vlog2.pop %v7847
    %v8278 = vmul.f32 %v8277, 0.6931472
    %v8279 = vlog2.pop %v7848
    %v8280 = vmul.f32 %v8279, 0.6931472
    %v8281 = vlog2.pop %v7849
    %v8282 = vmul.f32 %v8281, 0.6931472
    %v8283 = vlog2.pop %v7850
    %v8284 = vmul.f32 %v8283, 0.6931472
    %v8285 = vlog2.pop %v7851
    %v8286 = vmul.f32 %v8285, 0.6931472
    %v8287 = vlog2.pop %v7852
    %v8288 = vmul.f32 %v8287, 0.6931472
    %v8289 = vlog2.pop %v7853
    %v8290 = vmul.f32 %v8289, 0.6931472
    %v8291 = vlog2.pop %v7854
    %v8292 = vmul.f32 %v8291, 0.6931472
    %v8293 = vlog2.pop %v7855
    %v8294 = vmul.f32 %v8293, 0.6931472
    %v8295 = vlog2.pop %v7856
    %v8296 = vmul.f32 %v8295, 0.6931472
    %v8297 = vlog2.pop %v7857
    %v8298 = vmul.f32 %v8297, 0.6931472
    %v8299 = vlog2.pop %v7858
    %v8300 = vmul.f32 %v8299, 0.6931472
    %v8301 = vlog2.pop %v7859
    %v8302 = vmul.f32 %v8301, 0.6931472
    %v8303 = vlog2.pop %v7860
    %v8304 = vmul.f32 %v8303, 0.6931472
    %v8305 = vlog2.pop %v7861
    %v8306 = vmul.f32 %v8305, 0.6931472
    %v8307 = vlog2.pop %v7862
    %v8308 = vmul.f32 %v8307, 0.6931472
    %v8309 = vlog2.pop %v7863
    %v8310 = vmul.f32 %v8309, 0.6931472
    %v8311 = vlog2.pop %v7864
    %v8312 = vmul.f32 %v8311, 0.6931472
    %v8313 = vlog2.pop %v7865
    %v8314 = vmul.f32 %v8313, 0.6931472
    %v8315 = vlog2.pop %v7866
    %v8316 = vmul.f32 %v8315, 0.6931472
    %v8317 = vlog2.pop %v7867
    %v8318 = vmul.f32 %v8317, 0.6931472
    %v8319 = vlog2.pop %v7868
    %v8320 = vmul.f32 %v8319, 0.6931472
    %v8321 = vlog2.pop %v7869
    %v8322 = vmul.f32 %v8321, 0.6931472
    %v8323 = vlog2.pop %v7870
    %v8324 = vmul.f32 %v8323, 0.6931472
    %v8325 = vlog2.pop %v7871
    %v8326 = vmul.f32 %v8325, 0.6931472
    %v8327 = vlog2.pop %v7872
    %v8328 = vmul.f32 %v8327, 0.6931472
    %v8329 = vlog2.pop %v7873
    %v8330 = vmul.f32 %v8329, 0.6931472
    %v8331 = vlog2.pop %v7874
    %v8332 = vmul.f32 %v8331, 0.6931472
    %v8333 = vlog2.pop %v7875
    %v8334 = vmul.f32 %v8333, 0.6931472
    %v8335 = vlog2.pop %v7876
    %v8336 = vmul.f32 %v8335, 0.6931472
    %v8337 = vlog2.pop %v7877
    %v8338 = vmul.f32 %v8337, 0.6931472
    %v8339 = vlog2.pop %v7878
    %v8340 = vmul.f32 %v8339, 0.6931472
    %v8341 = vlog2.pop %v7879
    %v8342 = vmul.f32 %v8341, 0.6931472
    %v8343 = vlog2.pop %v7880
    %v8344 = vmul.f32 %v8343, 0.6931472
    %v8345 = vlog2.pop %v7881
    %v8346 = vmul.f32 %v8345, 0.6931472
    %v8347 = vlog2.pop %v7882
    %v8348 = vmul.f32 %v8347, 0.6931472
    %v8349 = vlog2.pop %v7883
    %v8350 = vmul.f32 %v8349, 0.6931472
    %v8351 = vlog2.pop %v7884
    %v8352 = vmul.f32 %v8351, 0.6931472
    %v8353 = vlog2.pop %v7885
    %v8354 = vmul.f32 %v8353, 0.6931472
    %v8355 = vlog2.pop %v7886
    %v8356 = vmul.f32 %v8355, 0.6931472
    %v8357 = vlog2.pop %v7887
    %v8358 = vmul.f32 %v8357, 0.6931472
    %v8359 = vlog2.pop %v7888
    %v8360 = vmul.f32 %v8359, 0.6931472
    %v8361 = vlog2.pop %v7889
    %v8362 = vmul.f32 %v8361, 0.6931472
    %v8363 = vlog2.pop %v7890
    %v8364 = vmul.f32 %v8363, 0.6931472
    %v8365 = vlog2.pop %v7891
    %v8366 = vmul.f32 %v8365, 0.6931472
    %v8367 = vlog2.pop %v7892
    %v8368 = vmul.f32 %v8367, 0.6931472
    %v8369 = vlog2.pop %v7893
    %v8370 = vmul.f32 %v8369, 0.6931472
    %v8371 = vlog2.pop %v7894
    %v8372 = vmul.f32 %v8371, 0.6931472
    %v8373 = vlog2.pop %v7895
    %v8374 = vmul.f32 %v8373, 0.6931472
    %v8375 = vlog2.pop %v7896
    %v8376 = vmul.f32 %v8375, 0.6931472
    %v8377 = vlog2.pop %v7897
    %v8378 = vmul.f32 %v8377, 0.6931472
    %v8379 = vlog2.pop %v7898
    %v8380 = vmul.f32 %v8379, 0.6931472
    %v8381 = vlog2.pop %v7899
    %v8382 = vmul.f32 %v8381, 0.6931472
    %v8383 = vlog2.pop %v7900
    %v8384 = vmul.f32 %v8383, 0.6931472
    %v8385 = vlog2.pop %v7901
    %v8386 = vmul.f32 %v8385, 0.6931472
    %v8387 = vlog2.pop %v7902
    %v8388 = vmul.f32 %v8387, 0.6931472
    %v8389 = vlog2.pop %v7903
    %v8390 = vmul.f32 %v8389, 0.6931472
    %v8391 = vlog2.pop %v7904
    %v8392 = vmul.f32 %v8391, 0.6931472
    %v8393 = vlog2.pop %v7905
    %v8394 = vmul.f32 %v8393, 0.6931472
    %v8395 = vlog2.pop %v7906
    %v8396 = vmul.f32 %v8395, 0.6931472
    %v8397 = vlog2.pop %v7907
    %v8398 = vmul.f32 %v8397, 0.6931472
    %v8399 = vlog2.pop %v7908
    %v8400 = vmul.f32 %v8399, 0.6931472
    %v8401 = vlog2.pop %v7909
    %v8402 = vmul.f32 %v8401, 0.6931472
    %v8403 = vlog2.pop %v7910
    %v8404 = vmul.f32 %v8403, 0.6931472
    %v8405 = vlog2.pop %v7911
    %v8406 = vmul.f32 %v8405, 0.6931472
    %v8407 = vlog2.pop %v7912
    %v8408 = vmul.f32 %v8407, 0.6931472
    %v8409 = vlog2.pop %v7913
    %v8410 = vmul.f32 %v8409, 0.6931472
    %v8411 = vlog2.pop %v7914
    %v8412 = vmul.f32 %v8411, 0.6931472
    %v8413 = vlog2.pop %v7915
    %v8414 = vmul.f32 %v8413, 0.6931472
    %v8415 = vlog2.pop %v7916
    %v8416 = vmul.f32 %v8415, 0.6931472
    %v8417 = vlog2.pop %v7917
    %v8418 = vmul.f32 %v8417, 0.6931472
    %v8419 = vlog2.pop %v7918
    %v8420 = vmul.f32 %v8419, 0.6931472
    %v8421 = vlog2.pop %v7919
    %v8422 = vmul.f32 %v8421, 0.6931472
    %v8423 = vlog2.pop %v7920
    %v8424 = vmul.f32 %v8423, 0.6931472
    %v8425 = vlog2.pop %v7921
    %v8426 = vmul.f32 %v8425, 0.6931472
    %v8427 = vlog2.pop %v7922
    %v8428 = vmul.f32 %v8427, 0.6931472
    %v8429 = vlog2.pop %v7923
    %v8430 = vmul.f32 %v8429, 0.6931472
    %v8431 = vlog2.pop %v7924
    %v8432 = vmul.f32 %v8431, 0.6931472
    %v8433 = vlog2.pop %v7925
    %v8434 = vmul.f32 %v8433, 0.6931472
    %v8435 = vlog2.pop %v7926
    %v8436 = vmul.f32 %v8435, 0.6931472
    %v8437 = vlog2.pop %v7927
    %v8438 = vmul.f32 %v8437, 0.6931472
    %v8439 = vlog2.pop %v7928
    %v8440 = vmul.f32 %v8439, 0.6931472
    %v8441 = vlog2.pop %v7929
    %v8442 = vmul.f32 %v8441, 0.6931472
    %v8443 = vlog2.pop %v7930
    %v8444 = vmul.f32 %v8443, 0.6931472
    %v8445 = vlog2.pop %v7931
    %v8446 = vmul.f32 %v8445, 0.6931472
    %v8447 = vlog2.pop %v7932
    %v8448 = vmul.f32 %v8447, 0.6931472
    %v8449 = vlog2.pop %v7933
    %v8450 = vmul.f32 %v8449, 0.6931472
    %v8451 = vlog2.pop %v7934
    %v8452 = vmul.f32 %v8451, 0.6931472
    %v8453 = vlog2.pop %v7935
    %v8454 = vmul.f32 %v8453, 0.6931472
    %v8455 = vlog2.pop %v7936
    %v8456 = vmul.f32 %v8455, 0.6931472
    %v8457 = vlog2.pop %v7937
    %v8458 = vmul.f32 %v8457, 0.6931472
    %v8459 = vlog2.pop %v7938
    %v8460 = vmul.f32 %v8459, 0.6931472
    %v8461 = vlog2.pop %v7939
    %v8462 = vmul.f32 %v8461, 0.6931472
    %v8463 = vlog2.pop %v7940
    %v8464 = vmul.f32 %v8463, 0.6931472
    %v8465 = vlog2.pop %v7941
    %v8466 = vmul.f32 %v8465, 0.6931472
    %v8467 = vlog2.pop %v7942
    %v8468 = vmul.f32 %v8467, 0.6931472
    %v8469 = vlog2.pop %v7943
    %v8470 = vmul.f32 %v8469, 0.6931472
    %v8471 = vlog2.pop %v7944
    %v8472 = vmul.f32 %v8471, 0.6931472
    %v8473 = vlog2.pop %v7945
    %v8474 = vmul.f32 %v8473, 0.6931472
    %v8475 = vlog2.pop %v7946
    %v8476 = vmul.f32 %v8475, 0.6931472
    %v8477 = vlog2.pop %v7947
    %v8478 = vmul.f32 %v8477, 0.6931472
    %v8479 = vlog2.pop %v7948
    %v8480 = vmul.f32 %v8479, 0.6931472
    %v8481 = vadd.f32 %v6353, %v7950
    %v8482 = vadd.f32 %v6354, %v7952
    %v8483 = vadd.f32 %v6355, %v7954
    %v8484 = vadd.f32 %v6356, %v7956
    %v8485 = vadd.f32 %v6357, %v7958
    %v8486 = vadd.f32 %v6358, %v7960
    %v8487 = vadd.f32 %v6359, %v7962
    %v8488 = vadd.f32 %v6360, %v7964
    %v8489 = vadd.f32 %v6361, %v7966
    %v8490 = vadd.f32 %v6362, %v7968
    %v8491 = vadd.f32 %v6363, %v7970
    %v8492 = vadd.f32 %v6364, %v7972
    %v8493 = vadd.f32 %v6365, %v7974
    %v8494 = vadd.f32 %v6366, %v7976
    %v8495 = vadd.f32 %v6367, %v7978
    %v8496 = vadd.f32 %v6368, %v7980
    %v8497 = vadd.f32 %v6369, %v7982
    %v8498 = vadd.f32 %v6370, %v7984
    %v8499 = vadd.f32 %v6371, %v7986
    %v8500 = vadd.f32 %v6372, %v7988
    %v8501 = vadd.f32 %v6373, %v7990
    %v8502 = vadd.f32 %v6374, %v7992
    %v8503 = vadd.f32 %v6375, %v7994
    %v8504 = vadd.f32 %v6376, %v7996
    %v8505 = vadd.f32 %v6377, %v7998
    %v8506 = vadd.f32 %v6378, %v8000
    %v8507 = vadd.f32 %v6379, %v8002
    %v8508 = vadd.f32 %v6380, %v8004
    %v8509 = vadd.f32 %v6381, %v8006
    %v8510 = vadd.f32 %v6382, %v8008
    %v8511 = vadd.f32 %v6383, %v8010
    %v8512 = vadd.f32 %v6384, %v8012
    %v8513 = vadd.f32 %v6385, %v8014
    %v8514 = vadd.f32 %v6386, %v8016
    %v8515 = vadd.f32 %v6387, %v8018
    %v8516 = vadd.f32 %v6388, %v8020
    %v8517 = vadd.f32 %v6389, %v8022
    %v8518 = vadd.f32 %v6390, %v8024
    %v8519 = vadd.f32 %v6391, %v8026
    %v8520 = vadd.f32 %v6392, %v8028
    %v8521 = vadd.f32 %v6393, %v8030
    %v8522 = vadd.f32 %v6394, %v8032
    %v8523 = vadd.f32 %v6395, %v8034
    %v8524 = vadd.f32 %v6396, %v8036
    %v8525 = vadd.f32 %v6397, %v8038
    %v8526 = vadd.f32 %v6398, %v8040
    %v8527 = vadd.f32 %v6399, %v8042
    %v8528 = vadd.f32 %v6400, %v8044
    %v8529 = vadd.f32 %v6401, %v8046
    %v8530 = vadd.f32 %v6402, %v8048
    %v8531 = vadd.f32 %v6403, %v8050
    %v8532 = vadd.f32 %v6404, %v8052
    %v8533 = vadd.f32 %v6405, %v8054
    %v8534 = vadd.f32 %v6406, %v8056
    %v8535 = vadd.f32 %v6407, %v8058
    %v8536 = vadd.f32 %v6408, %v8060
    %v8537 = vadd.f32 %v6409, %v8062
    %v8538 = vadd.f32 %v6410, %v8064
    %v8539 = vadd.f32 %v6411, %v8066
    %v8540 = vadd.f32 %v6412, %v8068
    %v8541 = vadd.f32 %v6413, %v8070
    %v8542 = vadd.f32 %v6414, %v8072
    %v8543 = vadd.f32 %v6415, %v8074
    %v8544 = vadd.f32 %v6416, %v8076
    %v8545 = vadd.f32 %v6417, %v8078
    %v8546 = vadd.f32 %v6418, %v8080
    %v8547 = vadd.f32 %v6419, %v8082
    %v8548 = vadd.f32 %v6420, %v8084
    %v8549 = vadd.f32 %v6421, %v8086
    %v8550 = vadd.f32 %v6422, %v8088
    %v8551 = vadd.f32 %v6423, %v8090
    %v8552 = vadd.f32 %v6424, %v8092
    %v8553 = vadd.f32 %v6425, %v8094
    %v8554 = vadd.f32 %v6426, %v8096
    %v8555 = vadd.f32 %v6427, %v8098
    %v8556 = vadd.f32 %v6428, %v8100
    %v8557 = vadd.f32 %v6429, %v8102
    %v8558 = vadd.f32 %v6430, %v8104
    %v8559 = vadd.f32 %v6431, %v8106
    %v8560 = vadd.f32 %v6432, %v8108
    %v8561 = vadd.f32 %v6433, %v8110
    %v8562 = vadd.f32 %v6434, %v8112
    %v8563 = vadd.f32 %v6435, %v8114
    %v8564 = vadd.f32 %v6436, %v8116
    %v8565 = vadd.f32 %v6437, %v8118
    %v8566 = vadd.f32 %v6438, %v8120
    %v8567 = vadd.f32 %v6439, %v8122
    %v8568 = vadd.f32 %v6440, %v8124
    %v8569 = vadd.f32 %v6441, %v8126
    %v8570 = vadd.f32 %v6442, %v8128
    %v8571 = vadd.f32 %v6443, %v8130
    %v8572 = vadd.f32 %v6444, %v8132
    %v8573 = vadd.f32 %v6445, %v8134
    %v8574 = vadd.f32 %v6446, %v8136
    %v8575 = vadd.f32 %v6447, %v8138
    %v8576 = vadd.f32 %v6448, %v8140
    %v8577 = vadd.f32 %v6449, %v8142
    %v8578 = vadd.f32 %v6450, %v8144
    %v8579 = vadd.f32 %v6451, %v8146
    %v8580 = vadd.f32 %v6452, %v8148
    %v8581 = vadd.f32 %v6453, %v8150
    %v8582 = vadd.f32 %v6454, %v8152
    %v8583 = vadd.f32 %v6455, %v8154
    %v8584 = vadd.f32 %v6456, %v8156
    %v8585 = vadd.f32 %v6457, %v8158
    %v8586 = vadd.f32 %v6458, %v8160
    %v8587 = vadd.f32 %v6459, %v8162
    %v8588 = vadd.f32 %v6460, %v8164
    %v8589 = vadd.f32 %v6461, %v8166
    %v8590 = vadd.f32 %v6462, %v8168
    %v8591 = vadd.f32 %v6463, %v8170
    %v8592 = vadd.f32 %v6464, %v8172
    %v8593 = vadd.f32 %v6465, %v8174
    %v8594 = vadd.f32 %v6466, %v8176
    %v8595 = vadd.f32 %v6467, %v8178
    %v8596 = vadd.f32 %v6468, %v8180
    %v8597 = vadd.f32 %v6469, %v8182
    %v8598 = vadd.f32 %v6470, %v8184
    %v8599 = vadd.f32 %v6471, %v8186
    %v8600 = vadd.f32 %v6472, %v8188
    %v8601 = vadd.f32 %v6473, %v8190
    %v8602 = vadd.f32 %v6474, %v8192
    %v8603 = vadd.f32 %v6475, %v8194
    %v8604 = vadd.f32 %v6476, %v8196
    %v8605 = vadd.f32 %v6477, %v8198
    %v8606 = vadd.f32 %v6478, %v8200
    %v8607 = vadd.f32 %v6479, %v8202
    %v8608 = vadd.f32 %v6480, %v8204
    %v8609 = vadd.f32 %v6481, %v8206
    %v8610 = vadd.f32 %v6482, %v8208
    %v8611 = vadd.f32 %v6483, %v8210
    %v8612 = vadd.f32 %v6484, %v8212
    %v8613 = vadd.f32 %v6485, %v8214
    %v8614 = vadd.f32 %v6486, %v8216
    %v8615 = vadd.f32 %v6487, %v8218
    %v8616 = vadd.f32 %v6488, %v8220
    %v8617 = vadd.f32 %v6489, %v8222
    %v8618 = vadd.f32 %v6490, %v8224
    %v8619 = vadd.f32 %v6491, %v8226
    %v8620 = vadd.f32 %v6492, %v8228
    %v8621 = vadd.f32 %v6493, %v8230
    %v8622 = vadd.f32 %v6494, %v8232
    %v8623 = vadd.f32 %v6495, %v8234
    %v8624 = vadd.f32 %v6496, %v8236
    %v8625 = vadd.f32 %v6497, %v8238
    %v8626 = vadd.f32 %v6498, %v8240
    %v8627 = vadd.f32 %v6499, %v8242
    %v8628 = vadd.f32 %v6500, %v8244
    %v8629 = vadd.f32 %v6501, %v8246
    %v8630 = vadd.f32 %v6502, %v8248
    %v8631 = vadd.f32 %v6503, %v8250
    %v8632 = vadd.f32 %v6504, %v8252
    %v8633 = vadd.f32 %v6505, %v8254
    %v8634 = vadd.f32 %v6506, %v8256
    %v8635 = vadd.f32 %v6507, %v8258
    %v8636 = vadd.f32 %v6508, %v8260
    %v8637 = vadd.f32 %v6509, %v8262
    %v8638 = vadd.f32 %v6510, %v8264
    %v8639 = vadd.f32 %v6511, %v8266
    %v8640 = vadd.f32 %v6512, %v8268
    %v8641 = vadd.f32 %v6513, %v8270
    %v8642 = vadd.f32 %v6514, %v8272
    %v8643 = vadd.f32 %v6515, %v8274
    %v8644 = vadd.f32 %v6516, %v8276
    %v8645 = vadd.f32 %v6517, %v8278
    %v8646 = vadd.f32 %v6518, %v8280
    %v8647 = vadd.f32 %v6519, %v8282
    %v8648 = vadd.f32 %v6520, %v8284
    %v8649 = vadd.f32 %v6521, %v8286
    %v8650 = vadd.f32 %v6522, %v8288
    %v8651 = vadd.f32 %v6523, %v8290
    %v8652 = vadd.f32 %v6524, %v8292
    %v8653 = vadd.f32 %v6525, %v8294
    %v8654 = vadd.f32 %v6526, %v8296
    %v8655 = vadd.f32 %v6527, %v8298
    %v8656 = vadd.f32 %v6528, %v8300
    %v8657 = vadd.f32 %v6529, %v8302
    %v8658 = vadd.f32 %v6530, %v8304
    %v8659 = vadd.f32 %v6531, %v8306
    %v8660 = vadd.f32 %v6532, %v8308
    %v8661 = vadd.f32 %v6533, %v8310
    %v8662 = vadd.f32 %v6534, %v8312
    %v8663 = vadd.f32 %v6535, %v8314
    %v8664 = vadd.f32 %v6536, %v8316
    %v8665 = vadd.f32 %v6537, %v8318
    %v8666 = vadd.f32 %v6538, %v8320
    %v8667 = vadd.f32 %v6539, %v8322
    %v8668 = vadd.f32 %v6540, %v8324
    %v8669 = vadd.f32 %v6541, %v8326
    %v8670 = vadd.f32 %v6542, %v8328
    %v8671 = vadd.f32 %v6543, %v8330
    %v8672 = vadd.f32 %v6544, %v8332
    %v8673 = vadd.f32 %v6545, %v8334
    %v8674 = vadd.f32 %v6546, %v8336
    %v8675 = vadd.f32 %v6547, %v8338
    %v8676 = vadd.f32 %v6548, %v8340
    %v8677 = vadd.f32 %v6549, %v8342
    %v8678 = vadd.f32 %v6550, %v8344
    %v8679 = vadd.f32 %v6551, %v8346
    %v8680 = vadd.f32 %v6552, %v8348
    %v8681 = vadd.f32 %v6553, %v8350
    %v8682 = vadd.f32 %v6554, %v8352
    %v8683 = vadd.f32 %v6555, %v8354
    %v8684 = vadd.f32 %v6556, %v8356
    %v8685 = vadd.f32 %v6557, %v8358
    %v8686 = vadd.f32 %v6558, %v8360
    %v8687 = vadd.f32 %v6559, %v8362
    %v8688 = vadd.f32 %v6560, %v8364
    %v8689 = vadd.f32 %v6561, %v8366
    %v8690 = vadd.f32 %v6562, %v8368
    %v8691 = vadd.f32 %v6563, %v8370
    %v8692 = vadd.f32 %v6564, %v8372
    %v8693 = vadd.f32 %v6565, %v8374
    %v8694 = vadd.f32 %v6566, %v8376
    %v8695 = vadd.f32 %v6567, %v8378
    %v8696 = vadd.f32 %v6568, %v8380
    %v8697 = vadd.f32 %v6569, %v8382
    %v8698 = vadd.f32 %v6570, %v8384
    %v8699 = vadd.f32 %v6571, %v8386
    %v8700 = vadd.f32 %v6572, %v8388
    %v8701 = vadd.f32 %v6573, %v8390
    %v8702 = vadd.f32 %v6574, %v8392
    %v8703 = vadd.f32 %v6575, %v8394
    %v8704 = vadd.f32 %v6576, %v8396
    %v8705 = vadd.f32 %v6577, %v8398
    %v8706 = vadd.f32 %v6578, %v8400
    %v8707 = vadd.f32 %v6579, %v8402
    %v8708 = vadd.f32 %v6580, %v8404
    %v8709 = vadd.f32 %v6581, %v8406
    %v8710 = vadd.f32 %v6582, %v8408
    %v8711 = vadd.f32 %v6583, %v8410
    %v8712 = vadd.f32 %v6584, %v8412
    %v8713 = vadd.f32 %v6585, %v8414
    %v8714 = vadd.f32 %v6586, %v8416
    %v8715 = vadd.f32 %v6587, %v8418
    %v8716 = vadd.f32 %v6588, %v8420
    %v8717 = vadd.f32 %v6589, %v8422
    %v8718 = vadd.f32 %v6590, %v8424
    %v8719 = vadd.f32 %v6591, %v8426
    %v8720 = vadd.f32 %v6592, %v8428
    %v8721 = vadd.f32 %v6593, %v8430
    %v8722 = vadd.f32 %v6594, %v8432
    %v8723 = vadd.f32 %v6595, %v8434
    %v8724 = vadd.f32 %v6596, %v8436
    %v8725 = vadd.f32 %v6597, %v8438
    %v8726 = vadd.f32 %v6598, %v8440
    %v8727 = vadd.f32 %v6599, %v8442
    %v8728 = vadd.f32 %v6600, %v8444
    %v8729 = vadd.f32 %v6601, %v8446
    %v8730 = vadd.f32 %v6602, %v8448
    %v8731 = vadd.f32 %v6603, %v8450
    %v8732 = vadd.f32 %v6604, %v8452
    %v8733 = vadd.f32 %v6605, %v8454
    %v8734 = vadd.f32 %v6606, %v8456
    %v8735 = vadd.f32 %v6607, %v8458
    %v8736 = vadd.f32 %v6608, %v8460
    %v8737 = vadd.f32 %v6609, %v8462
    %v8738 = vadd.f32 %v6610, %v8464
    %v8739 = vadd.f32 %v6611, %v8466
    %v8740 = vadd.f32 %v6612, %v8468
    %v8741 = vadd.f32 %v6613, %v8470
    %v8742 = vadd.f32 %v6614, %v8472
    %v8743 = vadd.f32 %v6615, %v8474
    %v8744 = vadd.f32 %v6616, %v8476
    %v8745 = vadd.f32 %v6617, %v8478
    %v8746 = vadd.f32 %v6618, %v8480
    %v8747 = vmul.f32 %v6087, %v2315
    %v8748 = vmul.f32 %v6088, %v2317
    %v8749 = vmul.f32 %v6089, %v2901
    %v8750 = vmul.f32 %v6090, %v2903
    %v8751 = vmul.f32 %v6091, %v3487
    %v8752 = vmul.f32 %v6092, %v3489
    %v8753 = vmul.f32 %v6093, %v4035
    %v8754 = vmul.f32 %v6094, %v2321
    %v8755 = vmul.f32 %v6095, %v2323
    %v8756 = vmul.f32 %v6096, %v2907
    %v8757 = vmul.f32 %v6097, %v2909
    %v8758 = vmul.f32 %v6098, %v3493
    %v8759 = vmul.f32 %v6099, %v3495
    %v8760 = vmul.f32 %v6100, %v4040
    %v8761 = vmul.f32 %v6101, %v2327
    %v8762 = vmul.f32 %v6102, %v2329
    %v8763 = vmul.f32 %v6103, %v2913
    %v8764 = vmul.f32 %v6104, %v2915
    %v8765 = vmul.f32 %v6105, %v3499
    %v8766 = vmul.f32 %v6106, %v3501
    %v8767 = vmul.f32 %v6107, %v4045
    %v8768 = vmul.f32 %v6108, %v2333
    %v8769 = vmul.f32 %v6109, %v2335
    %v8770 = vmul.f32 %v6110, %v2919
    %v8771 = vmul.f32 %v6111, %v2921
    %v8772 = vmul.f32 %v6112, %v3505
    %v8773 = vmul.f32 %v6113, %v3507
    %v8774 = vmul.f32 %v6114, %v4050
    %v8775 = vmul.f32 %v6115, %v2339
    %v8776 = vmul.f32 %v6116, %v2341
    %v8777 = vmul.f32 %v6117, %v2925
    %v8778 = vmul.f32 %v6118, %v2927
    %v8779 = vmul.f32 %v6119, %v3511
    %v8780 = vmul.f32 %v6120, %v3513
    %v8781 = vmul.f32 %v6121, %v4055
    %v8782 = vmul.f32 %v6122, %v2345
    %v8783 = vmul.f32 %v6123, %v2347
    %v8784 = vmul.f32 %v6124, %v2931
    %v8785 = vmul.f32 %v6125, %v2933
    %v8786 = vmul.f32 %v6126, %v3517
    %v8787 = vmul.f32 %v6127, %v3519
    %v8788 = vmul.f32 %v6128, %v4060
    %v8789 = vmul.f32 %v6129, %v2351
    %v8790 = vmul.f32 %v6130, %v2353
    %v8791 = vmul.f32 %v6131, %v2937
    %v8792 = vmul.f32 %v6132, %v2939
    %v8793 = vmul.f32 %v6133, %v3523
    %v8794 = vmul.f32 %v6134, %v3525
    %v8795 = vmul.f32 %v6135, %v4065
    %v8796 = vmul.f32 %v6136, %v2357
    %v8797 = vmul.f32 %v6137, %v2359
    %v8798 = vmul.f32 %v6138, %v2943
    %v8799 = vmul.f32 %v6139, %v2945
    %v8800 = vmul.f32 %v6140, %v3529
    %v8801 = vmul.f32 %v6141, %v3531
    %v8802 = vmul.f32 %v6142, %v4070
    %v8803 = vmul.f32 %v6143, %v2363
    %v8804 = vmul.f32 %v6144, %v2365
    %v8805 = vmul.f32 %v6145, %v2949
    %v8806 = vmul.f32 %v6146, %v2951
    %v8807 = vmul.f32 %v6147, %v3535
    %v8808 = vmul.f32 %v6148, %v3537
    %v8809 = vmul.f32 %v6149, %v4075
    %v8810 = vmul.f32 %v6150, %v2369
    %v8811 = vmul.f32 %v6151, %v2371
    %v8812 = vmul.f32 %v6152, %v2955
    %v8813 = vmul.f32 %v6153, %v2957
    %v8814 = vmul.f32 %v6154, %v3541
    %v8815 = vmul.f32 %v6155, %v3543
    %v8816 = vmul.f32 %v6156, %v4080
    %v8817 = vmul.f32 %v6157, %v2375
    %v8818 = vmul.f32 %v6158, %v2377
    %v8819 = vmul.f32 %v6159, %v2961
    %v8820 = vmul.f32 %v6160, %v2963
    %v8821 = vmul.f32 %v6161, %v3547
    %v8822 = vmul.f32 %v6162, %v3549
    %v8823 = vmul.f32 %v6163, %v4085
    %v8824 = vmul.f32 %v6164, %v2381
    %v8825 = vmul.f32 %v6165, %v2383
    %v8826 = vmul.f32 %v6166, %v2967
    %v8827 = vmul.f32 %v6167, %v2969
    %v8828 = vmul.f32 %v6168, %v3553
    %v8829 = vmul.f32 %v6169, %v3555
    %v8830 = vmul.f32 %v6170, %v4090
    %v8831 = vmul.f32 %v6171, %v2387
    %v8832 = vmul.f32 %v6172, %v2389
    %v8833 = vmul.f32 %v6173, %v2973
    %v8834 = vmul.f32 %v6174, %v2975
    %v8835 = vmul.f32 %v6175, %v3559
    %v8836 = vmul.f32 %v6176, %v3561
    %v8837 = vmul.f32 %v6177, %v4095
    %v8838 = vmul.f32 %v6178, %v2393
    %v8839 = vmul.f32 %v6179, %v2395
    %v8840 = vmul.f32 %v6180, %v2979
    %v8841 = vmul.f32 %v6181, %v2981
    %v8842 = vmul.f32 %v6182, %v3565
    %v8843 = vmul.f32 %v6183, %v3567
    %v8844 = vmul.f32 %v6184, %v4100
    %v8845 = vmul.f32 %v6185, %v2399
    %v8846 = vmul.f32 %v6186, %v2401
    %v8847 = vmul.f32 %v6187, %v2985
    %v8848 = vmul.f32 %v6188, %v2987
    %v8849 = vmul.f32 %v6189, %v3571
    %v8850 = vmul.f32 %v6190, %v3573
    %v8851 = vmul.f32 %v6191, %v4105
    %v8852 = vmul.f32 %v6192, %v2405
    %v8853 = vmul.f32 %v6193, %v2407
    %v8854 = vmul.f32 %v6194, %v2991
    %v8855 = vmul.f32 %v6195, %v2993
    %v8856 = vmul.f32 %v6196, %v3577
    %v8857 = vmul.f32 %v6197, %v3579
    %v8858 = vmul.f32 %v6198, %v4110
    %v8859 = vmul.f32 %v6199, %v2411
    %v8860 = vmul.f32 %v6200, %v2413
    %v8861 = vmul.f32 %v6201, %v2997
    %v8862 = vmul.f32 %v6202, %v2999
    %v8863 = vmul.f32 %v6203, %v3583
    %v8864 = vmul.f32 %v6204, %v3585
    %v8865 = vmul.f32 %v6205, %v4115
    %v8866 = vmul.f32 %v6206, %v2417
    %v8867 = vmul.f32 %v6207, %v2419
    %v8868 = vmul.f32 %v6208, %v3003
    %v8869 = vmul.f32 %v6209, %v3005
    %v8870 = vmul.f32 %v6210, %v3589
    %v8871 = vmul.f32 %v6211, %v3591
    %v8872 = vmul.f32 %v6212, %v4120
    %v8873 = vmul.f32 %v6213, %v2423
    %v8874 = vmul.f32 %v6214, %v2425
    %v8875 = vmul.f32 %v6215, %v3009
    %v8876 = vmul.f32 %v6216, %v3011
    %v8877 = vmul.f32 %v6217, %v3595
    %v8878 = vmul.f32 %v6218, %v3597
    %v8879 = vmul.f32 %v6219, %v4125
    %v8880 = vmul.f32 %v6220, %v2429
    %v8881 = vmul.f32 %v6221, %v2431
    %v8882 = vmul.f32 %v6222, %v3015
    %v8883 = vmul.f32 %v6223, %v3017
    %v8884 = vmul.f32 %v6224, %v3601
    %v8885 = vmul.f32 %v6225, %v3603
    %v8886 = vmul.f32 %v6226, %v4130
    %v8887 = vmul.f32 %v6227, %v2435
    %v8888 = vmul.f32 %v6228, %v2437
    %v8889 = vmul.f32 %v6229, %v3021
    %v8890 = vmul.f32 %v6230, %v3023
    %v8891 = vmul.f32 %v6231, %v3607
    %v8892 = vmul.f32 %v6232, %v3609
    %v8893 = vmul.f32 %v6233, %v4135
    %v8894 = vmul.f32 %v6234, %v2441
    %v8895 = vmul.f32 %v6235, %v2443
    %v8896 = vmul.f32 %v6236, %v3027
    %v8897 = vmul.f32 %v6237, %v3029
    %v8898 = vmul.f32 %v6238, %v3613
    %v8899 = vmul.f32 %v6239, %v3615
    %v8900 = vmul.f32 %v6240, %v4140
    %v8901 = vmul.f32 %v6241, %v2447
    %v8902 = vmul.f32 %v6242, %v2449
    %v8903 = vmul.f32 %v6243, %v3033
    %v8904 = vmul.f32 %v6244, %v3035
    %v8905 = vmul.f32 %v6245, %v3619
    %v8906 = vmul.f32 %v6246, %v3621
    %v8907 = vmul.f32 %v6247, %v4145
    %v8908 = vmul.f32 %v6248, %v2453
    %v8909 = vmul.f32 %v6249, %v2455
    %v8910 = vmul.f32 %v6250, %v3039
    %v8911 = vmul.f32 %v6251, %v3041
    %v8912 = vmul.f32 %v6252, %v3625
    %v8913 = vmul.f32 %v6253, %v3627
    %v8914 = vmul.f32 %v6254, %v4150
    %v8915 = vmul.f32 %v6255, %v2459
    %v8916 = vmul.f32 %v6256, %v2461
    %v8917 = vmul.f32 %v6257, %v3045
    %v8918 = vmul.f32 %v6258, %v3047
    %v8919 = vmul.f32 %v6259, %v3631
    %v8920 = vmul.f32 %v6260, %v3633
    %v8921 = vmul.f32 %v6261, %v4155
    %v8922 = vmul.f32 %v6262, %v2465
    %v8923 = vmul.f32 %v6263, %v2467
    %v8924 = vmul.f32 %v6264, %v3051
    %v8925 = vmul.f32 %v6265, %v3053
    %v8926 = vmul.f32 %v6266, %v3637
    %v8927 = vmul.f32 %v6267, %v3639
    %v8928 = vmul.f32 %v6268, %v4160
    %v8929 = vmul.f32 %v6269, %v2471
    %v8930 = vmul.f32 %v6270, %v2473
    %v8931 = vmul.f32 %v6271, %v3057
    %v8932 = vmul.f32 %v6272, %v3059
    %v8933 = vmul.f32 %v6273, %v3643
    %v8934 = vmul.f32 %v6274, %v3645
    %v8935 = vmul.f32 %v6275, %v4165
    %v8936 = vmul.f32 %v6276, %v2477
    %v8937 = vmul.f32 %v6277, %v2479
    %v8938 = vmul.f32 %v6278, %v3063
    %v8939 = vmul.f32 %v6279, %v3065
    %v8940 = vmul.f32 %v6280, %v3649
    %v8941 = vmul.f32 %v6281, %v3651
    %v8942 = vmul.f32 %v6282, %v4170
    %v8943 = vmul.f32 %v6283, %v2483
    %v8944 = vmul.f32 %v6284, %v2485
    %v8945 = vmul.f32 %v6285, %v3069
    %v8946 = vmul.f32 %v6286, %v3071
    %v8947 = vmul.f32 %v6287, %v3655
    %v8948 = vmul.f32 %v6288, %v3657
    %v8949 = vmul.f32 %v6289, %v4175
    %v8950 = vmul.f32 %v6290, %v2489
    %v8951 = vmul.f32 %v6291, %v2491
    %v8952 = vmul.f32 %v6292, %v3075
    %v8953 = vmul.f32 %v6293, %v3077
    %v8954 = vmul.f32 %v6294, %v3661
    %v8955 = vmul.f32 %v6295, %v3663
    %v8956 = vmul.f32 %v6296, %v4180
    %v8957 = vmul.f32 %v6297, %v2495
    %v8958 = vmul.f32 %v6298, %v2497
    %v8959 = vmul.f32 %v6299, %v3081
    %v8960 = vmul.f32 %v6300, %v3083
    %v8961 = vmul.f32 %v6301, %v3667
    %v8962 = vmul.f32 %v6302, %v3669
    %v8963 = vmul.f32 %v6303, %v4185
    %v8964 = vmul.f32 %v6304, %v2501
    %v8965 = vmul.f32 %v6305, %v2503
    %v8966 = vmul.f32 %v6306, %v3087
    %v8967 = vmul.f32 %v6307, %v3089
    %v8968 = vmul.f32 %v6308, %v3673
    %v8969 = vmul.f32 %v6309, %v3675
    %v8970 = vmul.f32 %v6310, %v4190
    %v8971 = vmul.f32 %v6311, %v2507
    %v8972 = vmul.f32 %v6312, %v2509
    %v8973 = vmul.f32 %v6313, %v3093
    %v8974 = vmul.f32 %v6314, %v3095
    %v8975 = vmul.f32 %v6315, %v3679
    %v8976 = vmul.f32 %v6316, %v3681
    %v8977 = vmul.f32 %v6317, %v4195
    %v8978 = vmul.f32 %v6318, %v2513
    %v8979 = vmul.f32 %v6319, %v2515
    %v8980 = vmul.f32 %v6320, %v3099
    %v8981 = vmul.f32 %v6321, %v3101
    %v8982 = vmul.f32 %v6322, %v3685
    %v8983 = vmul.f32 %v6323, %v3687
    %v8984 = vmul.f32 %v6324, %v4200
    %v8985 = vmul.f32 %v6325, %v2519
    %v8986 = vmul.f32 %v6326, %v2521
    %v8987 = vmul.f32 %v6327, %v3105
    %v8988 = vmul.f32 %v6328, %v3107
    %v8989 = vmul.f32 %v6329, %v3691
    %v8990 = vmul.f32 %v6330, %v3693
    %v8991 = vmul.f32 %v6331, %v4205
    %v8992 = vmul.f32 %v6332, %v2525
    %v8993 = vmul.f32 %v6333, %v2527
    %v8994 = vmul.f32 %v6334, %v3111
    %v8995 = vmul.f32 %v6335, %v3113
    %v8996 = vmul.f32 %v6336, %v3697
    %v8997 = vmul.f32 %v6337, %v3699
    %v8998 = vmul.f32 %v6338, %v4210
    %v8999 = vmul.f32 %v6339, %v2531
    %v9000 = vmul.f32 %v6340, %v2533
    %v9001 = vmul.f32 %v6341, %v3117
    %v9002 = vmul.f32 %v6342, %v3119
    %v9003 = vmul.f32 %v6343, %v3703
    %v9004 = vmul.f32 %v6344, %v3705
    %v9005 = vmul.f32 %v6345, %v4215
    %v9006 = vmul.f32 %v6346, %v2537
    %v9007 = vmul.f32 %v6347, %v2539
    %v9008 = vmul.f32 %v6348, %v3123
    %v9009 = vmul.f32 %v6349, %v3125
    %v9010 = vmul.f32 %v6350, %v3709
    %v9011 = vmul.f32 %v6351, %v3711
    %v9012 = vmul.f32 %v6352, %v4220
    %v9013 = vsub.f32 %v8747, %v8481
    %v9014 = vsub.f32 %v8748, %v8482
    %v9015 = vsub.f32 %v8749, %v8483
    %v9016 = vsub.f32 %v8750, %v8484
    %v9017 = vsub.f32 %v8751, %v8485
    %v9018 = vsub.f32 %v8752, %v8486
    %v9019 = vsub.f32 %v8753, %v8487
    %v9020 = vsub.f32 %v8754, %v8488
    %v9021 = vsub.f32 %v8755, %v8489
    %v9022 = vsub.f32 %v8756, %v8490
    %v9023 = vsub.f32 %v8757, %v8491
    %v9024 = vsub.f32 %v8758, %v8492
    %v9025 = vsub.f32 %v8759, %v8493
    %v9026 = vsub.f32 %v8760, %v8494
    %v9027 = vsub.f32 %v8761, %v8495
    %v9028 = vsub.f32 %v8762, %v8496
    %v9029 = vsub.f32 %v8763, %v8497
    %v9030 = vsub.f32 %v8764, %v8498
    %v9031 = vsub.f32 %v8765, %v8499
    %v9032 = vsub.f32 %v8766, %v8500
    %v9033 = vsub.f32 %v8767, %v8501
    %v9034 = vsub.f32 %v8768, %v8502
    %v9035 = vsub.f32 %v8769, %v8503
    %v9036 = vsub.f32 %v8770, %v8504
    %v9037 = vsub.f32 %v8771, %v8505
    %v9038 = vsub.f32 %v8772, %v8506
    %v9039 = vsub.f32 %v8773, %v8507
    %v9040 = vsub.f32 %v8774, %v8508
    %v9041 = vsub.f32 %v8775, %v8509
    %v9042 = vsub.f32 %v8776, %v8510
    %v9043 = vsub.f32 %v8777, %v8511
    %v9044 = vsub.f32 %v8778, %v8512
    %v9045 = vsub.f32 %v8779, %v8513
    %v9046 = vsub.f32 %v8780, %v8514
    %v9047 = vsub.f32 %v8781, %v8515
    %v9048 = vsub.f32 %v8782, %v8516
    %v9049 = vsub.f32 %v8783, %v8517
    %v9050 = vsub.f32 %v8784, %v8518
    %v9051 = vsub.f32 %v8785, %v8519
    %v9052 = vsub.f32 %v8786, %v8520
    %v9053 = vsub.f32 %v8787, %v8521
    %v9054 = vsub.f32 %v8788, %v8522
    %v9055 = vsub.f32 %v8789, %v8523
    %v9056 = vsub.f32 %v8790, %v8524
    %v9057 = vsub.f32 %v8791, %v8525
    %v9058 = vsub.f32 %v8792, %v8526
    %v9059 = vsub.f32 %v8793, %v8527
    %v9060 = vsub.f32 %v8794, %v8528
    %v9061 = vsub.f32 %v8795, %v8529
    %v9062 = vsub.f32 %v8796, %v8530
    %v9063 = vsub.f32 %v8797, %v8531
    %v9064 = vsub.f32 %v8798, %v8532
    %v9065 = vsub.f32 %v8799, %v8533
    %v9066 = vsub.f32 %v8800, %v8534
    %v9067 = vsub.f32 %v8801, %v8535
    %v9068 = vsub.f32 %v8802, %v8536
    %v9069 = vsub.f32 %v8803, %v8537
    %v9070 = vsub.f32 %v8804, %v8538
    %v9071 = vsub.f32 %v8805, %v8539
    %v9072 = vsub.f32 %v8806, %v8540
    %v9073 = vsub.f32 %v8807, %v8541
    %v9074 = vsub.f32 %v8808, %v8542
    %v9075 = vsub.f32 %v8809, %v8543
    %v9076 = vsub.f32 %v8810, %v8544
    %v9077 = vsub.f32 %v8811, %v8545
    %v9078 = vsub.f32 %v8812, %v8546
    %v9079 = vsub.f32 %v8813, %v8547
    %v9080 = vsub.f32 %v8814, %v8548
    %v9081 = vsub.f32 %v8815, %v8549
    %v9082 = vsub.f32 %v8816, %v8550
    %v9083 = vsub.f32 %v8817, %v8551
    %v9084 = vsub.f32 %v8818, %v8552
    %v9085 = vsub.f32 %v8819, %v8553
    %v9086 = vsub.f32 %v8820, %v8554
    %v9087 = vsub.f32 %v8821, %v8555
    %v9088 = vsub.f32 %v8822, %v8556
    %v9089 = vsub.f32 %v8823, %v8557
    %v9090 = vsub.f32 %v8824, %v8558
    %v9091 = vsub.f32 %v8825, %v8559
    %v9092 = vsub.f32 %v8826, %v8560
    %v9093 = vsub.f32 %v8827, %v8561
    %v9094 = vsub.f32 %v8828, %v8562
    %v9095 = vsub.f32 %v8829, %v8563
    %v9096 = vsub.f32 %v8830, %v8564
    %v9097 = vsub.f32 %v8831, %v8565
    %v9098 = vsub.f32 %v8832, %v8566
    %v9099 = vsub.f32 %v8833, %v8567
    %v9100 = vsub.f32 %v8834, %v8568
    %v9101 = vsub.f32 %v8835, %v8569
    %v9102 = vsub.f32 %v8836, %v8570
    %v9103 = vsub.f32 %v8837, %v8571
    %v9104 = vsub.f32 %v8838, %v8572
    %v9105 = vsub.f32 %v8839, %v8573
    %v9106 = vsub.f32 %v8840, %v8574
    %v9107 = vsub.f32 %v8841, %v8575
    %v9108 = vsub.f32 %v8842, %v8576
    %v9109 = vsub.f32 %v8843, %v8577
    %v9110 = vsub.f32 %v8844, %v8578
    %v9111 = vsub.f32 %v8845, %v8579
    %v9112 = vsub.f32 %v8846, %v8580
    %v9113 = vsub.f32 %v8847, %v8581
    %v9114 = vsub.f32 %v8848, %v8582
    %v9115 = vsub.f32 %v8849, %v8583
    %v9116 = vsub.f32 %v8850, %v8584
    %v9117 = vsub.f32 %v8851, %v8585
    %v9118 = vsub.f32 %v8852, %v8586
    %v9119 = vsub.f32 %v8853, %v8587
    %v9120 = vsub.f32 %v8854, %v8588
    %v9121 = vsub.f32 %v8855, %v8589
    %v9122 = vsub.f32 %v8856, %v8590
    %v9123 = vsub.f32 %v8857, %v8591
    %v9124 = vsub.f32 %v8858, %v8592
    %v9125 = vsub.f32 %v8859, %v8593
    %v9126 = vsub.f32 %v8860, %v8594
    %v9127 = vsub.f32 %v8861, %v8595
    %v9128 = vsub.f32 %v8862, %v8596
    %v9129 = vsub.f32 %v8863, %v8597
    %v9130 = vsub.f32 %v8864, %v8598
    %v9131 = vsub.f32 %v8865, %v8599
    %v9132 = vsub.f32 %v8866, %v8600
    %v9133 = vsub.f32 %v8867, %v8601
    %v9134 = vsub.f32 %v8868, %v8602
    %v9135 = vsub.f32 %v8869, %v8603
    %v9136 = vsub.f32 %v8870, %v8604
    %v9137 = vsub.f32 %v8871, %v8605
    %v9138 = vsub.f32 %v8872, %v8606
    %v9139 = vsub.f32 %v8873, %v8607
    %v9140 = vsub.f32 %v8874, %v8608
    %v9141 = vsub.f32 %v8875, %v8609
    %v9142 = vsub.f32 %v8876, %v8610
    %v9143 = vsub.f32 %v8877, %v8611
    %v9144 = vsub.f32 %v8878, %v8612
    %v9145 = vsub.f32 %v8879, %v8613
    %v9146 = vsub.f32 %v8880, %v8614
    %v9147 = vsub.f32 %v8881, %v8615
    %v9148 = vsub.f32 %v8882, %v8616
    %v9149 = vsub.f32 %v8883, %v8617
    %v9150 = vsub.f32 %v8884, %v8618
    %v9151 = vsub.f32 %v8885, %v8619
    %v9152 = vsub.f32 %v8886, %v8620
    %v9153 = vsub.f32 %v8887, %v8621
    %v9154 = vsub.f32 %v8888, %v8622
    %v9155 = vsub.f32 %v8889, %v8623
    %v9156 = vsub.f32 %v8890, %v8624
    %v9157 = vsub.f32 %v8891, %v8625
    %v9158 = vsub.f32 %v8892, %v8626
    %v9159 = vsub.f32 %v8893, %v8627
    %v9160 = vsub.f32 %v8894, %v8628
    %v9161 = vsub.f32 %v8895, %v8629
    %v9162 = vsub.f32 %v8896, %v8630
    %v9163 = vsub.f32 %v8897, %v8631
    %v9164 = vsub.f32 %v8898, %v8632
    %v9165 = vsub.f32 %v8899, %v8633
    %v9166 = vsub.f32 %v8900, %v8634
    %v9167 = vsub.f32 %v8901, %v8635
    %v9168 = vsub.f32 %v8902, %v8636
    %v9169 = vsub.f32 %v8903, %v8637
    %v9170 = vsub.f32 %v8904, %v8638
    %v9171 = vsub.f32 %v8905, %v8639
    %v9172 = vsub.f32 %v8906, %v8640
    %v9173 = vsub.f32 %v8907, %v8641
    %v9174 = vsub.f32 %v8908, %v8642
    %v9175 = vsub.f32 %v8909, %v8643
    %v9176 = vsub.f32 %v8910, %v8644
    %v9177 = vsub.f32 %v8911, %v8645
    %v9178 = vsub.f32 %v8912, %v8646
    %v9179 = vsub.f32 %v8913, %v8647
    %v9180 = vsub.f32 %v8914, %v8648
    %v9181 = vsub.f32 %v8915, %v8649
    %v9182 = vsub.f32 %v8916, %v8650
    %v9183 = vsub.f32 %v8917, %v8651
    %v9184 = vsub.f32 %v8918, %v8652
    %v9185 = vsub.f32 %v8919, %v8653
    %v9186 = vsub.f32 %v8920, %v8654
    %v9187 = vsub.f32 %v8921, %v8655
    %v9188 = vsub.f32 %v8922, %v8656
    %v9189 = vsub.f32 %v8923, %v8657
    %v9190 = vsub.f32 %v8924, %v8658
    %v9191 = vsub.f32 %v8925, %v8659
    %v9192 = vsub.f32 %v8926, %v8660
    %v9193 = vsub.f32 %v8927, %v8661
    %v9194 = vsub.f32 %v8928, %v8662
    %v9195 = vsub.f32 %v8929, %v8663
    %v9196 = vsub.f32 %v8930, %v8664
    %v9197 = vsub.f32 %v8931, %v8665
    %v9198 = vsub.f32 %v8932, %v8666
    %v9199 = vsub.f32 %v8933, %v8667
    %v9200 = vsub.f32 %v8934, %v8668
    %v9201 = vsub.f32 %v8935, %v8669
    %v9202 = vsub.f32 %v8936, %v8670
    %v9203 = vsub.f32 %v8937, %v8671
    %v9204 = vsub.f32 %v8938, %v8672
    %v9205 = vsub.f32 %v8939, %v8673
    %v9206 = vsub.f32 %v8940, %v8674
    %v9207 = vsub.f32 %v8941, %v8675
    %v9208 = vsub.f32 %v8942, %v8676
    %v9209 = vsub.f32 %v8943, %v8677
    %v9210 = vsub.f32 %v8944, %v8678
    %v9211 = vsub.f32 %v8945, %v8679
    %v9212 = vsub.f32 %v8946, %v8680
    %v9213 = vsub.f32 %v8947, %v8681
    %v9214 = vsub.f32 %v8948, %v8682
    %v9215 = vsub.f32 %v8949, %v8683
    %v9216 = vsub.f32 %v8950, %v8684
    %v9217 = vsub.f32 %v8951, %v8685
    %v9218 = vsub.f32 %v8952, %v8686
    %v9219 = vsub.f32 %v8953, %v8687
    %v9220 = vsub.f32 %v8954, %v8688
    %v9221 = vsub.f32 %v8955, %v8689
    %v9222 = vsub.f32 %v8956, %v8690
    %v9223 = vsub.f32 %v8957, %v8691
    %v9224 = vsub.f32 %v8958, %v8692
    %v9225 = vsub.f32 %v8959, %v8693
    %v9226 = vsub.f32 %v8960, %v8694
    %v9227 = vsub.f32 %v8961, %v8695
    %v9228 = vsub.f32 %v8962, %v8696
    %v9229 = vsub.f32 %v8963, %v8697
    %v9230 = vsub.f32 %v8964, %v8698
    %v9231 = vsub.f32 %v8965, %v8699
    %v9232 = vsub.f32 %v8966, %v8700
    %v9233 = vsub.f32 %v8967, %v8701
    %v9234 = vsub.f32 %v8968, %v8702
    %v9235 = vsub.f32 %v8969, %v8703
    %v9236 = vsub.f32 %v8970, %v8704
    %v9237 = vsub.f32 %v8971, %v8705
    %v9238 = vsub.f32 %v8972, %v8706
    %v9239 = vsub.f32 %v8973, %v8707
    %v9240 = vsub.f32 %v8974, %v8708
    %v9241 = vsub.f32 %v8975, %v8709
    %v9242 = vsub.f32 %v8976, %v8710
    %v9243 = vsub.f32 %v8977, %v8711
    %v9244 = vsub.f32 %v8978, %v8712
    %v9245 = vsub.f32 %v8979, %v8713
    %v9246 = vsub.f32 %v8980, %v8714
    %v9247 = vsub.f32 %v8981, %v8715
    %v9248 = vsub.f32 %v8982, %v8716
    %v9249 = vsub.f32 %v8983, %v8717
    %v9250 = vsub.f32 %v8984, %v8718
    %v9251 = vsub.f32 %v8985, %v8719
    %v9252 = vsub.f32 %v8986, %v8720
    %v9253 = vsub.f32 %v8987, %v8721
    %v9254 = vsub.f32 %v8988, %v8722
    %v9255 = vsub.f32 %v8989, %v8723
    %v9256 = vsub.f32 %v8990, %v8724
    %v9257 = vsub.f32 %v8991, %v8725
    %v9258 = vsub.f32 %v8992, %v8726
    %v9259 = vsub.f32 %v8993, %v8727
    %v9260 = vsub.f32 %v8994, %v8728
    %v9261 = vsub.f32 %v8995, %v8729
    %v9262 = vsub.f32 %v8996, %v8730
    %v9263 = vsub.f32 %v8997, %v8731
    %v9264 = vsub.f32 %v8998, %v8732
    %v9265 = vsub.f32 %v8999, %v8733
    %v9266 = vsub.f32 %v9000, %v8734
    %v9267 = vsub.f32 %v9001, %v8735
    %v9268 = vsub.f32 %v9002, %v8736
    %v9269 = vsub.f32 %v9003, %v8737
    %v9270 = vsub.f32 %v9004, %v8738
    %v9271 = vsub.f32 %v9005, %v8739
    %v9272 = vsub.f32 %v9006, %v8740
    %v9273 = vsub.f32 %v9007, %v8741
    %v9274 = vsub.f32 %v9008, %v8742
    %v9275 = vsub.f32 %v9009, %v8743
    %v9276 = vsub.f32 %v9010, %v8744
    %v9277 = vsub.f32 %v9011, %v8745
    %v9278 = vsub.f32 %v9012, %v8746
    %v9279 = vadd.f32 %v9013, %v9014
    %v9280 = vadd.f32 %v9279, %v9015
    %v9281 = vadd.f32 %v9280, %v9016
    %v9282 = vadd.f32 %v9281, %v9017
    %v9283 = vadd.f32 %v9282, %v9018
    %v9284 = vsel %vm5825, %v9019, 0.0
    %v9285 = vadd.f32 %v9283, %v9284
    %9286 = vadd.xlane.f32.xlu0 %v9285
    %v9287 = vpop.xlane.xlu0 %9286
    %v9288 = vadd.f32 %v9020, %v9021
    %v9289 = vadd.f32 %v9288, %v9022
    %v9290 = vadd.f32 %v9289, %v9023
    %v9291 = vadd.f32 %v9290, %v9024
    %v9292 = vadd.f32 %v9291, %v9025
    %v9293 = vsel %vm5825, %v9026, 0.0
    %v9294 = vadd.f32 %v9292, %v9293
    %9295 = vadd.xlane.f32.xlu0 %v9294
    %v9296 = vpop.xlane.xlu0 %9295
    %v9297 = vadd.f32 %v9027, %v9028
    %v9298 = vadd.f32 %v9297, %v9029
    %v9299 = vadd.f32 %v9298, %v9030
    %v9300 = vadd.f32 %v9299, %v9031
    %v9301 = vadd.f32 %v9300, %v9032
    %v9302 = vsel %vm5825, %v9033, 0.0
    %v9303 = vadd.f32 %v9301, %v9302
    %9304 = vadd.xlane.f32.xlu0 %v9303
    %v9305 = vpop.xlane.xlu0 %9304
    %v9306 = vadd.f32 %v9034, %v9035
    %v9307 = vadd.f32 %v9306, %v9036
    %v9308 = vadd.f32 %v9307, %v9037
    %v9309 = vadd.f32 %v9308, %v9038
    %v9310 = vadd.f32 %v9309, %v9039
    %v9311 = vsel %vm5825, %v9040, 0.0
    %v9312 = vadd.f32 %v9310, %v9311
    %9313 = vadd.xlane.f32.xlu0 %v9312
    %v9314 = vpop.xlane.xlu0 %9313
    %v9315 = vadd.f32 %v9041, %v9042
    %v9316 = vadd.f32 %v9315, %v9043
    %v9317 = vadd.f32 %v9316, %v9044
    %v9318 = vadd.f32 %v9317, %v9045
    %v9319 = vadd.f32 %v9318, %v9046
    %v9320 = vsel %vm5825, %v9047, 0.0
    %v9321 = vadd.f32 %v9319, %v9320
    %9322 = vadd.xlane.f32.xlu0 %v9321
    %v9323 = vpop.xlane.xlu0 %9322
    %v9324 = vadd.f32 %v9048, %v9049
    %v9325 = vadd.f32 %v9324, %v9050
    %v9326 = vadd.f32 %v9325, %v9051
    %v9327 = vadd.f32 %v9326, %v9052
    %v9328 = vadd.f32 %v9327, %v9053
    %v9329 = vsel %vm5825, %v9054, 0.0
    %v9330 = vadd.f32 %v9328, %v9329
    %9331 = vadd.xlane.f32.xlu0 %v9330
    %v9332 = vpop.xlane.xlu0 %9331
    %v9333 = vadd.f32 %v9055, %v9056
    %v9334 = vadd.f32 %v9333, %v9057
    %v9335 = vadd.f32 %v9334, %v9058
    %v9336 = vadd.f32 %v9335, %v9059
    %v9337 = vadd.f32 %v9336, %v9060
    %v9338 = vsel %vm5825, %v9061, 0.0
    %v9339 = vadd.f32 %v9337, %v9338
    %9340 = vadd.xlane.f32.xlu0 %v9339
    %v9341 = vpop.xlane.xlu0 %9340
    %v9342 = vadd.f32 %v9062, %v9063
    %v9343 = vadd.f32 %v9342, %v9064
    %v9344 = vadd.f32 %v9343, %v9065
    %v9345 = vadd.f32 %v9344, %v9066
    %v9346 = vadd.f32 %v9345, %v9067
    %v9347 = vsel %vm5825, %v9068, 0.0
    %v9348 = vadd.f32 %v9346, %v9347
    %9349 = vadd.xlane.f32.xlu0 %v9348
    %v9350 = vpop.xlane.xlu0 %9349
    %v9351 = vadd.f32 %v9069, %v9070
    %v9352 = vadd.f32 %v9351, %v9071
    %v9353 = vadd.f32 %v9352, %v9072
    %v9354 = vadd.f32 %v9353, %v9073
    %v9355 = vadd.f32 %v9354, %v9074
    %v9356 = vsel %vm5825, %v9075, 0.0
    %v9357 = vadd.f32 %v9355, %v9356
    %9358 = vadd.xlane.f32.xlu0 %v9357
    %v9359 = vpop.xlane.xlu0 %9358
    %v9360 = vadd.f32 %v9076, %v9077
    %v9361 = vadd.f32 %v9360, %v9078
    %v9362 = vadd.f32 %v9361, %v9079
    %v9363 = vadd.f32 %v9362, %v9080
    %v9364 = vadd.f32 %v9363, %v9081
    %v9365 = vsel %vm5825, %v9082, 0.0
    %v9366 = vadd.f32 %v9364, %v9365
    %9367 = vadd.xlane.f32.xlu0 %v9366
    %v9368 = vpop.xlane.xlu0 %9367
    %v9369 = vadd.f32 %v9083, %v9084
    %v9370 = vadd.f32 %v9369, %v9085
    %v9371 = vadd.f32 %v9370, %v9086
    %v9372 = vadd.f32 %v9371, %v9087
    %v9373 = vadd.f32 %v9372, %v9088
    %v9374 = vsel %vm5825, %v9089, 0.0
    %v9375 = vadd.f32 %v9373, %v9374
    %9376 = vadd.xlane.f32.xlu0 %v9375
    %v9377 = vpop.xlane.xlu0 %9376
    %v9378 = vadd.f32 %v9090, %v9091
    %v9379 = vadd.f32 %v9378, %v9092
    %v9380 = vadd.f32 %v9379, %v9093
    %v9381 = vadd.f32 %v9380, %v9094
    %v9382 = vadd.f32 %v9381, %v9095
    %v9383 = vsel %vm5825, %v9096, 0.0
    %v9384 = vadd.f32 %v9382, %v9383
    %9385 = vadd.xlane.f32.xlu0 %v9384
    %v9386 = vpop.xlane.xlu0 %9385
    %v9387 = vadd.f32 %v9097, %v9098
    %v9388 = vadd.f32 %v9387, %v9099
    %v9389 = vadd.f32 %v9388, %v9100
    %v9390 = vadd.f32 %v9389, %v9101
    %v9391 = vadd.f32 %v9390, %v9102
    %v9392 = vsel %vm5825, %v9103, 0.0
    %v9393 = vadd.f32 %v9391, %v9392
    %9394 = vadd.xlane.f32.xlu0 %v9393
    %v9395 = vpop.xlane.xlu0 %9394
    %v9396 = vadd.f32 %v9104, %v9105
    %v9397 = vadd.f32 %v9396, %v9106
    %v9398 = vadd.f32 %v9397, %v9107
    %v9399 = vadd.f32 %v9398, %v9108
    %v9400 = vadd.f32 %v9399, %v9109
    %v9401 = vsel %vm5825, %v9110, 0.0
    %v9402 = vadd.f32 %v9400, %v9401
    %9403 = vadd.xlane.f32.xlu0 %v9402
    %v9404 = vpop.xlane.xlu0 %9403
    %v9405 = vadd.f32 %v9111, %v9112
    %v9406 = vadd.f32 %v9405, %v9113
    %v9407 = vadd.f32 %v9406, %v9114
    %v9408 = vadd.f32 %v9407, %v9115
    %v9409 = vadd.f32 %v9408, %v9116
    %v9410 = vsel %vm5825, %v9117, 0.0
    %v9411 = vadd.f32 %v9409, %v9410
    %9412 = vadd.xlane.f32.xlu0 %v9411
    %v9413 = vpop.xlane.xlu0 %9412
    %v9414 = vadd.f32 %v9118, %v9119
    %v9415 = vadd.f32 %v9414, %v9120
    %v9416 = vadd.f32 %v9415, %v9121
    %v9417 = vadd.f32 %v9416, %v9122
    %v9418 = vadd.f32 %v9417, %v9123
    %v9419 = vsel %vm5825, %v9124, 0.0
    %v9420 = vadd.f32 %v9418, %v9419
    %9421 = vadd.xlane.f32.xlu0 %v9420
    %v9422 = vpop.xlane.xlu0 %9421
    %v9423 = vadd.f32 %v9125, %v9126
    %v9424 = vadd.f32 %v9423, %v9127
    %v9425 = vadd.f32 %v9424, %v9128
    %v9426 = vadd.f32 %v9425, %v9129
    %v9427 = vadd.f32 %v9426, %v9130
    %v9428 = vsel %vm5825, %v9131, 0.0
    %v9429 = vadd.f32 %v9427, %v9428
    %9430 = vadd.xlane.f32.xlu0 %v9429
    %v9431 = vpop.xlane.xlu0 %9430
    %v9432 = vadd.f32 %v9132, %v9133
    %v9433 = vadd.f32 %v9432, %v9134
    %v9434 = vadd.f32 %v9433, %v9135
    %v9435 = vadd.f32 %v9434, %v9136
    %v9436 = vadd.f32 %v9435, %v9137
    %v9437 = vsel %vm5825, %v9138, 0.0
    %v9438 = vadd.f32 %v9436, %v9437
    %9439 = vadd.xlane.f32.xlu0 %v9438
    %v9440 = vpop.xlane.xlu0 %9439
    %v9441 = vadd.f32 %v9139, %v9140
    %v9442 = vadd.f32 %v9441, %v9141
    %v9443 = vadd.f32 %v9442, %v9142
    %v9444 = vadd.f32 %v9443, %v9143
    %v9445 = vadd.f32 %v9444, %v9144
    %v9446 = vsel %vm5825, %v9145, 0.0
    %v9447 = vadd.f32 %v9445, %v9446
    %9448 = vadd.xlane.f32.xlu0 %v9447
    %v9449 = vpop.xlane.xlu0 %9448
    %v9450 = vadd.f32 %v9146, %v9147
    %v9451 = vadd.f32 %v9450, %v9148
    %v9452 = vadd.f32 %v9451, %v9149
    %v9453 = vadd.f32 %v9452, %v9150
    %v9454 = vadd.f32 %v9453, %v9151
    %v9455 = vsel %vm5825, %v9152, 0.0
    %v9456 = vadd.f32 %v9454, %v9455
    %9457 = vadd.xlane.f32.xlu0 %v9456
    %v9458 = vpop.xlane.xlu0 %9457
    %v9459 = vadd.f32 %v9153, %v9154
    %v9460 = vadd.f32 %v9459, %v9155
    %v9461 = vadd.f32 %v9460, %v9156
    %v9462 = vadd.f32 %v9461, %v9157
    %v9463 = vadd.f32 %v9462, %v9158
    %v9464 = vsel %vm5825, %v9159, 0.0
    %v9465 = vadd.f32 %v9463, %v9464
    %9466 = vadd.xlane.f32.xlu0 %v9465
    %v9467 = vpop.xlane.xlu0 %9466
    %v9468 = vadd.f32 %v9160, %v9161
    %v9469 = vadd.f32 %v9468, %v9162
    %v9470 = vadd.f32 %v9469, %v9163
    %v9471 = vadd.f32 %v9470, %v9164
    %v9472 = vadd.f32 %v9471, %v9165
    %v9473 = vsel %vm5825, %v9166, 0.0
    %v9474 = vadd.f32 %v9472, %v9473
    %9475 = vadd.xlane.f32.xlu0 %v9474
    %v9476 = vpop.xlane.xlu0 %9475
    %v9477 = vadd.f32 %v9167, %v9168
    %v9478 = vadd.f32 %v9477, %v9169
    %v9479 = vadd.f32 %v9478, %v9170
    %v9480 = vadd.f32 %v9479, %v9171
    %v9481 = vadd.f32 %v9480, %v9172
    %v9482 = vsel %vm5825, %v9173, 0.0
    %v9483 = vadd.f32 %v9481, %v9482
    %9484 = vadd.xlane.f32.xlu0 %v9483
    %v9485 = vpop.xlane.xlu0 %9484
    %v9486 = vadd.f32 %v9174, %v9175
    %v9487 = vadd.f32 %v9486, %v9176
    %v9488 = vadd.f32 %v9487, %v9177
    %v9489 = vadd.f32 %v9488, %v9178
    %v9490 = vadd.f32 %v9489, %v9179
    %v9491 = vsel %vm5825, %v9180, 0.0
    %v9492 = vadd.f32 %v9490, %v9491
    %9493 = vadd.xlane.f32.xlu0 %v9492
    %v9494 = vpop.xlane.xlu0 %9493
    %v9495 = vadd.f32 %v9181, %v9182
    %v9496 = vadd.f32 %v9495, %v9183
    %v9497 = vadd.f32 %v9496, %v9184
    %v9498 = vadd.f32 %v9497, %v9185
    %v9499 = vadd.f32 %v9498, %v9186
    %v9500 = vsel %vm5825, %v9187, 0.0
    %v9501 = vadd.f32 %v9499, %v9500
    %9502 = vadd.xlane.f32.xlu0 %v9501
    %v9503 = vpop.xlane.xlu0 %9502
    %v9504 = vadd.f32 %v9188, %v9189
    %v9505 = vadd.f32 %v9504, %v9190
    %v9506 = vadd.f32 %v9505, %v9191
    %v9507 = vadd.f32 %v9506, %v9192
    %v9508 = vadd.f32 %v9507, %v9193
    %v9509 = vsel %vm5825, %v9194, 0.0
    %v9510 = vadd.f32 %v9508, %v9509
    %9511 = vadd.xlane.f32.xlu0 %v9510
    %v9512 = vpop.xlane.xlu0 %9511
    %v9513 = vadd.f32 %v9195, %v9196
    %v9514 = vadd.f32 %v9513, %v9197
    %v9515 = vadd.f32 %v9514, %v9198
    %v9516 = vadd.f32 %v9515, %v9199
    %v9517 = vadd.f32 %v9516, %v9200
    %v9518 = vsel %vm5825, %v9201, 0.0
    %v9519 = vadd.f32 %v9517, %v9518
    %9520 = vadd.xlane.f32.xlu0 %v9519
    %v9521 = vpop.xlane.xlu0 %9520
    %v9522 = vadd.f32 %v9202, %v9203
    %v9523 = vadd.f32 %v9522, %v9204
    %v9524 = vadd.f32 %v9523, %v9205
    %v9525 = vadd.f32 %v9524, %v9206
    %v9526 = vadd.f32 %v9525, %v9207
    %v9527 = vsel %vm5825, %v9208, 0.0
    %v9528 = vadd.f32 %v9526, %v9527
    %9529 = vadd.xlane.f32.xlu0 %v9528
    %v9530 = vpop.xlane.xlu0 %9529
    %v9531 = vadd.f32 %v9209, %v9210
    %v9532 = vadd.f32 %v9531, %v9211
    %v9533 = vadd.f32 %v9532, %v9212
    %v9534 = vadd.f32 %v9533, %v9213
    %v9535 = vadd.f32 %v9534, %v9214
    %v9536 = vsel %vm5825, %v9215, 0.0
    %v9537 = vadd.f32 %v9535, %v9536
    %9538 = vadd.xlane.f32.xlu0 %v9537
    %v9539 = vpop.xlane.xlu0 %9538
    %v9540 = vadd.f32 %v9216, %v9217
    %v9541 = vadd.f32 %v9540, %v9218
    %v9542 = vadd.f32 %v9541, %v9219
    %v9543 = vadd.f32 %v9542, %v9220
    %v9544 = vadd.f32 %v9543, %v9221
    %v9545 = vsel %vm5825, %v9222, 0.0
    %v9546 = vadd.f32 %v9544, %v9545
    %9547 = vadd.xlane.f32.xlu0 %v9546
    %v9548 = vpop.xlane.xlu0 %9547
    %v9549 = vadd.f32 %v9223, %v9224
    %v9550 = vadd.f32 %v9549, %v9225
    %v9551 = vadd.f32 %v9550, %v9226
    %v9552 = vadd.f32 %v9551, %v9227
    %v9553 = vadd.f32 %v9552, %v9228
    %v9554 = vsel %vm5825, %v9229, 0.0
    %v9555 = vadd.f32 %v9553, %v9554
    %9556 = vadd.xlane.f32.xlu0 %v9555
    %v9557 = vpop.xlane.xlu0 %9556
    %v9558 = vadd.f32 %v9230, %v9231
    %v9559 = vadd.f32 %v9558, %v9232
    %v9560 = vadd.f32 %v9559, %v9233
    %v9561 = vadd.f32 %v9560, %v9234
    %v9562 = vadd.f32 %v9561, %v9235
    %v9563 = vsel %vm5825, %v9236, 0.0
    %v9564 = vadd.f32 %v9562, %v9563
    %9565 = vadd.xlane.f32.xlu0 %v9564
    %v9566 = vpop.xlane.xlu0 %9565
    %v9567 = vadd.f32 %v9237, %v9238
    %v9568 = vadd.f32 %v9567, %v9239
    %v9569 = vadd.f32 %v9568, %v9240
    %v9570 = vadd.f32 %v9569, %v9241
    %v9571 = vadd.f32 %v9570, %v9242
    %v9572 = vsel %vm5825, %v9243, 0.0
    %v9573 = vadd.f32 %v9571, %v9572
    %9574 = vadd.xlane.f32.xlu0 %v9573
    %v9575 = vpop.xlane.xlu0 %9574
    %v9576 = vadd.f32 %v9244, %v9245
    %v9577 = vadd.f32 %v9576, %v9246
    %v9578 = vadd.f32 %v9577, %v9247
    %v9579 = vadd.f32 %v9578, %v9248
    %v9580 = vadd.f32 %v9579, %v9249
    %v9581 = vsel %vm5825, %v9250, 0.0
    %v9582 = vadd.f32 %v9580, %v9581
    %9583 = vadd.xlane.f32.xlu0 %v9582
    %v9584 = vpop.xlane.xlu0 %9583
    %v9585 = vadd.f32 %v9251, %v9252
    %v9586 = vadd.f32 %v9585, %v9253
    %v9587 = vadd.f32 %v9586, %v9254
    %v9588 = vadd.f32 %v9587, %v9255
    %v9589 = vadd.f32 %v9588, %v9256
    %v9590 = vsel %vm5825, %v9257, 0.0
    %v9591 = vadd.f32 %v9589, %v9590
    %9592 = vadd.xlane.f32.xlu0 %v9591
    %v9593 = vpop.xlane.xlu0 %9592
    %v9594 = vadd.f32 %v9258, %v9259
    %v9595 = vadd.f32 %v9594, %v9260
    %v9596 = vadd.f32 %v9595, %v9261
    %v9597 = vadd.f32 %v9596, %v9262
    %v9598 = vadd.f32 %v9597, %v9263
    %v9599 = vsel %vm5825, %v9264, 0.0
    %v9600 = vadd.f32 %v9598, %v9599
    %9601 = vadd.xlane.f32.xlu0 %v9600
    %v9602 = vpop.xlane.xlu0 %9601
    %v9603 = vadd.f32 %v9265, %v9266
    %v9604 = vadd.f32 %v9603, %v9267
    %v9605 = vadd.f32 %v9604, %v9268
    %v9606 = vadd.f32 %v9605, %v9269
    %v9607 = vadd.f32 %v9606, %v9270
    %v9608 = vsel %vm5825, %v9271, 0.0
    %v9609 = vadd.f32 %v9607, %v9608
    %9610 = vadd.xlane.f32.xlu0 %v9609
    %v9611 = vpop.xlane.xlu0 %9610
    %vm9612 = vcmask 1043456
    %v9613 = vsel %vm9612, %v9272, 0.0
    %v9614 = vsel %vm9612, %v9273, 0.0
    %v9615 = vadd.f32 %v9613, %v9614
    %v9616 = vsel %vm9612, %v9274, 0.0
    %v9617 = vadd.f32 %v9615, %v9616
    %v9618 = vsel %vm9612, %v9275, 0.0
    %v9619 = vadd.f32 %v9617, %v9618
    %v9620 = vsel %vm9612, %v9276, 0.0
    %v9621 = vadd.f32 %v9619, %v9620
    %v9622 = vsel %vm9612, %v9277, 0.0
    %v9623 = vadd.f32 %v9621, %v9622
    %v9624 = vsel %vm6085, %v9278, 0.0
    %v9625 = vadd.f32 %v9623, %v9624
    %9626 = vadd.xlane.f32.xlu0 %v9625
    %v9627 = vpop.xlane.xlu0 %9626
    %v9628 = vsub.f32 0.0, %v9287
    %v9629 = vsub.f32 0.0, %v9296
    %v9630 = vsub.f32 0.0, %v9305
    %v9631 = vsub.f32 0.0, %v9314
    %v9632 = vsub.f32 0.0, %v9323
    %v9633 = vsub.f32 0.0, %v9332
    %v9634 = vsub.f32 0.0, %v9341
    %v9635 = vsub.f32 0.0, %v9350
    %v9636 = vsub.f32 0.0, %v9359
    %v9637 = vsub.f32 0.0, %v9368
    %v9638 = vsub.f32 0.0, %v9377
    %v9639 = vsub.f32 0.0, %v9386
    %v9640 = vsub.f32 0.0, %v9395
    %v9641 = vsub.f32 0.0, %v9404
    %v9642 = vsub.f32 0.0, %v9413
    %v9643 = vsub.f32 0.0, %v9422
    %v9644 = vsub.f32 0.0, %v9431
    %v9645 = vsub.f32 0.0, %v9440
    %v9646 = vsub.f32 0.0, %v9449
    %v9647 = vsub.f32 0.0, %v9458
    %v9648 = vsub.f32 0.0, %v9467
    %v9649 = vsub.f32 0.0, %v9476
    %v9650 = vsub.f32 0.0, %v9485
    %v9651 = vsub.f32 0.0, %v9494
    %v9652 = vsub.f32 0.0, %v9503
    %v9653 = vsub.f32 0.0, %v9512
    %v9654 = vsub.f32 0.0, %v9521
    %v9655 = vsub.f32 0.0, %v9530
    %v9656 = vsub.f32 0.0, %v9539
    %v9657 = vsub.f32 0.0, %v9548
    %v9658 = vsub.f32 0.0, %v9557
    %v9659 = vsub.f32 0.0, %v9566
    %v9660 = vsub.f32 0.0, %v9575
    %v9661 = vsub.f32 0.0, %v9584
    %v9662 = vsub.f32 0.0, %v9593
    %v9663 = vsub.f32 0.0, %v9602
    %v9664 = vsub.f32 0.0, %v9611
    %v9665 = vsub.f32 0.0, %v9627
    %vm9666 = vcmask 7168
    %9667 = vst.msk [vmem:[%s9] sm:$0xff] %vm9666, %v9628
    %9668 = vst.msk [vmem:[%s9 + $0x8] sm:$0xff] %vm9666, %v9629
    %9669 = vst.msk [vmem:[%s9 + $0x10] sm:$0xff] %vm9666, %v9630
    %9670 = vst.msk [vmem:[%s9 + $0x18] sm:$0xff] %vm9666, %v9631
    %9671 = vst.msk [vmem:[%s9 + $0x20] sm:$0xff] %vm9666, %v9632
    %9672 = vst.msk [vmem:[%s9 + $0x28] sm:$0xff] %vm9666, %v9633
    %9673 = vst.msk [vmem:[%s9 + $0x30] sm:$0xff] %vm9666, %v9634
    %9674 = vst.msk [vmem:[%s9 + $0x38] sm:$0xff] %vm9666, %v9635
    %9675 = vst.msk [vmem:[%s9 + $0x40] sm:$0xff] %vm9666, %v9636
    %9676 = vst.msk [vmem:[%s9 + $0x48] sm:$0xff] %vm9666, %v9637
    %9677 = vst.msk [vmem:[%s9 + $0x50] sm:$0xff] %vm9666, %v9638
    %9678 = vst.msk [vmem:[%s9 + $0x58] sm:$0xff] %vm9666, %v9639
    %9679 = vst.msk [vmem:[%s9 + $0x60] sm:$0xff] %vm9666, %v9640
    %9680 = vst.msk [vmem:[%s9 + $0x68] sm:$0xff] %vm9666, %v9641
    %9681 = vst.msk [vmem:[%s9 + $0x70] sm:$0xff] %vm9666, %v9642
    %9682 = vst.msk [vmem:[%s9 + $0x78] sm:$0xff] %vm9666, %v9643
    %9683 = vst.msk [vmem:[%s9 + $0x80] sm:$0xff] %vm9666, %v9644
    %9684 = vst.msk [vmem:[%s9 + $0x88] sm:$0xff] %vm9666, %v9645
    %9685 = vst.msk [vmem:[%s9 + $0x90] sm:$0xff] %vm9666, %v9646
    %9686 = vst.msk [vmem:[%s9 + $0x98] sm:$0xff] %vm9666, %v9647
    %9687 = vst.msk [vmem:[%s9 + $0xa0] sm:$0xff] %vm9666, %v9648
    %9688 = vst.msk [vmem:[%s9 + $0xa8] sm:$0xff] %vm9666, %v9649
    %9689 = vst.msk [vmem:[%s9 + $0xb0] sm:$0xff] %vm9666, %v9650
    %9690 = vst.msk [vmem:[%s9 + $0xb8] sm:$0xff] %vm9666, %v9651
    %9691 = vst.msk [vmem:[%s9 + $0xc0] sm:$0xff] %vm9666, %v9652
    %9692 = vst.msk [vmem:[%s9 + $0xc8] sm:$0xff] %vm9666, %v9653
    %9693 = vst.msk [vmem:[%s9 + $0xd0] sm:$0xff] %vm9666, %v9654
    %9694 = vst.msk [vmem:[%s9 + $0xd8] sm:$0xff] %vm9666, %v9655
    %9695 = vst.msk [vmem:[%s9 + $0xe0] sm:$0xff] %vm9666, %v9656
    %9696 = vst.msk [vmem:[%s9 + $0xe8] sm:$0xff] %vm9666, %v9657
    %9697 = vst.msk [vmem:[%s9 + $0xf0] sm:$0xff] %vm9666, %v9658
    %9698 = vst.msk [vmem:[%s9 + $0xf8] sm:$0xff] %vm9666, %v9659
    %9699 = vst.msk [vmem:[%s9 + $0x100] sm:$0xff] %vm9666, %v9660
    %9700 = vst.msk [vmem:[%s9 + $0x108] sm:$0xff] %vm9666, %v9661
    %9701 = vst.msk [vmem:[%s9 + $0x110] sm:$0xff] %vm9666, %v9662
    %9702 = vst.msk [vmem:[%s9 + $0x118] sm:$0xff] %vm9666, %v9663
    %9703 = vst.msk [vmem:[%s9 + $0x120] sm:$0xff] %vm9666, %v9664
    %vm9704 = vcmask 3072
    %9705 = vst.msk [vmem:[%s9 + $0x128] sm:$0xf] %vm9704, %v9665
    // Predicated region
    $region34: #{tpu_custom_call.1} parent=1 // pred_check
      _
    $region35: #{tpu_custom_call.1} parent=1 // pred_check_branch
      %9707 = sbr.rel (0) target = $region37
    $region36: #{tpu_custom_call.1} parent=1 // pred_region
      %s9709 = ssub.s32 34048, 34048
      %9710 = vsyncadd [#allocation3], %s9709
      %s9711 = sshll.u32 [#allocation2], 4
      %s9712 = int_to_ptr.vmem [resolvable:$true] %s9711
      %9717 = dma.vmem_to_hbm [thread:$0]  %s9712, 34048, %s8, [#allocation3], 896, 896, 56
    $region37: #{tpu_custom_call.1} parent=1 // pred_fallthru
      _
    // Predicated region
    $region38: #{tpu_custom_call.1} parent=1 // pred_check
      _
    $region39: #{tpu_custom_call.1} parent=1 // pred_check_branch
      %9719 = sbr.rel (0) target = $region41
    $region40: #{tpu_custom_call.1} parent=1 // pred_region
      _
    $region41: #{tpu_custom_call.1} parent=1 // pred_fallthru
      _
    // Predicated region
    $region42: #{tpu_custom_call.1} parent=1 // pred_check
      _
    $region43: #{tpu_custom_call.1} parent=1 // pred_check_branch
      %9721 = sbr.rel (0) target = $region45
    $region44: #{tpu_custom_call.1} parent=1 // pred_region
      %9722 = dma.done [#allocation3], 34048
    $region45: #{tpu_custom_call.1} parent=1 // pred_fallthru
      _
    // Predicated region
    $region46: #{tpu_custom_call.1} parent=1 // pred_check
      _
    $region47: #{tpu_custom_call.1} parent=1 // pred_check_branch
      %9724 = sbr.rel (0) target = $region49
    $region48: #{tpu_custom_call.1} parent=1 // pred_region
      _
    $region49: #{tpu_custom_call.1} parent=1 // pred_fallthru
      _
    %9725 = vsyncpa [#allocation3], 1

</llo_original>
